<compile_context>
chip_gen: v7x
topology: tpu7x:2x2x1
jax: 0.10.0
libtpu: 0.0.40
codegen_flags: <defaults>
</compile_context>

<pallas_src>
import jax
import jax.numpy as jnp
from jax.experimental import pallas as pl
from jax.experimental.pallas import tpu as pltpu

# ----------------------- small synthetic configuration -----------------------
B = 2                 # batch
C_IMG = 3             # image channels
IMG = 16              # image spatial size
PATCH = 8             # patch size
N_PATCH = (IMG // PATCH) ** 2     # 4 patches
N_VIS_TOK = N_PATCH + 1           # +1 CLS token = 5
VIS_PAD = 8           # vision tokens padded to 8 rows / image (sublane aligned)
D_VIS = 32            # CLIP vision hidden size
N_VIS_LAYERS = 2
N_VIS_HEADS = 4
D_LM = 32             # GPT-2 hidden size
N_LM_LAYERS = 2
N_LM_HEADS = 4
VOCAB = 64
VOCAB_PAD = 128       # lane-dense logits
SEQ = 8               # text sequence length
MAX_POS = 16
SELECT_LAYER = -2     # config.select_layer
EPS = 1e-5
NEG_INF = -1e9

DH = D_LM // N_LM_HEADS                          # 8
N_VIS_USED = N_VIS_LAYERS + 1 + SELECT_LAYER     # layers feeding hidden_states[-2]
VEC_W = 128                                      # width of the packed vector bank

assert D_VIS == D_LM and N_VIS_HEADS == N_LM_HEADS  # shared per-head lane masks

# ------------------------- packed parameter layouts ---------------------------
# vector bank rows (each row: one (1, <=128) vector padded to 128 lanes)
R_VIS_BASE = 0                                   # B*VIS_PAD rows (cls+pos, pre-tiled)
R_WPE = R_VIS_BASE + B * VIS_PAD                 # B*SEQ rows (wpe, pre-tiled)
R_PRE_G = R_WPE + B * SEQ
R_PRE_B = R_PRE_G + 1
R_PROJ_B = R_PRE_B + 1
R_LNF_G = R_PROJ_B + 1
R_LNF_B = R_LNF_G + 1
R_VIS_L = R_LNF_B + 1                            # per CLIP layer: 10 rows
VIS_VROWS = 10                                   # ln1g,ln1b,qb,kb,vb,ob,ln2g,ln2b,fc1b,fc2b
R_LM_L = R_VIS_L + N_VIS_USED * VIS_VROWS        # per GPT block: 16 rows
LM_VROWS = 16  # ln1g,ln1b,qb,kb,vb,ob,lnxg,lnxb,xqb,xkb,xvb,xob,ln2g,ln2b,fcb,projb
N_VEC_ROWS = R_LM_L + N_LM_LAYERS * LM_VROWS

# (32, 32) weight slabs
W33_VIS = 0                                      # per CLIP layer: 4 (q, k, v, o)
W33_LM = W33_VIS + 4 * N_VIS_USED                # per block: 8 (q,k,v,o,xq,xk,xv,xo)
W33_PROJ = W33_LM + 8 * N_LM_LAYERS              # vision_projector
N_W33 = W33_PROJ + 1

# (32, 128) weight slabs
WWIDE_VIS_FC1 = 0
WWIDE_LM_FC = WWIDE_VIS_FC1 + N_VIS_USED
WWIDE_WTE_T = WWIDE_LM_FC + N_LM_LAYERS          # pre-transposed tied lm_head
N_WWIDE = WWIDE_WTE_T + 1

# (128, 32) weight slabs
WTALL_VIS_FC2 = 0
WTALL_LM_PROJ = WTALL_VIS_FC2 + N_VIS_USED
WTALL_WTE = WTALL_LM_PROJ + N_LM_LAYERS          # token embedding (vocab padded)
N_WTALL = WTALL_WTE + 1


# ------------------------- in-kernel math helpers -----------------------------
def _ln(x, g, b):
    mu = jnp.mean(x, axis=-1, keepdims=True)
    xc = x - mu
    var = jnp.mean(xc * xc, axis=-1, keepdims=True)
    return xc * jax.lax.rsqrt(var + EPS) * g + b


def _quick_gelu(x):            # CLIP quick GELU
    return x * (1.0 / (1.0 + jnp.exp(-1.702 * x)))


def _gelu_new(x):              # GPT-2 tanh GELU
    return 0.5 * x * (1.0 + jnp.tanh(
        0.7978845608028654 * (x + 0.044715 * x * x * x)))


def _lin(x, w, b=None, act=None):
    # bf16 MXU operands, f32 accumulation, f32 elementwise tail
    y = jnp.dot(x.astype(w.dtype), w, preferred_element_type=jnp.float32)
    if b is not None:
        y = y + b
    if act == "quick_gelu":
        y = _quick_gelu(y)
    elif act == "gelu_new":
        y = _gelu_new(y)
    return y


def _attn(q, k, v, head_masks, mask_ref):
    """Multi-head attention on one lane-dense (batch*tokens, D) slab.

    Head separation uses per-head lane select masks (no width-8 slices, no
    concatenates); batch separation, causality and key padding are folded into
    one additive block-diagonal score mask (precomputed host-side, loaded here
    at its point of use).  Attention scale is pre-folded into the Q weights.
    Per-head outputs accumulate directly into the merged (rows, D) result.
    """
    qb = q.astype(jnp.bfloat16)
    kb = k.astype(jnp.bfloat16)
    vb = v.astype(jnp.bfloat16)
    mask = mask_ref[...]
    out = jnp.zeros(q.shape, jnp.float32)
    for hm in head_masks:
        qh = jnp.where(hm, qb, 0)
        vh = jnp.where(hm, vb, 0)
        s = jax.lax.dot_general(qh, kb, (((1,), (1,)), ((), ())),
                                preferred_element_type=jnp.float32)
        s = s + mask
        s = s - jnp.max(s, axis=-1, keepdims=True)
        p = jnp.exp(s)
        p = p * pl.reciprocal(jnp.sum(p, axis=-1, keepdims=True), approx=True)
        out = out + jnp.dot(p.astype(jnp.bfloat16), vh,
                            preferred_element_type=jnp.float32)
    return out


# ------------------------------ fused mega-kernel ------------------------------
def _forward_kernel(patches_ref, ids_lab_ref, lweight_ref,
                    vis_mask_ref, txt_mask_ref, cross_mask_ref,
                    patch_w_ref, w33_ref, wwide_ref, wtall_ref, vec_ref,
                    logits_ref, loss_ref):
    f32 = jnp.float32

    def vrow(i, w=D_LM):
        # one packed LN/bias vector, read lazily at its point of use
        return vec_ref[i:i + 1, 0:w]

    # per-head lane masks (D_VIS == D_LM and same head count -> shared)
    lane = jax.lax.broadcasted_iota(jnp.int32, (1, D_LM), 1)
    head_masks = [(lane >= h * DH) & (lane < (h + 1) * DH)
                  for h in range(N_LM_HEADS)]

    # ---------------- CLIP vision tower ----------------
    # patch-embed Conv2d(kernel=stride=PATCH, no bias) as a matmul over patch rows
    # pre-padded to 8 rows per image (row 0 = CLS slot, rows 5..7 = pad).
    h = jnp.dot(patches_ref[...], patch_w_ref[...],
                preferred_element_type=f32)                         # (B*VIS_PAD, D_VIS)
    h = h + vec_ref[R_VIS_BASE:R_VIS_BASE + B * VIS_PAD, 0:D_VIS]    # cls + pos emb
    h = _ln(h, vrow(R_PRE_G), vrow(R_PRE_B))                         # pre_layrnorm

    for l in range(N_VIS_USED):     # only layers feeding hidden_states[SELECT_LAYER]
        rb = R_VIS_L + l * VIS_VROWS
        wi = W33_VIS + 4 * l
        res = h
        x = _ln(h, vrow(rb + 0), vrow(rb + 1))
        q = _lin(x, w33_ref[wi + 0], vrow(rb + 2))     # scale folded into q
        k = _lin(x, w33_ref[wi + 1], vrow(rb + 3))
        v = _lin(x, w33_ref[wi + 2], vrow(rb + 4))
        a = _attn(q, k, v, head_masks, vis_mask_ref)
        h = res + _lin(a, w33_ref[wi + 3], vrow(rb + 5))
        res = h
        x = _ln(h, vrow(rb + 6), vrow(rb + 7))
        x = _lin(x, wwide_ref[WWIDE_VIS_FC1 + l], vrow(rb + 8, 4 * D_VIS),
                 act="quick_gelu")
        h = res + _lin(x, wtall_ref[WTALL_VIS_FC2 + l], vrow(rb + 9))

    # ---------------- vision projector ----------------
    enc = _lin(h, w33_ref[W33_PROJ], vrow(R_PROJ_B))                 # (B*VIS_PAD, D_LM)

    # ---------------- GPT-2 embeddings ----------------
    iota_v = jax.lax.broadcasted_iota(jnp.int32, (B * SEQ, VOCAB_PAD), 1)
    onehot = (iota_v == ids_lab_ref[:, 0:1]).astype(jnp.bfloat16)
    h = jnp.dot(onehot, wtall_ref[WTALL_WTE], preferred_element_type=f32)
    h = h + vec_ref[R_WPE:R_WPE + B * SEQ, 0:D_LM]                   # wpe (pre-tiled)

    # ---------------- GPT-2 blocks with cross attention ----------------
    for l in range(N_LM_LAYERS):
        rb = R_LM_L + l * LM_VROWS
        wi = W33_LM + 8 * l
        # causal self attention
        res = h
        x = _ln(h, vrow(rb + 0), vrow(rb + 1))
        q = _lin(x, w33_ref[wi + 0], vrow(rb + 2))
        k = _lin(x, w33_ref[wi + 1], vrow(rb + 3))
        v = _lin(x, w33_ref[wi + 2], vrow(rb + 4))
        a = _attn(q, k, v, head_masks, txt_mask_ref)
        h = res + _lin(a, w33_ref[wi + 3], vrow(rb + 5))
        # cross attention to projected image features
        res = h
        x = _ln(h, vrow(rb + 6), vrow(rb + 7))
        q = _lin(x, w33_ref[wi + 4], vrow(rb + 8))
        k = _lin(enc, w33_ref[wi + 5], vrow(rb + 9))
        v = _lin(enc, w33_ref[wi + 6], vrow(rb + 10))
        a = _attn(q, k, v, head_masks, cross_mask_ref)
        h = res + _lin(a, w33_ref[wi + 7], vrow(rb + 11))
        # MLP
        res = h
        x = _ln(h, vrow(rb + 12), vrow(rb + 13))
        x = _lin(x, wwide_ref[WWIDE_LM_FC + l], vrow(rb + 14, 4 * D_LM),
                 act="gelu_new")
        h = res + _lin(x, wtall_ref[WTALL_LM_PROJ + l], vrow(rb + 15))

    h = _ln(h, vrow(R_LNF_G), vrow(R_LNF_B))

    # tied lm_head against the pre-transposed wte (lane-dense, 128-wide logits)
    logits = jnp.dot(h.astype(jnp.bfloat16), wwide_ref[WWIDE_WTE_T],
                     preferred_element_type=f32)                     # (B*SEQ, 128)
    logits_ref[...] = logits

    # shifted cross-entropy loss over the valid vocab lanes (pad lanes masked)
    iota_l = jax.lax.broadcasted_iota(jnp.int32, (B * SEQ, VOCAB_PAD), 1)
    zl = logits + jnp.where(iota_l < VOCAB, 0.0, NEG_INF)
    zl = zl - jnp.max(zl, axis=-1, keepdims=True)
    logp = zl - jnp.log(jnp.sum(jnp.exp(zl), axis=-1, keepdims=True))
    onehot_lab = (iota_l == ids_lab_ref[:, 1:2]).astype(f32)
    nll = -jnp.sum(logp * onehot_lab, axis=-1, keepdims=True)        # (B*SEQ, 1)
    loss_ref[...] = jnp.sum(nll * lweight_ref[...], axis=0, keepdims=True) * (
        1.0 / float(B * (SEQ - 1)))


# ------------------------------ parameter build --------------------------------
class ParamGen:
    def __init__(self, seed=0):
        self.key = jax.random.PRNGKey(seed)
        self.count = 0

    def normal(self, shape, scale=0.02):
        self.count += 1
        k = jax.random.fold_in(self.key, self.count)
        return (scale * jax.random.normal(k, shape)).astype(jnp.float32)

    @staticmethod
    def zeros(shape):
        return jnp.zeros(shape, jnp.float32)

    @staticmethod
    def ones(shape):
        return jnp.ones(shape, jnp.float32)


def build_packed_params():
    """Deterministic synthetic weights, pre-packed into a few dense arrays."""
    pg = ParamGen(0)
    scale = float(DH) ** -0.5          # attention scale folded into Q

    vrows = [None] * N_VEC_ROWS
    w33 = [None] * N_W33
    wwide = [None] * N_WWIDE
    wtall = [None] * N_WTALL

    def setv(i, v):
        v = jnp.asarray(v, jnp.float32).reshape(1, -1)
        vrows[i] = jnp.pad(v, ((0, 0), (0, VEC_W - v.shape[1])))

    # ---- CLIP embeddings / pre-LN ----
    patch_w = pg.normal((C_IMG * PATCH * PATCH, D_VIS))       # conv as matmul, no bias
    cls_emb = pg.normal((1, D_VIS))
    pos_emb = pg.normal((N_VIS_TOK, D_VIS))
    vis_base = jnp.zeros((VIS_PAD, D_VIS), jnp.float32)
    vis_base = vis_base.at[0].set(cls_emb[0] + pos_emb[0])
    vis_base = vis_base.at[1:N_VIS_TOK].set(pos_emb[1:])
    vis_base_tiled = jnp.tile(vis_base, (B, 1))               # pre-tiled over batch
    for r in range(B * VIS_PAD):
        setv(R_VIS_BASE + r, vis_base_tiled[r])
    setv(R_PRE_G, pg.ones((1, D_VIS)))
    setv(R_PRE_B, pg.zeros((1, D_VIS)))

    # ---- CLIP encoder layers actually used ----
    for l in range(N_VIS_USED):
        rb = R_VIS_L + l * VIS_VROWS
        wi = W33_VIS + 4 * l
        setv(rb + 0, pg.ones((1, D_VIS)))
        setv(rb + 1, pg.zeros((1, D_VIS)))
        w33[wi + 0] = pg.normal((D_VIS, D_VIS)) * scale       # q (scale folded)
        w33[wi + 1] = pg.normal((D_VIS, D_VIS))               # k
        w33[wi + 2] = pg.normal((D_VIS, D_VIS))               # v
        w33[wi + 3] = pg.normal((D_VIS, D_VIS))               # out proj
        setv(rb + 2, pg.zeros((1, D_VIS)) * scale)            # q bias (scaled)
        setv(rb + 3, pg.zeros((1, D_VIS)))
        setv(rb + 4, pg.zeros((1, D_VIS)))
        setv(rb + 5, pg.zeros((1, D_VIS)))
        setv(rb + 6, pg.ones((1, D_VIS)))
        setv(rb + 7, pg.zeros((1, D_VIS)))
        wwide[WWIDE_VIS_FC1 + l] = pg.normal((D_VIS, 4 * D_VIS))
        setv(rb + 8, pg.zeros((1, 4 * D_VIS)))
        wtall[WTALL_VIS_FC2 + l] = pg.normal((4 * D_VIS, D_VIS))
        setv(rb + 9, pg.zeros((1, D_VIS)))

    # ---- vision projector ----
    w33[W33_PROJ] = pg.normal((D_VIS, D_LM))
    setv(R_PROJ_B, pg.zeros((1, D_LM)))

    # ---- GPT-2 embeddings / tied head ----
    wte = pg.normal((VOCAB, D_LM))
    wte_pad = jnp.zeros((VOCAB_PAD, D_LM), jnp.float32).at[:VOCAB].set(wte)
    wtall[WTALL_WTE] = wte_pad
    wwide[WWIDE_WTE_T] = wte_pad.T                             # pre-transposed lm_head
    wpe = pg.normal((MAX_POS, D_LM))
    wpe_tiled = jnp.tile(wpe[:SEQ], (B, 1))                    # pre-tiled over batch
    for r in range(B * SEQ):
        setv(R_WPE + r, wpe_tiled[r])

    # ---- GPT-2 blocks ----
    for l in range(N_LM_LAYERS):
        rb = R_LM_L + l * LM_VROWS
        wi = W33_LM + 8 * l
        setv(rb + 0, pg.ones((1, D_LM)))
        setv(rb + 1, pg.zeros((1, D_LM)))
        w33[wi + 0] = pg.normal((D_LM, D_LM)) * scale          # self q (scaled)
        w33[wi + 1] = pg.normal((D_LM, D_LM))                  # self k
        w33[wi + 2] = pg.normal((D_LM, D_LM))                  # self v
        w33[wi + 3] = pg.normal((D_LM, D_LM))                  # self out proj
        setv(rb + 2, pg.zeros((1, D_LM)) * scale)
        setv(rb + 3, pg.zeros((1, D_LM)))
        setv(rb + 4, pg.zeros((1, D_LM)))
        setv(rb + 5, pg.zeros((1, D_LM)))
        setv(rb + 6, pg.ones((1, D_LM)))                       # ln_cross_attn
        setv(rb + 7, pg.zeros((1, D_LM)))
        w33[wi + 4] = pg.normal((D_LM, D_LM)) * scale          # cross q (scaled)
        w33[wi + 5] = pg.normal((D_LM, D_LM))                  # cross k
        w33[wi + 6] = pg.normal((D_LM, D_LM))                  # cross v
        w33[wi + 7] = pg.normal((D_LM, D_LM))                  # cross out proj
        setv(rb + 8, pg.zeros((1, D_LM)) * scale)
        setv(rb + 9, pg.zeros((1, D_LM)))
        setv(rb + 10, pg.zeros((1, D_LM)))
        setv(rb + 11, pg.zeros((1, D_LM)))
        setv(rb + 12, pg.ones((1, D_LM)))
        setv(rb + 13, pg.zeros((1, D_LM)))
        wwide[WWIDE_LM_FC + l] = pg.normal((D_LM, 4 * D_LM))
        setv(rb + 14, pg.zeros((1, 4 * D_LM)))
        wtall[WTALL_LM_PROJ + l] = pg.normal((4 * D_LM, D_LM))
        setv(rb + 15, pg.zeros((1, D_LM)))

    setv(R_LNF_G, pg.ones((1, D_LM)))
    setv(R_LNF_B, pg.zeros((1, D_LM)))

    assert all(x is not None for x in vrows + w33 + wwide + wtall)
    return dict(
        patch_w=patch_w.astype(jnp.bfloat16),
        w33=jnp.stack(w33).astype(jnp.bfloat16),
        wwide=jnp.stack(wwide).astype(jnp.bfloat16),
        wtall=jnp.stack(wtall).astype(jnp.bfloat16),
        vecs=jnp.concatenate(vrows, axis=0),
    )


# --------------------------------- forward ------------------------------------
def knowledge_vision_gpt2_forward(packed, input_ids, attention_mask, images, labels):
    Bn, T = input_ids.shape

    # NCHW -> flattened patch rows, ordered (c, py, px) to match the conv weight
    # layout, and padded to 8 rows per image (row 0 = CLS slot, rows 5..7 pad).
    x = images.reshape(Bn, C_IMG, IMG // PATCH, PATCH, IMG // PATCH, PATCH)
    p = x.transpose(0, 2, 4, 1, 3, 5).reshape(Bn, N_PATCH, C_IMG * PATCH * PATCH)
    patches = jnp.zeros((Bn, VIS_PAD, C_IMG * PATCH * PATCH), jnp.float32)
    patches = patches.at[:, 1:1 + N_PATCH, :].set(p)
    patches = patches.reshape(Bn * VIS_PAD, -1).astype(jnp.bfloat16)

    # input ids and HF-style shifted labels packed into one int32 array
    lab_shift = jnp.concatenate(
        [labels[:, 1:], jnp.zeros((Bn, 1), labels.dtype)], axis=1)
    ids_lab = jnp.stack([input_ids, lab_shift], axis=-1).reshape(
        Bn * T, 2).astype(jnp.int32)
    lweight = jnp.concatenate(
        [jnp.ones((Bn, T - 1), jnp.float32), jnp.zeros((Bn, 1), jnp.float32)],
        axis=1).reshape(Bn * T, 1)

    # block-diagonal additive score masks (batch separation + causality + padding)
    vb = jnp.arange(Bn * VIS_PAD) // VIS_PAD
    vis_valid = (jnp.arange(Bn * VIS_PAD) % VIS_PAD) < N_VIS_TOK
    vis_mask = jnp.where((vb[:, None] == vb[None, :]) & vis_valid[None, :],
                         0.0, NEG_INF).astype(jnp.float32)

    tb = jnp.arange(Bn * T) // T
    ti = jnp.arange(Bn * T) % T
    keymask = attention_mask.reshape(Bn * T).astype(bool)
    txt_mask = jnp.where((tb[:, None] == tb[None, :])
                         & (ti[:, None] >= ti[None, :])
                         & keymask[None, :], 0.0, NEG_INF).astype(jnp.float32)

    cross_mask = jnp.where((tb[:, None] == vb[None, :]) & vis_valid[None, :],
                           0.0, NEG_INF).astype(jnp.float32)

    logits2d, loss = pl.pallas_call(
        _forward_kernel,
        out_shape=(jax.ShapeDtypeStruct((Bn * T, VOCAB_PAD), jnp.float32),
                   jax.ShapeDtypeStruct((1, 1), jnp.float32)),
        compiler_params=pltpu.CompilerParams(vmem_limit_bytes=4 * 1024 * 1024),
    )(patches, ids_lab, lweight, vis_mask, txt_mask, cross_mask,
      packed["patch_w"], packed["w33"], packed["wwide"], packed["wtall"],
      packed["vecs"])

    return loss[0, 0], logits2d[:, :VOCAB].reshape(Bn, T, VOCAB)


# ------------------------------------ main ------------------------------------
if __name__ == "__main__":
    key = jax.random.PRNGKey(0)
    k_img, k_ids = jax.random.split(key)

    images = jax.random.normal(k_img, (B, C_IMG, IMG, IMG), dtype=jnp.float32)  # NCHW
    input_ids = jax.random.randint(k_ids, (B, SEQ), 0, VOCAB, dtype=jnp.int32)
    attention_mask = jnp.ones((B, SEQ), jnp.int32)
    labels = input_ids                                  # standard LM training setup

    packed = build_packed_params()

    fwd = jax.jit(knowledge_vision_gpt2_forward)
    loss, logits = fwd(packed, input_ids, attention_mask, images, labels)
    jax.block_until_ready((loss, logits))

    assert logits.shape == (B, SEQ, VOCAB)
    assert bool(jnp.isfinite(loss))
    print("KERNEL_OK")
</pallas_src>

<mosaic_0001>
module attributes {stable_mosaic.version = 11 : i64} {
  func.func @_forward_kernel(%arg0: memref<16x192xbf16, #tpu.memory_space<vmem>>, %arg1: memref<16x2xi32, #tpu.memory_space<vmem>>, %arg2: memref<16x1xf32, #tpu.memory_space<vmem>>, %arg3: memref<16x16xf32, #tpu.memory_space<vmem>>, %arg4: memref<16x16xf32, #tpu.memory_space<vmem>>, %arg5: memref<16x16xf32, #tpu.memory_space<vmem>>, %arg6: memref<192x32xbf16, #tpu.memory_space<vmem>>, %arg7: memref<21x32x32xbf16, #tpu.memory_space<vmem>>, %arg8: memref<4x32x128xbf16, #tpu.memory_space<vmem>>, %arg9: memref<4x128x32xbf16, #tpu.memory_space<vmem>>, %arg10: memref<79x128xf32, #tpu.memory_space<vmem>>, %arg11: memref<16x128xf32, #tpu.memory_space<vmem>>, %arg12: memref<1x1xf32, #tpu.memory_space<vmem>>) attributes {dimension_semantics = [], scalar_prefetch = 0 : i64, scratch_operands = 0 : i64, tpu.core_type = #tpu.core_type<tc>} {
    %0 = tpu.iota {dimensions = array<i32: 1>} : vector<1x32xi32>
    %c0_i32 = arith.constant 0 : i32
    %1 = vector.broadcast %c0_i32 : i32 to vector<1x32xi32>
    %2 = arith.cmpi sge, %0, %1 : vector<1x32xi32>
    %c8_i32 = arith.constant 8 : i32
    %3 = vector.broadcast %c8_i32 : i32 to vector<1x32xi32>
    %4 = arith.cmpi slt, %0, %3 : vector<1x32xi32>
    %5 = arith.andi %2, %4 : vector<1x32xi1>
    %c8_i32_0 = arith.constant 8 : i32
    %6 = vector.broadcast %c8_i32_0 : i32 to vector<1x32xi32>
    %7 = arith.cmpi sge, %0, %6 : vector<1x32xi32>
    %c16_i32 = arith.constant 16 : i32
    %8 = vector.broadcast %c16_i32 : i32 to vector<1x32xi32>
    %9 = arith.cmpi slt, %0, %8 : vector<1x32xi32>
    %10 = arith.andi %7, %9 : vector<1x32xi1>
    %c16_i32_1 = arith.constant 16 : i32
    %11 = vector.broadcast %c16_i32_1 : i32 to vector<1x32xi32>
    %12 = arith.cmpi sge, %0, %11 : vector<1x32xi32>
    %c24_i32 = arith.constant 24 : i32
    %13 = vector.broadcast %c24_i32 : i32 to vector<1x32xi32>
    %14 = arith.cmpi slt, %0, %13 : vector<1x32xi32>
    %15 = arith.andi %12, %14 : vector<1x32xi1>
    %c24_i32_2 = arith.constant 24 : i32
    %16 = vector.broadcast %c24_i32_2 : i32 to vector<1x32xi32>
    %17 = arith.cmpi sge, %0, %16 : vector<1x32xi32>
    %c32_i32 = arith.constant 32 : i32
    %18 = vector.broadcast %c32_i32 : i32 to vector<1x32xi32>
    %19 = arith.cmpi slt, %0, %18 : vector<1x32xi32>
    %20 = arith.andi %17, %19 : vector<1x32xi1>
    %c0 = arith.constant 0 : index
    %c0_3 = arith.constant 0 : index
    %21 = vector.load %arg0[%c0, %c0_3] : memref<16x192xbf16, #tpu.memory_space<vmem>>, vector<16x192xbf16>
    %c0_4 = arith.constant 0 : index
    %c0_5 = arith.constant 0 : index
    %22 = vector.load %arg6[%c0_4, %c0_5] : memref<192x32xbf16, #tpu.memory_space<vmem>>, vector<192x32xbf16>
    %cst = arith.constant dense<0.000000e+00> : vector<16x32xf32>
    %23 = tpu.matmul %21, %22, %cst {dimension_numbers = #tpu.dot_dimension_numbers<[1], [0], [0], [1], [0, 0, 1, 1], [], []>} : vector<16x192xbf16>, vector<192x32xbf16>, vector<16x32xf32> -> vector<16x32xf32>
    %c0_6 = arith.constant 0 : index
    %c0_7 = arith.constant 0 : index
    %24 = vector.load %arg10[%c0_6, %c0_7] : memref<79x128xf32, #tpu.memory_space<vmem>>, vector<16x32xf32>
    %25 = arith.addf %23, %24 : vector<16x32xf32>
    %c32 = arith.constant 32 : index
    %c0_8 = arith.constant 0 : index
    %26 = vector.load %arg10[%c32, %c0_8] : memref<79x128xf32, #tpu.memory_space<vmem>>, vector<1x32xf32>
    %c33 = arith.constant 33 : index
    %c0_9 = arith.constant 0 : index
    %27 = vector.load %arg10[%c33, %c0_9] : memref<79x128xf32, #tpu.memory_space<vmem>>, vector<1x32xf32>
    %cst_10 = arith.constant dense<0.000000e+00> : vector<16xf32>
    %28 = vector.multi_reduction <add>, %25, %cst_10 [1] : vector<16x32xf32> to vector<16xf32>
    %29 = vector.shape_cast %28 : vector<16xf32> to vector<16x1xf32>
    %cst_11 = arith.constant 3.200000e+01 : f32
    %30 = vector.broadcast %cst_11 : f32 to vector<16x1xf32>
    %31 = arith.divf %29, %30 : vector<16x1xf32>
    %32 = vector.broadcast %31 : vector<16x1xf32> to vector<16x32xf32>
    %33 = arith.subf %25, %32 : vector<16x32xf32>
    %34 = arith.mulf %33, %33 : vector<16x32xf32>
    %cst_12 = arith.constant dense<0.000000e+00> : vector<16xf32>
    %35 = vector.multi_reduction <add>, %34, %cst_12 [1] : vector<16x32xf32> to vector<16xf32>
    %36 = vector.shape_cast %35 : vector<16xf32> to vector<16x1xf32>
    %cst_13 = arith.constant 3.200000e+01 : f32
    %37 = vector.broadcast %cst_13 : f32 to vector<16x1xf32>
    %38 = arith.divf %36, %37 : vector<16x1xf32>
    %cst_14 = arith.constant 9.99999974E-6 : f32
    %39 = vector.broadcast %cst_14 : f32 to vector<16x1xf32>
    %40 = arith.addf %38, %39 : vector<16x1xf32>
    %41 = math.rsqrt %40 : vector<16x1xf32>
    %42 = vector.broadcast %41 : vector<16x1xf32> to vector<16x32xf32>
    %43 = arith.mulf %33, %42 : vector<16x32xf32>
    %44 = vector.broadcast %26 : vector<1x32xf32> to vector<16x32xf32>
    %45 = arith.mulf %43, %44 : vector<16x32xf32>
    %46 = vector.broadcast %27 : vector<1x32xf32> to vector<16x32xf32>
    %47 = arith.addf %45, %46 : vector<16x32xf32>
    %c37 = arith.constant 37 : index
    %c0_15 = arith.constant 0 : index
    %48 = vector.load %arg10[%c37, %c0_15] : memref<79x128xf32, #tpu.memory_space<vmem>>, vector<1x32xf32>
    %c38 = arith.constant 38 : index
    %c0_16 = arith.constant 0 : index
    %49 = vector.load %arg10[%c38, %c0_16] : memref<79x128xf32, #tpu.memory_space<vmem>>, vector<1x32xf32>
    %cst_17 = arith.constant dense<0.000000e+00> : vector<16xf32>
    %50 = vector.multi_reduction <add>, %47, %cst_17 [1] : vector<16x32xf32> to vector<16xf32>
    %51 = vector.shape_cast %50 : vector<16xf32> to vector<16x1xf32>
    %cst_18 = arith.constant 3.200000e+01 : f32
    %52 = vector.broadcast %cst_18 : f32 to vector<16x1xf32>
    %53 = arith.divf %51, %52 : vector<16x1xf32>
    %54 = vector.broadcast %53 : vector<16x1xf32> to vector<16x32xf32>
    %55 = arith.subf %47, %54 : vector<16x32xf32>
    %56 = arith.mulf %55, %55 : vector<16x32xf32>
    %cst_19 = arith.constant dense<0.000000e+00> : vector<16xf32>
    %57 = vector.multi_reduction <add>, %56, %cst_19 [1] : vector<16x32xf32> to vector<16xf32>
    %58 = vector.shape_cast %57 : vector<16xf32> to vector<16x1xf32>
    %cst_20 = arith.constant 3.200000e+01 : f32
    %59 = vector.broadcast %cst_20 : f32 to vector<16x1xf32>
    %60 = arith.divf %58, %59 : vector<16x1xf32>
    %cst_21 = arith.constant 9.99999974E-6 : f32
    %61 = vector.broadcast %cst_21 : f32 to vector<16x1xf32>
    %62 = arith.addf %60, %61 : vector<16x1xf32>
    %63 = math.rsqrt %62 : vector<16x1xf32>
    %64 = vector.broadcast %63 : vector<16x1xf32> to vector<16x32xf32>
    %65 = arith.mulf %55, %64 : vector<16x32xf32>
    %66 = vector.broadcast %48 : vector<1x32xf32> to vector<16x32xf32>
    %67 = arith.mulf %65, %66 : vector<16x32xf32>
    %68 = vector.broadcast %49 : vector<1x32xf32> to vector<16x32xf32>
    %69 = arith.addf %67, %68 : vector<16x32xf32>
    %c0_22 = arith.constant 0 : index
    %c0_23 = arith.constant 0 : index
    %c0_24 = arith.constant 0 : index
    %70 = vector.load %arg7[%c0_22, %c0_23, %c0_24] : memref<21x32x32xbf16, #tpu.memory_space<vmem>>, vector<1x32x32xbf16>
    %71 = vector.shape_cast %70 : vector<1x32x32xbf16> to vector<32x32xbf16>
    %c39 = arith.constant 39 : index
    %c0_25 = arith.constant 0 : index
    %72 = vector.load %arg10[%c39, %c0_25] : memref<79x128xf32, #tpu.memory_space<vmem>>, vector<1x32xf32>
    %73 = arith.truncf %69 : vector<16x32xf32> to vector<16x32xbf16>
    %cst_26 = arith.constant dense<0.000000e+00> : vector<16x32xf32>
    %74 = tpu.matmul %73, %71, %cst_26 {dimension_numbers = #tpu.dot_dimension_numbers<[1], [0], [0], [1], [0, 0, 1, 1], [], []>} : vector<16x32xbf16>, vector<32x32xbf16>, vector<16x32xf32> -> vector<16x32xf32>
    %75 = vector.broadcast %72 : vector<1x32xf32> to vector<16x32xf32>
    %76 = arith.addf %74, %75 : vector<16x32xf32>
    %c1 = arith.constant 1 : index
    %c0_27 = arith.constant 0 : index
    %c0_28 = arith.constant 0 : index
    %77 = vector.load %arg7[%c1, %c0_27, %c0_28] : memref<21x32x32xbf16, #tpu.memory_space<vmem>>, vector<1x32x32xbf16>
    %78 = vector.shape_cast %77 : vector<1x32x32xbf16> to vector<32x32xbf16>
    %c40 = arith.constant 40 : index
    %c0_29 = arith.constant 0 : index
    %79 = vector.load %arg10[%c40, %c0_29] : memref<79x128xf32, #tpu.memory_space<vmem>>, vector<1x32xf32>
    %80 = arith.truncf %69 : vector<16x32xf32> to vector<16x32xbf16>
    %cst_30 = arith.constant dense<0.000000e+00> : vector<16x32xf32>
    %81 = tpu.matmul %80, %78, %cst_30 {dimension_numbers = #tpu.dot_dimension_numbers<[1], [0], [0], [1], [0, 0, 1, 1], [], []>} : vector<16x32xbf16>, vector<32x32xbf16>, vector<16x32xf32> -> vector<16x32xf32>
    %82 = vector.broadcast %79 : vector<1x32xf32> to vector<16x32xf32>
    %83 = arith.addf %81, %82 : vector<16x32xf32>
    %c2 = arith.constant 2 : index
    %c0_31 = arith.constant 0 : index
    %c0_32 = arith.constant 0 : index
    %84 = vector.load %arg7[%c2, %c0_31, %c0_32] : memref<21x32x32xbf16, #tpu.memory_space<vmem>>, vector<1x32x32xbf16>
    %85 = vector.shape_cast %84 : vector<1x32x32xbf16> to vector<32x32xbf16>
    %c41 = arith.constant 41 : index
    %c0_33 = arith.constant 0 : index
    %86 = vector.load %arg10[%c41, %c0_33] : memref<79x128xf32, #tpu.memory_space<vmem>>, vector<1x32xf32>
    %87 = arith.truncf %69 : vector<16x32xf32> to vector<16x32xbf16>
    %cst_34 = arith.constant dense<0.000000e+00> : vector<16x32xf32>
    %88 = tpu.matmul %87, %85, %cst_34 {dimension_numbers = #tpu.dot_dimension_numbers<[1], [0], [0], [1], [0, 0, 1, 1], [], []>} : vector<16x32xbf16>, vector<32x32xbf16>, vector<16x32xf32> -> vector<16x32xf32>
    %89 = vector.broadcast %86 : vector<1x32xf32> to vector<16x32xf32>
    %90 = arith.addf %88, %89 : vector<16x32xf32>
    %91 = arith.truncf %76 : vector<16x32xf32> to vector<16x32xbf16>
    %92 = arith.truncf %83 : vector<16x32xf32> to vector<16x32xbf16>
    %93 = arith.truncf %90 : vector<16x32xf32> to vector<16x32xbf16>
    %c0_35 = arith.constant 0 : index
    %c0_36 = arith.constant 0 : index
    %94 = vector.load %arg3[%c0_35, %c0_36] : memref<16x16xf32, #tpu.memory_space<vmem>>, vector<16x16xf32>
    %cst_37 = arith.constant 0.000000e+00 : f32
    %95 = vector.broadcast %cst_37 : f32 to vector<16x32xf32>
    %c0_i32_38 = arith.constant 0 : i32
    %96 = arith.sitofp %c0_i32_38 : i32 to bf16
    %97 = vector.shape_cast %5 : vector<1x32xi1> to vector<1x32xi1>
    %98 = vector.broadcast %97 : vector<1x32xi1> to vector<16x32xi1>
    %99 = vector.broadcast %96 : bf16 to vector<16x32xbf16>
    %100 = arith.select %98, %91, %99 : vector<16x32xi1>, vector<16x32xbf16>
    %c0_i32_39 = arith.constant 0 : i32
    %101 = arith.sitofp %c0_i32_39 : i32 to bf16
    %102 = vector.shape_cast %5 : vector<1x32xi1> to vector<1x32xi1>
    %103 = vector.broadcast %102 : vector<1x32xi1> to vector<16x32xi1>
    %104 = vector.broadcast %101 : bf16 to vector<16x32xbf16>
    %105 = arith.select %103, %93, %104 : vector<16x32xi1>, vector<16x32xbf16>
    %cst_40 = arith.constant dense<0.000000e+00> : vector<16x16xf32>
    %106 = tpu.matmul %100, %92, %cst_40 {dimension_numbers = #tpu.dot_dimension_numbers<[1], [1], [0], [0], [0, 0, 1, 0], [], []>} : vector<16x32xbf16>, vector<16x32xbf16>, vector<16x16xf32> -> vector<16x16xf32>
    %107 = arith.addf %106, %94 : vector<16x16xf32>
    %cst_41 = arith.constant dense<0xFF800000> : vector<16xf32>
    %108 = vector.multi_reduction <maximumf>, %107, %cst_41 [1] : vector<16x16xf32> to vector<16xf32>
    %109 = vector.shape_cast %108 : vector<16xf32> to vector<16x1xf32>
    %110 = vector.broadcast %109 : vector<16x1xf32> to vector<16x16xf32>
    %111 = arith.subf %107, %110 : vector<16x16xf32>
    %112 = math.exp %111 : vector<16x16xf32>
    %cst_42 = arith.constant dense<0.000000e+00> : vector<16xf32>
    %113 = vector.multi_reduction <add>, %112, %cst_42 [1] : vector<16x16xf32> to vector<16xf32>
    %114 = vector.shape_cast %113 : vector<16xf32> to vector<16x1xf32>
    %115 = tpu.reciprocal %114 {approx = true} : vector<16x1xf32> -> vector<16x1xf32>
    %116 = vector.broadcast %115 : vector<16x1xf32> to vector<16x16xf32>
    %117 = arith.mulf %112, %116 : vector<16x16xf32>
    %118 = arith.truncf %117 : vector<16x16xf32> to vector<16x16xbf16>
    %cst_43 = arith.constant dense<0.000000e+00> : vector<16x32xf32>
    %119 = tpu.matmul %118, %105, %cst_43 {dimension_numbers = #tpu.dot_dimension_numbers<[1], [0], [0], [1], [0, 0, 1, 1], [], []>} : vector<16x16xbf16>, vector<16x32xbf16>, vector<16x32xf32> -> vector<16x32xf32>
    %120 = arith.addf %95, %119 : vector<16x32xf32>
    %c0_i32_44 = arith.constant 0 : i32
    %121 = arith.sitofp %c0_i32_44 : i32 to bf16
    %122 = vector.shape_cast %10 : vector<1x32xi1> to vector<1x32xi1>
    %123 = vector.broadcast %122 : vector<1x32xi1> to vector<16x32xi1>
    %124 = vector.broadcast %121 : bf16 to vector<16x32xbf16>
    %125 = arith.select %123, %91, %124 : vector<16x32xi1>, vector<16x32xbf16>
    %c0_i32_45 = arith.constant 0 : i32
    %126 = arith.sitofp %c0_i32_45 : i32 to bf16
    %127 = vector.shape_cast %10 : vector<1x32xi1> to vector<1x32xi1>
    %128 = vector.broadcast %127 : vector<1x32xi1> to vector<16x32xi1>
    %129 = vector.broadcast %126 : bf16 to vector<16x32xbf16>
    %130 = arith.select %128, %93, %129 : vector<16x32xi1>, vector<16x32xbf16>
    %cst_46 = arith.constant dense<0.000000e+00> : vector<16x16xf32>
    %131 = tpu.matmul %125, %92, %cst_46 {dimension_numbers = #tpu.dot_dimension_numbers<[1], [1], [0], [0], [0, 0, 1, 0], [], []>} : vector<16x32xbf16>, vector<16x32xbf16>, vector<16x16xf32> -> vector<16x16xf32>
    %132 = arith.addf %131, %94 : vector<16x16xf32>
    %cst_47 = arith.constant dense<0xFF800000> : vector<16xf32>
    %133 = vector.multi_reduction <maximumf>, %132, %cst_47 [1] : vector<16x16xf32> to vector<16xf32>
    %134 = vector.shape_cast %133 : vector<16xf32> to vector<16x1xf32>
    %135 = vector.broadcast %134 : vector<16x1xf32> to vector<16x16xf32>
    %136 = arith.subf %132, %135 : vector<16x16xf32>
    %137 = math.exp %136 : vector<16x16xf32>
    %cst_48 = arith.constant dense<0.000000e+00> : vector<16xf32>
    %138 = vector.multi_reduction <add>, %137, %cst_48 [1] : vector<16x16xf32> to vector<16xf32>
    %139 = vector.shape_cast %138 : vector<16xf32> to vector<16x1xf32>
    %140 = tpu.reciprocal %139 {approx = true} : vector<16x1xf32> -> vector<16x1xf32>
    %141 = vector.broadcast %140 : vector<16x1xf32> to vector<16x16xf32>
    %142 = arith.mulf %137, %141 : vector<16x16xf32>
    %143 = arith.truncf %142 : vector<16x16xf32> to vector<16x16xbf16>
    %cst_49 = arith.constant dense<0.000000e+00> : vector<16x32xf32>
    %144 = tpu.matmul %143, %130, %cst_49 {dimension_numbers = #tpu.dot_dimension_numbers<[1], [0], [0], [1], [0, 0, 1, 1], [], []>} : vector<16x16xbf16>, vector<16x32xbf16>, vector<16x32xf32> -> vector<16x32xf32>
    %145 = arith.addf %120, %144 : vector<16x32xf32>
    %c0_i32_50 = arith.constant 0 : i32
    %146 = arith.sitofp %c0_i32_50 : i32 to bf16
    %147 = vector.shape_cast %15 : vector<1x32xi1> to vector<1x32xi1>
    %148 = vector.broadcast %147 : vector<1x32xi1> to vector<16x32xi1>
    %149 = vector.broadcast %146 : bf16 to vector<16x32xbf16>
    %150 = arith.select %148, %91, %149 : vector<16x32xi1>, vector<16x32xbf16>
    %c0_i32_51 = arith.constant 0 : i32
    %151 = arith.sitofp %c0_i32_51 : i32 to bf16
    %152 = vector.shape_cast %15 : vector<1x32xi1> to vector<1x32xi1>
    %153 = vector.broadcast %152 : vector<1x32xi1> to vector<16x32xi1>
    %154 = vector.broadcast %151 : bf16 to vector<16x32xbf16>
    %155 = arith.select %153, %93, %154 : vector<16x32xi1>, vector<16x32xbf16>
    %cst_52 = arith.constant dense<0.000000e+00> : vector<16x16xf32>
    %156 = tpu.matmul %150, %92, %cst_52 {dimension_numbers = #tpu.dot_dimension_numbers<[1], [1], [0], [0], [0, 0, 1, 0], [], []>} : vector<16x32xbf16>, vector<16x32xbf16>, vector<16x16xf32> -> vector<16x16xf32>
    %157 = arith.addf %156, %94 : vector<16x16xf32>
    %cst_53 = arith.constant dense<0xFF800000> : vector<16xf32>
    %158 = vector.multi_reduction <maximumf>, %157, %cst_53 [1] : vector<16x16xf32> to vector<16xf32>
    %159 = vector.shape_cast %158 : vector<16xf32> to vector<16x1xf32>
    %160 = vector.broadcast %159 : vector<16x1xf32> to vector<16x16xf32>
    %161 = arith.subf %157, %160 : vector<16x16xf32>
    %162 = math.exp %161 : vector<16x16xf32>
    %cst_54 = arith.constant dense<0.000000e+00> : vector<16xf32>
    %163 = vector.multi_reduction <add>, %162, %cst_54 [1] : vector<16x16xf32> to vector<16xf32>
    %164 = vector.shape_cast %163 : vector<16xf32> to vector<16x1xf32>
    %165 = tpu.reciprocal %164 {approx = true} : vector<16x1xf32> -> vector<16x1xf32>
    %166 = vector.broadcast %165 : vector<16x1xf32> to vector<16x16xf32>
    %167 = arith.mulf %162, %166 : vector<16x16xf32>
    %168 = arith.truncf %167 : vector<16x16xf32> to vector<16x16xbf16>
    %cst_55 = arith.constant dense<0.000000e+00> : vector<16x32xf32>
    %169 = tpu.matmul %168, %155, %cst_55 {dimension_numbers = #tpu.dot_dimension_numbers<[1], [0], [0], [1], [0, 0, 1, 1], [], []>} : vector<16x16xbf16>, vector<16x32xbf16>, vector<16x32xf32> -> vector<16x32xf32>
    %170 = arith.addf %145, %169 : vector<16x32xf32>
    %c0_i32_56 = arith.constant 0 : i32
    %171 = arith.sitofp %c0_i32_56 : i32 to bf16
    %172 = vector.shape_cast %20 : vector<1x32xi1> to vector<1x32xi1>
    %173 = vector.broadcast %172 : vector<1x32xi1> to vector<16x32xi1>
    %174 = vector.broadcast %171 : bf16 to vector<16x32xbf16>
    %175 = arith.select %173, %91, %174 : vector<16x32xi1>, vector<16x32xbf16>
    %c0_i32_57 = arith.constant 0 : i32
    %176 = arith.sitofp %c0_i32_57 : i32 to bf16
    %177 = vector.shape_cast %20 : vector<1x32xi1> to vector<1x32xi1>
    %178 = vector.broadcast %177 : vector<1x32xi1> to vector<16x32xi1>
    %179 = vector.broadcast %176 : bf16 to vector<16x32xbf16>
    %180 = arith.select %178, %93, %179 : vector<16x32xi1>, vector<16x32xbf16>
    %cst_58 = arith.constant dense<0.000000e+00> : vector<16x16xf32>
    %181 = tpu.matmul %175, %92, %cst_58 {dimension_numbers = #tpu.dot_dimension_numbers<[1], [1], [0], [0], [0, 0, 1, 0], [], []>} : vector<16x32xbf16>, vector<16x32xbf16>, vector<16x16xf32> -> vector<16x16xf32>
    %182 = arith.addf %181, %94 : vector<16x16xf32>
    %cst_59 = arith.constant dense<0xFF800000> : vector<16xf32>
    %183 = vector.multi_reduction <maximumf>, %182, %cst_59 [1] : vector<16x16xf32> to vector<16xf32>
    %184 = vector.shape_cast %183 : vector<16xf32> to vector<16x1xf32>
    %185 = vector.broadcast %184 : vector<16x1xf32> to vector<16x16xf32>
    %186 = arith.subf %182, %185 : vector<16x16xf32>
    %187 = math.exp %186 : vector<16x16xf32>
    %cst_60 = arith.constant dense<0.000000e+00> : vector<16xf32>
    %188 = vector.multi_reduction <add>, %187, %cst_60 [1] : vector<16x16xf32> to vector<16xf32>
    %189 = vector.shape_cast %188 : vector<16xf32> to vector<16x1xf32>
    %190 = tpu.reciprocal %189 {approx = true} : vector<16x1xf32> -> vector<16x1xf32>
    %191 = vector.broadcast %190 : vector<16x1xf32> to vector<16x16xf32>
    %192 = arith.mulf %187, %191 : vector<16x16xf32>
    %193 = arith.truncf %192 : vector<16x16xf32> to vector<16x16xbf16>
    %cst_61 = arith.constant dense<0.000000e+00> : vector<16x32xf32>
    %194 = tpu.matmul %193, %180, %cst_61 {dimension_numbers = #tpu.dot_dimension_numbers<[1], [0], [0], [1], [0, 0, 1, 1], [], []>} : vector<16x16xbf16>, vector<16x32xbf16>, vector<16x32xf32> -> vector<16x32xf32>
    %195 = arith.addf %170, %194 : vector<16x32xf32>
    %c3 = arith.constant 3 : index
    %c0_62 = arith.constant 0 : index
    %c0_63 = arith.constant 0 : index
    %196 = vector.load %arg7[%c3, %c0_62, %c0_63] : memref<21x32x32xbf16, #tpu.memory_space<vmem>>, vector<1x32x32xbf16>
    %197 = vector.shape_cast %196 : vector<1x32x32xbf16> to vector<32x32xbf16>
    %c42 = arith.constant 42 : index
    %c0_64 = arith.constant 0 : index
    %198 = vector.load %arg10[%c42, %c0_64] : memref<79x128xf32, #tpu.memory_space<vmem>>, vector<1x32xf32>
    %199 = arith.truncf %195 : vector<16x32xf32> to vector<16x32xbf16>
    %cst_65 = arith.constant dense<0.000000e+00> : vector<16x32xf32>
    %200 = tpu.matmul %199, %197, %cst_65 {dimension_numbers = #tpu.dot_dimension_numbers<[1], [0], [0], [1], [0, 0, 1, 1], [], []>} : vector<16x32xbf16>, vector<32x32xbf16>, vector<16x32xf32> -> vector<16x32xf32>
    %201 = vector.broadcast %198 : vector<1x32xf32> to vector<16x32xf32>
    %202 = arith.addf %200, %201 : vector<16x32xf32>
    %203 = arith.addf %47, %202 : vector<16x32xf32>
    %c43 = arith.constant 43 : index
    %c0_66 = arith.constant 0 : index
    %204 = vector.load %arg10[%c43, %c0_66] : memref<79x128xf32, #tpu.memory_space<vmem>>, vector<1x32xf32>
    %c44 = arith.constant 44 : index
    %c0_67 = arith.constant 0 : index
    %205 = vector.load %arg10[%c44, %c0_67] : memref<79x128xf32, #tpu.memory_space<vmem>>, vector<1x32xf32>
    %cst_68 = arith.constant dense<0.000000e+00> : vector<16xf32>
    %206 = vector.multi_reduction <add>, %203, %cst_68 [1] : vector<16x32xf32> to vector<16xf32>
    %207 = vector.shape_cast %206 : vector<16xf32> to vector<16x1xf32>
    %cst_69 = arith.constant 3.200000e+01 : f32
    %208 = vector.broadcast %cst_69 : f32 to vector<16x1xf32>
    %209 = arith.divf %207, %208 : vector<16x1xf32>
    %210 = vector.broadcast %209 : vector<16x1xf32> to vector<16x32xf32>
    %211 = arith.subf %203, %210 : vector<16x32xf32>
    %212 = arith.mulf %211, %211 : vector<16x32xf32>
    %cst_70 = arith.constant dense<0.000000e+00> : vector<16xf32>
    %213 = vector.multi_reduction <add>, %212, %cst_70 [1] : vector<16x32xf32> to vector<16xf32>
    %214 = vector.shape_cast %213 : vector<16xf32> to vector<16x1xf32>
    %cst_71 = arith.constant 3.200000e+01 : f32
    %215 = vector.broadcast %cst_71 : f32 to vector<16x1xf32>
    %216 = arith.divf %214, %215 : vector<16x1xf32>
    %cst_72 = arith.constant 9.99999974E-6 : f32
    %217 = vector.broadcast %cst_72 : f32 to vector<16x1xf32>
    %218 = arith.addf %216, %217 : vector<16x1xf32>
    %219 = math.rsqrt %218 : vector<16x1xf32>
    %220 = vector.broadcast %219 : vector<16x1xf32> to vector<16x32xf32>
    %221 = arith.mulf %211, %220 : vector<16x32xf32>
    %222 = vector.broadcast %204 : vector<1x32xf32> to vector<16x32xf32>
    %223 = arith.mulf %221, %222 : vector<16x32xf32>
    %224 = vector.broadcast %205 : vector<1x32xf32> to vector<16x32xf32>
    %225 = arith.addf %223, %224 : vector<16x32xf32>
    %c0_73 = arith.constant 0 : index
    %c0_74 = arith.constant 0 : index
    %c0_75 = arith.constant 0 : index
    %226 = vector.load %arg8[%c0_73, %c0_74, %c0_75] : memref<4x32x128xbf16, #tpu.memory_space<vmem>>, vector<1x32x128xbf16>
    %227 = vector.shape_cast %226 : vector<1x32x128xbf16> to vector<32x128xbf16>
    %c45 = arith.constant 45 : index
    %c0_76 = arith.constant 0 : index
    %228 = vector.load %arg10[%c45, %c0_76] : memref<79x128xf32, #tpu.memory_space<vmem>>, vector<1x128xf32>
    %229 = arith.truncf %225 : vector<16x32xf32> to vector<16x32xbf16>
    %cst_77 = arith.constant dense<0.000000e+00> : vector<16x128xf32>
    %230 = tpu.matmul %229, %227, %cst_77 {dimension_numbers = #tpu.dot_dimension_numbers<[1], [0], [0], [1], [0, 0, 1, 1], [], []>} : vector<16x32xbf16>, vector<32x128xbf16>, vector<16x128xf32> -> vector<16x128xf32>
    %231 = vector.broadcast %228 : vector<1x128xf32> to vector<16x128xf32>
    %232 = arith.addf %230, %231 : vector<16x128xf32>
    %cst_78 = arith.constant -1.702000e+00 : f32
    %233 = vector.broadcast %cst_78 : f32 to vector<16x128xf32>
    %234 = arith.mulf %233, %232 : vector<16x128xf32>
    %235 = math.exp %234 : vector<16x128xf32>
    %cst_79 = arith.constant 1.000000e+00 : f32
    %236 = vector.broadcast %cst_79 : f32 to vector<16x128xf32>
    %237 = arith.addf %236, %235 : vector<16x128xf32>
    %cst_80 = arith.constant 1.000000e+00 : f32
    %238 = vector.broadcast %cst_80 : f32 to vector<16x128xf32>
    %239 = arith.divf %238, %237 : vector<16x128xf32>
    %240 = arith.mulf %232, %239 : vector<16x128xf32>
    %c0_81 = arith.constant 0 : index
    %c0_82 = arith.constant 0 : index
    %c0_83 = arith.constant 0 : index
    %241 = vector.load %arg9[%c0_81, %c0_82, %c0_83] : memref<4x128x32xbf16, #tpu.memory_space<vmem>>, vector<1x128x32xbf16>
    %242 = vector.shape_cast %241 : vector<1x128x32xbf16> to vector<128x32xbf16>
    %c46 = arith.constant 46 : index
    %c0_84 = arith.constant 0 : index
    %243 = vector.load %arg10[%c46, %c0_84] : memref<79x128xf32, #tpu.memory_space<vmem>>, vector<1x32xf32>
    %244 = arith.truncf %240 : vector<16x128xf32> to vector<16x128xbf16>
    %cst_85 = arith.constant dense<0.000000e+00> : vector<16x32xf32>
    %245 = tpu.matmul %244, %242, %cst_85 {dimension_numbers = #tpu.dot_dimension_numbers<[1], [0], [0], [1], [0, 0, 1, 1], [], []>} : vector<16x128xbf16>, vector<128x32xbf16>, vector<16x32xf32> -> vector<16x32xf32>
    %246 = vector.broadcast %243 : vector<1x32xf32> to vector<16x32xf32>
    %247 = arith.addf %245, %246 : vector<16x32xf32>
    %248 = arith.addf %203, %247 : vector<16x32xf32>
    %c20 = arith.constant 20 : index
    %c0_86 = arith.constant 0 : index
    %c0_87 = arith.constant 0 : index
    %249 = vector.load %arg7[%c20, %c0_86, %c0_87] : memref<21x32x32xbf16, #tpu.memory_space<vmem>>, vector<1x32x32xbf16>
    %250 = vector.shape_cast %249 : vector<1x32x32xbf16> to vector<32x32xbf16>
    %c34 = arith.constant 34 : index
    %c0_88 = arith.constant 0 : index
    %251 = vector.load %arg10[%c34, %c0_88] : memref<79x128xf32, #tpu.memory_space<vmem>>, vector<1x32xf32>
    %252 = arith.truncf %248 : vector<16x32xf32> to vector<16x32xbf16>
    %cst_89 = arith.constant dense<0.000000e+00> : vector<16x32xf32>
    %253 = tpu.matmul %252, %250, %cst_89 {dimension_numbers = #tpu.dot_dimension_numbers<[1], [0], [0], [1], [0, 0, 1, 1], [], []>} : vector<16x32xbf16>, vector<32x32xbf16>, vector<16x32xf32> -> vector<16x32xf32>
    %254 = vector.broadcast %251 : vector<1x32xf32> to vector<16x32xf32>
    %255 = arith.addf %253, %254 : vector<16x32xf32>
    %256 = tpu.iota {dimensions = array<i32: 1>} : vector<16x128xi32>
    %c0_90 = arith.constant 0 : index
    %c0_91 = arith.constant 0 : index
    %257 = vector.load %arg1[%c0_90, %c0_91] : memref<16x2xi32, #tpu.memory_space<vmem>>, vector<16x1xi32>
    %258 = vector.broadcast %257 : vector<16x1xi32> to vector<16x128xi32>
    %259 = arith.cmpi eq, %256, %258 : vector<16x128xi32>
    %260 = arith.extui %259 : vector<16x128xi1> to vector<16x128xi32>
    %261 = arith.sitofp %260 : vector<16x128xi32> to vector<16x128xf32>
    %262 = arith.truncf %261 : vector<16x128xf32> to vector<16x128xbf16>
    %c3_92 = arith.constant 3 : index
    %c0_93 = arith.constant 0 : index
    %c0_94 = arith.constant 0 : index
    %263 = vector.load %arg9[%c3_92, %c0_93, %c0_94] : memref<4x128x32xbf16, #tpu.memory_space<vmem>>, vector<1x128x32xbf16>
    %264 = vector.shape_cast %263 : vector<1x128x32xbf16> to vector<128x32xbf16>
    %cst_95 = arith.constant dense<0.000000e+00> : vector<16x32xf32>
    %265 = tpu.matmul %262, %264, %cst_95 {dimension_numbers = #tpu.dot_dimension_numbers<[1], [0], [0], [1], [0, 0, 1, 1], [], []>} : vector<16x128xbf16>, vector<128x32xbf16>, vector<16x32xf32> -> vector<16x32xf32>
    %c16 = arith.constant 16 : index
    %c0_96 = arith.constant 0 : index
    %266 = vector.load %arg10[%c16, %c0_96] : memref<79x128xf32, #tpu.memory_space<vmem>>, vector<16x32xf32>
    %267 = arith.addf %265, %266 : vector<16x32xf32>
    %c47 = arith.constant 47 : index
    %c0_97 = arith.constant 0 : index
    %268 = vector.load %arg10[%c47, %c0_97] : memref<79x128xf32, #tpu.memory_space<vmem>>, vector<1x32xf32>
    %c48 = arith.constant 48 : index
    %c0_98 = arith.constant 0 : index
    %269 = vector.load %arg10[%c48, %c0_98] : memref<79x128xf32, #tpu.memory_space<vmem>>, vector<1x32xf32>
    %cst_99 = arith.constant dense<0.000000e+00> : vector<16xf32>
    %270 = vector.multi_reduction <add>, %267, %cst_99 [1] : vector<16x32xf32> to vector<16xf32>
    %271 = vector.shape_cast %270 : vector<16xf32> to vector<16x1xf32>
    %cst_100 = arith.constant 3.200000e+01 : f32
    %272 = vector.broadcast %cst_100 : f32 to vector<16x1xf32>
    %273 = arith.divf %271, %272 : vector<16x1xf32>
    %274 = vector.broadcast %273 : vector<16x1xf32> to vector<16x32xf32>
    %275 = arith.subf %267, %274 : vector<16x32xf32>
    %276 = arith.mulf %275, %275 : vector<16x32xf32>
    %cst_101 = arith.constant dense<0.000000e+00> : vector<16xf32>
    %277 = vector.multi_reduction <add>, %276, %cst_101 [1] : vector<16x32xf32> to vector<16xf32>
    %278 = vector.shape_cast %277 : vector<16xf32> to vector<16x1xf32>
    %cst_102 = arith.constant 3.200000e+01 : f32
    %279 = vector.broadcast %cst_102 : f32 to vector<16x1xf32>
    %280 = arith.divf %278, %279 : vector<16x1xf32>
    %cst_103 = arith.constant 9.99999974E-6 : f32
    %281 = vector.broadcast %cst_103 : f32 to vector<16x1xf32>
    %282 = arith.addf %280, %281 : vector<16x1xf32>
    %283 = math.rsqrt %282 : vector<16x1xf32>
    %284 = vector.broadcast %283 : vector<16x1xf32> to vector<16x32xf32>
    %285 = arith.mulf %275, %284 : vector<16x32xf32>
    %286 = vector.broadcast %268 : vector<1x32xf32> to vector<16x32xf32>
    %287 = arith.mulf %285, %286 : vector<16x32xf32>
    %288 = vector.broadcast %269 : vector<1x32xf32> to vector<16x32xf32>
    %289 = arith.addf %287, %288 : vector<16x32xf32>
    %c4 = arith.constant 4 : index
    %c0_104 = arith.constant 0 : index
    %c0_105 = arith.constant 0 : index
    %290 = vector.load %arg7[%c4, %c0_104, %c0_105] : memref<21x32x32xbf16, #tpu.memory_space<vmem>>, vector<1x32x32xbf16>
    %291 = vector.shape_cast %290 : vector<1x32x32xbf16> to vector<32x32xbf16>
    %c49 = arith.constant 49 : index
    %c0_106 = arith.constant 0 : index
    %292 = vector.load %arg10[%c49, %c0_106] : memref<79x128xf32, #tpu.memory_space<vmem>>, vector<1x32xf32>
    %293 = arith.truncf %289 : vector<16x32xf32> to vector<16x32xbf16>
    %cst_107 = arith.constant dense<0.000000e+00> : vector<16x32xf32>
    %294 = tpu.matmul %293, %291, %cst_107 {dimension_numbers = #tpu.dot_dimension_numbers<[1], [0], [0], [1], [0, 0, 1, 1], [], []>} : vector<16x32xbf16>, vector<32x32xbf16>, vector<16x32xf32> -> vector<16x32xf32>
    %295 = vector.broadcast %292 : vector<1x32xf32> to vector<16x32xf32>
    %296 = arith.addf %294, %295 : vector<16x32xf32>
    %c5 = arith.constant 5 : index
    %c0_108 = arith.constant 0 : index
    %c0_109 = arith.constant 0 : index
    %297 = vector.load %arg7[%c5, %c0_108, %c0_109] : memref<21x32x32xbf16, #tpu.memory_space<vmem>>, vector<1x32x32xbf16>
    %298 = vector.shape_cast %297 : vector<1x32x32xbf16> to vector<32x32xbf16>
    %c50 = arith.constant 50 : index
    %c0_110 = arith.constant 0 : index
    %299 = vector.load %arg10[%c50, %c0_110] : memref<79x128xf32, #tpu.memory_space<vmem>>, vector<1x32xf32>
    %300 = arith.truncf %289 : vector<16x32xf32> to vector<16x32xbf16>
    %cst_111 = arith.constant dense<0.000000e+00> : vector<16x32xf32>
    %301 = tpu.matmul %300, %298, %cst_111 {dimension_numbers = #tpu.dot_dimension_numbers<[1], [0], [0], [1], [0, 0, 1, 1], [], []>} : vector<16x32xbf16>, vector<32x32xbf16>, vector<16x32xf32> -> vector<16x32xf32>
    %302 = vector.broadcast %299 : vector<1x32xf32> to vector<16x32xf32>
    %303 = arith.addf %301, %302 : vector<16x32xf32>
    %c6 = arith.constant 6 : index
    %c0_112 = arith.constant 0 : index
    %c0_113 = arith.constant 0 : index
    %304 = vector.load %arg7[%c6, %c0_112, %c0_113] : memref<21x32x32xbf16, #tpu.memory_space<vmem>>, vector<1x32x32xbf16>
    %305 = vector.shape_cast %304 : vector<1x32x32xbf16> to vector<32x32xbf16>
    %c51 = arith.constant 51 : index
    %c0_114 = arith.constant 0 : index
    %306 = vector.load %arg10[%c51, %c0_114] : memref<79x128xf32, #tpu.memory_space<vmem>>, vector<1x32xf32>
    %307 = arith.truncf %289 : vector<16x32xf32> to vector<16x32xbf16>
    %cst_115 = arith.constant dense<0.000000e+00> : vector<16x32xf32>
    %308 = tpu.matmul %307, %305, %cst_115 {dimension_numbers = #tpu.dot_dimension_numbers<[1], [0], [0], [1], [0, 0, 1, 1], [], []>} : vector<16x32xbf16>, vector<32x32xbf16>, vector<16x32xf32> -> vector<16x32xf32>
    %309 = vector.broadcast %306 : vector<1x32xf32> to vector<16x32xf32>
    %310 = arith.addf %308, %309 : vector<16x32xf32>
    %311 = arith.truncf %296 : vector<16x32xf32> to vector<16x32xbf16>
    %312 = arith.truncf %303 : vector<16x32xf32> to vector<16x32xbf16>
    %313 = arith.truncf %310 : vector<16x32xf32> to vector<16x32xbf16>
    %c0_116 = arith.constant 0 : index
    %c0_117 = arith.constant 0 : index
    %314 = vector.load %arg4[%c0_116, %c0_117] : memref<16x16xf32, #tpu.memory_space<vmem>>, vector<16x16xf32>
    %cst_118 = arith.constant 0.000000e+00 : f32
    %315 = vector.broadcast %cst_118 : f32 to vector<16x32xf32>
    %c0_i32_119 = arith.constant 0 : i32
    %316 = arith.sitofp %c0_i32_119 : i32 to bf16
    %317 = vector.shape_cast %5 : vector<1x32xi1> to vector<1x32xi1>
    %318 = vector.broadcast %317 : vector<1x32xi1> to vector<16x32xi1>
    %319 = vector.broadcast %316 : bf16 to vector<16x32xbf16>
    %320 = arith.select %318, %311, %319 : vector<16x32xi1>, vector<16x32xbf16>
    %c0_i32_120 = arith.constant 0 : i32
    %321 = arith.sitofp %c0_i32_120 : i32 to bf16
    %322 = vector.shape_cast %5 : vector<1x32xi1> to vector<1x32xi1>
    %323 = vector.broadcast %322 : vector<1x32xi1> to vector<16x32xi1>
    %324 = vector.broadcast %321 : bf16 to vector<16x32xbf16>
    %325 = arith.select %323, %313, %324 : vector<16x32xi1>, vector<16x32xbf16>
    %cst_121 = arith.constant dense<0.000000e+00> : vector<16x16xf32>
    %326 = tpu.matmul %320, %312, %cst_121 {dimension_numbers = #tpu.dot_dimension_numbers<[1], [1], [0], [0], [0, 0, 1, 0], [], []>} : vector<16x32xbf16>, vector<16x32xbf16>, vector<16x16xf32> -> vector<16x16xf32>
    %327 = arith.addf %326, %314 : vector<16x16xf32>
    %cst_122 = arith.constant dense<0xFF800000> : vector<16xf32>
    %328 = vector.multi_reduction <maximumf>, %327, %cst_122 [1] : vector<16x16xf32> to vector<16xf32>
    %329 = vector.shape_cast %328 : vector<16xf32> to vector<16x1xf32>
    %330 = vector.broadcast %329 : vector<16x1xf32> to vector<16x16xf32>
    %331 = arith.subf %327, %330 : vector<16x16xf32>
    %332 = math.exp %331 : vector<16x16xf32>
    %cst_123 = arith.constant dense<0.000000e+00> : vector<16xf32>
    %333 = vector.multi_reduction <add>, %332, %cst_123 [1] : vector<16x16xf32> to vector<16xf32>
    %334 = vector.shape_cast %333 : vector<16xf32> to vector<16x1xf32>
    %335 = tpu.reciprocal %334 {approx = true} : vector<16x1xf32> -> vector<16x1xf32>
    %336 = vector.broadcast %335 : vector<16x1xf32> to vector<16x16xf32>
    %337 = arith.mulf %332, %336 : vector<16x16xf32>
    %338 = arith.truncf %337 : vector<16x16xf32> to vector<16x16xbf16>
    %cst_124 = arith.constant dense<0.000000e+00> : vector<16x32xf32>
    %339 = tpu.matmul %338, %325, %cst_124 {dimension_numbers = #tpu.dot_dimension_numbers<[1], [0], [0], [1], [0, 0, 1, 1], [], []>} : vector<16x16xbf16>, vector<16x32xbf16>, vector<16x32xf32> -> vector<16x32xf32>
    %340 = arith.addf %315, %339 : vector<16x32xf32>
    %c0_i32_125 = arith.constant 0 : i32
    %341 = arith.sitofp %c0_i32_125 : i32 to bf16
    %342 = vector.shape_cast %10 : vector<1x32xi1> to vector<1x32xi1>
    %343 = vector.broadcast %342 : vector<1x32xi1> to vector<16x32xi1>
    %344 = vector.broadcast %341 : bf16 to vector<16x32xbf16>
    %345 = arith.select %343, %311, %344 : vector<16x32xi1>, vector<16x32xbf16>
    %c0_i32_126 = arith.constant 0 : i32
    %346 = arith.sitofp %c0_i32_126 : i32 to bf16
    %347 = vector.shape_cast %10 : vector<1x32xi1> to vector<1x32xi1>
    %348 = vector.broadcast %347 : vector<1x32xi1> to vector<16x32xi1>
    %349 = vector.broadcast %346 : bf16 to vector<16x32xbf16>
    %350 = arith.select %348, %313, %349 : vector<16x32xi1>, vector<16x32xbf16>
    %cst_127 = arith.constant dense<0.000000e+00> : vector<16x16xf32>
    %351 = tpu.matmul %345, %312, %cst_127 {dimension_numbers = #tpu.dot_dimension_numbers<[1], [1], [0], [0], [0, 0, 1, 0], [], []>} : vector<16x32xbf16>, vector<16x32xbf16>, vector<16x16xf32> -> vector<16x16xf32>
    %352 = arith.addf %351, %314 : vector<16x16xf32>
    %cst_128 = arith.constant dense<0xFF800000> : vector<16xf32>
    %353 = vector.multi_reduction <maximumf>, %352, %cst_128 [1] : vector<16x16xf32> to vector<16xf32>
    %354 = vector.shape_cast %353 : vector<16xf32> to vector<16x1xf32>
    %355 = vector.broadcast %354 : vector<16x1xf32> to vector<16x16xf32>
    %356 = arith.subf %352, %355 : vector<16x16xf32>
    %357 = math.exp %356 : vector<16x16xf32>
    %cst_129 = arith.constant dense<0.000000e+00> : vector<16xf32>
    %358 = vector.multi_reduction <add>, %357, %cst_129 [1] : vector<16x16xf32> to vector<16xf32>
    %359 = vector.shape_cast %358 : vector<16xf32> to vector<16x1xf32>
    %360 = tpu.reciprocal %359 {approx = true} : vector<16x1xf32> -> vector<16x1xf32>
    %361 = vector.broadcast %360 : vector<16x1xf32> to vector<16x16xf32>
    %362 = arith.mulf %357, %361 : vector<16x16xf32>
    %363 = arith.truncf %362 : vector<16x16xf32> to vector<16x16xbf16>
    %cst_130 = arith.constant dense<0.000000e+00> : vector<16x32xf32>
    %364 = tpu.matmul %363, %350, %cst_130 {dimension_numbers = #tpu.dot_dimension_numbers<[1], [0], [0], [1], [0, 0, 1, 1], [], []>} : vector<16x16xbf16>, vector<16x32xbf16>, vector<16x32xf32> -> vector<16x32xf32>
    %365 = arith.addf %340, %364 : vector<16x32xf32>
    %c0_i32_131 = arith.constant 0 : i32
    %366 = arith.sitofp %c0_i32_131 : i32 to bf16
    %367 = vector.shape_cast %15 : vector<1x32xi1> to vector<1x32xi1>
    %368 = vector.broadcast %367 : vector<1x32xi1> to vector<16x32xi1>
    %369 = vector.broadcast %366 : bf16 to vector<16x32xbf16>
    %370 = arith.select %368, %311, %369 : vector<16x32xi1>, vector<16x32xbf16>
    %c0_i32_132 = arith.constant 0 : i32
    %371 = arith.sitofp %c0_i32_132 : i32 to bf16
    %372 = vector.shape_cast %15 : vector<1x32xi1> to vector<1x32xi1>
    %373 = vector.broadcast %372 : vector<1x32xi1> to vector<16x32xi1>
    %374 = vector.broadcast %371 : bf16 to vector<16x32xbf16>
    %375 = arith.select %373, %313, %374 : vector<16x32xi1>, vector<16x32xbf16>
    %cst_133 = arith.constant dense<0.000000e+00> : vector<16x16xf32>
    %376 = tpu.matmul %370, %312, %cst_133 {dimension_numbers = #tpu.dot_dimension_numbers<[1], [1], [0], [0], [0, 0, 1, 0], [], []>} : vector<16x32xbf16>, vector<16x32xbf16>, vector<16x16xf32> -> vector<16x16xf32>
    %377 = arith.addf %376, %314 : vector<16x16xf32>
    %cst_134 = arith.constant dense<0xFF800000> : vector<16xf32>
    %378 = vector.multi_reduction <maximumf>, %377, %cst_134 [1] : vector<16x16xf32> to vector<16xf32>
    %379 = vector.shape_cast %378 : vector<16xf32> to vector<16x1xf32>
    %380 = vector.broadcast %379 : vector<16x1xf32> to vector<16x16xf32>
    %381 = arith.subf %377, %380 : vector<16x16xf32>
    %382 = math.exp %381 : vector<16x16xf32>
    %cst_135 = arith.constant dense<0.000000e+00> : vector<16xf32>
    %383 = vector.multi_reduction <add>, %382, %cst_135 [1] : vector<16x16xf32> to vector<16xf32>
    %384 = vector.shape_cast %383 : vector<16xf32> to vector<16x1xf32>
    %385 = tpu.reciprocal %384 {approx = true} : vector<16x1xf32> -> vector<16x1xf32>
    %386 = vector.broadcast %385 : vector<16x1xf32> to vector<16x16xf32>
    %387 = arith.mulf %382, %386 : vector<16x16xf32>
    %388 = arith.truncf %387 : vector<16x16xf32> to vector<16x16xbf16>
    %cst_136 = arith.constant dense<0.000000e+00> : vector<16x32xf32>
    %389 = tpu.matmul %388, %375, %cst_136 {dimension_numbers = #tpu.dot_dimension_numbers<[1], [0], [0], [1], [0, 0, 1, 1], [], []>} : vector<16x16xbf16>, vector<16x32xbf16>, vector<16x32xf32> -> vector<16x32xf32>
    %390 = arith.addf %365, %389 : vector<16x32xf32>
    %c0_i32_137 = arith.constant 0 : i32
    %391 = arith.sitofp %c0_i32_137 : i32 to bf16
    %392 = vector.shape_cast %20 : vector<1x32xi1> to vector<1x32xi1>
    %393 = vector.broadcast %392 : vector<1x32xi1> to vector<16x32xi1>
    %394 = vector.broadcast %391 : bf16 to vector<16x32xbf16>
    %395 = arith.select %393, %311, %394 : vector<16x32xi1>, vector<16x32xbf16>
    %c0_i32_138 = arith.constant 0 : i32
    %396 = arith.sitofp %c0_i32_138 : i32 to bf16
    %397 = vector.shape_cast %20 : vector<1x32xi1> to vector<1x32xi1>
    %398 = vector.broadcast %397 : vector<1x32xi1> to vector<16x32xi1>
    %399 = vector.broadcast %396 : bf16 to vector<16x32xbf16>
    %400 = arith.select %398, %313, %399 : vector<16x32xi1>, vector<16x32xbf16>
    %cst_139 = arith.constant dense<0.000000e+00> : vector<16x16xf32>
    %401 = tpu.matmul %395, %312, %cst_139 {dimension_numbers = #tpu.dot_dimension_numbers<[1], [1], [0], [0], [0, 0, 1, 0], [], []>} : vector<16x32xbf16>, vector<16x32xbf16>, vector<16x16xf32> -> vector<16x16xf32>
    %402 = arith.addf %401, %314 : vector<16x16xf32>
    %cst_140 = arith.constant dense<0xFF800000> : vector<16xf32>
    %403 = vector.multi_reduction <maximumf>, %402, %cst_140 [1] : vector<16x16xf32> to vector<16xf32>
    %404 = vector.shape_cast %403 : vector<16xf32> to vector<16x1xf32>
    %405 = vector.broadcast %404 : vector<16x1xf32> to vector<16x16xf32>
    %406 = arith.subf %402, %405 : vector<16x16xf32>
    %407 = math.exp %406 : vector<16x16xf32>
    %cst_141 = arith.constant dense<0.000000e+00> : vector<16xf32>
    %408 = vector.multi_reduction <add>, %407, %cst_141 [1] : vector<16x16xf32> to vector<16xf32>
    %409 = vector.shape_cast %408 : vector<16xf32> to vector<16x1xf32>
    %410 = tpu.reciprocal %409 {approx = true} : vector<16x1xf32> -> vector<16x1xf32>
    %411 = vector.broadcast %410 : vector<16x1xf32> to vector<16x16xf32>
    %412 = arith.mulf %407, %411 : vector<16x16xf32>
    %413 = arith.truncf %412 : vector<16x16xf32> to vector<16x16xbf16>
    %cst_142 = arith.constant dense<0.000000e+00> : vector<16x32xf32>
    %414 = tpu.matmul %413, %400, %cst_142 {dimension_numbers = #tpu.dot_dimension_numbers<[1], [0], [0], [1], [0, 0, 1, 1], [], []>} : vector<16x16xbf16>, vector<16x32xbf16>, vector<16x32xf32> -> vector<16x32xf32>
    %415 = arith.addf %390, %414 : vector<16x32xf32>
    %c7 = arith.constant 7 : index
    %c0_143 = arith.constant 0 : index
    %c0_144 = arith.constant 0 : index
    %416 = vector.load %arg7[%c7, %c0_143, %c0_144] : memref<21x32x32xbf16, #tpu.memory_space<vmem>>, vector<1x32x32xbf16>
    %417 = vector.shape_cast %416 : vector<1x32x32xbf16> to vector<32x32xbf16>
    %c52 = arith.constant 52 : index
    %c0_145 = arith.constant 0 : index
    %418 = vector.load %arg10[%c52, %c0_145] : memref<79x128xf32, #tpu.memory_space<vmem>>, vector<1x32xf32>
    %419 = arith.truncf %415 : vector<16x32xf32> to vector<16x32xbf16>
    %cst_146 = arith.constant dense<0.000000e+00> : vector<16x32xf32>
    %420 = tpu.matmul %419, %417, %cst_146 {dimension_numbers = #tpu.dot_dimension_numbers<[1], [0], [0], [1], [0, 0, 1, 1], [], []>} : vector<16x32xbf16>, vector<32x32xbf16>, vector<16x32xf32> -> vector<16x32xf32>
    %421 = vector.broadcast %418 : vector<1x32xf32> to vector<16x32xf32>
    %422 = arith.addf %420, %421 : vector<16x32xf32>
    %423 = arith.addf %267, %422 : vector<16x32xf32>
    %c53 = arith.constant 53 : index
    %c0_147 = arith.constant 0 : index
    %424 = vector.load %arg10[%c53, %c0_147] : memref<79x128xf32, #tpu.memory_space<vmem>>, vector<1x32xf32>
    %c54 = arith.constant 54 : index
    %c0_148 = arith.constant 0 : index
    %425 = vector.load %arg10[%c54, %c0_148] : memref<79x128xf32, #tpu.memory_space<vmem>>, vector<1x32xf32>
    %cst_149 = arith.constant dense<0.000000e+00> : vector<16xf32>
    %426 = vector.multi_reduction <add>, %423, %cst_149 [1] : vector<16x32xf32> to vector<16xf32>
    %427 = vector.shape_cast %426 : vector<16xf32> to vector<16x1xf32>
    %cst_150 = arith.constant 3.200000e+01 : f32
    %428 = vector.broadcast %cst_150 : f32 to vector<16x1xf32>
    %429 = arith.divf %427, %428 : vector<16x1xf32>
    %430 = vector.broadcast %429 : vector<16x1xf32> to vector<16x32xf32>
    %431 = arith.subf %423, %430 : vector<16x32xf32>
    %432 = arith.mulf %431, %431 : vector<16x32xf32>
    %cst_151 = arith.constant dense<0.000000e+00> : vector<16xf32>
    %433 = vector.multi_reduction <add>, %432, %cst_151 [1] : vector<16x32xf32> to vector<16xf32>
    %434 = vector.shape_cast %433 : vector<16xf32> to vector<16x1xf32>
    %cst_152 = arith.constant 3.200000e+01 : f32
    %435 = vector.broadcast %cst_152 : f32 to vector<16x1xf32>
    %436 = arith.divf %434, %435 : vector<16x1xf32>
    %cst_153 = arith.constant 9.99999974E-6 : f32
    %437 = vector.broadcast %cst_153 : f32 to vector<16x1xf32>
    %438 = arith.addf %436, %437 : vector<16x1xf32>
    %439 = math.rsqrt %438 : vector<16x1xf32>
    %440 = vector.broadcast %439 : vector<16x1xf32> to vector<16x32xf32>
    %441 = arith.mulf %431, %440 : vector<16x32xf32>
    %442 = vector.broadcast %424 : vector<1x32xf32> to vector<16x32xf32>
    %443 = arith.mulf %441, %442 : vector<16x32xf32>
    %444 = vector.broadcast %425 : vector<1x32xf32> to vector<16x32xf32>
    %445 = arith.addf %443, %444 : vector<16x32xf32>
    %c8 = arith.constant 8 : index
    %c0_154 = arith.constant 0 : index
    %c0_155 = arith.constant 0 : index
    %446 = vector.load %arg7[%c8, %c0_154, %c0_155] : memref<21x32x32xbf16, #tpu.memory_space<vmem>>, vector<1x32x32xbf16>
    %447 = vector.shape_cast %446 : vector<1x32x32xbf16> to vector<32x32xbf16>
    %c55 = arith.constant 55 : index
    %c0_156 = arith.constant 0 : index
    %448 = vector.load %arg10[%c55, %c0_156] : memref<79x128xf32, #tpu.memory_space<vmem>>, vector<1x32xf32>
    %449 = arith.truncf %445 : vector<16x32xf32> to vector<16x32xbf16>
    %cst_157 = arith.constant dense<0.000000e+00> : vector<16x32xf32>
    %450 = tpu.matmul %449, %447, %cst_157 {dimension_numbers = #tpu.dot_dimension_numbers<[1], [0], [0], [1], [0, 0, 1, 1], [], []>} : vector<16x32xbf16>, vector<32x32xbf16>, vector<16x32xf32> -> vector<16x32xf32>
    %451 = vector.broadcast %448 : vector<1x32xf32> to vector<16x32xf32>
    %452 = arith.addf %450, %451 : vector<16x32xf32>
    %c9 = arith.constant 9 : index
    %c0_158 = arith.constant 0 : index
    %c0_159 = arith.constant 0 : index
    %453 = vector.load %arg7[%c9, %c0_158, %c0_159] : memref<21x32x32xbf16, #tpu.memory_space<vmem>>, vector<1x32x32xbf16>
    %454 = vector.shape_cast %453 : vector<1x32x32xbf16> to vector<32x32xbf16>
    %c56 = arith.constant 56 : index
    %c0_160 = arith.constant 0 : index
    %455 = vector.load %arg10[%c56, %c0_160] : memref<79x128xf32, #tpu.memory_space<vmem>>, vector<1x32xf32>
    %456 = arith.truncf %255 : vector<16x32xf32> to vector<16x32xbf16>
    %cst_161 = arith.constant dense<0.000000e+00> : vector<16x32xf32>
    %457 = tpu.matmul %456, %454, %cst_161 {dimension_numbers = #tpu.dot_dimension_numbers<[1], [0], [0], [1], [0, 0, 1, 1], [], []>} : vector<16x32xbf16>, vector<32x32xbf16>, vector<16x32xf32> -> vector<16x32xf32>
    %458 = vector.broadcast %455 : vector<1x32xf32> to vector<16x32xf32>
    %459 = arith.addf %457, %458 : vector<16x32xf32>
    %c10 = arith.constant 10 : index
    %c0_162 = arith.constant 0 : index
    %c0_163 = arith.constant 0 : index
    %460 = vector.load %arg7[%c10, %c0_162, %c0_163] : memref<21x32x32xbf16, #tpu.memory_space<vmem>>, vector<1x32x32xbf16>
    %461 = vector.shape_cast %460 : vector<1x32x32xbf16> to vector<32x32xbf16>
    %c57 = arith.constant 57 : index
    %c0_164 = arith.constant 0 : index
    %462 = vector.load %arg10[%c57, %c0_164] : memref<79x128xf32, #tpu.memory_space<vmem>>, vector<1x32xf32>
    %463 = arith.truncf %255 : vector<16x32xf32> to vector<16x32xbf16>
    %cst_165 = arith.constant dense<0.000000e+00> : vector<16x32xf32>
    %464 = tpu.matmul %463, %461, %cst_165 {dimension_numbers = #tpu.dot_dimension_numbers<[1], [0], [0], [1], [0, 0, 1, 1], [], []>} : vector<16x32xbf16>, vector<32x32xbf16>, vector<16x32xf32> -> vector<16x32xf32>
    %465 = vector.broadcast %462 : vector<1x32xf32> to vector<16x32xf32>
    %466 = arith.addf %464, %465 : vector<16x32xf32>
    %467 = arith.truncf %452 : vector<16x32xf32> to vector<16x32xbf16>
    %468 = arith.truncf %459 : vector<16x32xf32> to vector<16x32xbf16>
    %469 = arith.truncf %466 : vector<16x32xf32> to vector<16x32xbf16>
    %c0_166 = arith.constant 0 : index
    %c0_167 = arith.constant 0 : index
    %470 = vector.load %arg5[%c0_166, %c0_167] : memref<16x16xf32, #tpu.memory_space<vmem>>, vector<16x16xf32>
    %cst_168 = arith.constant 0.000000e+00 : f32
    %471 = vector.broadcast %cst_168 : f32 to vector<16x32xf32>
    %c0_i32_169 = arith.constant 0 : i32
    %472 = arith.sitofp %c0_i32_169 : i32 to bf16
    %473 = vector.shape_cast %5 : vector<1x32xi1> to vector<1x32xi1>
    %474 = vector.broadcast %473 : vector<1x32xi1> to vector<16x32xi1>
    %475 = vector.broadcast %472 : bf16 to vector<16x32xbf16>
    %476 = arith.select %474, %467, %475 : vector<16x32xi1>, vector<16x32xbf16>
    %c0_i32_170 = arith.constant 0 : i32
    %477 = arith.sitofp %c0_i32_170 : i32 to bf16
    %478 = vector.shape_cast %5 : vector<1x32xi1> to vector<1x32xi1>
    %479 = vector.broadcast %478 : vector<1x32xi1> to vector<16x32xi1>
    %480 = vector.broadcast %477 : bf16 to vector<16x32xbf16>
    %481 = arith.select %479, %469, %480 : vector<16x32xi1>, vector<16x32xbf16>
    %cst_171 = arith.constant dense<0.000000e+00> : vector<16x16xf32>
    %482 = tpu.matmul %476, %468, %cst_171 {dimension_numbers = #tpu.dot_dimension_numbers<[1], [1], [0], [0], [0, 0, 1, 0], [], []>} : vector<16x32xbf16>, vector<16x32xbf16>, vector<16x16xf32> -> vector<16x16xf32>
    %483 = arith.addf %482, %470 : vector<16x16xf32>
    %cst_172 = arith.constant dense<0xFF800000> : vector<16xf32>
    %484 = vector.multi_reduction <maximumf>, %483, %cst_172 [1] : vector<16x16xf32> to vector<16xf32>
    %485 = vector.shape_cast %484 : vector<16xf32> to vector<16x1xf32>
    %486 = vector.broadcast %485 : vector<16x1xf32> to vector<16x16xf32>
    %487 = arith.subf %483, %486 : vector<16x16xf32>
    %488 = math.exp %487 : vector<16x16xf32>
    %cst_173 = arith.constant dense<0.000000e+00> : vector<16xf32>
    %489 = vector.multi_reduction <add>, %488, %cst_173 [1] : vector<16x16xf32> to vector<16xf32>
    %490 = vector.shape_cast %489 : vector<16xf32> to vector<16x1xf32>
    %491 = tpu.reciprocal %490 {approx = true} : vector<16x1xf32> -> vector<16x1xf32>
    %492 = vector.broadcast %491 : vector<16x1xf32> to vector<16x16xf32>
    %493 = arith.mulf %488, %492 : vector<16x16xf32>
    %494 = arith.truncf %493 : vector<16x16xf32> to vector<16x16xbf16>
    %cst_174 = arith.constant dense<0.000000e+00> : vector<16x32xf32>
    %495 = tpu.matmul %494, %481, %cst_174 {dimension_numbers = #tpu.dot_dimension_numbers<[1], [0], [0], [1], [0, 0, 1, 1], [], []>} : vector<16x16xbf16>, vector<16x32xbf16>, vector<16x32xf32> -> vector<16x32xf32>
    %496 = arith.addf %471, %495 : vector<16x32xf32>
    %c0_i32_175 = arith.constant 0 : i32
    %497 = arith.sitofp %c0_i32_175 : i32 to bf16
    %498 = vector.shape_cast %10 : vector<1x32xi1> to vector<1x32xi1>
    %499 = vector.broadcast %498 : vector<1x32xi1> to vector<16x32xi1>
    %500 = vector.broadcast %497 : bf16 to vector<16x32xbf16>
    %501 = arith.select %499, %467, %500 : vector<16x32xi1>, vector<16x32xbf16>
    %c0_i32_176 = arith.constant 0 : i32
    %502 = arith.sitofp %c0_i32_176 : i32 to bf16
    %503 = vector.shape_cast %10 : vector<1x32xi1> to vector<1x32xi1>
    %504 = vector.broadcast %503 : vector<1x32xi1> to vector<16x32xi1>
    %505 = vector.broadcast %502 : bf16 to vector<16x32xbf16>
    %506 = arith.select %504, %469, %505 : vector<16x32xi1>, vector<16x32xbf16>
    %cst_177 = arith.constant dense<0.000000e+00> : vector<16x16xf32>
    %507 = tpu.matmul %501, %468, %cst_177 {dimension_numbers = #tpu.dot_dimension_numbers<[1], [1], [0], [0], [0, 0, 1, 0], [], []>} : vector<16x32xbf16>, vector<16x32xbf16>, vector<16x16xf32> -> vector<16x16xf32>
    %508 = arith.addf %507, %470 : vector<16x16xf32>
    %cst_178 = arith.constant dense<0xFF800000> : vector<16xf32>
    %509 = vector.multi_reduction <maximumf>, %508, %cst_178 [1] : vector<16x16xf32> to vector<16xf32>
    %510 = vector.shape_cast %509 : vector<16xf32> to vector<16x1xf32>
    %511 = vector.broadcast %510 : vector<16x1xf32> to vector<16x16xf32>
    %512 = arith.subf %508, %511 : vector<16x16xf32>
    %513 = math.exp %512 : vector<16x16xf32>
    %cst_179 = arith.constant dense<0.000000e+00> : vector<16xf32>
    %514 = vector.multi_reduction <add>, %513, %cst_179 [1] : vector<16x16xf32> to vector<16xf32>
    %515 = vector.shape_cast %514 : vector<16xf32> to vector<16x1xf32>
    %516 = tpu.reciprocal %515 {approx = true} : vector<16x1xf32> -> vector<16x1xf32>
    %517 = vector.broadcast %516 : vector<16x1xf32> to vector<16x16xf32>
    %518 = arith.mulf %513, %517 : vector<16x16xf32>
    %519 = arith.truncf %518 : vector<16x16xf32> to vector<16x16xbf16>
    %cst_180 = arith.constant dense<0.000000e+00> : vector<16x32xf32>
    %520 = tpu.matmul %519, %506, %cst_180 {dimension_numbers = #tpu.dot_dimension_numbers<[1], [0], [0], [1], [0, 0, 1, 1], [], []>} : vector<16x16xbf16>, vector<16x32xbf16>, vector<16x32xf32> -> vector<16x32xf32>
    %521 = arith.addf %496, %520 : vector<16x32xf32>
    %c0_i32_181 = arith.constant 0 : i32
    %522 = arith.sitofp %c0_i32_181 : i32 to bf16
    %523 = vector.shape_cast %15 : vector<1x32xi1> to vector<1x32xi1>
    %524 = vector.broadcast %523 : vector<1x32xi1> to vector<16x32xi1>
    %525 = vector.broadcast %522 : bf16 to vector<16x32xbf16>
    %526 = arith.select %524, %467, %525 : vector<16x32xi1>, vector<16x32xbf16>
    %c0_i32_182 = arith.constant 0 : i32
    %527 = arith.sitofp %c0_i32_182 : i32 to bf16
    %528 = vector.shape_cast %15 : vector<1x32xi1> to vector<1x32xi1>
    %529 = vector.broadcast %528 : vector<1x32xi1> to vector<16x32xi1>
    %530 = vector.broadcast %527 : bf16 to vector<16x32xbf16>
    %531 = arith.select %529, %469, %530 : vector<16x32xi1>, vector<16x32xbf16>
    %cst_183 = arith.constant dense<0.000000e+00> : vector<16x16xf32>
    %532 = tpu.matmul %526, %468, %cst_183 {dimension_numbers = #tpu.dot_dimension_numbers<[1], [1], [0], [0], [0, 0, 1, 0], [], []>} : vector<16x32xbf16>, vector<16x32xbf16>, vector<16x16xf32> -> vector<16x16xf32>
    %533 = arith.addf %532, %470 : vector<16x16xf32>
    %cst_184 = arith.constant dense<0xFF800000> : vector<16xf32>
    %534 = vector.multi_reduction <maximumf>, %533, %cst_184 [1] : vector<16x16xf32> to vector<16xf32>
    %535 = vector.shape_cast %534 : vector<16xf32> to vector<16x1xf32>
    %536 = vector.broadcast %535 : vector<16x1xf32> to vector<16x16xf32>
    %537 = arith.subf %533, %536 : vector<16x16xf32>
    %538 = math.exp %537 : vector<16x16xf32>
    %cst_185 = arith.constant dense<0.000000e+00> : vector<16xf32>
    %539 = vector.multi_reduction <add>, %538, %cst_185 [1] : vector<16x16xf32> to vector<16xf32>
    %540 = vector.shape_cast %539 : vector<16xf32> to vector<16x1xf32>
    %541 = tpu.reciprocal %540 {approx = true} : vector<16x1xf32> -> vector<16x1xf32>
    %542 = vector.broadcast %541 : vector<16x1xf32> to vector<16x16xf32>
    %543 = arith.mulf %538, %542 : vector<16x16xf32>
    %544 = arith.truncf %543 : vector<16x16xf32> to vector<16x16xbf16>
    %cst_186 = arith.constant dense<0.000000e+00> : vector<16x32xf32>
    %545 = tpu.matmul %544, %531, %cst_186 {dimension_numbers = #tpu.dot_dimension_numbers<[1], [0], [0], [1], [0, 0, 1, 1], [], []>} : vector<16x16xbf16>, vector<16x32xbf16>, vector<16x32xf32> -> vector<16x32xf32>
    %546 = arith.addf %521, %545 : vector<16x32xf32>
    %c0_i32_187 = arith.constant 0 : i32
    %547 = arith.sitofp %c0_i32_187 : i32 to bf16
    %548 = vector.shape_cast %20 : vector<1x32xi1> to vector<1x32xi1>
    %549 = vector.broadcast %548 : vector<1x32xi1> to vector<16x32xi1>
    %550 = vector.broadcast %547 : bf16 to vector<16x32xbf16>
    %551 = arith.select %549, %467, %550 : vector<16x32xi1>, vector<16x32xbf16>
    %c0_i32_188 = arith.constant 0 : i32
    %552 = arith.sitofp %c0_i32_188 : i32 to bf16
    %553 = vector.shape_cast %20 : vector<1x32xi1> to vector<1x32xi1>
    %554 = vector.broadcast %553 : vector<1x32xi1> to vector<16x32xi1>
    %555 = vector.broadcast %552 : bf16 to vector<16x32xbf16>
    %556 = arith.select %554, %469, %555 : vector<16x32xi1>, vector<16x32xbf16>
    %cst_189 = arith.constant dense<0.000000e+00> : vector<16x16xf32>
    %557 = tpu.matmul %551, %468, %cst_189 {dimension_numbers = #tpu.dot_dimension_numbers<[1], [1], [0], [0], [0, 0, 1, 0], [], []>} : vector<16x32xbf16>, vector<16x32xbf16>, vector<16x16xf32> -> vector<16x16xf32>
    %558 = arith.addf %557, %470 : vector<16x16xf32>
    %cst_190 = arith.constant dense<0xFF800000> : vector<16xf32>
    %559 = vector.multi_reduction <maximumf>, %558, %cst_190 [1] : vector<16x16xf32> to vector<16xf32>
    %560 = vector.shape_cast %559 : vector<16xf32> to vector<16x1xf32>
    %561 = vector.broadcast %560 : vector<16x1xf32> to vector<16x16xf32>
    %562 = arith.subf %558, %561 : vector<16x16xf32>
    %563 = math.exp %562 : vector<16x16xf32>
    %cst_191 = arith.constant dense<0.000000e+00> : vector<16xf32>
    %564 = vector.multi_reduction <add>, %563, %cst_191 [1] : vector<16x16xf32> to vector<16xf32>
    %565 = vector.shape_cast %564 : vector<16xf32> to vector<16x1xf32>
    %566 = tpu.reciprocal %565 {approx = true} : vector<16x1xf32> -> vector<16x1xf32>
    %567 = vector.broadcast %566 : vector<16x1xf32> to vector<16x16xf32>
    %568 = arith.mulf %563, %567 : vector<16x16xf32>
    %569 = arith.truncf %568 : vector<16x16xf32> to vector<16x16xbf16>
    %cst_192 = arith.constant dense<0.000000e+00> : vector<16x32xf32>
    %570 = tpu.matmul %569, %556, %cst_192 {dimension_numbers = #tpu.dot_dimension_numbers<[1], [0], [0], [1], [0, 0, 1, 1], [], []>} : vector<16x16xbf16>, vector<16x32xbf16>, vector<16x32xf32> -> vector<16x32xf32>
    %571 = arith.addf %546, %570 : vector<16x32xf32>
    %c11 = arith.constant 11 : index
    %c0_193 = arith.constant 0 : index
    %c0_194 = arith.constant 0 : index
    %572 = vector.load %arg7[%c11, %c0_193, %c0_194] : memref<21x32x32xbf16, #tpu.memory_space<vmem>>, vector<1x32x32xbf16>
    %573 = vector.shape_cast %572 : vector<1x32x32xbf16> to vector<32x32xbf16>
    %c58 = arith.constant 58 : index
    %c0_195 = arith.constant 0 : index
    %574 = vector.load %arg10[%c58, %c0_195] : memref<79x128xf32, #tpu.memory_space<vmem>>, vector<1x32xf32>
    %575 = arith.truncf %571 : vector<16x32xf32> to vector<16x32xbf16>
    %cst_196 = arith.constant dense<0.000000e+00> : vector<16x32xf32>
    %576 = tpu.matmul %575, %573, %cst_196 {dimension_numbers = #tpu.dot_dimension_numbers<[1], [0], [0], [1], [0, 0, 1, 1], [], []>} : vector<16x32xbf16>, vector<32x32xbf16>, vector<16x32xf32> -> vector<16x32xf32>
    %577 = vector.broadcast %574 : vector<1x32xf32> to vector<16x32xf32>
    %578 = arith.addf %576, %577 : vector<16x32xf32>
    %579 = arith.addf %423, %578 : vector<16x32xf32>
    %c59 = arith.constant 59 : index
    %c0_197 = arith.constant 0 : index
    %580 = vector.load %arg10[%c59, %c0_197] : memref<79x128xf32, #tpu.memory_space<vmem>>, vector<1x32xf32>
    %c60 = arith.constant 60 : index
    %c0_198 = arith.constant 0 : index
    %581 = vector.load %arg10[%c60, %c0_198] : memref<79x128xf32, #tpu.memory_space<vmem>>, vector<1x32xf32>
    %cst_199 = arith.constant dense<0.000000e+00> : vector<16xf32>
    %582 = vector.multi_reduction <add>, %579, %cst_199 [1] : vector<16x32xf32> to vector<16xf32>
    %583 = vector.shape_cast %582 : vector<16xf32> to vector<16x1xf32>
    %cst_200 = arith.constant 3.200000e+01 : f32
    %584 = vector.broadcast %cst_200 : f32 to vector<16x1xf32>
    %585 = arith.divf %583, %584 : vector<16x1xf32>
    %586 = vector.broadcast %585 : vector<16x1xf32> to vector<16x32xf32>
    %587 = arith.subf %579, %586 : vector<16x32xf32>
    %588 = arith.mulf %587, %587 : vector<16x32xf32>
    %cst_201 = arith.constant dense<0.000000e+00> : vector<16xf32>
    %589 = vector.multi_reduction <add>, %588, %cst_201 [1] : vector<16x32xf32> to vector<16xf32>
    %590 = vector.shape_cast %589 : vector<16xf32> to vector<16x1xf32>
    %cst_202 = arith.constant 3.200000e+01 : f32
    %591 = vector.broadcast %cst_202 : f32 to vector<16x1xf32>
    %592 = arith.divf %590, %591 : vector<16x1xf32>
    %cst_203 = arith.constant 9.99999974E-6 : f32
    %593 = vector.broadcast %cst_203 : f32 to vector<16x1xf32>
    %594 = arith.addf %592, %593 : vector<16x1xf32>
    %595 = math.rsqrt %594 : vector<16x1xf32>
    %596 = vector.broadcast %595 : vector<16x1xf32> to vector<16x32xf32>
    %597 = arith.mulf %587, %596 : vector<16x32xf32>
    %598 = vector.broadcast %580 : vector<1x32xf32> to vector<16x32xf32>
    %599 = arith.mulf %597, %598 : vector<16x32xf32>
    %600 = vector.broadcast %581 : vector<1x32xf32> to vector<16x32xf32>
    %601 = arith.addf %599, %600 : vector<16x32xf32>
    %c1_204 = arith.constant 1 : index
    %c0_205 = arith.constant 0 : index
    %c0_206 = arith.constant 0 : index
    %602 = vector.load %arg8[%c1_204, %c0_205, %c0_206] : memref<4x32x128xbf16, #tpu.memory_space<vmem>>, vector<1x32x128xbf16>
    %603 = vector.shape_cast %602 : vector<1x32x128xbf16> to vector<32x128xbf16>
    %c61 = arith.constant 61 : index
    %c0_207 = arith.constant 0 : index
    %604 = vector.load %arg10[%c61, %c0_207] : memref<79x128xf32, #tpu.memory_space<vmem>>, vector<1x128xf32>
    %605 = arith.truncf %601 : vector<16x32xf32> to vector<16x32xbf16>
    %cst_208 = arith.constant dense<0.000000e+00> : vector<16x128xf32>
    %606 = tpu.matmul %605, %603, %cst_208 {dimension_numbers = #tpu.dot_dimension_numbers<[1], [0], [0], [1], [0, 0, 1, 1], [], []>} : vector<16x32xbf16>, vector<32x128xbf16>, vector<16x128xf32> -> vector<16x128xf32>
    %607 = vector.broadcast %604 : vector<1x128xf32> to vector<16x128xf32>
    %608 = arith.addf %606, %607 : vector<16x128xf32>
    %cst_209 = arith.constant 5.000000e-01 : f32
    %609 = vector.broadcast %cst_209 : f32 to vector<16x128xf32>
    %610 = arith.mulf %609, %608 : vector<16x128xf32>
    %cst_210 = arith.constant 4.471500e-02 : f32
    %611 = vector.broadcast %cst_210 : f32 to vector<16x128xf32>
    %612 = arith.mulf %611, %608 : vector<16x128xf32>
    %613 = arith.mulf %612, %608 : vector<16x128xf32>
    %614 = arith.mulf %613, %608 : vector<16x128xf32>
    %615 = arith.addf %608, %614 : vector<16x128xf32>
    %cst_211 = arith.constant 0.797884583 : f32
    %616 = vector.broadcast %cst_211 : f32 to vector<16x128xf32>
    %617 = arith.mulf %616, %615 : vector<16x128xf32>
    %618 = math.tanh %617 : vector<16x128xf32>
    %cst_212 = arith.constant 1.000000e+00 : f32
    %619 = vector.broadcast %cst_212 : f32 to vector<16x128xf32>
    %620 = arith.addf %619, %618 : vector<16x128xf32>
    %621 = arith.mulf %610, %620 : vector<16x128xf32>
    %c1_213 = arith.constant 1 : index
    %c0_214 = arith.constant 0 : index
    %c0_215 = arith.constant 0 : index
    %622 = vector.load %arg9[%c1_213, %c0_214, %c0_215] : memref<4x128x32xbf16, #tpu.memory_space<vmem>>, vector<1x128x32xbf16>
    %623 = vector.shape_cast %622 : vector<1x128x32xbf16> to vector<128x32xbf16>
    %c62 = arith.constant 62 : index
    %c0_216 = arith.constant 0 : index
    %624 = vector.load %arg10[%c62, %c0_216] : memref<79x128xf32, #tpu.memory_space<vmem>>, vector<1x32xf32>
    %625 = arith.truncf %621 : vector<16x128xf32> to vector<16x128xbf16>
    %cst_217 = arith.constant dense<0.000000e+00> : vector<16x32xf32>
    %626 = tpu.matmul %625, %623, %cst_217 {dimension_numbers = #tpu.dot_dimension_numbers<[1], [0], [0], [1], [0, 0, 1, 1], [], []>} : vector<16x128xbf16>, vector<128x32xbf16>, vector<16x32xf32> -> vector<16x32xf32>
    %627 = vector.broadcast %624 : vector<1x32xf32> to vector<16x32xf32>
    %628 = arith.addf %626, %627 : vector<16x32xf32>
    %629 = arith.addf %579, %628 : vector<16x32xf32>
    %c63 = arith.constant 63 : index
    %c0_218 = arith.constant 0 : index
    %630 = vector.load %arg10[%c63, %c0_218] : memref<79x128xf32, #tpu.memory_space<vmem>>, vector<1x32xf32>
    %c64 = arith.constant 64 : index
    %c0_219 = arith.constant 0 : index
    %631 = vector.load %arg10[%c64, %c0_219] : memref<79x128xf32, #tpu.memory_space<vmem>>, vector<1x32xf32>
    %cst_220 = arith.constant dense<0.000000e+00> : vector<16xf32>
    %632 = vector.multi_reduction <add>, %629, %cst_220 [1] : vector<16x32xf32> to vector<16xf32>
    %633 = vector.shape_cast %632 : vector<16xf32> to vector<16x1xf32>
    %cst_221 = arith.constant 3.200000e+01 : f32
    %634 = vector.broadcast %cst_221 : f32 to vector<16x1xf32>
    %635 = arith.divf %633, %634 : vector<16x1xf32>
    %636 = vector.broadcast %635 : vector<16x1xf32> to vector<16x32xf32>
    %637 = arith.subf %629, %636 : vector<16x32xf32>
    %638 = arith.mulf %637, %637 : vector<16x32xf32>
    %cst_222 = arith.constant dense<0.000000e+00> : vector<16xf32>
    %639 = vector.multi_reduction <add>, %638, %cst_222 [1] : vector<16x32xf32> to vector<16xf32>
    %640 = vector.shape_cast %639 : vector<16xf32> to vector<16x1xf32>
    %cst_223 = arith.constant 3.200000e+01 : f32
    %641 = vector.broadcast %cst_223 : f32 to vector<16x1xf32>
    %642 = arith.divf %640, %641 : vector<16x1xf32>
    %cst_224 = arith.constant 9.99999974E-6 : f32
    %643 = vector.broadcast %cst_224 : f32 to vector<16x1xf32>
    %644 = arith.addf %642, %643 : vector<16x1xf32>
    %645 = math.rsqrt %644 : vector<16x1xf32>
    %646 = vector.broadcast %645 : vector<16x1xf32> to vector<16x32xf32>
    %647 = arith.mulf %637, %646 : vector<16x32xf32>
    %648 = vector.broadcast %630 : vector<1x32xf32> to vector<16x32xf32>
    %649 = arith.mulf %647, %648 : vector<16x32xf32>
    %650 = vector.broadcast %631 : vector<1x32xf32> to vector<16x32xf32>
    %651 = arith.addf %649, %650 : vector<16x32xf32>
    %c12 = arith.constant 12 : index
    %c0_225 = arith.constant 0 : index
    %c0_226 = arith.constant 0 : index
    %652 = vector.load %arg7[%c12, %c0_225, %c0_226] : memref<21x32x32xbf16, #tpu.memory_space<vmem>>, vector<1x32x32xbf16>
    %653 = vector.shape_cast %652 : vector<1x32x32xbf16> to vector<32x32xbf16>
    %c65 = arith.constant 65 : index
    %c0_227 = arith.constant 0 : index
    %654 = vector.load %arg10[%c65, %c0_227] : memref<79x128xf32, #tpu.memory_space<vmem>>, vector<1x32xf32>
    %655 = arith.truncf %651 : vector<16x32xf32> to vector<16x32xbf16>
    %cst_228 = arith.constant dense<0.000000e+00> : vector<16x32xf32>
    %656 = tpu.matmul %655, %653, %cst_228 {dimension_numbers = #tpu.dot_dimension_numbers<[1], [0], [0], [1], [0, 0, 1, 1], [], []>} : vector<16x32xbf16>, vector<32x32xbf16>, vector<16x32xf32> -> vector<16x32xf32>
    %657 = vector.broadcast %654 : vector<1x32xf32> to vector<16x32xf32>
    %658 = arith.addf %656, %657 : vector<16x32xf32>
    %c13 = arith.constant 13 : index
    %c0_229 = arith.constant 0 : index
    %c0_230 = arith.constant 0 : index
    %659 = vector.load %arg7[%c13, %c0_229, %c0_230] : memref<21x32x32xbf16, #tpu.memory_space<vmem>>, vector<1x32x32xbf16>
    %660 = vector.shape_cast %659 : vector<1x32x32xbf16> to vector<32x32xbf16>
    %c66 = arith.constant 66 : index
    %c0_231 = arith.constant 0 : index
    %661 = vector.load %arg10[%c66, %c0_231] : memref<79x128xf32, #tpu.memory_space<vmem>>, vector<1x32xf32>
    %662 = arith.truncf %651 : vector<16x32xf32> to vector<16x32xbf16>
    %cst_232 = arith.constant dense<0.000000e+00> : vector<16x32xf32>
    %663 = tpu.matmul %662, %660, %cst_232 {dimension_numbers = #tpu.dot_dimension_numbers<[1], [0], [0], [1], [0, 0, 1, 1], [], []>} : vector<16x32xbf16>, vector<32x32xbf16>, vector<16x32xf32> -> vector<16x32xf32>
    %664 = vector.broadcast %661 : vector<1x32xf32> to vector<16x32xf32>
    %665 = arith.addf %663, %664 : vector<16x32xf32>
    %c14 = arith.constant 14 : index
    %c0_233 = arith.constant 0 : index
    %c0_234 = arith.constant 0 : index
    %666 = vector.load %arg7[%c14, %c0_233, %c0_234] : memref<21x32x32xbf16, #tpu.memory_space<vmem>>, vector<1x32x32xbf16>
    %667 = vector.shape_cast %666 : vector<1x32x32xbf16> to vector<32x32xbf16>
    %c67 = arith.constant 67 : index
    %c0_235 = arith.constant 0 : index
    %668 = vector.load %arg10[%c67, %c0_235] : memref<79x128xf32, #tpu.memory_space<vmem>>, vector<1x32xf32>
    %669 = arith.truncf %651 : vector<16x32xf32> to vector<16x32xbf16>
    %cst_236 = arith.constant dense<0.000000e+00> : vector<16x32xf32>
    %670 = tpu.matmul %669, %667, %cst_236 {dimension_numbers = #tpu.dot_dimension_numbers<[1], [0], [0], [1], [0, 0, 1, 1], [], []>} : vector<16x32xbf16>, vector<32x32xbf16>, vector<16x32xf32> -> vector<16x32xf32>
    %671 = vector.broadcast %668 : vector<1x32xf32> to vector<16x32xf32>
    %672 = arith.addf %670, %671 : vector<16x32xf32>
    %673 = arith.truncf %658 : vector<16x32xf32> to vector<16x32xbf16>
    %674 = arith.truncf %665 : vector<16x32xf32> to vector<16x32xbf16>
    %675 = arith.truncf %672 : vector<16x32xf32> to vector<16x32xbf16>
    %c0_237 = arith.constant 0 : index
    %c0_238 = arith.constant 0 : index
    %676 = vector.load %arg4[%c0_237, %c0_238] : memref<16x16xf32, #tpu.memory_space<vmem>>, vector<16x16xf32>
    %cst_239 = arith.constant 0.000000e+00 : f32
    %677 = vector.broadcast %cst_239 : f32 to vector<16x32xf32>
    %c0_i32_240 = arith.constant 0 : i32
    %678 = arith.sitofp %c0_i32_240 : i32 to bf16
    %679 = vector.shape_cast %5 : vector<1x32xi1> to vector<1x32xi1>
    %680 = vector.broadcast %679 : vector<1x32xi1> to vector<16x32xi1>
    %681 = vector.broadcast %678 : bf16 to vector<16x32xbf16>
    %682 = arith.select %680, %673, %681 : vector<16x32xi1>, vector<16x32xbf16>
    %c0_i32_241 = arith.constant 0 : i32
    %683 = arith.sitofp %c0_i32_241 : i32 to bf16
    %684 = vector.shape_cast %5 : vector<1x32xi1> to vector<1x32xi1>
    %685 = vector.broadcast %684 : vector<1x32xi1> to vector<16x32xi1>
    %686 = vector.broadcast %683 : bf16 to vector<16x32xbf16>
    %687 = arith.select %685, %675, %686 : vector<16x32xi1>, vector<16x32xbf16>
    %cst_242 = arith.constant dense<0.000000e+00> : vector<16x16xf32>
    %688 = tpu.matmul %682, %674, %cst_242 {dimension_numbers = #tpu.dot_dimension_numbers<[1], [1], [0], [0], [0, 0, 1, 0], [], []>} : vector<16x32xbf16>, vector<16x32xbf16>, vector<16x16xf32> -> vector<16x16xf32>
    %689 = arith.addf %688, %676 : vector<16x16xf32>
    %cst_243 = arith.constant dense<0xFF800000> : vector<16xf32>
    %690 = vector.multi_reduction <maximumf>, %689, %cst_243 [1] : vector<16x16xf32> to vector<16xf32>
    %691 = vector.shape_cast %690 : vector<16xf32> to vector<16x1xf32>
    %692 = vector.broadcast %691 : vector<16x1xf32> to vector<16x16xf32>
    %693 = arith.subf %689, %692 : vector<16x16xf32>
    %694 = math.exp %693 : vector<16x16xf32>
    %cst_244 = arith.constant dense<0.000000e+00> : vector<16xf32>
    %695 = vector.multi_reduction <add>, %694, %cst_244 [1] : vector<16x16xf32> to vector<16xf32>
    %696 = vector.shape_cast %695 : vector<16xf32> to vector<16x1xf32>
    %697 = tpu.reciprocal %696 {approx = true} : vector<16x1xf32> -> vector<16x1xf32>
    %698 = vector.broadcast %697 : vector<16x1xf32> to vector<16x16xf32>
    %699 = arith.mulf %694, %698 : vector<16x16xf32>
    %700 = arith.truncf %699 : vector<16x16xf32> to vector<16x16xbf16>
    %cst_245 = arith.constant dense<0.000000e+00> : vector<16x32xf32>
    %701 = tpu.matmul %700, %687, %cst_245 {dimension_numbers = #tpu.dot_dimension_numbers<[1], [0], [0], [1], [0, 0, 1, 1], [], []>} : vector<16x16xbf16>, vector<16x32xbf16>, vector<16x32xf32> -> vector<16x32xf32>
    %702 = arith.addf %677, %701 : vector<16x32xf32>
    %c0_i32_246 = arith.constant 0 : i32
    %703 = arith.sitofp %c0_i32_246 : i32 to bf16
    %704 = vector.shape_cast %10 : vector<1x32xi1> to vector<1x32xi1>
    %705 = vector.broadcast %704 : vector<1x32xi1> to vector<16x32xi1>
    %706 = vector.broadcast %703 : bf16 to vector<16x32xbf16>
    %707 = arith.select %705, %673, %706 : vector<16x32xi1>, vector<16x32xbf16>
    %c0_i32_247 = arith.constant 0 : i32
    %708 = arith.sitofp %c0_i32_247 : i32 to bf16
    %709 = vector.shape_cast %10 : vector<1x32xi1> to vector<1x32xi1>
    %710 = vector.broadcast %709 : vector<1x32xi1> to vector<16x32xi1>
    %711 = vector.broadcast %708 : bf16 to vector<16x32xbf16>
    %712 = arith.select %710, %675, %711 : vector<16x32xi1>, vector<16x32xbf16>
    %cst_248 = arith.constant dense<0.000000e+00> : vector<16x16xf32>
    %713 = tpu.matmul %707, %674, %cst_248 {dimension_numbers = #tpu.dot_dimension_numbers<[1], [1], [0], [0], [0, 0, 1, 0], [], []>} : vector<16x32xbf16>, vector<16x32xbf16>, vector<16x16xf32> -> vector<16x16xf32>
    %714 = arith.addf %713, %676 : vector<16x16xf32>
    %cst_249 = arith.constant dense<0xFF800000> : vector<16xf32>
    %715 = vector.multi_reduction <maximumf>, %714, %cst_249 [1] : vector<16x16xf32> to vector<16xf32>
    %716 = vector.shape_cast %715 : vector<16xf32> to vector<16x1xf32>
    %717 = vector.broadcast %716 : vector<16x1xf32> to vector<16x16xf32>
    %718 = arith.subf %714, %717 : vector<16x16xf32>
    %719 = math.exp %718 : vector<16x16xf32>
    %cst_250 = arith.constant dense<0.000000e+00> : vector<16xf32>
    %720 = vector.multi_reduction <add>, %719, %cst_250 [1] : vector<16x16xf32> to vector<16xf32>
    %721 = vector.shape_cast %720 : vector<16xf32> to vector<16x1xf32>
    %722 = tpu.reciprocal %721 {approx = true} : vector<16x1xf32> -> vector<16x1xf32>
    %723 = vector.broadcast %722 : vector<16x1xf32> to vector<16x16xf32>
    %724 = arith.mulf %719, %723 : vector<16x16xf32>
    %725 = arith.truncf %724 : vector<16x16xf32> to vector<16x16xbf16>
    %cst_251 = arith.constant dense<0.000000e+00> : vector<16x32xf32>
    %726 = tpu.matmul %725, %712, %cst_251 {dimension_numbers = #tpu.dot_dimension_numbers<[1], [0], [0], [1], [0, 0, 1, 1], [], []>} : vector<16x16xbf16>, vector<16x32xbf16>, vector<16x32xf32> -> vector<16x32xf32>
    %727 = arith.addf %702, %726 : vector<16x32xf32>
    %c0_i32_252 = arith.constant 0 : i32
    %728 = arith.sitofp %c0_i32_252 : i32 to bf16
    %729 = vector.shape_cast %15 : vector<1x32xi1> to vector<1x32xi1>
    %730 = vector.broadcast %729 : vector<1x32xi1> to vector<16x32xi1>
    %731 = vector.broadcast %728 : bf16 to vector<16x32xbf16>
    %732 = arith.select %730, %673, %731 : vector<16x32xi1>, vector<16x32xbf16>
    %c0_i32_253 = arith.constant 0 : i32
    %733 = arith.sitofp %c0_i32_253 : i32 to bf16
    %734 = vector.shape_cast %15 : vector<1x32xi1> to vector<1x32xi1>
    %735 = vector.broadcast %734 : vector<1x32xi1> to vector<16x32xi1>
    %736 = vector.broadcast %733 : bf16 to vector<16x32xbf16>
    %737 = arith.select %735, %675, %736 : vector<16x32xi1>, vector<16x32xbf16>
    %cst_254 = arith.constant dense<0.000000e+00> : vector<16x16xf32>
    %738 = tpu.matmul %732, %674, %cst_254 {dimension_numbers = #tpu.dot_dimension_numbers<[1], [1], [0], [0], [0, 0, 1, 0], [], []>} : vector<16x32xbf16>, vector<16x32xbf16>, vector<16x16xf32> -> vector<16x16xf32>
    %739 = arith.addf %738, %676 : vector<16x16xf32>
    %cst_255 = arith.constant dense<0xFF800000> : vector<16xf32>
    %740 = vector.multi_reduction <maximumf>, %739, %cst_255 [1] : vector<16x16xf32> to vector<16xf32>
    %741 = vector.shape_cast %740 : vector<16xf32> to vector<16x1xf32>
    %742 = vector.broadcast %741 : vector<16x1xf32> to vector<16x16xf32>
    %743 = arith.subf %739, %742 : vector<16x16xf32>
    %744 = math.exp %743 : vector<16x16xf32>
    %cst_256 = arith.constant dense<0.000000e+00> : vector<16xf32>
    %745 = vector.multi_reduction <add>, %744, %cst_256 [1] : vector<16x16xf32> to vector<16xf32>
    %746 = vector.shape_cast %745 : vector<16xf32> to vector<16x1xf32>
    %747 = tpu.reciprocal %746 {approx = true} : vector<16x1xf32> -> vector<16x1xf32>
    %748 = vector.broadcast %747 : vector<16x1xf32> to vector<16x16xf32>
    %749 = arith.mulf %744, %748 : vector<16x16xf32>
    %750 = arith.truncf %749 : vector<16x16xf32> to vector<16x16xbf16>
    %cst_257 = arith.constant dense<0.000000e+00> : vector<16x32xf32>
    %751 = tpu.matmul %750, %737, %cst_257 {dimension_numbers = #tpu.dot_dimension_numbers<[1], [0], [0], [1], [0, 0, 1, 1], [], []>} : vector<16x16xbf16>, vector<16x32xbf16>, vector<16x32xf32> -> vector<16x32xf32>
    %752 = arith.addf %727, %751 : vector<16x32xf32>
    %c0_i32_258 = arith.constant 0 : i32
    %753 = arith.sitofp %c0_i32_258 : i32 to bf16
    %754 = vector.shape_cast %20 : vector<1x32xi1> to vector<1x32xi1>
    %755 = vector.broadcast %754 : vector<1x32xi1> to vector<16x32xi1>
    %756 = vector.broadcast %753 : bf16 to vector<16x32xbf16>
    %757 = arith.select %755, %673, %756 : vector<16x32xi1>, vector<16x32xbf16>
    %c0_i32_259 = arith.constant 0 : i32
    %758 = arith.sitofp %c0_i32_259 : i32 to bf16
    %759 = vector.shape_cast %20 : vector<1x32xi1> to vector<1x32xi1>
    %760 = vector.broadcast %759 : vector<1x32xi1> to vector<16x32xi1>
    %761 = vector.broadcast %758 : bf16 to vector<16x32xbf16>
    %762 = arith.select %760, %675, %761 : vector<16x32xi1>, vector<16x32xbf16>
    %cst_260 = arith.constant dense<0.000000e+00> : vector<16x16xf32>
    %763 = tpu.matmul %757, %674, %cst_260 {dimension_numbers = #tpu.dot_dimension_numbers<[1], [1], [0], [0], [0, 0, 1, 0], [], []>} : vector<16x32xbf16>, vector<16x32xbf16>, vector<16x16xf32> -> vector<16x16xf32>
    %764 = arith.addf %763, %676 : vector<16x16xf32>
    %cst_261 = arith.constant dense<0xFF800000> : vector<16xf32>
    %765 = vector.multi_reduction <maximumf>, %764, %cst_261 [1] : vector<16x16xf32> to vector<16xf32>
    %766 = vector.shape_cast %765 : vector<16xf32> to vector<16x1xf32>
    %767 = vector.broadcast %766 : vector<16x1xf32> to vector<16x16xf32>
    %768 = arith.subf %764, %767 : vector<16x16xf32>
    %769 = math.exp %768 : vector<16x16xf32>
    %cst_262 = arith.constant dense<0.000000e+00> : vector<16xf32>
    %770 = vector.multi_reduction <add>, %769, %cst_262 [1] : vector<16x16xf32> to vector<16xf32>
    %771 = vector.shape_cast %770 : vector<16xf32> to vector<16x1xf32>
    %772 = tpu.reciprocal %771 {approx = true} : vector<16x1xf32> -> vector<16x1xf32>
    %773 = vector.broadcast %772 : vector<16x1xf32> to vector<16x16xf32>
    %774 = arith.mulf %769, %773 : vector<16x16xf32>
    %775 = arith.truncf %774 : vector<16x16xf32> to vector<16x16xbf16>
    %cst_263 = arith.constant dense<0.000000e+00> : vector<16x32xf32>
    %776 = tpu.matmul %775, %762, %cst_263 {dimension_numbers = #tpu.dot_dimension_numbers<[1], [0], [0], [1], [0, 0, 1, 1], [], []>} : vector<16x16xbf16>, vector<16x32xbf16>, vector<16x32xf32> -> vector<16x32xf32>
    %777 = arith.addf %752, %776 : vector<16x32xf32>
    %c15 = arith.constant 15 : index
    %c0_264 = arith.constant 0 : index
    %c0_265 = arith.constant 0 : index
    %778 = vector.load %arg7[%c15, %c0_264, %c0_265] : memref<21x32x32xbf16, #tpu.memory_space<vmem>>, vector<1x32x32xbf16>
    %779 = vector.shape_cast %778 : vector<1x32x32xbf16> to vector<32x32xbf16>
    %c68 = arith.constant 68 : index
    %c0_266 = arith.constant 0 : index
    %780 = vector.load %arg10[%c68, %c0_266] : memref<79x128xf32, #tpu.memory_space<vmem>>, vector<1x32xf32>
    %781 = arith.truncf %777 : vector<16x32xf32> to vector<16x32xbf16>
    %cst_267 = arith.constant dense<0.000000e+00> : vector<16x32xf32>
    %782 = tpu.matmul %781, %779, %cst_267 {dimension_numbers = #tpu.dot_dimension_numbers<[1], [0], [0], [1], [0, 0, 1, 1], [], []>} : vector<16x32xbf16>, vector<32x32xbf16>, vector<16x32xf32> -> vector<16x32xf32>
    %783 = vector.broadcast %780 : vector<1x32xf32> to vector<16x32xf32>
    %784 = arith.addf %782, %783 : vector<16x32xf32>
    %785 = arith.addf %629, %784 : vector<16x32xf32>
    %c69 = arith.constant 69 : index
    %c0_268 = arith.constant 0 : index
    %786 = vector.load %arg10[%c69, %c0_268] : memref<79x128xf32, #tpu.memory_space<vmem>>, vector<1x32xf32>
    %c70 = arith.constant 70 : index
    %c0_269 = arith.constant 0 : index
    %787 = vector.load %arg10[%c70, %c0_269] : memref<79x128xf32, #tpu.memory_space<vmem>>, vector<1x32xf32>
    %cst_270 = arith.constant dense<0.000000e+00> : vector<16xf32>
    %788 = vector.multi_reduction <add>, %785, %cst_270 [1] : vector<16x32xf32> to vector<16xf32>
    %789 = vector.shape_cast %788 : vector<16xf32> to vector<16x1xf32>
    %cst_271 = arith.constant 3.200000e+01 : f32
    %790 = vector.broadcast %cst_271 : f32 to vector<16x1xf32>
    %791 = arith.divf %789, %790 : vector<16x1xf32>
    %792 = vector.broadcast %791 : vector<16x1xf32> to vector<16x32xf32>
    %793 = arith.subf %785, %792 : vector<16x32xf32>
    %794 = arith.mulf %793, %793 : vector<16x32xf32>
    %cst_272 = arith.constant dense<0.000000e+00> : vector<16xf32>
    %795 = vector.multi_reduction <add>, %794, %cst_272 [1] : vector<16x32xf32> to vector<16xf32>
    %796 = vector.shape_cast %795 : vector<16xf32> to vector<16x1xf32>
    %cst_273 = arith.constant 3.200000e+01 : f32
    %797 = vector.broadcast %cst_273 : f32 to vector<16x1xf32>
    %798 = arith.divf %796, %797 : vector<16x1xf32>
    %cst_274 = arith.constant 9.99999974E-6 : f32
    %799 = vector.broadcast %cst_274 : f32 to vector<16x1xf32>
    %800 = arith.addf %798, %799 : vector<16x1xf32>
    %801 = math.rsqrt %800 : vector<16x1xf32>
    %802 = vector.broadcast %801 : vector<16x1xf32> to vector<16x32xf32>
    %803 = arith.mulf %793, %802 : vector<16x32xf32>
    %804 = vector.broadcast %786 : vector<1x32xf32> to vector<16x32xf32>
    %805 = arith.mulf %803, %804 : vector<16x32xf32>
    %806 = vector.broadcast %787 : vector<1x32xf32> to vector<16x32xf32>
    %807 = arith.addf %805, %806 : vector<16x32xf32>
    %c16_275 = arith.constant 16 : index
    %c0_276 = arith.constant 0 : index
    %c0_277 = arith.constant 0 : index
    %808 = vector.load %arg7[%c16_275, %c0_276, %c0_277] : memref<21x32x32xbf16, #tpu.memory_space<vmem>>, vector<1x32x32xbf16>
    %809 = vector.shape_cast %808 : vector<1x32x32xbf16> to vector<32x32xbf16>
    %c71 = arith.constant 71 : index
    %c0_278 = arith.constant 0 : index
    %810 = vector.load %arg10[%c71, %c0_278] : memref<79x128xf32, #tpu.memory_space<vmem>>, vector<1x32xf32>
    %811 = arith.truncf %807 : vector<16x32xf32> to vector<16x32xbf16>
    %cst_279 = arith.constant dense<0.000000e+00> : vector<16x32xf32>
    %812 = tpu.matmul %811, %809, %cst_279 {dimension_numbers = #tpu.dot_dimension_numbers<[1], [0], [0], [1], [0, 0, 1, 1], [], []>} : vector<16x32xbf16>, vector<32x32xbf16>, vector<16x32xf32> -> vector<16x32xf32>
    %813 = vector.broadcast %810 : vector<1x32xf32> to vector<16x32xf32>
    %814 = arith.addf %812, %813 : vector<16x32xf32>
    %c17 = arith.constant 17 : index
    %c0_280 = arith.constant 0 : index
    %c0_281 = arith.constant 0 : index
    %815 = vector.load %arg7[%c17, %c0_280, %c0_281] : memref<21x32x32xbf16, #tpu.memory_space<vmem>>, vector<1x32x32xbf16>
    %816 = vector.shape_cast %815 : vector<1x32x32xbf16> to vector<32x32xbf16>
    %c72 = arith.constant 72 : index
    %c0_282 = arith.constant 0 : index
    %817 = vector.load %arg10[%c72, %c0_282] : memref<79x128xf32, #tpu.memory_space<vmem>>, vector<1x32xf32>
    %818 = arith.truncf %255 : vector<16x32xf32> to vector<16x32xbf16>
    %cst_283 = arith.constant dense<0.000000e+00> : vector<16x32xf32>
    %819 = tpu.matmul %818, %816, %cst_283 {dimension_numbers = #tpu.dot_dimension_numbers<[1], [0], [0], [1], [0, 0, 1, 1], [], []>} : vector<16x32xbf16>, vector<32x32xbf16>, vector<16x32xf32> -> vector<16x32xf32>
    %820 = vector.broadcast %817 : vector<1x32xf32> to vector<16x32xf32>
    %821 = arith.addf %819, %820 : vector<16x32xf32>
    %c18 = arith.constant 18 : index
    %c0_284 = arith.constant 0 : index
    %c0_285 = arith.constant 0 : index
    %822 = vector.load %arg7[%c18, %c0_284, %c0_285] : memref<21x32x32xbf16, #tpu.memory_space<vmem>>, vector<1x32x32xbf16>
    %823 = vector.shape_cast %822 : vector<1x32x32xbf16> to vector<32x32xbf16>
    %c73 = arith.constant 73 : index
    %c0_286 = arith.constant 0 : index
    %824 = vector.load %arg10[%c73, %c0_286] : memref<79x128xf32, #tpu.memory_space<vmem>>, vector<1x32xf32>
    %825 = arith.truncf %255 : vector<16x32xf32> to vector<16x32xbf16>
    %cst_287 = arith.constant dense<0.000000e+00> : vector<16x32xf32>
    %826 = tpu.matmul %825, %823, %cst_287 {dimension_numbers = #tpu.dot_dimension_numbers<[1], [0], [0], [1], [0, 0, 1, 1], [], []>} : vector<16x32xbf16>, vector<32x32xbf16>, vector<16x32xf32> -> vector<16x32xf32>
    %827 = vector.broadcast %824 : vector<1x32xf32> to vector<16x32xf32>
    %828 = arith.addf %826, %827 : vector<16x32xf32>
    %829 = arith.truncf %814 : vector<16x32xf32> to vector<16x32xbf16>
    %830 = arith.truncf %821 : vector<16x32xf32> to vector<16x32xbf16>
    %831 = arith.truncf %828 : vector<16x32xf32> to vector<16x32xbf16>
    %c0_288 = arith.constant 0 : index
    %c0_289 = arith.constant 0 : index
    %832 = vector.load %arg5[%c0_288, %c0_289] : memref<16x16xf32, #tpu.memory_space<vmem>>, vector<16x16xf32>
    %cst_290 = arith.constant 0.000000e+00 : f32
    %833 = vector.broadcast %cst_290 : f32 to vector<16x32xf32>
    %c0_i32_291 = arith.constant 0 : i32
    %834 = arith.sitofp %c0_i32_291 : i32 to bf16
    %835 = vector.shape_cast %5 : vector<1x32xi1> to vector<1x32xi1>
    %836 = vector.broadcast %835 : vector<1x32xi1> to vector<16x32xi1>
    %837 = vector.broadcast %834 : bf16 to vector<16x32xbf16>
    %838 = arith.select %836, %829, %837 : vector<16x32xi1>, vector<16x32xbf16>
    %c0_i32_292 = arith.constant 0 : i32
    %839 = arith.sitofp %c0_i32_292 : i32 to bf16
    %840 = vector.shape_cast %5 : vector<1x32xi1> to vector<1x32xi1>
    %841 = vector.broadcast %840 : vector<1x32xi1> to vector<16x32xi1>
    %842 = vector.broadcast %839 : bf16 to vector<16x32xbf16>
    %843 = arith.select %841, %831, %842 : vector<16x32xi1>, vector<16x32xbf16>
    %cst_293 = arith.constant dense<0.000000e+00> : vector<16x16xf32>
    %844 = tpu.matmul %838, %830, %cst_293 {dimension_numbers = #tpu.dot_dimension_numbers<[1], [1], [0], [0], [0, 0, 1, 0], [], []>} : vector<16x32xbf16>, vector<16x32xbf16>, vector<16x16xf32> -> vector<16x16xf32>
    %845 = arith.addf %844, %832 : vector<16x16xf32>
    %cst_294 = arith.constant dense<0xFF800000> : vector<16xf32>
    %846 = vector.multi_reduction <maximumf>, %845, %cst_294 [1] : vector<16x16xf32> to vector<16xf32>
    %847 = vector.shape_cast %846 : vector<16xf32> to vector<16x1xf32>
    %848 = vector.broadcast %847 : vector<16x1xf32> to vector<16x16xf32>
    %849 = arith.subf %845, %848 : vector<16x16xf32>
    %850 = math.exp %849 : vector<16x16xf32>
    %cst_295 = arith.constant dense<0.000000e+00> : vector<16xf32>
    %851 = vector.multi_reduction <add>, %850, %cst_295 [1] : vector<16x16xf32> to vector<16xf32>
    %852 = vector.shape_cast %851 : vector<16xf32> to vector<16x1xf32>
    %853 = tpu.reciprocal %852 {approx = true} : vector<16x1xf32> -> vector<16x1xf32>
    %854 = vector.broadcast %853 : vector<16x1xf32> to vector<16x16xf32>
    %855 = arith.mulf %850, %854 : vector<16x16xf32>
    %856 = arith.truncf %855 : vector<16x16xf32> to vector<16x16xbf16>
    %cst_296 = arith.constant dense<0.000000e+00> : vector<16x32xf32>
    %857 = tpu.matmul %856, %843, %cst_296 {dimension_numbers = #tpu.dot_dimension_numbers<[1], [0], [0], [1], [0, 0, 1, 1], [], []>} : vector<16x16xbf16>, vector<16x32xbf16>, vector<16x32xf32> -> vector<16x32xf32>
    %858 = arith.addf %833, %857 : vector<16x32xf32>
    %c0_i32_297 = arith.constant 0 : i32
    %859 = arith.sitofp %c0_i32_297 : i32 to bf16
    %860 = vector.shape_cast %10 : vector<1x32xi1> to vector<1x32xi1>
    %861 = vector.broadcast %860 : vector<1x32xi1> to vector<16x32xi1>
    %862 = vector.broadcast %859 : bf16 to vector<16x32xbf16>
    %863 = arith.select %861, %829, %862 : vector<16x32xi1>, vector<16x32xbf16>
    %c0_i32_298 = arith.constant 0 : i32
    %864 = arith.sitofp %c0_i32_298 : i32 to bf16
    %865 = vector.shape_cast %10 : vector<1x32xi1> to vector<1x32xi1>
    %866 = vector.broadcast %865 : vector<1x32xi1> to vector<16x32xi1>
    %867 = vector.broadcast %864 : bf16 to vector<16x32xbf16>
    %868 = arith.select %866, %831, %867 : vector<16x32xi1>, vector<16x32xbf16>
    %cst_299 = arith.constant dense<0.000000e+00> : vector<16x16xf32>
    %869 = tpu.matmul %863, %830, %cst_299 {dimension_numbers = #tpu.dot_dimension_numbers<[1], [1], [0], [0], [0, 0, 1, 0], [], []>} : vector<16x32xbf16>, vector<16x32xbf16>, vector<16x16xf32> -> vector<16x16xf32>
    %870 = arith.addf %869, %832 : vector<16x16xf32>
    %cst_300 = arith.constant dense<0xFF800000> : vector<16xf32>
    %871 = vector.multi_reduction <maximumf>, %870, %cst_300 [1] : vector<16x16xf32> to vector<16xf32>
    %872 = vector.shape_cast %871 : vector<16xf32> to vector<16x1xf32>
    %873 = vector.broadcast %872 : vector<16x1xf32> to vector<16x16xf32>
    %874 = arith.subf %870, %873 : vector<16x16xf32>
    %875 = math.exp %874 : vector<16x16xf32>
    %cst_301 = arith.constant dense<0.000000e+00> : vector<16xf32>
    %876 = vector.multi_reduction <add>, %875, %cst_301 [1] : vector<16x16xf32> to vector<16xf32>
    %877 = vector.shape_cast %876 : vector<16xf32> to vector<16x1xf32>
    %878 = tpu.reciprocal %877 {approx = true} : vector<16x1xf32> -> vector<16x1xf32>
    %879 = vector.broadcast %878 : vector<16x1xf32> to vector<16x16xf32>
    %880 = arith.mulf %875, %879 : vector<16x16xf32>
    %881 = arith.truncf %880 : vector<16x16xf32> to vector<16x16xbf16>
    %cst_302 = arith.constant dense<0.000000e+00> : vector<16x32xf32>
    %882 = tpu.matmul %881, %868, %cst_302 {dimension_numbers = #tpu.dot_dimension_numbers<[1], [0], [0], [1], [0, 0, 1, 1], [], []>} : vector<16x16xbf16>, vector<16x32xbf16>, vector<16x32xf32> -> vector<16x32xf32>
    %883 = arith.addf %858, %882 : vector<16x32xf32>
    %c0_i32_303 = arith.constant 0 : i32
    %884 = arith.sitofp %c0_i32_303 : i32 to bf16
    %885 = vector.shape_cast %15 : vector<1x32xi1> to vector<1x32xi1>
    %886 = vector.broadcast %885 : vector<1x32xi1> to vector<16x32xi1>
    %887 = vector.broadcast %884 : bf16 to vector<16x32xbf16>
    %888 = arith.select %886, %829, %887 : vector<16x32xi1>, vector<16x32xbf16>
    %c0_i32_304 = arith.constant 0 : i32
    %889 = arith.sitofp %c0_i32_304 : i32 to bf16
    %890 = vector.shape_cast %15 : vector<1x32xi1> to vector<1x32xi1>
    %891 = vector.broadcast %890 : vector<1x32xi1> to vector<16x32xi1>
    %892 = vector.broadcast %889 : bf16 to vector<16x32xbf16>
    %893 = arith.select %891, %831, %892 : vector<16x32xi1>, vector<16x32xbf16>
    %cst_305 = arith.constant dense<0.000000e+00> : vector<16x16xf32>
    %894 = tpu.matmul %888, %830, %cst_305 {dimension_numbers = #tpu.dot_dimension_numbers<[1], [1], [0], [0], [0, 0, 1, 0], [], []>} : vector<16x32xbf16>, vector<16x32xbf16>, vector<16x16xf32> -> vector<16x16xf32>
    %895 = arith.addf %894, %832 : vector<16x16xf32>
    %cst_306 = arith.constant dense<0xFF800000> : vector<16xf32>
    %896 = vector.multi_reduction <maximumf>, %895, %cst_306 [1] : vector<16x16xf32> to vector<16xf32>
    %897 = vector.shape_cast %896 : vector<16xf32> to vector<16x1xf32>
    %898 = vector.broadcast %897 : vector<16x1xf32> to vector<16x16xf32>
    %899 = arith.subf %895, %898 : vector<16x16xf32>
    %900 = math.exp %899 : vector<16x16xf32>
    %cst_307 = arith.constant dense<0.000000e+00> : vector<16xf32>
    %901 = vector.multi_reduction <add>, %900, %cst_307 [1] : vector<16x16xf32> to vector<16xf32>
    %902 = vector.shape_cast %901 : vector<16xf32> to vector<16x1xf32>
    %903 = tpu.reciprocal %902 {approx = true} : vector<16x1xf32> -> vector<16x1xf32>
    %904 = vector.broadcast %903 : vector<16x1xf32> to vector<16x16xf32>
    %905 = arith.mulf %900, %904 : vector<16x16xf32>
    %906 = arith.truncf %905 : vector<16x16xf32> to vector<16x16xbf16>
    %cst_308 = arith.constant dense<0.000000e+00> : vector<16x32xf32>
    %907 = tpu.matmul %906, %893, %cst_308 {dimension_numbers = #tpu.dot_dimension_numbers<[1], [0], [0], [1], [0, 0, 1, 1], [], []>} : vector<16x16xbf16>, vector<16x32xbf16>, vector<16x32xf32> -> vector<16x32xf32>
    %908 = arith.addf %883, %907 : vector<16x32xf32>
    %c0_i32_309 = arith.constant 0 : i32
    %909 = arith.sitofp %c0_i32_309 : i32 to bf16
    %910 = vector.shape_cast %20 : vector<1x32xi1> to vector<1x32xi1>
    %911 = vector.broadcast %910 : vector<1x32xi1> to vector<16x32xi1>
    %912 = vector.broadcast %909 : bf16 to vector<16x32xbf16>
    %913 = arith.select %911, %829, %912 : vector<16x32xi1>, vector<16x32xbf16>
    %c0_i32_310 = arith.constant 0 : i32
    %914 = arith.sitofp %c0_i32_310 : i32 to bf16
    %915 = vector.shape_cast %20 : vector<1x32xi1> to vector<1x32xi1>
    %916 = vector.broadcast %915 : vector<1x32xi1> to vector<16x32xi1>
    %917 = vector.broadcast %914 : bf16 to vector<16x32xbf16>
    %918 = arith.select %916, %831, %917 : vector<16x32xi1>, vector<16x32xbf16>
    %cst_311 = arith.constant dense<0.000000e+00> : vector<16x16xf32>
    %919 = tpu.matmul %913, %830, %cst_311 {dimension_numbers = #tpu.dot_dimension_numbers<[1], [1], [0], [0], [0, 0, 1, 0], [], []>} : vector<16x32xbf16>, vector<16x32xbf16>, vector<16x16xf32> -> vector<16x16xf32>
    %920 = arith.addf %919, %832 : vector<16x16xf32>
    %cst_312 = arith.constant dense<0xFF800000> : vector<16xf32>
    %921 = vector.multi_reduction <maximumf>, %920, %cst_312 [1] : vector<16x16xf32> to vector<16xf32>
    %922 = vector.shape_cast %921 : vector<16xf32> to vector<16x1xf32>
    %923 = vector.broadcast %922 : vector<16x1xf32> to vector<16x16xf32>
    %924 = arith.subf %920, %923 : vector<16x16xf32>
    %925 = math.exp %924 : vector<16x16xf32>
    %cst_313 = arith.constant dense<0.000000e+00> : vector<16xf32>
    %926 = vector.multi_reduction <add>, %925, %cst_313 [1] : vector<16x16xf32> to vector<16xf32>
    %927 = vector.shape_cast %926 : vector<16xf32> to vector<16x1xf32>
    %928 = tpu.reciprocal %927 {approx = true} : vector<16x1xf32> -> vector<16x1xf32>
    %929 = vector.broadcast %928 : vector<16x1xf32> to vector<16x16xf32>
    %930 = arith.mulf %925, %929 : vector<16x16xf32>
    %931 = arith.truncf %930 : vector<16x16xf32> to vector<16x16xbf16>
    %cst_314 = arith.constant dense<0.000000e+00> : vector<16x32xf32>
    %932 = tpu.matmul %931, %918, %cst_314 {dimension_numbers = #tpu.dot_dimension_numbers<[1], [0], [0], [1], [0, 0, 1, 1], [], []>} : vector<16x16xbf16>, vector<16x32xbf16>, vector<16x32xf32> -> vector<16x32xf32>
    %933 = arith.addf %908, %932 : vector<16x32xf32>
    %c19 = arith.constant 19 : index
    %c0_315 = arith.constant 0 : index
    %c0_316 = arith.constant 0 : index
    %934 = vector.load %arg7[%c19, %c0_315, %c0_316] : memref<21x32x32xbf16, #tpu.memory_space<vmem>>, vector<1x32x32xbf16>
    %935 = vector.shape_cast %934 : vector<1x32x32xbf16> to vector<32x32xbf16>
    %c74 = arith.constant 74 : index
    %c0_317 = arith.constant 0 : index
    %936 = vector.load %arg10[%c74, %c0_317] : memref<79x128xf32, #tpu.memory_space<vmem>>, vector<1x32xf32>
    %937 = arith.truncf %933 : vector<16x32xf32> to vector<16x32xbf16>
    %cst_318 = arith.constant dense<0.000000e+00> : vector<16x32xf32>
    %938 = tpu.matmul %937, %935, %cst_318 {dimension_numbers = #tpu.dot_dimension_numbers<[1], [0], [0], [1], [0, 0, 1, 1], [], []>} : vector<16x32xbf16>, vector<32x32xbf16>, vector<16x32xf32> -> vector<16x32xf32>
    %939 = vector.broadcast %936 : vector<1x32xf32> to vector<16x32xf32>
    %940 = arith.addf %938, %939 : vector<16x32xf32>
    %941 = arith.addf %785, %940 : vector<16x32xf32>
    %c75 = arith.constant 75 : index
    %c0_319 = arith.constant 0 : index
    %942 = vector.load %arg10[%c75, %c0_319] : memref<79x128xf32, #tpu.memory_space<vmem>>, vector<1x32xf32>
    %c76 = arith.constant 76 : index
    %c0_320 = arith.constant 0 : index
    %943 = vector.load %arg10[%c76, %c0_320] : memref<79x128xf32, #tpu.memory_space<vmem>>, vector<1x32xf32>
    %cst_321 = arith.constant dense<0.000000e+00> : vector<16xf32>
    %944 = vector.multi_reduction <add>, %941, %cst_321 [1] : vector<16x32xf32> to vector<16xf32>
    %945 = vector.shape_cast %944 : vector<16xf32> to vector<16x1xf32>
    %cst_322 = arith.constant 3.200000e+01 : f32
    %946 = vector.broadcast %cst_322 : f32 to vector<16x1xf32>
    %947 = arith.divf %945, %946 : vector<16x1xf32>
    %948 = vector.broadcast %947 : vector<16x1xf32> to vector<16x32xf32>
    %949 = arith.subf %941, %948 : vector<16x32xf32>
    %950 = arith.mulf %949, %949 : vector<16x32xf32>
    %cst_323 = arith.constant dense<0.000000e+00> : vector<16xf32>
    %951 = vector.multi_reduction <add>, %950, %cst_323 [1] : vector<16x32xf32> to vector<16xf32>
    %952 = vector.shape_cast %951 : vector<16xf32> to vector<16x1xf32>
    %cst_324 = arith.constant 3.200000e+01 : f32
    %953 = vector.broadcast %cst_324 : f32 to vector<16x1xf32>
    %954 = arith.divf %952, %953 : vector<16x1xf32>
    %cst_325 = arith.constant 9.99999974E-6 : f32
    %955 = vector.broadcast %cst_325 : f32 to vector<16x1xf32>
    %956 = arith.addf %954, %955 : vector<16x1xf32>
    %957 = math.rsqrt %956 : vector<16x1xf32>
    %958 = vector.broadcast %957 : vector<16x1xf32> to vector<16x32xf32>
    %959 = arith.mulf %949, %958 : vector<16x32xf32>
    %960 = vector.broadcast %942 : vector<1x32xf32> to vector<16x32xf32>
    %961 = arith.mulf %959, %960 : vector<16x32xf32>
    %962 = vector.broadcast %943 : vector<1x32xf32> to vector<16x32xf32>
    %963 = arith.addf %961, %962 : vector<16x32xf32>
    %c2_326 = arith.constant 2 : index
    %c0_327 = arith.constant 0 : index
    %c0_328 = arith.constant 0 : index
    %964 = vector.load %arg8[%c2_326, %c0_327, %c0_328] : memref<4x32x128xbf16, #tpu.memory_space<vmem>>, vector<1x32x128xbf16>
    %965 = vector.shape_cast %964 : vector<1x32x128xbf16> to vector<32x128xbf16>
    %c77 = arith.constant 77 : index
    %c0_329 = arith.constant 0 : index
    %966 = vector.load %arg10[%c77, %c0_329] : memref<79x128xf32, #tpu.memory_space<vmem>>, vector<1x128xf32>
    %967 = arith.truncf %963 : vector<16x32xf32> to vector<16x32xbf16>
    %cst_330 = arith.constant dense<0.000000e+00> : vector<16x128xf32>
    %968 = tpu.matmul %967, %965, %cst_330 {dimension_numbers = #tpu.dot_dimension_numbers<[1], [0], [0], [1], [0, 0, 1, 1], [], []>} : vector<16x32xbf16>, vector<32x128xbf16>, vector<16x128xf32> -> vector<16x128xf32>
    %969 = vector.broadcast %966 : vector<1x128xf32> to vector<16x128xf32>
    %970 = arith.addf %968, %969 : vector<16x128xf32>
    %cst_331 = arith.constant 5.000000e-01 : f32
    %971 = vector.broadcast %cst_331 : f32 to vector<16x128xf32>
    %972 = arith.mulf %971, %970 : vector<16x128xf32>
    %cst_332 = arith.constant 4.471500e-02 : f32
    %973 = vector.broadcast %cst_332 : f32 to vector<16x128xf32>
    %974 = arith.mulf %973, %970 : vector<16x128xf32>
    %975 = arith.mulf %974, %970 : vector<16x128xf32>
    %976 = arith.mulf %975, %970 : vector<16x128xf32>
    %977 = arith.addf %970, %976 : vector<16x128xf32>
    %cst_333 = arith.constant 0.797884583 : f32
    %978 = vector.broadcast %cst_333 : f32 to vector<16x128xf32>
    %979 = arith.mulf %978, %977 : vector<16x128xf32>
    %980 = math.tanh %979 : vector<16x128xf32>
    %cst_334 = arith.constant 1.000000e+00 : f32
    %981 = vector.broadcast %cst_334 : f32 to vector<16x128xf32>
    %982 = arith.addf %981, %980 : vector<16x128xf32>
    %983 = arith.mulf %972, %982 : vector<16x128xf32>
    %c2_335 = arith.constant 2 : index
    %c0_336 = arith.constant 0 : index
    %c0_337 = arith.constant 0 : index
    %984 = vector.load %arg9[%c2_335, %c0_336, %c0_337] : memref<4x128x32xbf16, #tpu.memory_space<vmem>>, vector<1x128x32xbf16>
    %985 = vector.shape_cast %984 : vector<1x128x32xbf16> to vector<128x32xbf16>
    %c78 = arith.constant 78 : index
    %c0_338 = arith.constant 0 : index
    %986 = vector.load %arg10[%c78, %c0_338] : memref<79x128xf32, #tpu.memory_space<vmem>>, vector<1x32xf32>
    %987 = arith.truncf %983 : vector<16x128xf32> to vector<16x128xbf16>
    %cst_339 = arith.constant dense<0.000000e+00> : vector<16x32xf32>
    %988 = tpu.matmul %987, %985, %cst_339 {dimension_numbers = #tpu.dot_dimension_numbers<[1], [0], [0], [1], [0, 0, 1, 1], [], []>} : vector<16x128xbf16>, vector<128x32xbf16>, vector<16x32xf32> -> vector<16x32xf32>
    %989 = vector.broadcast %986 : vector<1x32xf32> to vector<16x32xf32>
    %990 = arith.addf %988, %989 : vector<16x32xf32>
    %991 = arith.addf %941, %990 : vector<16x32xf32>
    %c35 = arith.constant 35 : index
    %c0_340 = arith.constant 0 : index
    %992 = vector.load %arg10[%c35, %c0_340] : memref<79x128xf32, #tpu.memory_space<vmem>>, vector<1x32xf32>
    %c36 = arith.constant 36 : index
    %c0_341 = arith.constant 0 : index
    %993 = vector.load %arg10[%c36, %c0_341] : memref<79x128xf32, #tpu.memory_space<vmem>>, vector<1x32xf32>
    %cst_342 = arith.constant dense<0.000000e+00> : vector<16xf32>
    %994 = vector.multi_reduction <add>, %991, %cst_342 [1] : vector<16x32xf32> to vector<16xf32>
    %995 = vector.shape_cast %994 : vector<16xf32> to vector<16x1xf32>
    %cst_343 = arith.constant 3.200000e+01 : f32
    %996 = vector.broadcast %cst_343 : f32 to vector<16x1xf32>
    %997 = arith.divf %995, %996 : vector<16x1xf32>
    %998 = vector.broadcast %997 : vector<16x1xf32> to vector<16x32xf32>
    %999 = arith.subf %991, %998 : vector<16x32xf32>
    %1000 = arith.mulf %999, %999 : vector<16x32xf32>
    %cst_344 = arith.constant dense<0.000000e+00> : vector<16xf32>
    %1001 = vector.multi_reduction <add>, %1000, %cst_344 [1] : vector<16x32xf32> to vector<16xf32>
    %1002 = vector.shape_cast %1001 : vector<16xf32> to vector<16x1xf32>
    %cst_345 = arith.constant 3.200000e+01 : f32
    %1003 = vector.broadcast %cst_345 : f32 to vector<16x1xf32>
    %1004 = arith.divf %1002, %1003 : vector<16x1xf32>
    %cst_346 = arith.constant 9.99999974E-6 : f32
    %1005 = vector.broadcast %cst_346 : f32 to vector<16x1xf32>
    %1006 = arith.addf %1004, %1005 : vector<16x1xf32>
    %1007 = math.rsqrt %1006 : vector<16x1xf32>
    %1008 = vector.broadcast %1007 : vector<16x1xf32> to vector<16x32xf32>
    %1009 = arith.mulf %999, %1008 : vector<16x32xf32>
    %1010 = vector.broadcast %992 : vector<1x32xf32> to vector<16x32xf32>
    %1011 = arith.mulf %1009, %1010 : vector<16x32xf32>
    %1012 = vector.broadcast %993 : vector<1x32xf32> to vector<16x32xf32>
    %1013 = arith.addf %1011, %1012 : vector<16x32xf32>
    %1014 = arith.truncf %1013 : vector<16x32xf32> to vector<16x32xbf16>
    %c3_347 = arith.constant 3 : index
    %c0_348 = arith.constant 0 : index
    %c0_349 = arith.constant 0 : index
    %1015 = vector.load %arg8[%c3_347, %c0_348, %c0_349] : memref<4x32x128xbf16, #tpu.memory_space<vmem>>, vector<1x32x128xbf16>
    %1016 = vector.shape_cast %1015 : vector<1x32x128xbf16> to vector<32x128xbf16>
    %cst_350 = arith.constant dense<0.000000e+00> : vector<16x128xf32>
    %1017 = tpu.matmul %1014, %1016, %cst_350 {dimension_numbers = #tpu.dot_dimension_numbers<[1], [0], [0], [1], [0, 0, 1, 1], [], []>} : vector<16x32xbf16>, vector<32x128xbf16>, vector<16x128xf32> -> vector<16x128xf32>
    %c0_351 = arith.constant 0 : index
    %c0_352 = arith.constant 0 : index
    %1018 = vector.load %arg11[%c0_351, %c0_352] : memref<16x128xf32, #tpu.memory_space<vmem>>, vector<16x128xf32>
    tpu.vector_store %arg11[%c0_351, %c0_352], %1017 {strides = array<i32>} : memref<16x128xf32, #tpu.memory_space<vmem>>, vector<16x128xf32>,
    %1019 = tpu.iota {dimensions = array<i32: 1>} : vector<16x128xi32>
    %c64_i32 = arith.constant 64 : i32
    %1020 = vector.broadcast %c64_i32 : i32 to vector<16x128xi32>
    %1021 = arith.cmpi slt, %1019, %1020 : vector<16x128xi32>
    %cst_353 = arith.constant 0.000000e+00 : f32
    %cst_354 = arith.constant -1.000000e+09 : f32
    %1022 = vector.broadcast %cst_353 : f32 to vector<16x128xf32>
    %1023 = vector.broadcast %cst_354 : f32 to vector<16x128xf32>
    %1024 = arith.select %1021, %1022, %1023 : vector<16x128xi1>, vector<16x128xf32>
    %1025 = arith.addf %1017, %1024 : vector<16x128xf32>
    %cst_355 = arith.constant dense<0xFF800000> : vector<16xf32>
    %1026 = vector.multi_reduction <maximumf>, %1025, %cst_355 [1] : vector<16x128xf32> to vector<16xf32>
    %1027 = vector.shape_cast %1026 : vector<16xf32> to vector<16x1xf32>
    %1028 = vector.broadcast %1027 : vector<16x1xf32> to vector<16x128xf32>
    %1029 = arith.subf %1025, %1028 : vector<16x128xf32>
    %1030 = math.exp %1029 : vector<16x128xf32>
    %cst_356 = arith.constant dense<0.000000e+00> : vector<16xf32>
    %1031 = vector.multi_reduction <add>, %1030, %cst_356 [1] : vector<16x128xf32> to vector<16xf32>
    %1032 = vector.shape_cast %1031 : vector<16xf32> to vector<16x1xf32>
    %1033 = math.log %1032 : vector<16x1xf32>
    %1034 = vector.broadcast %1033 : vector<16x1xf32> to vector<16x128xf32>
    %1035 = arith.subf %1029, %1034 : vector<16x128xf32>
    %c0_357 = arith.constant 0 : index
    %c1_358 = arith.constant 1 : index
    %1036 = vector.load %arg1[%c0_357, %c1_358] : memref<16x2xi32, #tpu.memory_space<vmem>>, vector<16x1xi32>
    %1037 = vector.broadcast %1036 : vector<16x1xi32> to vector<16x128xi32>
    %1038 = arith.cmpi eq, %1019, %1037 : vector<16x128xi32>
    %1039 = arith.extui %1038 : vector<16x128xi1> to vector<16x128xi32>
    %1040 = arith.sitofp %1039 : vector<16x128xi32> to vector<16x128xf32>
    %1041 = arith.mulf %1035, %1040 : vector<16x128xf32>
    %cst_359 = arith.constant dense<0.000000e+00> : vector<16xf32>
    %1042 = vector.multi_reduction <add>, %1041, %cst_359 [1] : vector<16x128xf32> to vector<16xf32>
    %1043 = vector.shape_cast %1042 : vector<16xf32> to vector<16x1xf32>
    %cst_360 = arith.constant 0.000000e+00 : f32
    %1044 = vector.broadcast %cst_360 : f32 to vector<16x1xf32>
    %1045 = arith.subf %1044, %1043 : vector<16x1xf32>
    %c0_361 = arith.constant 0 : index
    %c0_362 = arith.constant 0 : index
    %1046 = vector.load %arg2[%c0_361, %c0_362] : memref<16x1xf32, #tpu.memory_space<vmem>>, vector<16x1xf32>
    %1047 = arith.mulf %1045, %1046 : vector<16x1xf32>
    %cst_363 = arith.constant dense<0.000000e+00> : vector<1xf32>
    %1048 = vector.multi_reduction <add>, %1047, %cst_363 [0] : vector<16x1xf32> to vector<1xf32>
    %1049 = vector.shape_cast %1048 : vector<1xf32> to vector<1x1xf32>
    %cst_364 = arith.constant 0.0714285746 : f32
    %1050 = vector.broadcast %cst_364 : f32 to vector<1x1xf32>
    %1051 = arith.mulf %1049, %1050 : vector<1x1xf32>
    %c0_365 = arith.constant 0 : index
    %c0_366 = arith.constant 0 : index
    %1052 = vector.load %arg12[%c0_365, %c0_366] : memref<1x1xf32, #tpu.memory_space<vmem>>, vector<1x1xf32>
    tpu.vector_store %arg12[%c0_365, %c0_366], %1051 {strides = array<i32>} : memref<1x1xf32, #tpu.memory_space<vmem>>, vector<1x1xf32>,
    return
  }
}

</mosaic_0001>

<llo_original>
// kernel: knowledge_vision_gpt2_forward.1
$region0: #{knowledge_vision_gpt2_forward.1}
  #allocation0 [shape = 'u32[]', space=smem, size = 0x4, offset = 0x4, fixed_abs, tag = 'smem constant byte address 0x4 - core index']
  #allocation1 [shape = 'u32[144,128]{1,0:T(1,128)}', space=vmem, size = 0x12000, scoped, tag = 'internal scratch']
  %s0 = inlined_call_operand.vmem [shape: bf16[16,192], index: 0, kind: input, shape index: {}]
  %s1 = inlined_call_operand.vmem [shape: s32[16,2], index: 1, kind: input, shape index: {}]
  %s2 = inlined_call_operand.vmem [shape: f32[16,1], index: 2, kind: input, shape index: {}]
  %s3 = inlined_call_operand.vmem [shape: f32[16,16], index: 3, kind: input, shape index: {}, may-alias: {3,5}]
  %s4 = inlined_call_operand.vmem [shape: f32[16,16], index: 4, kind: input, shape index: {}]
  %s5 = inlined_call_operand.vmem [shape: f32[16,16], index: 5, kind: input, shape index: {}, may-alias: {3,5}]
  %s6 = inlined_call_operand.vmem [shape: bf16[192,32], index: 6, kind: input, shape index: {}]
  %s7 = inlined_call_operand.vmem [shape: bf16[21,32,32], index: 7, kind: input, shape index: {}]
  %s8 = inlined_call_operand.vmem [shape: bf16[4,32,128], index: 8, kind: input, shape index: {}]
  %s9 = inlined_call_operand.vmem [shape: bf16[4,128,32], index: 9, kind: input, shape index: {}]
  %s10 = inlined_call_operand.vmem [shape: f32[79,128], index: 10, kind: input, shape index: {}]
  %s11 = inlined_call_operand.vmem [shape: f32[16,128], index: 11, kind: output, shape index: {0}]
  %s12 = inlined_call_operand.hbm [shape: f32[1,1], index: 12, kind: output, shape index: {1}]
  %13 = xla_tuple %s11, %s12
  %s14 = sld [smem:[#allocation0]]
  $region62: #{knowledge_vision_gpt2_forward.1} parent=0
    _
  %s16 = ssub.s32 1, %s14
  %s17 = scalar_select 0, %s16, %s14
  $region1: #{knowledge_vision_gpt2_forward.1} parent=0
    #allocation2 [shape = 'u8[512]{0}', space=vmem, size = 0x400, scoped, tag = 'output window, operand 1, single buffered']
    #allocation3 [shape = 's32[1]{0}', space=sflag, size = 0x4, scoped, tag = 'scoped memory for knowledge_vision_gpt2_forward.1']
    %18 = vsyncpa [#allocation3], 0
    // Predicated region
    $region2: #{knowledge_vision_gpt2_forward.1} parent=1 // pred_check
      _
    $region3: #{knowledge_vision_gpt2_forward.1} parent=1 // pred_check_branch
      %20 = sbr.rel (0) target = $region5
    $region4: #{knowledge_vision_gpt2_forward.1} parent=1 // pred_region
      _
    $region5: #{knowledge_vision_gpt2_forward.1} parent=1 // pred_fallthru
      _
    // Predicated region
    $region6: #{knowledge_vision_gpt2_forward.1} parent=1 // pred_check
      _
    $region7: #{knowledge_vision_gpt2_forward.1} parent=1 // pred_check_branch
      %22 = sbr.rel (0) target = $region9
    $region8: #{knowledge_vision_gpt2_forward.1} parent=1 // pred_region
      _
    $region9: #{knowledge_vision_gpt2_forward.1} parent=1 // pred_fallthru
      _
    // Predicated region
    $region10: #{knowledge_vision_gpt2_forward.1} parent=1 // pred_check
      _
    $region11: #{knowledge_vision_gpt2_forward.1} parent=1 // pred_check_branch
      %24 = sbr.rel (0) target = $region13
    $region12: #{knowledge_vision_gpt2_forward.1} parent=1 // pred_region
      _
    $region13: #{knowledge_vision_gpt2_forward.1} parent=1 // pred_fallthru
      _
    // Predicated region
    $region14: #{knowledge_vision_gpt2_forward.1} parent=1 // pred_check
      _
    $region15: #{knowledge_vision_gpt2_forward.1} parent=1 // pred_check_branch
      %26 = sbr.rel (0) target = $region17
    $region16: #{knowledge_vision_gpt2_forward.1} parent=1 // pred_region
      _
    $region17: #{knowledge_vision_gpt2_forward.1} parent=1 // pred_fallthru
      _
    // Predicated region
    $region18: #{knowledge_vision_gpt2_forward.1} parent=1 // pred_check
      _
    $region19: #{knowledge_vision_gpt2_forward.1} parent=1 // pred_check_branch
      %28 = sbr.rel (0) target = $region21
    $region20: #{knowledge_vision_gpt2_forward.1} parent=1 // pred_region
      _
    $region21: #{knowledge_vision_gpt2_forward.1} parent=1 // pred_fallthru
      _
    // Predicated region
    $region22: #{knowledge_vision_gpt2_forward.1} parent=1 // pred_check
      _
    $region23: #{knowledge_vision_gpt2_forward.1} parent=1 // pred_check_branch
      %30 = sbr.rel (0) target = $region25
    $region24: #{knowledge_vision_gpt2_forward.1} parent=1 // pred_region
      _
    $region25: #{knowledge_vision_gpt2_forward.1} parent=1 // pred_fallthru
      _
    // Predicated region
    $region26: #{knowledge_vision_gpt2_forward.1} parent=1 // pred_check
      _
    $region27: #{knowledge_vision_gpt2_forward.1} parent=1 // pred_check_branch
      %32 = sbr.rel (0) target = $region29
    $region28: #{knowledge_vision_gpt2_forward.1} parent=1 // pred_region
      _
    $region29: #{knowledge_vision_gpt2_forward.1} parent=1 // pred_fallthru
      _
    // Predicated region
    $region30: #{knowledge_vision_gpt2_forward.1} parent=1 // pred_check
      _
    $region31: #{knowledge_vision_gpt2_forward.1} parent=1 // pred_check_branch
      %34 = sbr.rel (0) target = $region33
    $region32: #{knowledge_vision_gpt2_forward.1} parent=1 // pred_region
      _
    $region33: #{knowledge_vision_gpt2_forward.1} parent=1 // pred_fallthru
      _
    // Predicated region
    $region34: #{knowledge_vision_gpt2_forward.1} parent=1 // pred_check
      _
    $region35: #{knowledge_vision_gpt2_forward.1} parent=1 // pred_check_branch
      %36 = sbr.rel (0) target = $region37
    $region36: #{knowledge_vision_gpt2_forward.1} parent=1 // pred_region
      _
    $region37: #{knowledge_vision_gpt2_forward.1} parent=1 // pred_fallthru
      _
    // Predicated region
    $region38: #{knowledge_vision_gpt2_forward.1} parent=1 // pred_check
      _
    $region39: #{knowledge_vision_gpt2_forward.1} parent=1 // pred_check_branch
      %38 = sbr.rel (0) target = $region41
    $region40: #{knowledge_vision_gpt2_forward.1} parent=1 // pred_region
      _
    $region41: #{knowledge_vision_gpt2_forward.1} parent=1 // pred_fallthru
      _
    // Predicated region
    $region42: #{knowledge_vision_gpt2_forward.1} parent=1 // pred_check
      _
    $region43: #{knowledge_vision_gpt2_forward.1} parent=1 // pred_check_branch
      %40 = sbr.rel (0) target = $region45
    $region44: #{knowledge_vision_gpt2_forward.1} parent=1 // pred_region
      _
    $region45: #{knowledge_vision_gpt2_forward.1} parent=1 // pred_fallthru
      _
    %v44 = vlaneseq
    %v45 = vand.u32 %v44, 127
    %vm46 = vcmp.ge.s32.totalorder %v45, 0
    %vm47 = vcmp.lt.s32.totalorder %v45, 8
    %vm48 = vmand %vm46, %vm47
    %vm49 = vcmp.ge.s32.totalorder %v45, 8
    %vm50 = vcmp.lt.s32.totalorder %v45, 16
    %vm51 = vmand %vm49, %vm50
    %vm52 = vcmp.ge.s32.totalorder %v45, 16
    %vm53 = vcmp.lt.s32.totalorder %v45, 24
    %vm54 = vmand %vm52, %vm53
    %vm55 = vcmp.ge.s32.totalorder %v45, 24
    %vm56 = vcmp.lt.s32.totalorder %v45, 32
    %vm57 = vmand %vm55, %vm56
    %v58 = vld [vmem:[%s0] sm:$0xff]
    %v59 = vld [vmem:[%s0 + $0x8] sm:$0xff]
    %v60 = vld [vmem:[%s6] sm:$0xf]
    %v61 = vld [vmem:[%s6 + $0x4] sm:$0xf]
    %v62 = vld [vmem:[%s6 + $0x8] sm:$0xf]
    %v63 = vld [vmem:[%s6 + $0xc] sm:$0xf]
    %v64 = vld [vmem:[%s6 + $0x10] sm:$0xf]
    %v65 = vld [vmem:[%s6 + $0x14] sm:$0xf]
    %v66 = vld [vmem:[%s6 + $0x18] sm:$0xf]
    %v67 = vld [vmem:[%s6 + $0x1c] sm:$0xf]
    %v68 = vld [vmem:[%s6 + $0x20] sm:$0xf]
    %v69 = vld [vmem:[%s6 + $0x24] sm:$0xf]
    %v70 = vld [vmem:[%s6 + $0x28] sm:$0xf]
    %v71 = vld [vmem:[%s6 + $0x2c] sm:$0xf]
    %v72 = vld [vmem:[%s6 + $0x30] sm:$0xf]
    %v73 = vld [vmem:[%s6 + $0x34] sm:$0xf]
    %v74 = vld [vmem:[%s6 + $0x38] sm:$0xf]
    %v75 = vld [vmem:[%s6 + $0x3c] sm:$0xf]
    %v76 = vld [vmem:[%s6 + $0x40] sm:$0xf]
    %v77 = vld [vmem:[%s6 + $0x44] sm:$0xf]
    %v78 = vld [vmem:[%s6 + $0x48] sm:$0xf]
    %v79 = vld [vmem:[%s6 + $0x4c] sm:$0xf]
    %v80 = vld [vmem:[%s6 + $0x50] sm:$0xf]
    %v81 = vld [vmem:[%s6 + $0x54] sm:$0xf]
    %v82 = vld [vmem:[%s6 + $0x58] sm:$0xf]
    %v83 = vld [vmem:[%s6 + $0x5c] sm:$0xf]
    %v84 = vld [vmem:[%s10] sm:$0xff]
    %v85 = vld [vmem:[%s10 + $0x8] sm:$0xff]
    %v88 = vunpack.c.l.b16 %v58
    %v89 = vunpack.c.h.b16 %v58
    %v90 = vunpack.c.l.b16 %v59
    %v91 = vunpack.c.h.b16 %v59
    %v92 = vpack.c.b16 %v90, %v88
    %v93 = vpack.c.b16 %v91, %v89
    %v119 = vunpack.c.l.b16 %v60
    %v120 = vunpack.c.l.b16 %v61
    %v121 = vunpack.c.l.b16 %v62
    %v122 = vunpack.c.l.b16 %v63
    %v123 = vunpack.c.l.b16 %v64
    %v124 = vunpack.c.l.b16 %v65
    %v125 = vunpack.c.l.b16 %v66
    %v126 = vunpack.c.l.b16 %v67
    %v127 = vunpack.c.l.b16 %v68
    %v128 = vunpack.c.l.b16 %v69
    %v129 = vunpack.c.l.b16 %v70
    %v130 = vunpack.c.l.b16 %v71
    %v131 = vunpack.c.l.b16 %v72
    %v132 = vunpack.c.l.b16 %v73
    %v133 = vunpack.c.l.b16 %v74
    %v134 = vunpack.c.l.b16 %v75
    %v135 = vunpack.c.l.b16 %v76
    %v136 = vunpack.c.l.b16 %v77
    %v137 = vunpack.c.l.b16 %v78
    %v138 = vunpack.c.l.b16 %v79
    %v139 = vunpack.c.l.b16 %v80
    %v140 = vunpack.c.l.b16 %v81
    %v141 = vunpack.c.l.b16 %v82
    %v142 = vunpack.c.l.b16 %v83
    %v143 = vpack.c.b16 %v120, %v119
    %v144 = vpack.c.b16 %v122, %v121
    %v145 = vpack.c.b16 %v124, %v123
    %v146 = vpack.c.b16 %v126, %v125
    %v147 = vpack.c.b16 %v128, %v127
    %v148 = vpack.c.b16 %v130, %v129
    %v149 = vpack.c.b16 %v132, %v131
    %v150 = vpack.c.b16 %v134, %v133
    %v151 = vpack.c.b16 %v136, %v135
    %v152 = vpack.c.b16 %v138, %v137
    %v153 = vpack.c.b16 %v140, %v139
    %v154 = vpack.c.b16 %v142, %v141
    %vm167 = vcmask 523264
    %v169 = vsel %vm167, %v93, 0
    %171 = vmatprep.subr.bf16.mxu0 0
    %172 = vmatpush1.bf16.msra.mxu0 %v143
    %173 = vmatprep.subr.bf16.mxu0 0
    %174 = vmatpush1.bf16.msra.mxu0 %v144
    %175 = vmatprep.subr.bf16.mxu0 0
    %176 = vmatpush1.bf16.msra.mxu0 %v145
    %177 = vmatprep.subr.bf16.mxu0 0
    %178 = vmatpush1.bf16.msra.mxu0 %v146
    %179 = vmatprep.subr.bf16.mxu0 0
    %180 = vmatpush1.bf16.msra.mxu0 %v147
    %181 = vmatprep.subr.bf16.mxu0 0
    %182 = vmatpush1.bf16.msra.mxu0 %v148
    %183 = vmatprep.subr.bf16.mxu0 0
    %184 = vmatpush1.bf16.msra.mxu0 %v149
    %185 = vmatprep.subr.bf16.mxu0 0
    %186 = vmatpush1.bf16.msra.mxu0 %v150
    %187 = vmatprep.subr.bf16.mxu0 0
    %188 = vmatpush1.bf16.msra.mxu0 %v151
    %189 = vmatprep.subr.bf16.mxu0 0
    %190 = vmatpush1.bf16.msra.mxu0 %v152
    %191 = vmatprep.subr.bf16.mxu0 0
    %192 = vmatpush1.bf16.msra.mxu0 %v153
    %193 = vmatprep.subr.bf16.mxu0 0
    %194 = vmatpush1.bf16.msra.mxu0 %v154
    %195 = vmatprep.subr.bf16.mxu0 0
    %196 = vmatpush1.bf16.msra.mxu0 0
    %197 = vmatprep.subr.bf16.mxu0 0
    %198 = vmatpush1.bf16.msra.mxu0 0
    %199 = vmatprep.subr.bf16.mxu0 0
    %200 = vmatpush1.bf16.msra.mxu0 0
    %201 = vmatprep.subr.bf16.mxu0 0
    %202 = vmatpush1.bf16.msra.mxu0 0
    %203 = vmatprep.mubr.bf16.mxu0 %v169
    %204 = vmatmul.mubr.bf16.gmra.mrb[0].mxu0 %v92
    %v205 = vpop.f32.mrb[0].mxu0
    %v206 = vadd.f32 %v84, %v205
    %v207 = vpop.f32.mrb[0].mxu0
    %v208 = vpop.f32.mrb[0].mxu0
    %v209 = vadd.f32 %v85, %v208
    %v210 = vpop.f32.mrb[0].mxu0
    %211 = vdwg.mxu0
    %v212 = vld [vmem:[%s10 + $0x20] sm:$0x1]
    %v213 = vld [vmem:[%s10 + $0x21] sm:$0x1]
    %vm214 = vcmask 261120
    %v215 = vsel %vm214, %v206, 0.0
    %216 = vadd.xlane.f32.xlu0 %v215
    %v217 = vpop.xlane.xlu0 %216
    %v218 = vsel %vm214, %v209, 0.0
    %219 = vadd.xlane.f32.xlu0 %v218
    %v220 = vpop.xlane.xlu0 %219
    %v221 = vrcp.pop 32.0
    %v222 = vmul.f32 %v217, %v221
    %v223 = vmul.f32 %v220, %v221
    %v224 = vsub.f32 %v206, %v222
    %v225 = vsub.f32 %v209, %v223
    %v226 = vmul.f32 %v224, %v224
    %v227 = vmul.f32 %v225, %v225
    %v228 = vsel %vm214, %v226, 0.0
    %229 = vadd.xlane.f32.xlu0 %v228
    %v230 = vpop.xlane.xlu0 %229
    %v231 = vsel %vm214, %v227, 0.0
    %232 = vadd.xlane.f32.xlu0 %v231
    %v233 = vpop.xlane.xlu0 %232
    %v234 = vmul.f32 %v230, %v221
    %v235 = vmul.f32 %v233, %v221
    %v236 = vadd.f32 %v234, 1e-05
    %v237 = vadd.f32 %v235, 1e-05
    %v238 = vrsqrt.pop %v236
    %v239 = vrsqrt.pop %v237
    %v240 = vmul.f32 %v224, %v238
    %v241 = vmul.f32 %v225, %v239
    %v242 = vlaneseq
    %v243 = vshrl.u32 %v242, 7
    %v244 = vsub.s32 0, %v243
    %v245 = vrot.slane %v212, %v244
    %v246 = vmul.f32 %v240, %v245
    %v247 = vmul.f32 %v241, %v245
    %v248 = vlaneseq
    %v249 = vshrl.u32 %v248, 7
    %v250 = vsub.s32 0, %v249
    %v251 = vrot.slane %v213, %v250
    %v252 = vadd.f32 %v246, %v251
    %v253 = vadd.f32 %v247, %v251
    %v254 = vld [vmem:[%s10 + $0x25] sm:$0x1]
    %v255 = vld [vmem:[%s10 + $0x26] sm:$0x1]
    %v256 = vsel %vm214, %v252, 0.0
    %257 = vadd.xlane.f32.xlu0 %v256
    %v258 = vpop.xlane.xlu0 %257
    %v259 = vsel %vm214, %v253, 0.0
    %260 = vadd.xlane.f32.xlu0 %v259
    %v261 = vpop.xlane.xlu0 %260
    %v262 = vmul.f32 %v258, %v221
    %v263 = vmul.f32 %v261, %v221
    %v264 = vsub.f32 %v252, %v262
    %v265 = vsub.f32 %v253, %v263
    %v266 = vmul.f32 %v264, %v264
    %v267 = vmul.f32 %v265, %v265
    %v268 = vsel %vm214, %v266, 0.0
    %269 = vadd.xlane.f32.xlu0 %v268
    %v270 = vpop.xlane.xlu0 %269
    %v271 = vsel %vm214, %v267, 0.0
    %272 = vadd.xlane.f32.xlu0 %v271
    %v273 = vpop.xlane.xlu0 %272
    %v274 = vmul.f32 %v270, %v221
    %v275 = vmul.f32 %v273, %v221
    %v276 = vadd.f32 %v274, 1e-05
    %v277 = vadd.f32 %v275, 1e-05
    %v278 = vrsqrt.pop %v276
    %v279 = vrsqrt.pop %v277
    %v280 = vmul.f32 %v264, %v278
    %v281 = vmul.f32 %v265, %v279
    %v282 = vlaneseq
    %v283 = vshrl.u32 %v282, 7
    %v284 = vsub.s32 0, %v283
    %v285 = vrot.slane %v254, %v284
    %v286 = vmul.f32 %v280, %v285
    %v287 = vmul.f32 %v281, %v285
    %v288 = vlaneseq
    %v289 = vshrl.u32 %v288, 7
    %v290 = vsub.s32 0, %v289
    %v291 = vrot.slane %v255, %v290
    %v292 = vadd.f32 %v286, %v291
    %v293 = vadd.f32 %v287, %v291
    %v294 = vld [vmem:[%s7] sm:$0xf]
    %v295 = vld [vmem:[%s7 + $0x4] sm:$0xf]
    %v296 = vld [vmem:[%s7 + $0x8] sm:$0xf]
    %v297 = vld [vmem:[%s7 + $0xc] sm:$0xf]
    %v298 = vld [vmem:[%s10 + $0x27] sm:$0x1]
    %v299 = vpack.c.bf16 %v293, %v292
    %v300 = vlaneseq
    %v301 = vshrl.u32 %v300, 7
    %v302 = vsub.s32 0, %v301
    %v303 = vrot.slane %v298, %v302
    %v308 = vunpack.c.l.b16 %v294
    %v309 = vunpack.c.l.b16 %v295
    %v310 = vunpack.c.l.b16 %v296
    %v311 = vunpack.c.l.b16 %v297
    %v312 = vpack.c.b16 %v309, %v308
    %v313 = vpack.c.b16 %v311, %v310
    %v317 = vsel %vm214, %v299, 0
    %319 = vmatprep.subr.bf16.mxu0 0
    %320 = vmatpush1.bf16.msra.mxu0 %v312
    %321 = vmatprep.subr.bf16.mxu0 0
    %322 = vmatpush1.bf16.msra.mxu0 %v313
    %323 = vmatprep.subr.bf16.mxu0 0
    %324 = vmatpush1.bf16.msra.mxu0 0
    %325 = vmatprep.subr.bf16.mxu0 0
    %326 = vmatpush1.bf16.msra.mxu0 0
    %327 = vmatprep.subr.bf16.mxu0 0
    %328 = vmatpush1.bf16.msra.mxu0 0
    %329 = vmatprep.subr.bf16.mxu0 0
    %330 = vmatpush1.bf16.msra.mxu0 0
    %331 = vmatprep.subr.bf16.mxu0 0
    %332 = vmatpush1.bf16.msra.mxu0 0
    %333 = vmatprep.subr.bf16.mxu0 0
    %334 = vmatpush1.bf16.msra.mxu0 0
    %335 = vmatprep.subr.bf16.mxu0 0
    %336 = vmatpush1.bf16.msra.mxu0 0
    %337 = vmatprep.subr.bf16.mxu0 0
    %338 = vmatpush1.bf16.msra.mxu0 0
    %339 = vmatprep.subr.bf16.mxu0 0
    %340 = vmatpush1.bf16.msra.mxu0 0
    %341 = vmatprep.subr.bf16.mxu0 0
    %342 = vmatpush1.bf16.msra.mxu0 0
    %343 = vmatprep.subr.bf16.mxu0 0
    %344 = vmatpush1.bf16.msra.mxu0 0
    %345 = vmatprep.subr.bf16.mxu0 0
    %346 = vmatpush1.bf16.msra.mxu0 0
    %347 = vmatprep.subr.bf16.mxu0 0
    %348 = vmatpush1.bf16.msra.mxu0 0
    %349 = vmatprep.subr.bf16.mxu0 0
    %350 = vmatpush1.bf16.msra.mxu0 0
    %351 = vmatprep.mubr.bf16.mxu0 0
    %352 = vmatmul.mubr.bf16.gmra.mrb[0].mxu0 %v317
    %v353 = vpop.f32.mrb[0].mxu0
    %v354 = vadd.f32 %v303, %v353
    %v355 = vpop.f32.mrb[0].mxu0
    %v356 = vpop.f32.mrb[0].mxu0
    %v357 = vadd.f32 %v303, %v356
    %v358 = vpop.f32.mrb[0].mxu0
    %359 = vdwg.mxu0
    %s360 = scalar_lea.vmem %s7, 16
    %v361 = vld [vmem:[%s360] sm:$0xf]
    %v362 = vld [vmem:[%s360 + $0x4] sm:$0xf]
    %v363 = vld [vmem:[%s360 + $0x8] sm:$0xf]
    %v364 = vld [vmem:[%s360 + $0xc] sm:$0xf]
    %v365 = vld [vmem:[%s10 + $0x28] sm:$0x1]
    %v366 = vlaneseq
    %v367 = vshrl.u32 %v366, 7
    %v368 = vsub.s32 0, %v367
    %v369 = vrot.slane %v365, %v368
    %v374 = vunpack.c.l.b16 %v361
    %v375 = vunpack.c.l.b16 %v362
    %v376 = vunpack.c.l.b16 %v363
    %v377 = vunpack.c.l.b16 %v364
    %v378 = vpack.c.b16 %v375, %v374
    %v379 = vpack.c.b16 %v377, %v376
    %382 = vmatprep.subr.bf16.mxu0 0
    %383 = vmatpush1.bf16.msra.mxu0 %v378
    %384 = vmatprep.subr.bf16.mxu0 0
    %385 = vmatpush1.bf16.msra.mxu0 %v379
    %386 = vmatprep.subr.bf16.mxu0 0
    %387 = vmatpush1.bf16.msra.mxu0 0
    %388 = vmatprep.subr.bf16.mxu0 0
    %389 = vmatpush1.bf16.msra.mxu0 0
    %390 = vmatprep.subr.bf16.mxu0 0
    %391 = vmatpush1.bf16.msra.mxu0 0
    %392 = vmatprep.subr.bf16.mxu0 0
    %393 = vmatpush1.bf16.msra.mxu0 0
    %394 = vmatprep.subr.bf16.mxu0 0
    %395 = vmatpush1.bf16.msra.mxu0 0
    %396 = vmatprep.subr.bf16.mxu0 0
    %397 = vmatpush1.bf16.msra.mxu0 0
    %398 = vmatprep.subr.bf16.mxu0 0
    %399 = vmatpush1.bf16.msra.mxu0 0
    %400 = vmatprep.subr.bf16.mxu0 0
    %401 = vmatpush1.bf16.msra.mxu0 0
    %402 = vmatprep.subr.bf16.mxu0 0
    %403 = vmatpush1.bf16.msra.mxu0 0
    %404 = vmatprep.subr.bf16.mxu0 0
    %405 = vmatpush1.bf16.msra.mxu0 0
    %406 = vmatprep.subr.bf16.mxu0 0
    %407 = vmatpush1.bf16.msra.mxu0 0
    %408 = vmatprep.subr.bf16.mxu0 0
    %409 = vmatpush1.bf16.msra.mxu0 0
    %410 = vmatprep.subr.bf16.mxu0 0
    %411 = vmatpush1.bf16.msra.mxu0 0
    %412 = vmatprep.subr.bf16.mxu0 0
    %413 = vmatpush1.bf16.msra.mxu0 0
    %414 = vmatprep.mubr.bf16.mxu0 0
    %415 = vmatmul.mubr.bf16.gmra.mrb[0].mxu0 %v317
    %v416 = vpop.f32.mrb[0].mxu0
    %v417 = vadd.f32 %v369, %v416
    %v418 = vpop.f32.mrb[0].mxu0
    %v419 = vpop.f32.mrb[0].mxu0
    %v420 = vadd.f32 %v369, %v419
    %v421 = vpop.f32.mrb[0].mxu0
    %422 = vdwg.mxu0
    %s423 = scalar_lea.vmem %s7, 32
    %v424 = vld [vmem:[%s423] sm:$0xf]
    %v425 = vld [vmem:[%s423 + $0x4] sm:$0xf]
    %v426 = vld [vmem:[%s423 + $0x8] sm:$0xf]
    %v427 = vld [vmem:[%s423 + $0xc] sm:$0xf]
    %v428 = vld [vmem:[%s10 + $0x29] sm:$0x1]
    %v429 = vlaneseq
    %v430 = vshrl.u32 %v429, 7
    %v431 = vsub.s32 0, %v430
    %v432 = vrot.slane %v428, %v431
    %v437 = vunpack.c.l.b16 %v424
    %v438 = vunpack.c.l.b16 %v425
    %v439 = vunpack.c.l.b16 %v426
    %v440 = vunpack.c.l.b16 %v427
    %v441 = vpack.c.b16 %v438, %v437
    %v442 = vpack.c.b16 %v440, %v439
    %445 = vmatprep.subr.bf16.mxu0 0
    %446 = vmatpush1.bf16.msra.mxu0 %v441
    %447 = vmatprep.subr.bf16.mxu0 0
    %448 = vmatpush1.bf16.msra.mxu0 %v442
    %449 = vmatprep.subr.bf16.mxu0 0
    %450 = vmatpush1.bf16.msra.mxu0 0
    %451 = vmatprep.subr.bf16.mxu0 0
    %452 = vmatpush1.bf16.msra.mxu0 0
    %453 = vmatprep.subr.bf16.mxu0 0
    %454 = vmatpush1.bf16.msra.mxu0 0
    %455 = vmatprep.subr.bf16.mxu0 0
    %456 = vmatpush1.bf16.msra.mxu0 0
    %457 = vmatprep.subr.bf16.mxu0 0
    %458 = vmatpush1.bf16.msra.mxu0 0
    %459 = vmatprep.subr.bf16.mxu0 0
    %460 = vmatpush1.bf16.msra.mxu0 0
    %461 = vmatprep.subr.bf16.mxu0 0
    %462 = vmatpush1.bf16.msra.mxu0 0
    %463 = vmatprep.subr.bf16.mxu0 0
    %464 = vmatpush1.bf16.msra.mxu0 0
    %465 = vmatprep.subr.bf16.mxu0 0
    %466 = vmatpush1.bf16.msra.mxu0 0
    %467 = vmatprep.subr.bf16.mxu0 0
    %468 = vmatpush1.bf16.msra.mxu0 0
    %469 = vmatprep.subr.bf16.mxu0 0
    %470 = vmatpush1.bf16.msra.mxu0 0
    %471 = vmatprep.subr.bf16.mxu0 0
    %472 = vmatpush1.bf16.msra.mxu0 0
    %473 = vmatprep.subr.bf16.mxu0 0
    %474 = vmatpush1.bf16.msra.mxu0 0
    %475 = vmatprep.subr.bf16.mxu0 0
    %476 = vmatpush1.bf16.msra.mxu0 0
    %477 = vmatprep.mubr.bf16.mxu0 0
    %478 = vmatmul.mubr.bf16.gmra.mrb[0].mxu0 %v317
    %v479 = vpop.f32.mrb[0].mxu0
    %v480 = vadd.f32 %v432, %v479
    %v481 = vpop.f32.mrb[0].mxu0
    %v482 = vpop.f32.mrb[0].mxu0
    %v483 = vadd.f32 %v432, %v482
    %v484 = vpop.f32.mrb[0].mxu0
    %485 = vdwg.mxu0
    %v486 = vpack.c.bf16 %v357, %v354
    %v487 = vpack.c.bf16 %v420, %v417
    %v488 = vpack.c.bf16 %v483, %v480
    %v489 = vld [vmem:[%s3] sm:$0xff]
    %v490 = vld [vmem:[%s3 + $0x8] sm:$0xff]
    %v491 = vsel %vm48, 1, 0
    %vm492 = vcmp.eq.s32.totalorder %v491, 1
    %vm493 = vmpackc.low %vm492, %vm492
    %v494 = vsel %vm493, 65537, 0
    %v495 = vlaneseq
    %v496 = vshrl.u32 %v495, 7
    %v497 = vsub.s32 0, %v496
    %v498 = vrot.slane %v494, %v497
    %vm499 = vcmp.ne.s16.totalorder %v498, 0
    %v500 = vsel %vm499, %v486, 0
    %v501 = vsel %vm499, %v488, 0
    %v503 = vsel %vm214, %v500, 0
    %v506 = vsel %vm214, %v487, 0
    %508 = vmatprep.subr.bf16.mxu0 0
    %509 = vmatpush1.bf16.xpose.msra.mxu0 %v506
    %510 = vmatprep.subr.bf16.mxu0 0
    %511 = vmatpush1.bf16.xpose.msra.mxu0 0
    %512 = vmatprep.subr.bf16.mxu0 0
    %513 = vmatpush1.bf16.xpose.msra.mxu0 0
    %514 = vmatprep.subr.bf16.mxu0 0
    %515 = vmatpush1.bf16.xpose.msra.mxu0 0
    %516 = vmatprep.subr.bf16.mxu0 0
    %517 = vmatpush1.bf16.xpose.msra.mxu0 0
    %518 = vmatprep.subr.bf16.mxu0 0
    %519 = vmatpush1.bf16.xpose.msra.mxu0 0
    %520 = vmatprep.subr.bf16.mxu0 0
    %521 = vmatpush1.bf16.xpose.msra.mxu0 0
    %522 = vmatprep.subr.bf16.mxu0 0
    %523 = vmatpush1.bf16.xpose.msra.mxu0 0
    %524 = vmatprep.subr.bf16.mxu0 0
    %525 = vmatpush1.bf16.xpose.msra.mxu0 0
    %526 = vmatprep.subr.bf16.mxu0 0
    %527 = vmatpush1.bf16.xpose.msra.mxu0 0
    %528 = vmatprep.subr.bf16.mxu0 0
    %529 = vmatpush1.bf16.xpose.msra.mxu0 0
    %530 = vmatprep.subr.bf16.mxu0 0
    %531 = vmatpush1.bf16.xpose.msra.mxu0 0
    %532 = vmatprep.subr.bf16.mxu0 0
    %533 = vmatpush1.bf16.xpose.msra.mxu0 0
    %534 = vmatprep.subr.bf16.mxu0 0
    %535 = vmatpush1.bf16.xpose.msra.mxu0 0
    %536 = vmatprep.subr.bf16.mxu0 0
    %537 = vmatpush1.bf16.xpose.msra.mxu0 0
    %538 = vmatprep.subr.bf16.mxu0 0
    %539 = vmatpush1.bf16.xpose.msra.mxu0 0
    %540 = vmatprep.mubr.bf16.mxu0 0
    %541 = vmatmul.mubr.bf16.gmra.mrb[0].mxu0 %v503
    %v542 = vpop.f32.mrb[0].mxu0
    %v543 = vadd.f32 %v489, %v542
    %v544 = vpop.f32.mrb[0].mxu0
    %v545 = vpop.f32.mrb[0].mxu0
    %v546 = vadd.f32 %v490, %v545
    %v547 = vpop.f32.mrb[0].mxu0
    %548 = vdwg.mxu0
    %vm549 = vcmask 130048
    %v550 = vsel %vm549, %v543, -inf
    %551 = vmax.xlane.f32.xlu0 %v550
    %v552 = vpop.xlane.xlu0 %551
    %v553 = vsel %vm549, %v546, -inf
    %554 = vmax.xlane.f32.xlu0 %v553
    %v555 = vpop.xlane.xlu0 %554
    %v556 = vsub.f32 %v543, %v552
    %v557 = vsub.f32 %v546, %v555
    %v558 = vmul.f32 %v556, 1.442695
    %v559 = vpow.pop %v558
    %v560 = vmul.f32 %v557, 1.442695
    %v561 = vpow.pop %v560
    %v562 = vsel %vm549, %v559, 0.0
    %563 = vadd.xlane.f32.xlu0 %v562
    %v564 = vpop.xlane.xlu0 %563
    %v565 = vsel %vm549, %v561, 0.0
    %566 = vadd.xlane.f32.xlu0 %v565
    %v567 = vpop.xlane.xlu0 %566
    %v568 = vrcp.pop %v564
    %v569 = vrcp.pop %v567
    %v570 = vmul.f32 %v559, %v568
    %v571 = vmul.f32 %v561, %v569
    %v572 = vpack.c.bf16 %v571, %v570
    %v573 = vsel %vm51, 1, 0
    %vm574 = vcmp.eq.s32.totalorder %v573, 1
    %vm575 = vmpackc.low %vm574, %vm574
    %v576 = vsel %vm575, 65537, 0
    %v577 = vlaneseq
    %v578 = vshrl.u32 %v577, 7
    %v579 = vsub.s32 0, %v578
    %v580 = vrot.slane %v576, %v579
    %vm581 = vcmp.ne.s16.totalorder %v580, 0
    %v582 = vsel %vm581, %v486, 0
    %v583 = vsel %vm581, %v488, 0
    %v585 = vsel %vm214, %v582, 0
    %587 = vmatprep.subr.bf16.mxu0 0
    %588 = vmatpush1.bf16.xpose.msra.mxu0 %v506
    %589 = vmatprep.subr.bf16.mxu0 0
    %590 = vmatpush1.bf16.xpose.msra.mxu0 0
    %591 = vmatprep.subr.bf16.mxu0 0
    %592 = vmatpush1.bf16.xpose.msra.mxu0 0
    %593 = vmatprep.subr.bf16.mxu0 0
    %594 = vmatpush1.bf16.xpose.msra.mxu0 0
    %595 = vmatprep.subr.bf16.mxu0 0
    %596 = vmatpush1.bf16.xpose.msra.mxu0 0
    %597 = vmatprep.subr.bf16.mxu0 0
    %598 = vmatpush1.bf16.xpose.msra.mxu0 0
    %599 = vmatprep.subr.bf16.mxu0 0
    %600 = vmatpush1.bf16.xpose.msra.mxu0 0
    %601 = vmatprep.subr.bf16.mxu0 0
    %602 = vmatpush1.bf16.xpose.msra.mxu0 0
    %603 = vmatprep.subr.bf16.mxu0 0
    %604 = vmatpush1.bf16.xpose.msra.mxu0 0
    %605 = vmatprep.subr.bf16.mxu0 0
    %606 = vmatpush1.bf16.xpose.msra.mxu0 0
    %607 = vmatprep.subr.bf16.mxu0 0
    %608 = vmatpush1.bf16.xpose.msra.mxu0 0
    %609 = vmatprep.subr.bf16.mxu0 0
    %610 = vmatpush1.bf16.xpose.msra.mxu0 0
    %611 = vmatprep.subr.bf16.mxu0 0
    %612 = vmatpush1.bf16.xpose.msra.mxu0 0
    %613 = vmatprep.subr.bf16.mxu0 0
    %614 = vmatpush1.bf16.xpose.msra.mxu0 0
    %615 = vmatprep.subr.bf16.mxu0 0
    %616 = vmatpush1.bf16.xpose.msra.mxu0 0
    %617 = vmatprep.subr.bf16.mxu0 0
    %618 = vmatpush1.bf16.xpose.msra.mxu0 0
    %619 = vmatprep.mubr.bf16.mxu0 0
    %620 = vmatmul.mubr.bf16.gmra.mrb[0].mxu0 %v585
    %v621 = vpop.f32.mrb[0].mxu0
    %v622 = vadd.f32 %v489, %v621
    %v623 = vpop.f32.mrb[0].mxu0
    %v624 = vpop.f32.mrb[0].mxu0
    %v625 = vadd.f32 %v490, %v624
    %v626 = vpop.f32.mrb[0].mxu0
    %627 = vdwg.mxu0
    %v628 = vsel %vm549, %v622, -inf
    %629 = vmax.xlane.f32.xlu0 %v628
    %v630 = vpop.xlane.xlu0 %629
    %v631 = vsel %vm549, %v625, -inf
    %632 = vmax.xlane.f32.xlu0 %v631
    %v633 = vpop.xlane.xlu0 %632
    %v634 = vsub.f32 %v622, %v630
    %v635 = vsub.f32 %v625, %v633
    %v636 = vmul.f32 %v634, 1.442695
    %v637 = vpow.pop %v636
    %v638 = vmul.f32 %v635, 1.442695
    %v639 = vpow.pop %v638
    %v640 = vsel %vm549, %v637, 0.0
    %641 = vadd.xlane.f32.xlu0 %v640
    %v642 = vpop.xlane.xlu0 %641
    %v643 = vsel %vm549, %v639, 0.0
    %644 = vadd.xlane.f32.xlu0 %v643
    %v645 = vpop.xlane.xlu0 %644
    %v646 = vrcp.pop %v642
    %v647 = vrcp.pop %v645
    %v648 = vmul.f32 %v637, %v646
    %v649 = vmul.f32 %v639, %v647
    %v650 = vpack.c.bf16 %v649, %v648
    %v652 = vsel %vm549, %v650, 0
    %654 = vmatprep.subr.bf16.mxu0 0
    %655 = vmatpush1.bf16.msra.mxu0 %v583
    %656 = vmatprep.subr.bf16.mxu0 0
    %657 = vmatpush1.bf16.msra.mxu0 0
    %658 = vmatprep.subr.bf16.mxu0 0
    %659 = vmatpush1.bf16.msra.mxu0 0
    %660 = vmatprep.subr.bf16.mxu0 0
    %661 = vmatpush1.bf16.msra.mxu0 0
    %662 = vmatprep.subr.bf16.mxu0 0
    %663 = vmatpush1.bf16.msra.mxu0 0
    %664 = vmatprep.subr.bf16.mxu0 0
    %665 = vmatpush1.bf16.msra.mxu0 0
    %666 = vmatprep.subr.bf16.mxu0 0
    %667 = vmatpush1.bf16.msra.mxu0 0
    %668 = vmatprep.subr.bf16.mxu0 0
    %669 = vmatpush1.bf16.msra.mxu0 0
    %670 = vmatprep.subr.bf16.mxu0 0
    %671 = vmatpush1.bf16.msra.mxu0 0
    %672 = vmatprep.subr.bf16.mxu0 0
    %673 = vmatpush1.bf16.msra.mxu0 0
    %674 = vmatprep.subr.bf16.mxu0 0
    %675 = vmatpush1.bf16.msra.mxu0 0
    %676 = vmatprep.subr.bf16.mxu0 0
    %677 = vmatpush1.bf16.msra.mxu0 0
    %678 = vmatprep.subr.bf16.mxu0 0
    %679 = vmatpush1.bf16.msra.mxu0 0
    %680 = vmatprep.subr.bf16.mxu0 0
    %681 = vmatpush1.bf16.msra.mxu0 0
    %682 = vmatprep.subr.bf16.mxu0 0
    %683 = vmatpush1.bf16.msra.mxu0 0
    %684 = vmatprep.subr.bf16.mxu0 0
    %685 = vmatpush1.bf16.msra.mxu0 0
    %686 = vmatprep.mubr.bf16.mxu0 0
    %687 = vmatmul.mubr.bf16.gmra.mrb[0].mxu0 %v652
    %v688 = vpop.f32.mrb[0].mxu0
    %v689 = vadd.f32 0.0, %v688
    %v690 = vpop.f32.mrb[0].mxu0
    %v691 = vpop.f32.mrb[0].mxu0
    %v692 = vadd.f32 0.0, %v691
    %v693 = vpop.f32.mrb[0].mxu0
    %694 = vdwg.mxu0
    %v696 = vsel %vm549, %v572, 0
    %698 = vmatprep.subr.bf16.mxu0 0
    %699 = vmatpush1.bf16.msra.mxu0 %v501
    %700 = vmatprep.subr.bf16.mxu0 0
    %701 = vmatpush1.bf16.msra.mxu0 0
    %702 = vmatprep.subr.bf16.mxu0 0
    %703 = vmatpush1.bf16.msra.mxu0 0
    %704 = vmatprep.subr.bf16.mxu0 0
    %705 = vmatpush1.bf16.msra.mxu0 0
    %706 = vmatprep.subr.bf16.mxu0 0
    %707 = vmatpush1.bf16.msra.mxu0 0
    %708 = vmatprep.subr.bf16.mxu0 0
    %709 = vmatpush1.bf16.msra.mxu0 0
    %710 = vmatprep.subr.bf16.mxu0 0
    %711 = vmatpush1.bf16.msra.mxu0 0
    %712 = vmatprep.subr.bf16.mxu0 0
    %713 = vmatpush1.bf16.msra.mxu0 0
    %714 = vmatprep.subr.bf16.mxu0 0
    %715 = vmatpush1.bf16.msra.mxu0 0
    %716 = vmatprep.subr.bf16.mxu0 0
    %717 = vmatpush1.bf16.msra.mxu0 0
    %718 = vmatprep.subr.bf16.mxu0 0
    %719 = vmatpush1.bf16.msra.mxu0 0
    %720 = vmatprep.subr.bf16.mxu0 0
    %721 = vmatpush1.bf16.msra.mxu0 0
    %722 = vmatprep.subr.bf16.mxu0 0
    %723 = vmatpush1.bf16.msra.mxu0 0
    %724 = vmatprep.subr.bf16.mxu0 0
    %725 = vmatpush1.bf16.msra.mxu0 0
    %726 = vmatprep.subr.bf16.mxu0 0
    %727 = vmatpush1.bf16.msra.mxu0 0
    %728 = vmatprep.subr.bf16.mxu0 0
    %729 = vmatpush1.bf16.msra.mxu0 0
    %730 = vmatprep.mubr.bf16.mxu0 0
    %731 = vmatmul.mubr.bf16.gmra.mrb[0].mxu0 %v696
    %v732 = vpop.f32.mrb[0].mxu0
    %v733 = vadd.f32 %v689, %v732
    %v734 = vpop.f32.mrb[0].mxu0
    %v735 = vpop.f32.mrb[0].mxu0
    %v736 = vadd.f32 %v692, %v735
    %v737 = vpop.f32.mrb[0].mxu0
    %738 = vdwg.mxu0
    %v739 = vsel %vm54, 1, 0
    %vm740 = vcmp.eq.s32.totalorder %v739, 1
    %vm741 = vmpackc.low %vm740, %vm740
    %v742 = vsel %vm741, 65537, 0
    %v743 = vlaneseq
    %v744 = vshrl.u32 %v743, 7
    %v745 = vsub.s32 0, %v744
    %v746 = vrot.slane %v742, %v745
    %vm747 = vcmp.ne.s16.totalorder %v746, 0
    %v748 = vsel %vm747, %v486, 0
    %v749 = vsel %vm747, %v488, 0
    %v751 = vsel %vm214, %v748, 0
    %753 = vmatprep.subr.bf16.mxu0 0
    %754 = vmatpush1.bf16.xpose.msra.mxu0 %v506
    %755 = vmatprep.subr.bf16.mxu0 0
    %756 = vmatpush1.bf16.xpose.msra.mxu0 0
    %757 = vmatprep.subr.bf16.mxu0 0
    %758 = vmatpush1.bf16.xpose.msra.mxu0 0
    %759 = vmatprep.subr.bf16.mxu0 0
    %760 = vmatpush1.bf16.xpose.msra.mxu0 0
    %761 = vmatprep.subr.bf16.mxu0 0
    %762 = vmatpush1.bf16.xpose.msra.mxu0 0
    %763 = vmatprep.subr.bf16.mxu0 0
    %764 = vmatpush1.bf16.xpose.msra.mxu0 0
    %765 = vmatprep.subr.bf16.mxu0 0
    %766 = vmatpush1.bf16.xpose.msra.mxu0 0
    %767 = vmatprep.subr.bf16.mxu0 0
    %768 = vmatpush1.bf16.xpose.msra.mxu0 0
    %769 = vmatprep.subr.bf16.mxu0 0
    %770 = vmatpush1.bf16.xpose.msra.mxu0 0
    %771 = vmatprep.subr.bf16.mxu0 0
    %772 = vmatpush1.bf16.xpose.msra.mxu0 0
    %773 = vmatprep.subr.bf16.mxu0 0
    %774 = vmatpush1.bf16.xpose.msra.mxu0 0
    %775 = vmatprep.subr.bf16.mxu0 0
    %776 = vmatpush1.bf16.xpose.msra.mxu0 0
    %777 = vmatprep.subr.bf16.mxu0 0
    %778 = vmatpush1.bf16.xpose.msra.mxu0 0
    %779 = vmatprep.subr.bf16.mxu0 0
    %780 = vmatpush1.bf16.xpose.msra.mxu0 0
    %781 = vmatprep.subr.bf16.mxu0 0
    %782 = vmatpush1.bf16.xpose.msra.mxu0 0
    %783 = vmatprep.subr.bf16.mxu0 0
    %784 = vmatpush1.bf16.xpose.msra.mxu0 0
    %785 = vmatprep.mubr.bf16.mxu0 0
    %786 = vmatmul.mubr.bf16.gmra.mrb[0].mxu0 %v751
    %v787 = vpop.f32.mrb[0].mxu0
    %v788 = vadd.f32 %v489, %v787
    %v789 = vpop.f32.mrb[0].mxu0
    %v790 = vpop.f32.mrb[0].mxu0
    %v791 = vadd.f32 %v490, %v790
    %v792 = vpop.f32.mrb[0].mxu0
    %793 = vdwg.mxu0
    %v794 = vsel %vm549, %v788, -inf
    %795 = vmax.xlane.f32.xlu0 %v794
    %v796 = vpop.xlane.xlu0 %795
    %v797 = vsel %vm549, %v791, -inf
    %798 = vmax.xlane.f32.xlu0 %v797
    %v799 = vpop.xlane.xlu0 %798
    %v800 = vsub.f32 %v788, %v796
    %v801 = vsub.f32 %v791, %v799
    %v802 = vmul.f32 %v800, 1.442695
    %v803 = vpow.pop %v802
    %v804 = vmul.f32 %v801, 1.442695
    %v805 = vpow.pop %v804
    %v806 = vsel %vm549, %v803, 0.0
    %807 = vadd.xlane.f32.xlu0 %v806
    %v808 = vpop.xlane.xlu0 %807
    %v809 = vsel %vm549, %v805, 0.0
    %810 = vadd.xlane.f32.xlu0 %v809
    %v811 = vpop.xlane.xlu0 %810
    %v812 = vrcp.pop %v808
    %v813 = vrcp.pop %v811
    %v814 = vmul.f32 %v803, %v812
    %v815 = vmul.f32 %v805, %v813
    %v816 = vpack.c.bf16 %v815, %v814
    %v818 = vsel %vm549, %v816, 0
    %820 = vmatprep.subr.bf16.mxu0 0
    %821 = vmatpush1.bf16.msra.mxu0 %v749
    %822 = vmatprep.subr.bf16.mxu0 0
    %823 = vmatpush1.bf16.msra.mxu0 0
    %824 = vmatprep.subr.bf16.mxu0 0
    %825 = vmatpush1.bf16.msra.mxu0 0
    %826 = vmatprep.subr.bf16.mxu0 0
    %827 = vmatpush1.bf16.msra.mxu0 0
    %828 = vmatprep.subr.bf16.mxu0 0
    %829 = vmatpush1.bf16.msra.mxu0 0
    %830 = vmatprep.subr.bf16.mxu0 0
    %831 = vmatpush1.bf16.msra.mxu0 0
    %832 = vmatprep.subr.bf16.mxu0 0
    %833 = vmatpush1.bf16.msra.mxu0 0
    %834 = vmatprep.subr.bf16.mxu0 0
    %835 = vmatpush1.bf16.msra.mxu0 0
    %836 = vmatprep.subr.bf16.mxu0 0
    %837 = vmatpush1.bf16.msra.mxu0 0
    %838 = vmatprep.subr.bf16.mxu0 0
    %839 = vmatpush1.bf16.msra.mxu0 0
    %840 = vmatprep.subr.bf16.mxu0 0
    %841 = vmatpush1.bf16.msra.mxu0 0
    %842 = vmatprep.subr.bf16.mxu0 0
    %843 = vmatpush1.bf16.msra.mxu0 0
    %844 = vmatprep.subr.bf16.mxu0 0
    %845 = vmatpush1.bf16.msra.mxu0 0
    %846 = vmatprep.subr.bf16.mxu0 0
    %847 = vmatpush1.bf16.msra.mxu0 0
    %848 = vmatprep.subr.bf16.mxu0 0
    %849 = vmatpush1.bf16.msra.mxu0 0
    %850 = vmatprep.subr.bf16.mxu0 0
    %851 = vmatpush1.bf16.msra.mxu0 0
    %852 = vmatprep.mubr.bf16.mxu0 0
    %853 = vmatmul.mubr.bf16.gmra.mrb[0].mxu0 %v818
    %v854 = vpop.f32.mrb[0].mxu0
    %v855 = vadd.f32 0.0, %v854
    %v856 = vpop.f32.mrb[0].mxu0
    %v857 = vpop.f32.mrb[0].mxu0
    %v858 = vadd.f32 0.0, %v857
    %v859 = vpop.f32.mrb[0].mxu0
    %860 = vdwg.mxu0
    %v861 = vadd.f32 %v733, %v855
    %v862 = vadd.f32 %v736, %v858
    %v863 = vsel %vm57, 1, 0
    %vm864 = vcmp.eq.s32.totalorder %v863, 1
    %vm865 = vmpackc.low %vm864, %vm864
    %v866 = vsel %vm865, 65537, 0
    %v867 = vlaneseq
    %v868 = vshrl.u32 %v867, 7
    %v869 = vsub.s32 0, %v868
    %v870 = vrot.slane %v866, %v869
    %vm871 = vcmp.ne.s16.totalorder %v870, 0
    %v872 = vsel %vm871, %v486, 0
    %v873 = vsel %vm871, %v488, 0
    %v875 = vsel %vm214, %v872, 0
    %877 = vmatprep.subr.bf16.mxu0 0
    %878 = vmatpush1.bf16.xpose.msra.mxu0 %v506
    %879 = vmatprep.subr.bf16.mxu0 0
    %880 = vmatpush1.bf16.xpose.msra.mxu0 0
    %881 = vmatprep.subr.bf16.mxu0 0
    %882 = vmatpush1.bf16.xpose.msra.mxu0 0
    %883 = vmatprep.subr.bf16.mxu0 0
    %884 = vmatpush1.bf16.xpose.msra.mxu0 0
    %885 = vmatprep.subr.bf16.mxu0 0
    %886 = vmatpush1.bf16.xpose.msra.mxu0 0
    %887 = vmatprep.subr.bf16.mxu0 0
    %888 = vmatpush1.bf16.xpose.msra.mxu0 0
    %889 = vmatprep.subr.bf16.mxu0 0
    %890 = vmatpush1.bf16.xpose.msra.mxu0 0
    %891 = vmatprep.subr.bf16.mxu0 0
    %892 = vmatpush1.bf16.xpose.msra.mxu0 0
    %893 = vmatprep.subr.bf16.mxu0 0
    %894 = vmatpush1.bf16.xpose.msra.mxu0 0
    %895 = vmatprep.subr.bf16.mxu0 0
    %896 = vmatpush1.bf16.xpose.msra.mxu0 0
    %897 = vmatprep.subr.bf16.mxu0 0
    %898 = vmatpush1.bf16.xpose.msra.mxu0 0
    %899 = vmatprep.subr.bf16.mxu0 0
    %900 = vmatpush1.bf16.xpose.msra.mxu0 0
    %901 = vmatprep.subr.bf16.mxu0 0
    %902 = vmatpush1.bf16.xpose.msra.mxu0 0
    %903 = vmatprep.subr.bf16.mxu0 0
    %904 = vmatpush1.bf16.xpose.msra.mxu0 0
    %905 = vmatprep.subr.bf16.mxu0 0
    %906 = vmatpush1.bf16.xpose.msra.mxu0 0
    %907 = vmatprep.subr.bf16.mxu0 0
    %908 = vmatpush1.bf16.xpose.msra.mxu0 0
    %909 = vmatprep.mubr.bf16.mxu0 0
    %910 = vmatmul.mubr.bf16.gmra.mrb[0].mxu0 %v875
    %v911 = vpop.f32.mrb[0].mxu0
    %v912 = vadd.f32 %v489, %v911
    %v913 = vpop.f32.mrb[0].mxu0
    %v914 = vpop.f32.mrb[0].mxu0
    %v915 = vadd.f32 %v490, %v914
    %v916 = vpop.f32.mrb[0].mxu0
    %917 = vdwg.mxu0
    %v918 = vsel %vm549, %v912, -inf
    %919 = vmax.xlane.f32.xlu0 %v918
    %v920 = vpop.xlane.xlu0 %919
    %v921 = vsel %vm549, %v915, -inf
    %922 = vmax.xlane.f32.xlu0 %v921
    %v923 = vpop.xlane.xlu0 %922
    %v924 = vsub.f32 %v912, %v920
    %v925 = vsub.f32 %v915, %v923
    %v926 = vmul.f32 %v924, 1.442695
    %v927 = vpow.pop %v926
    %v928 = vmul.f32 %v925, 1.442695
    %v929 = vpow.pop %v928
    %v930 = vsel %vm549, %v927, 0.0
    %931 = vadd.xlane.f32.xlu0 %v930
    %v932 = vpop.xlane.xlu0 %931
    %v933 = vsel %vm549, %v929, 0.0
    %934 = vadd.xlane.f32.xlu0 %v933
    %v935 = vpop.xlane.xlu0 %934
    %v936 = vrcp.pop %v932
    %v937 = vrcp.pop %v935
    %v938 = vmul.f32 %v927, %v936
    %v939 = vmul.f32 %v929, %v937
    %v940 = vpack.c.bf16 %v939, %v938
    %v942 = vsel %vm549, %v940, 0
    %944 = vmatprep.subr.bf16.mxu0 0
    %945 = vmatpush1.bf16.msra.mxu0 %v873
    %946 = vmatprep.subr.bf16.mxu0 0
    %947 = vmatpush1.bf16.msra.mxu0 0
    %948 = vmatprep.subr.bf16.mxu0 0
    %949 = vmatpush1.bf16.msra.mxu0 0
    %950 = vmatprep.subr.bf16.mxu0 0
    %951 = vmatpush1.bf16.msra.mxu0 0
    %952 = vmatprep.subr.bf16.mxu0 0
    %953 = vmatpush1.bf16.msra.mxu0 0
    %954 = vmatprep.subr.bf16.mxu0 0
    %955 = vmatpush1.bf16.msra.mxu0 0
    %956 = vmatprep.subr.bf16.mxu0 0
    %957 = vmatpush1.bf16.msra.mxu0 0
    %958 = vmatprep.subr.bf16.mxu0 0
    %959 = vmatpush1.bf16.msra.mxu0 0
    %960 = vmatprep.subr.bf16.mxu0 0
    %961 = vmatpush1.bf16.msra.mxu0 0
    %962 = vmatprep.subr.bf16.mxu0 0
    %963 = vmatpush1.bf16.msra.mxu0 0
    %964 = vmatprep.subr.bf16.mxu0 0
    %965 = vmatpush1.bf16.msra.mxu0 0
    %966 = vmatprep.subr.bf16.mxu0 0
    %967 = vmatpush1.bf16.msra.mxu0 0
    %968 = vmatprep.subr.bf16.mxu0 0
    %969 = vmatpush1.bf16.msra.mxu0 0
    %970 = vmatprep.subr.bf16.mxu0 0
    %971 = vmatpush1.bf16.msra.mxu0 0
    %972 = vmatprep.subr.bf16.mxu0 0
    %973 = vmatpush1.bf16.msra.mxu0 0
    %974 = vmatprep.subr.bf16.mxu0 0
    %975 = vmatpush1.bf16.msra.mxu0 0
    %976 = vmatprep.mubr.bf16.mxu0 0
    %977 = vmatmul.mubr.bf16.gmra.mrb[0].mxu0 %v942
    %v978 = vpop.f32.mrb[0].mxu0
    %v979 = vadd.f32 0.0, %v978
    %v980 = vpop.f32.mrb[0].mxu0
    %v981 = vpop.f32.mrb[0].mxu0
    %v982 = vadd.f32 0.0, %v981
    %v983 = vpop.f32.mrb[0].mxu0
    %984 = vdwg.mxu0
    %v985 = vadd.f32 %v861, %v979
    %v986 = vadd.f32 %v862, %v982
    %s987 = scalar_lea.vmem %s7, 48
    %v988 = vld [vmem:[%s987] sm:$0xf]
    %v989 = vld [vmem:[%s987 + $0x4] sm:$0xf]
    %v990 = vld [vmem:[%s987 + $0x8] sm:$0xf]
    %v991 = vld [vmem:[%s987 + $0xc] sm:$0xf]
    %v992 = vld [vmem:[%s10 + $0x2a] sm:$0x1]
    %v993 = vpack.c.bf16 %v986, %v985
    %v994 = vlaneseq
    %v995 = vshrl.u32 %v994, 7
    %v996 = vsub.s32 0, %v995
    %v997 = vrot.slane %v992, %v996
    %v1002 = vunpack.c.l.b16 %v988
    %v1003 = vunpack.c.l.b16 %v989
    %v1004 = vunpack.c.l.b16 %v990
    %v1005 = vunpack.c.l.b16 %v991
    %v1006 = vpack.c.b16 %v1003, %v1002
    %v1007 = vpack.c.b16 %v1005, %v1004
    %v1011 = vsel %vm214, %v993, 0
    %1013 = vmatprep.subr.bf16.mxu0 0
    %1014 = vmatpush1.bf16.msra.mxu0 %v1006
    %1015 = vmatprep.subr.bf16.mxu0 0
    %1016 = vmatpush1.bf16.msra.mxu0 %v1007
    %1017 = vmatprep.subr.bf16.mxu0 0
    %1018 = vmatpush1.bf16.msra.mxu0 0
    %1019 = vmatprep.subr.bf16.mxu0 0
    %1020 = vmatpush1.bf16.msra.mxu0 0
    %1021 = vmatprep.subr.bf16.mxu0 0
    %1022 = vmatpush1.bf16.msra.mxu0 0
    %1023 = vmatprep.subr.bf16.mxu0 0
    %1024 = vmatpush1.bf16.msra.mxu0 0
    %1025 = vmatprep.subr.bf16.mxu0 0
    %1026 = vmatpush1.bf16.msra.mxu0 0
    %1027 = vmatprep.subr.bf16.mxu0 0
    %1028 = vmatpush1.bf16.msra.mxu0 0
    %1029 = vmatprep.subr.bf16.mxu0 0
    %1030 = vmatpush1.bf16.msra.mxu0 0
    %1031 = vmatprep.subr.bf16.mxu0 0
    %1032 = vmatpush1.bf16.msra.mxu0 0
    %1033 = vmatprep.subr.bf16.mxu0 0
    %1034 = vmatpush1.bf16.msra.mxu0 0
    %1035 = vmatprep.subr.bf16.mxu0 0
    %1036 = vmatpush1.bf16.msra.mxu0 0
    %1037 = vmatprep.subr.bf16.mxu0 0
    %1038 = vmatpush1.bf16.msra.mxu0 0
    %1039 = vmatprep.subr.bf16.mxu0 0
    %1040 = vmatpush1.bf16.msra.mxu0 0
    %1041 = vmatprep.subr.bf16.mxu0 0
    %1042 = vmatpush1.bf16.msra.mxu0 0
    %1043 = vmatprep.subr.bf16.mxu0 0
    %1044 = vmatpush1.bf16.msra.mxu0 0
    %1045 = vmatprep.mubr.bf16.mxu0 0
    %1046 = vmatmul.mubr.bf16.gmra.mrb[0].mxu0 %v1011
    %v1047 = vpop.f32.mrb[0].mxu0
    %v1048 = vadd.f32 %v997, %v1047
    %v1049 = vpop.f32.mrb[0].mxu0
    %v1050 = vpop.f32.mrb[0].mxu0
    %v1051 = vadd.f32 %v997, %v1050
    %v1052 = vpop.f32.mrb[0].mxu0
    %1053 = vdwg.mxu0
    %v1054 = vadd.f32 %v252, %v1048
    %v1055 = vadd.f32 %v253, %v1051
    %v1056 = vld [vmem:[%s10 + $0x2b] sm:$0x1]
    %v1057 = vld [vmem:[%s10 + $0x2c] sm:$0x1]
    %v1058 = vsel %vm214, %v1054, 0.0
    %1059 = vadd.xlane.f32.xlu0 %v1058
    %v1060 = vpop.xlane.xlu0 %1059
    %v1061 = vsel %vm214, %v1055, 0.0
    %1062 = vadd.xlane.f32.xlu0 %v1061
    %v1063 = vpop.xlane.xlu0 %1062
    %v1064 = vmul.f32 %v1060, %v221
    %v1065 = vmul.f32 %v1063, %v221
    %v1066 = vsub.f32 %v1054, %v1064
    %v1067 = vsub.f32 %v1055, %v1065
    %v1068 = vmul.f32 %v1066, %v1066
    %v1069 = vmul.f32 %v1067, %v1067
    %v1070 = vsel %vm214, %v1068, 0.0
    %1071 = vadd.xlane.f32.xlu0 %v1070
    %v1072 = vpop.xlane.xlu0 %1071
    %v1073 = vsel %vm214, %v1069, 0.0
    %1074 = vadd.xlane.f32.xlu0 %v1073
    %v1075 = vpop.xlane.xlu0 %1074
    %v1076 = vmul.f32 %v1072, %v221
    %v1077 = vmul.f32 %v1075, %v221
    %v1078 = vadd.f32 %v1076, 1e-05
    %v1079 = vadd.f32 %v1077, 1e-05
    %v1080 = vrsqrt.pop %v1078
    %v1081 = vrsqrt.pop %v1079
    %v1082 = vmul.f32 %v1066, %v1080
    %v1083 = vmul.f32 %v1067, %v1081
    %v1084 = vlaneseq
    %v1085 = vshrl.u32 %v1084, 7
    %v1086 = vsub.s32 0, %v1085
    %v1087 = vrot.slane %v1056, %v1086
    %v1088 = vmul.f32 %v1082, %v1087
    %v1089 = vmul.f32 %v1083, %v1087
    %v1090 = vlaneseq
    %v1091 = vshrl.u32 %v1090, 7
    %v1092 = vsub.s32 0, %v1091
    %v1093 = vrot.slane %v1057, %v1092
    %v1094 = vadd.f32 %v1088, %v1093
    %v1095 = vadd.f32 %v1089, %v1093
    %v1096 = vld [vmem:[%s8] sm:$0xf]
    %v1097 = vld [vmem:[%s8 + $0x4] sm:$0xf]
    %v1098 = vld [vmem:[%s8 + $0x8] sm:$0xf]
    %v1099 = vld [vmem:[%s8 + $0xc] sm:$0xf]
    %v1100 = vld [vmem:[%s10 + $0x2d] sm:$0x1]
    %v1101 = vpack.c.bf16 %v1095, %v1094
    %v1102 = vlaneseq
    %v1103 = vshrl.u32 %v1102, 7
    %v1104 = vsub.s32 0, %v1103
    %v1105 = vrot.slane %v1100, %v1104
    %v1110 = vunpack.c.l.b16 %v1096
    %v1111 = vunpack.c.l.b16 %v1097
    %v1112 = vunpack.c.l.b16 %v1098
    %v1113 = vunpack.c.l.b16 %v1099
    %v1114 = vpack.c.b16 %v1111, %v1110
    %v1115 = vpack.c.b16 %v1113, %v1112
    %v1119 = vsel %vm214, %v1101, 0
    %1121 = vmatprep.subr.bf16.mxu0 0
    %1122 = vmatpush1.bf16.msra.mxu0 %v1114
    %1123 = vmatprep.subr.bf16.mxu0 0
    %1124 = vmatpush1.bf16.msra.mxu0 %v1115
    %1125 = vmatprep.subr.bf16.mxu0 0
    %1126 = vmatpush1.bf16.msra.mxu0 0
    %1127 = vmatprep.subr.bf16.mxu0 0
    %1128 = vmatpush1.bf16.msra.mxu0 0
    %1129 = vmatprep.subr.bf16.mxu0 0
    %1130 = vmatpush1.bf16.msra.mxu0 0
    %1131 = vmatprep.subr.bf16.mxu0 0
    %1132 = vmatpush1.bf16.msra.mxu0 0
    %1133 = vmatprep.subr.bf16.mxu0 0
    %1134 = vmatpush1.bf16.msra.mxu0 0
    %1135 = vmatprep.subr.bf16.mxu0 0
    %1136 = vmatpush1.bf16.msra.mxu0 0
    %1137 = vmatprep.subr.bf16.mxu0 0
    %1138 = vmatpush1.bf16.msra.mxu0 0
    %1139 = vmatprep.subr.bf16.mxu0 0
    %1140 = vmatpush1.bf16.msra.mxu0 0
    %1141 = vmatprep.subr.bf16.mxu0 0
    %1142 = vmatpush1.bf16.msra.mxu0 0
    %1143 = vmatprep.subr.bf16.mxu0 0
    %1144 = vmatpush1.bf16.msra.mxu0 0
    %1145 = vmatprep.subr.bf16.mxu0 0
    %1146 = vmatpush1.bf16.msra.mxu0 0
    %1147 = vmatprep.subr.bf16.mxu0 0
    %1148 = vmatpush1.bf16.msra.mxu0 0
    %1149 = vmatprep.subr.bf16.mxu0 0
    %1150 = vmatpush1.bf16.msra.mxu0 0
    %1151 = vmatprep.subr.bf16.mxu0 0
    %1152 = vmatpush1.bf16.msra.mxu0 0
    %1153 = vmatprep.mubr.bf16.mxu0 0
    %1154 = vmatmul.mubr.bf16.gmra.mrb[0].mxu0 %v1119
    %v1155 = vpop.f32.mrb[0].mxu0
    %v1156 = vadd.f32 %v1105, %v1155
    %v1157 = vpop.f32.mrb[0].mxu0
    %v1158 = vpop.f32.mrb[0].mxu0
    %v1159 = vadd.f32 %v1105, %v1158
    %v1160 = vpop.f32.mrb[0].mxu0
    %1161 = vdwg.mxu0
    %v1162 = vmul.f32 %v1156, -1.702
    %v1163 = vmul.f32 %v1159, -1.702
    %v1164 = vmul.f32 %v1162, 1.442695
    %v1165 = vpow.pop %v1164
    %v1166 = vmul.f32 %v1163, 1.442695
    %v1167 = vpow.pop %v1166
    %v1168 = vadd.f32 %v1165, 1.0
    %v1169 = vadd.f32 %v1167, 1.0
    %v1170 = vrcp.pop %v1168
    %v1171 = vmul.f32 1.0, %v1170
    %v1172 = vrcp.pop %v1169
    %v1173 = vmul.f32 1.0, %v1172
    %v1174 = vmul.f32 %v1156, %v1171
    %v1175 = vmul.f32 %v1159, %v1173
    %v1176 = vld [vmem:[%s9] sm:$0xf]
    %v1177 = vld [vmem:[%s9 + $0x4] sm:$0xf]
    %v1178 = vld [vmem:[%s9 + $0x8] sm:$0xf]
    %v1179 = vld [vmem:[%s9 + $0xc] sm:$0xf]
    %v1180 = vld [vmem:[%s9 + $0x10] sm:$0xf]
    %v1181 = vld [vmem:[%s9 + $0x14] sm:$0xf]
    %v1182 = vld [vmem:[%s9 + $0x18] sm:$0xf]
    %v1183 = vld [vmem:[%s9 + $0x1c] sm:$0xf]
    %v1184 = vld [vmem:[%s9 + $0x20] sm:$0xf]
    %v1185 = vld [vmem:[%s9 + $0x24] sm:$0xf]
    %v1186 = vld [vmem:[%s9 + $0x28] sm:$0xf]
    %v1187 = vld [vmem:[%s9 + $0x2c] sm:$0xf]
    %v1188 = vld [vmem:[%s9 + $0x30] sm:$0xf]
    %v1189 = vld [vmem:[%s9 + $0x34] sm:$0xf]
    %v1190 = vld [vmem:[%s9 + $0x38] sm:$0xf]
    %v1191 = vld [vmem:[%s9 + $0x3c] sm:$0xf]
    %v1192 = vld [vmem:[%s10 + $0x2e] sm:$0x1]
    %v1193 = vpack.c.bf16 %v1175, %v1174
    %v1194 = vlaneseq
    %v1195 = vshrl.u32 %v1194, 7
    %v1196 = vsub.s32 0, %v1195
    %v1197 = vrot.slane %v1192, %v1196
    %v1214 = vunpack.c.l.b16 %v1176
    %v1215 = vunpack.c.l.b16 %v1177
    %v1216 = vunpack.c.l.b16 %v1178
    %v1217 = vunpack.c.l.b16 %v1179
    %v1218 = vunpack.c.l.b16 %v1180
    %v1219 = vunpack.c.l.b16 %v1181
    %v1220 = vunpack.c.l.b16 %v1182
    %v1221 = vunpack.c.l.b16 %v1183
    %v1222 = vunpack.c.l.b16 %v1184
    %v1223 = vunpack.c.l.b16 %v1185
    %v1224 = vunpack.c.l.b16 %v1186
    %v1225 = vunpack.c.l.b16 %v1187
    %v1226 = vunpack.c.l.b16 %v1188
    %v1227 = vunpack.c.l.b16 %v1189
    %v1228 = vunpack.c.l.b16 %v1190
    %v1229 = vunpack.c.l.b16 %v1191
    %v1230 = vpack.c.b16 %v1215, %v1214
    %v1231 = vpack.c.b16 %v1217, %v1216
    %v1232 = vpack.c.b16 %v1219, %v1218
    %v1233 = vpack.c.b16 %v1221, %v1220
    %v1234 = vpack.c.b16 %v1223, %v1222
    %v1235 = vpack.c.b16 %v1225, %v1224
    %v1236 = vpack.c.b16 %v1227, %v1226
    %v1237 = vpack.c.b16 %v1229, %v1228
    %1246 = vmatprep.subr.bf16.mxu0 0
    %1247 = vmatpush1.bf16.msra.mxu0 %v1230
    %1248 = vmatprep.subr.bf16.mxu0 0
    %1249 = vmatpush1.bf16.msra.mxu0 %v1231
    %1250 = vmatprep.subr.bf16.mxu0 0
    %1251 = vmatpush1.bf16.msra.mxu0 %v1232
    %1252 = vmatprep.subr.bf16.mxu0 0
    %1253 = vmatpush1.bf16.msra.mxu0 %v1233
    %1254 = vmatprep.subr.bf16.mxu0 0
    %1255 = vmatpush1.bf16.msra.mxu0 %v1234
    %1256 = vmatprep.subr.bf16.mxu0 0
    %1257 = vmatpush1.bf16.msra.mxu0 %v1235
    %1258 = vmatprep.subr.bf16.mxu0 0
    %1259 = vmatpush1.bf16.msra.mxu0 %v1236
    %1260 = vmatprep.subr.bf16.mxu0 0
    %1261 = vmatpush1.bf16.msra.mxu0 %v1237
    %1262 = vmatprep.subr.bf16.mxu0 0
    %1263 = vmatpush1.bf16.msra.mxu0 0
    %1264 = vmatprep.subr.bf16.mxu0 0
    %1265 = vmatpush1.bf16.msra.mxu0 0
    %1266 = vmatprep.subr.bf16.mxu0 0
    %1267 = vmatpush1.bf16.msra.mxu0 0
    %1268 = vmatprep.subr.bf16.mxu0 0
    %1269 = vmatpush1.bf16.msra.mxu0 0
    %1270 = vmatprep.subr.bf16.mxu0 0
    %1271 = vmatpush1.bf16.msra.mxu0 0
    %1272 = vmatprep.subr.bf16.mxu0 0
    %1273 = vmatpush1.bf16.msra.mxu0 0
    %1274 = vmatprep.subr.bf16.mxu0 0
    %1275 = vmatpush1.bf16.msra.mxu0 0
    %1276 = vmatprep.subr.bf16.mxu0 0
    %1277 = vmatpush1.bf16.msra.mxu0 0
    %1278 = vmatprep.mubr.bf16.mxu0 0
    %1279 = vmatmul.mubr.bf16.gmra.mrb[0].mxu0 %v1193
    %v1280 = vpop.f32.mrb[0].mxu0
    %v1281 = vadd.f32 %v1197, %v1280
    %v1282 = vpop.f32.mrb[0].mxu0
    %v1283 = vpop.f32.mrb[0].mxu0
    %v1284 = vadd.f32 %v1197, %v1283
    %v1285 = vpop.f32.mrb[0].mxu0
    %1286 = vdwg.mxu0
    %v1287 = vadd.f32 %v1054, %v1281
    %v1288 = vadd.f32 %v1055, %v1284
    %s1289 = scalar_lea.vmem %s7, 320
    %v1290 = vld [vmem:[%s1289] sm:$0xf]
    %v1291 = vld [vmem:[%s1289 + $0x4] sm:$0xf]
    %v1292 = vld [vmem:[%s1289 + $0x8] sm:$0xf]
    %v1293 = vld [vmem:[%s1289 + $0xc] sm:$0xf]
    %v1294 = vld [vmem:[%s10 + $0x22] sm:$0x1]
    %v1295 = vpack.c.bf16 %v1288, %v1287
    %v1296 = vlaneseq
    %v1297 = vshrl.u32 %v1296, 7
    %v1298 = vsub.s32 0, %v1297
    %v1299 = vrot.slane %v1294, %v1298
    %v1304 = vunpack.c.l.b16 %v1290
    %v1305 = vunpack.c.l.b16 %v1291
    %v1306 = vunpack.c.l.b16 %v1292
    %v1307 = vunpack.c.l.b16 %v1293
    %v1308 = vpack.c.b16 %v1305, %v1304
    %v1309 = vpack.c.b16 %v1307, %v1306
    %v1313 = vsel %vm214, %v1295, 0
    %1315 = vmatprep.subr.bf16.mxu0 0
    %1316 = vmatpush1.bf16.msra.mxu0 %v1308
    %1317 = vmatprep.subr.bf16.mxu0 0
    %1318 = vmatpush1.bf16.msra.mxu0 %v1309
    %1319 = vmatprep.subr.bf16.mxu0 0
    %1320 = vmatpush1.bf16.msra.mxu0 0
    %1321 = vmatprep.subr.bf16.mxu0 0
    %1322 = vmatpush1.bf16.msra.mxu0 0
    %1323 = vmatprep.subr.bf16.mxu0 0
    %1324 = vmatpush1.bf16.msra.mxu0 0
    %1325 = vmatprep.subr.bf16.mxu0 0
    %1326 = vmatpush1.bf16.msra.mxu0 0
    %1327 = vmatprep.subr.bf16.mxu0 0
    %1328 = vmatpush1.bf16.msra.mxu0 0
    %1329 = vmatprep.subr.bf16.mxu0 0
    %1330 = vmatpush1.bf16.msra.mxu0 0
    %1331 = vmatprep.subr.bf16.mxu0 0
    %1332 = vmatpush1.bf16.msra.mxu0 0
    %1333 = vmatprep.subr.bf16.mxu0 0
    %1334 = vmatpush1.bf16.msra.mxu0 0
    %1335 = vmatprep.subr.bf16.mxu0 0
    %1336 = vmatpush1.bf16.msra.mxu0 0
    %1337 = vmatprep.subr.bf16.mxu0 0
    %1338 = vmatpush1.bf16.msra.mxu0 0
    %1339 = vmatprep.subr.bf16.mxu0 0
    %1340 = vmatpush1.bf16.msra.mxu0 0
    %1341 = vmatprep.subr.bf16.mxu0 0
    %1342 = vmatpush1.bf16.msra.mxu0 0
    %1343 = vmatprep.subr.bf16.mxu0 0
    %1344 = vmatpush1.bf16.msra.mxu0 0
    %1345 = vmatprep.subr.bf16.mxu0 0
    %1346 = vmatpush1.bf16.msra.mxu0 0
    %1347 = vmatprep.mubr.bf16.mxu0 0
    %1348 = vmatmul.mubr.bf16.gmra.mrb[0].mxu0 %v1313
    %v1349 = vpop.f32.mrb[0].mxu0
    %v1350 = vadd.f32 %v1299, %v1349
    %v1351 = vpop.f32.mrb[0].mxu0
    %v1352 = vpop.f32.mrb[0].mxu0
    %v1353 = vadd.f32 %v1299, %v1352
    %v1354 = vpop.f32.mrb[0].mxu0
    %1355 = vdwg.mxu0
    %v1356 = vld [vmem:[%s1] sm:$0xff]
    %v1357 = vld [vmem:[%s1 + $0x8] sm:$0xff]
    %1358 = vset.pattern.permute.xlu0 0
    %1359 = vperm.xlu0 %1358, %v1356
    %v1360 = vpop.permute.xlu0 %1359
    %1361 = vset.pattern.permute.xlu0 0
    %1362 = vperm.xlu0 %1361, %v1357
    %v1363 = vpop.permute.xlu0 %1362
    %vm1364 = vcmp.eq.s32.totalorder %v45, %v1360
    %vm1365 = vcmp.eq.s32.totalorder %v45, %v1363
    %v1366 = vsel %vm1364, 1, 0
    %v1367 = vsel %vm1365, 1, 0
    %v1368 = vcvt.s32.f32 %v1366
    %v1369 = vcvt.s32.f32 %v1367
    %v1370 = vpack.c.bf16 %v1369, %v1368
    %s1371 = scalar_lea.vmem %s9, 192
    %v1372 = vld [vmem:[%s1371] sm:$0xf]
    %v1373 = vld [vmem:[%s1371 + $0x4] sm:$0xf]
    %v1374 = vld [vmem:[%s1371 + $0x8] sm:$0xf]
    %v1375 = vld [vmem:[%s1371 + $0xc] sm:$0xf]
    %v1376 = vld [vmem:[%s1371 + $0x10] sm:$0xf]
    %v1377 = vld [vmem:[%s1371 + $0x14] sm:$0xf]
    %v1378 = vld [vmem:[%s1371 + $0x18] sm:$0xf]
    %v1379 = vld [vmem:[%s1371 + $0x1c] sm:$0xf]
    %v1380 = vld [vmem:[%s1371 + $0x20] sm:$0xf]
    %v1381 = vld [vmem:[%s1371 + $0x24] sm:$0xf]
    %v1382 = vld [vmem:[%s1371 + $0x28] sm:$0xf]
    %v1383 = vld [vmem:[%s1371 + $0x2c] sm:$0xf]
    %v1384 = vld [vmem:[%s1371 + $0x30] sm:$0xf]
    %v1385 = vld [vmem:[%s1371 + $0x34] sm:$0xf]
    %v1386 = vld [vmem:[%s1371 + $0x38] sm:$0xf]
    %v1387 = vld [vmem:[%s1371 + $0x3c] sm:$0xf]
    %v1388 = vld [vmem:[%s10 + $0x10] sm:$0xff]
    %v1389 = vld [vmem:[%s10 + $0x18] sm:$0xff]
    %v1406 = vunpack.c.l.b16 %v1372
    %v1407 = vunpack.c.l.b16 %v1373
    %v1408 = vunpack.c.l.b16 %v1374
    %v1409 = vunpack.c.l.b16 %v1375
    %v1410 = vunpack.c.l.b16 %v1376
    %v1411 = vunpack.c.l.b16 %v1377
    %v1412 = vunpack.c.l.b16 %v1378
    %v1413 = vunpack.c.l.b16 %v1379
    %v1414 = vunpack.c.l.b16 %v1380
    %v1415 = vunpack.c.l.b16 %v1381
    %v1416 = vunpack.c.l.b16 %v1382
    %v1417 = vunpack.c.l.b16 %v1383
    %v1418 = vunpack.c.l.b16 %v1384
    %v1419 = vunpack.c.l.b16 %v1385
    %v1420 = vunpack.c.l.b16 %v1386
    %v1421 = vunpack.c.l.b16 %v1387
    %v1422 = vpack.c.b16 %v1407, %v1406
    %v1423 = vpack.c.b16 %v1409, %v1408
    %v1424 = vpack.c.b16 %v1411, %v1410
    %v1425 = vpack.c.b16 %v1413, %v1412
    %v1426 = vpack.c.b16 %v1415, %v1414
    %v1427 = vpack.c.b16 %v1417, %v1416
    %v1428 = vpack.c.b16 %v1419, %v1418
    %v1429 = vpack.c.b16 %v1421, %v1420
    %1438 = vmatprep.subr.bf16.mxu0 0
    %1439 = vmatpush1.bf16.msra.mxu0 %v1422
    %1440 = vmatprep.subr.bf16.mxu0 0
    %1441 = vmatpush1.bf16.msra.mxu0 %v1423
    %1442 = vmatprep.subr.bf16.mxu0 0
    %1443 = vmatpush1.bf16.msra.mxu0 %v1424
    %1444 = vmatprep.subr.bf16.mxu0 0
    %1445 = vmatpush1.bf16.msra.mxu0 %v1425
    %1446 = vmatprep.subr.bf16.mxu0 0
    %1447 = vmatpush1.bf16.msra.mxu0 %v1426
    %1448 = vmatprep.subr.bf16.mxu0 0
    %1449 = vmatpush1.bf16.msra.mxu0 %v1427
    %1450 = vmatprep.subr.bf16.mxu0 0
    %1451 = vmatpush1.bf16.msra.mxu0 %v1428
    %1452 = vmatprep.subr.bf16.mxu0 0
    %1453 = vmatpush1.bf16.msra.mxu0 %v1429
    %1454 = vmatprep.subr.bf16.mxu0 0
    %1455 = vmatpush1.bf16.msra.mxu0 0
    %1456 = vmatprep.subr.bf16.mxu0 0
    %1457 = vmatpush1.bf16.msra.mxu0 0
    %1458 = vmatprep.subr.bf16.mxu0 0
    %1459 = vmatpush1.bf16.msra.mxu0 0
    %1460 = vmatprep.subr.bf16.mxu0 0
    %1461 = vmatpush1.bf16.msra.mxu0 0
    %1462 = vmatprep.subr.bf16.mxu0 0
    %1463 = vmatpush1.bf16.msra.mxu0 0
    %1464 = vmatprep.subr.bf16.mxu0 0
    %1465 = vmatpush1.bf16.msra.mxu0 0
    %1466 = vmatprep.subr.bf16.mxu0 0
    %1467 = vmatpush1.bf16.msra.mxu0 0
    %1468 = vmatprep.subr.bf16.mxu0 0
    %1469 = vmatpush1.bf16.msra.mxu0 0
    %1470 = vmatprep.mubr.bf16.mxu0 0
    %1471 = vmatmul.mubr.bf16.gmra.mrb[0].mxu0 %v1370
    %v1472 = vpop.f32.mrb[0].mxu0
    %v1473 = vadd.f32 %v1388, %v1472
    %v1474 = vpop.f32.mrb[0].mxu0
    %v1475 = vpop.f32.mrb[0].mxu0
    %v1476 = vadd.f32 %v1389, %v1475
    %v1477 = vpop.f32.mrb[0].mxu0
    %1478 = vdwg.mxu0
    %v1479 = vld [vmem:[%s10 + $0x2f] sm:$0x1]
    %v1480 = vld [vmem:[%s10 + $0x30] sm:$0x1]
    %v1481 = vsel %vm214, %v1473, 0.0
    %1482 = vadd.xlane.f32.xlu0 %v1481
    %v1483 = vpop.xlane.xlu0 %1482
    %v1484 = vsel %vm214, %v1476, 0.0
    %1485 = vadd.xlane.f32.xlu0 %v1484
    %v1486 = vpop.xlane.xlu0 %1485
    %v1487 = vmul.f32 %v1483, %v221
    %v1488 = vmul.f32 %v1486, %v221
    %v1489 = vsub.f32 %v1473, %v1487
    %v1490 = vsub.f32 %v1476, %v1488
    %v1491 = vmul.f32 %v1489, %v1489
    %v1492 = vmul.f32 %v1490, %v1490
    %v1493 = vsel %vm214, %v1491, 0.0
    %1494 = vadd.xlane.f32.xlu0 %v1493
    %v1495 = vpop.xlane.xlu0 %1494
    %v1496 = vsel %vm214, %v1492, 0.0
    %1497 = vadd.xlane.f32.xlu0 %v1496
    %v1498 = vpop.xlane.xlu0 %1497
    %v1499 = vmul.f32 %v1495, %v221
    %v1500 = vmul.f32 %v1498, %v221
    %v1501 = vadd.f32 %v1499, 1e-05
    %v1502 = vadd.f32 %v1500, 1e-05
    %v1503 = vrsqrt.pop %v1501
    %v1504 = vrsqrt.pop %v1502
    %v1505 = vmul.f32 %v1489, %v1503
    %v1506 = vmul.f32 %v1490, %v1504
    %v1507 = vlaneseq
    %v1508 = vshrl.u32 %v1507, 7
    %v1509 = vsub.s32 0, %v1508
    %v1510 = vrot.slane %v1479, %v1509
    %v1511 = vmul.f32 %v1505, %v1510
    %v1512 = vmul.f32 %v1506, %v1510
    %v1513 = vlaneseq
    %v1514 = vshrl.u32 %v1513, 7
    %v1515 = vsub.s32 0, %v1514
    %v1516 = vrot.slane %v1480, %v1515
    %v1517 = vadd.f32 %v1511, %v1516
    %v1518 = vadd.f32 %v1512, %v1516
    %s1519 = scalar_lea.vmem %s7, 64
    %v1520 = vld [vmem:[%s1519] sm:$0xf]
    %v1521 = vld [vmem:[%s1519 + $0x4] sm:$0xf]
    %v1522 = vld [vmem:[%s1519 + $0x8] sm:$0xf]
    %v1523 = vld [vmem:[%s1519 + $0xc] sm:$0xf]
    %v1524 = vld [vmem:[%s10 + $0x31] sm:$0x1]
    %v1525 = vpack.c.bf16 %v1518, %v1517
    %v1526 = vlaneseq
    %v1527 = vshrl.u32 %v1526, 7
    %v1528 = vsub.s32 0, %v1527
    %v1529 = vrot.slane %v1524, %v1528
    %v1534 = vunpack.c.l.b16 %v1520
    %v1535 = vunpack.c.l.b16 %v1521
    %v1536 = vunpack.c.l.b16 %v1522
    %v1537 = vunpack.c.l.b16 %v1523
    %v1538 = vpack.c.b16 %v1535, %v1534
    %v1539 = vpack.c.b16 %v1537, %v1536
    %v1543 = vsel %vm214, %v1525, 0
    %1545 = vmatprep.subr.bf16.mxu0 0
    %1546 = vmatpush1.bf16.msra.mxu0 %v1538
    %1547 = vmatprep.subr.bf16.mxu0 0
    %1548 = vmatpush1.bf16.msra.mxu0 %v1539
    %1549 = vmatprep.subr.bf16.mxu0 0
    %1550 = vmatpush1.bf16.msra.mxu0 0
    %1551 = vmatprep.subr.bf16.mxu0 0
    %1552 = vmatpush1.bf16.msra.mxu0 0
    %1553 = vmatprep.subr.bf16.mxu0 0
    %1554 = vmatpush1.bf16.msra.mxu0 0
    %1555 = vmatprep.subr.bf16.mxu0 0
    %1556 = vmatpush1.bf16.msra.mxu0 0
    %1557 = vmatprep.subr.bf16.mxu0 0
    %1558 = vmatpush1.bf16.msra.mxu0 0
    %1559 = vmatprep.subr.bf16.mxu0 0
    %1560 = vmatpush1.bf16.msra.mxu0 0
    %1561 = vmatprep.subr.bf16.mxu0 0
    %1562 = vmatpush1.bf16.msra.mxu0 0
    %1563 = vmatprep.subr.bf16.mxu0 0
    %1564 = vmatpush1.bf16.msra.mxu0 0
    %1565 = vmatprep.subr.bf16.mxu0 0
    %1566 = vmatpush1.bf16.msra.mxu0 0
    %1567 = vmatprep.subr.bf16.mxu0 0
    %1568 = vmatpush1.bf16.msra.mxu0 0
    %1569 = vmatprep.subr.bf16.mxu0 0
    %1570 = vmatpush1.bf16.msra.mxu0 0
    %1571 = vmatprep.subr.bf16.mxu0 0
    %1572 = vmatpush1.bf16.msra.mxu0 0
    %1573 = vmatprep.subr.bf16.mxu0 0
    %1574 = vmatpush1.bf16.msra.mxu0 0
    %1575 = vmatprep.subr.bf16.mxu0 0
    %1576 = vmatpush1.bf16.msra.mxu0 0
    %1577 = vmatprep.mubr.bf16.mxu0 0
    %1578 = vmatmul.mubr.bf16.gmra.mrb[0].mxu0 %v1543
    %v1579 = vpop.f32.mrb[0].mxu0
    %v1580 = vadd.f32 %v1529, %v1579
    %v1581 = vpop.f32.mrb[0].mxu0
    %v1582 = vpop.f32.mrb[0].mxu0
    %v1583 = vadd.f32 %v1529, %v1582
    %v1584 = vpop.f32.mrb[0].mxu0
    %1585 = vdwg.mxu0
    %s1586 = scalar_lea.vmem %s7, 80
    %v1587 = vld [vmem:[%s1586] sm:$0xf]
    %v1588 = vld [vmem:[%s1586 + $0x4] sm:$0xf]
    %v1589 = vld [vmem:[%s1586 + $0x8] sm:$0xf]
    %v1590 = vld [vmem:[%s1586 + $0xc] sm:$0xf]
    %v1591 = vld [vmem:[%s10 + $0x32] sm:$0x1]
    %v1592 = vlaneseq
    %v1593 = vshrl.u32 %v1592, 7
    %v1594 = vsub.s32 0, %v1593
    %v1595 = vrot.slane %v1591, %v1594
    %v1600 = vunpack.c.l.b16 %v1587
    %v1601 = vunpack.c.l.b16 %v1588
    %v1602 = vunpack.c.l.b16 %v1589
    %v1603 = vunpack.c.l.b16 %v1590
    %v1604 = vpack.c.b16 %v1601, %v1600
    %v1605 = vpack.c.b16 %v1603, %v1602
    %1608 = vmatprep.subr.bf16.mxu0 0
    %1609 = vmatpush1.bf16.msra.mxu0 %v1604
    %1610 = vmatprep.subr.bf16.mxu0 0
    %1611 = vmatpush1.bf16.msra.mxu0 %v1605
    %1612 = vmatprep.subr.bf16.mxu0 0
    %1613 = vmatpush1.bf16.msra.mxu0 0
    %1614 = vmatprep.subr.bf16.mxu0 0
    %1615 = vmatpush1.bf16.msra.mxu0 0
    %1616 = vmatprep.subr.bf16.mxu0 0
    %1617 = vmatpush1.bf16.msra.mxu0 0
    %1618 = vmatprep.subr.bf16.mxu0 0
    %1619 = vmatpush1.bf16.msra.mxu0 0
    %1620 = vmatprep.subr.bf16.mxu0 0
    %1621 = vmatpush1.bf16.msra.mxu0 0
    %1622 = vmatprep.subr.bf16.mxu0 0
    %1623 = vmatpush1.bf16.msra.mxu0 0
    %1624 = vmatprep.subr.bf16.mxu0 0
    %1625 = vmatpush1.bf16.msra.mxu0 0
    %1626 = vmatprep.subr.bf16.mxu0 0
    %1627 = vmatpush1.bf16.msra.mxu0 0
    %1628 = vmatprep.subr.bf16.mxu0 0
    %1629 = vmatpush1.bf16.msra.mxu0 0
    %1630 = vmatprep.subr.bf16.mxu0 0
    %1631 = vmatpush1.bf16.msra.mxu0 0
    %1632 = vmatprep.subr.bf16.mxu0 0
    %1633 = vmatpush1.bf16.msra.mxu0 0
    %1634 = vmatprep.subr.bf16.mxu0 0
    %1635 = vmatpush1.bf16.msra.mxu0 0
    %1636 = vmatprep.subr.bf16.mxu0 0
    %1637 = vmatpush1.bf16.msra.mxu0 0
    %1638 = vmatprep.subr.bf16.mxu0 0
    %1639 = vmatpush1.bf16.msra.mxu0 0
    %1640 = vmatprep.mubr.bf16.mxu0 0
    %1641 = vmatmul.mubr.bf16.gmra.mrb[0].mxu0 %v1543
    %v1642 = vpop.f32.mrb[0].mxu0
    %v1643 = vadd.f32 %v1595, %v1642
    %v1644 = vpop.f32.mrb[0].mxu0
    %v1645 = vpop.f32.mrb[0].mxu0
    %v1646 = vadd.f32 %v1595, %v1645
    %v1647 = vpop.f32.mrb[0].mxu0
    %1648 = vdwg.mxu0
    %s1649 = scalar_lea.vmem %s7, 96
    %v1650 = vld [vmem:[%s1649] sm:$0xf]
    %v1651 = vld [vmem:[%s1649 + $0x4] sm:$0xf]
    %v1652 = vld [vmem:[%s1649 + $0x8] sm:$0xf]
    %v1653 = vld [vmem:[%s1649 + $0xc] sm:$0xf]
    %v1654 = vld [vmem:[%s10 + $0x33] sm:$0x1]
    %v1655 = vlaneseq
    %v1656 = vshrl.u32 %v1655, 7
    %v1657 = vsub.s32 0, %v1656
    %v1658 = vrot.slane %v1654, %v1657
    %v1663 = vunpack.c.l.b16 %v1650
    %v1664 = vunpack.c.l.b16 %v1651
    %v1665 = vunpack.c.l.b16 %v1652
    %v1666 = vunpack.c.l.b16 %v1653
    %v1667 = vpack.c.b16 %v1664, %v1663
    %v1668 = vpack.c.b16 %v1666, %v1665
    %1671 = vmatprep.subr.bf16.mxu0 0
    %1672 = vmatpush1.bf16.msra.mxu0 %v1667
    %1673 = vmatprep.subr.bf16.mxu0 0
    %1674 = vmatpush1.bf16.msra.mxu0 %v1668
    %1675 = vmatprep.subr.bf16.mxu0 0
    %1676 = vmatpush1.bf16.msra.mxu0 0
    %1677 = vmatprep.subr.bf16.mxu0 0
    %1678 = vmatpush1.bf16.msra.mxu0 0
    %1679 = vmatprep.subr.bf16.mxu0 0
    %1680 = vmatpush1.bf16.msra.mxu0 0
    %1681 = vmatprep.subr.bf16.mxu0 0
    %1682 = vmatpush1.bf16.msra.mxu0 0
    %1683 = vmatprep.subr.bf16.mxu0 0
    %1684 = vmatpush1.bf16.msra.mxu0 0
    %1685 = vmatprep.subr.bf16.mxu0 0
    %1686 = vmatpush1.bf16.msra.mxu0 0
    %1687 = vmatprep.subr.bf16.mxu0 0
    %1688 = vmatpush1.bf16.msra.mxu0 0
    %1689 = vmatprep.subr.bf16.mxu0 0
    %1690 = vmatpush1.bf16.msra.mxu0 0
    %1691 = vmatprep.subr.bf16.mxu0 0
    %1692 = vmatpush1.bf16.msra.mxu0 0
    %1693 = vmatprep.subr.bf16.mxu0 0
    %1694 = vmatpush1.bf16.msra.mxu0 0
    %1695 = vmatprep.subr.bf16.mxu0 0
    %1696 = vmatpush1.bf16.msra.mxu0 0
    %1697 = vmatprep.subr.bf16.mxu0 0
    %1698 = vmatpush1.bf16.msra.mxu0 0
    %1699 = vmatprep.subr.bf16.mxu0 0
    %1700 = vmatpush1.bf16.msra.mxu0 0
    %1701 = vmatprep.subr.bf16.mxu0 0
    %1702 = vmatpush1.bf16.msra.mxu0 0
    %1703 = vmatprep.mubr.bf16.mxu0 0
    %1704 = vmatmul.mubr.bf16.gmra.mrb[0].mxu0 %v1543
    %v1705 = vpop.f32.mrb[0].mxu0
    %v1706 = vadd.f32 %v1658, %v1705
    %v1707 = vpop.f32.mrb[0].mxu0
    %v1708 = vpop.f32.mrb[0].mxu0
    %v1709 = vadd.f32 %v1658, %v1708
    %v1710 = vpop.f32.mrb[0].mxu0
    %1711 = vdwg.mxu0
    %v1712 = vpack.c.bf16 %v1583, %v1580
    %v1713 = vpack.c.bf16 %v1646, %v1643
    %v1714 = vpack.c.bf16 %v1709, %v1706
    %v1715 = vld [vmem:[%s4] sm:$0xff]
    %v1716 = vld [vmem:[%s4 + $0x8] sm:$0xff]
    %v1717 = vsel %vm499, %v1712, 0
    %v1718 = vsel %vm499, %v1714, 0
    %v1720 = vsel %vm214, %v1717, 0
    %v1723 = vsel %vm214, %v1713, 0
    %1725 = vmatprep.subr.bf16.mxu0 0
    %1726 = vmatpush1.bf16.xpose.msra.mxu0 %v1723
    %1727 = vmatprep.subr.bf16.mxu0 0
    %1728 = vmatpush1.bf16.xpose.msra.mxu0 0
    %1729 = vmatprep.subr.bf16.mxu0 0
    %1730 = vmatpush1.bf16.xpose.msra.mxu0 0
    %1731 = vmatprep.subr.bf16.mxu0 0
    %1732 = vmatpush1.bf16.xpose.msra.mxu0 0
    %1733 = vmatprep.subr.bf16.mxu0 0
    %1734 = vmatpush1.bf16.xpose.msra.mxu0 0
    %1735 = vmatprep.subr.bf16.mxu0 0
    %1736 = vmatpush1.bf16.xpose.msra.mxu0 0
    %1737 = vmatprep.subr.bf16.mxu0 0
    %1738 = vmatpush1.bf16.xpose.msra.mxu0 0
    %1739 = vmatprep.subr.bf16.mxu0 0
    %1740 = vmatpush1.bf16.xpose.msra.mxu0 0
    %1741 = vmatprep.subr.bf16.mxu0 0
    %1742 = vmatpush1.bf16.xpose.msra.mxu0 0
    %1743 = vmatprep.subr.bf16.mxu0 0
    %1744 = vmatpush1.bf16.xpose.msra.mxu0 0
    %1745 = vmatprep.subr.bf16.mxu0 0
    %1746 = vmatpush1.bf16.xpose.msra.mxu0 0
    %1747 = vmatprep.subr.bf16.mxu0 0
    %1748 = vmatpush1.bf16.xpose.msra.mxu0 0
    %1749 = vmatprep.subr.bf16.mxu0 0
    %1750 = vmatpush1.bf16.xpose.msra.mxu0 0
    %1751 = vmatprep.subr.bf16.mxu0 0
    %1752 = vmatpush1.bf16.xpose.msra.mxu0 0
    %1753 = vmatprep.subr.bf16.mxu0 0
    %1754 = vmatpush1.bf16.xpose.msra.mxu0 0
    %1755 = vmatprep.subr.bf16.mxu0 0
    %1756 = vmatpush1.bf16.xpose.msra.mxu0 0
    %1757 = vmatprep.mubr.bf16.mxu0 0
    %1758 = vmatmul.mubr.bf16.gmra.mrb[0].mxu0 %v1720
    %v1759 = vpop.f32.mrb[0].mxu0
    %v1760 = vadd.f32 %v1715, %v1759
    %v1761 = vpop.f32.mrb[0].mxu0
    %v1762 = vpop.f32.mrb[0].mxu0
    %v1763 = vadd.f32 %v1716, %v1762
    %v1764 = vpop.f32.mrb[0].mxu0
    %1765 = vdwg.mxu0
    %v1766 = vsel %vm549, %v1760, -inf
    %1767 = vmax.xlane.f32.xlu0 %v1766
    %v1768 = vpop.xlane.xlu0 %1767
    %v1769 = vsel %vm549, %v1763, -inf
    %1770 = vmax.xlane.f32.xlu0 %v1769
    %v1771 = vpop.xlane.xlu0 %1770
    %v1772 = vsub.f32 %v1760, %v1768
    %v1773 = vsub.f32 %v1763, %v1771
    %v1774 = vmul.f32 %v1772, 1.442695
    %v1775 = vpow.pop %v1774
    %v1776 = vmul.f32 %v1773, 1.442695
    %v1777 = vpow.pop %v1776
    %v1778 = vsel %vm549, %v1775, 0.0
    %1779 = vadd.xlane.f32.xlu0 %v1778
    %v1780 = vpop.xlane.xlu0 %1779
    %v1781 = vsel %vm549, %v1777, 0.0
    %1782 = vadd.xlane.f32.xlu0 %v1781
    %v1783 = vpop.xlane.xlu0 %1782
    %v1784 = vrcp.pop %v1780
    %v1785 = vrcp.pop %v1783
    %v1786 = vmul.f32 %v1775, %v1784
    %v1787 = vmul.f32 %v1777, %v1785
    %v1788 = vpack.c.bf16 %v1787, %v1786
    %v1789 = vsel %vm581, %v1712, 0
    %v1790 = vsel %vm581, %v1714, 0
    %v1792 = vsel %vm214, %v1789, 0
    %1794 = vmatprep.subr.bf16.mxu0 0
    %1795 = vmatpush1.bf16.xpose.msra.mxu0 %v1723
    %1796 = vmatprep.subr.bf16.mxu0 0
    %1797 = vmatpush1.bf16.xpose.msra.mxu0 0
    %1798 = vmatprep.subr.bf16.mxu0 0
    %1799 = vmatpush1.bf16.xpose.msra.mxu0 0
    %1800 = vmatprep.subr.bf16.mxu0 0
    %1801 = vmatpush1.bf16.xpose.msra.mxu0 0
    %1802 = vmatprep.subr.bf16.mxu0 0
    %1803 = vmatpush1.bf16.xpose.msra.mxu0 0
    %1804 = vmatprep.subr.bf16.mxu0 0
    %1805 = vmatpush1.bf16.xpose.msra.mxu0 0
    %1806 = vmatprep.subr.bf16.mxu0 0
    %1807 = vmatpush1.bf16.xpose.msra.mxu0 0
    %1808 = vmatprep.subr.bf16.mxu0 0
    %1809 = vmatpush1.bf16.xpose.msra.mxu0 0
    %1810 = vmatprep.subr.bf16.mxu0 0
    %1811 = vmatpush1.bf16.xpose.msra.mxu0 0
    %1812 = vmatprep.subr.bf16.mxu0 0
    %1813 = vmatpush1.bf16.xpose.msra.mxu0 0
    %1814 = vmatprep.subr.bf16.mxu0 0
    %1815 = vmatpush1.bf16.xpose.msra.mxu0 0
    %1816 = vmatprep.subr.bf16.mxu0 0
    %1817 = vmatpush1.bf16.xpose.msra.mxu0 0
    %1818 = vmatprep.subr.bf16.mxu0 0
    %1819 = vmatpush1.bf16.xpose.msra.mxu0 0
    %1820 = vmatprep.subr.bf16.mxu0 0
    %1821 = vmatpush1.bf16.xpose.msra.mxu0 0
    %1822 = vmatprep.subr.bf16.mxu0 0
    %1823 = vmatpush1.bf16.xpose.msra.mxu0 0
    %1824 = vmatprep.subr.bf16.mxu0 0
    %1825 = vmatpush1.bf16.xpose.msra.mxu0 0
    %1826 = vmatprep.mubr.bf16.mxu0 0
    %1827 = vmatmul.mubr.bf16.gmra.mrb[0].mxu0 %v1792
    %v1828 = vpop.f32.mrb[0].mxu0
    %v1829 = vadd.f32 %v1715, %v1828
    %v1830 = vpop.f32.mrb[0].mxu0
    %v1831 = vpop.f32.mrb[0].mxu0
    %v1832 = vadd.f32 %v1716, %v1831
    %v1833 = vpop.f32.mrb[0].mxu0
    %1834 = vdwg.mxu0
    %v1835 = vsel %vm549, %v1829, -inf
    %1836 = vmax.xlane.f32.xlu0 %v1835
    %v1837 = vpop.xlane.xlu0 %1836
    %v1838 = vsel %vm549, %v1832, -inf
    %1839 = vmax.xlane.f32.xlu0 %v1838
    %v1840 = vpop.xlane.xlu0 %1839
    %v1841 = vsub.f32 %v1829, %v1837
    %v1842 = vsub.f32 %v1832, %v1840
    %v1843 = vmul.f32 %v1841, 1.442695
    %v1844 = vpow.pop %v1843
    %v1845 = vmul.f32 %v1842, 1.442695
    %v1846 = vpow.pop %v1845
    %v1847 = vsel %vm549, %v1844, 0.0
    %1848 = vadd.xlane.f32.xlu0 %v1847
    %v1849 = vpop.xlane.xlu0 %1848
    %v1850 = vsel %vm549, %v1846, 0.0
    %1851 = vadd.xlane.f32.xlu0 %v1850
    %v1852 = vpop.xlane.xlu0 %1851
    %v1853 = vrcp.pop %v1849
    %v1854 = vrcp.pop %v1852
    %v1855 = vmul.f32 %v1844, %v1853
    %v1856 = vmul.f32 %v1846, %v1854
    %v1857 = vpack.c.bf16 %v1856, %v1855
    %v1859 = vsel %vm549, %v1857, 0
    %1861 = vmatprep.subr.bf16.mxu0 0
    %1862 = vmatpush1.bf16.msra.mxu0 %v1790
    %1863 = vmatprep.subr.bf16.mxu0 0
    %1864 = vmatpush1.bf16.msra.mxu0 0
    %1865 = vmatprep.subr.bf16.mxu0 0
    %1866 = vmatpush1.bf16.msra.mxu0 0
    %1867 = vmatprep.subr.bf16.mxu0 0
    %1868 = vmatpush1.bf16.msra.mxu0 0
    %1869 = vmatprep.subr.bf16.mxu0 0
    %1870 = vmatpush1.bf16.msra.mxu0 0
    %1871 = vmatprep.subr.bf16.mxu0 0
    %1872 = vmatpush1.bf16.msra.mxu0 0
    %1873 = vmatprep.subr.bf16.mxu0 0
    %1874 = vmatpush1.bf16.msra.mxu0 0
    %1875 = vmatprep.subr.bf16.mxu0 0
    %1876 = vmatpush1.bf16.msra.mxu0 0
    %1877 = vmatprep.subr.bf16.mxu0 0
    %1878 = vmatpush1.bf16.msra.mxu0 0
    %1879 = vmatprep.subr.bf16.mxu0 0
    %1880 = vmatpush1.bf16.msra.mxu0 0
    %1881 = vmatprep.subr.bf16.mxu0 0
    %1882 = vmatpush1.bf16.msra.mxu0 0
    %1883 = vmatprep.subr.bf16.mxu0 0
    %1884 = vmatpush1.bf16.msra.mxu0 0
    %1885 = vmatprep.subr.bf16.mxu0 0
    %1886 = vmatpush1.bf16.msra.mxu0 0
    %1887 = vmatprep.subr.bf16.mxu0 0
    %1888 = vmatpush1.bf16.msra.mxu0 0
    %1889 = vmatprep.subr.bf16.mxu0 0
    %1890 = vmatpush1.bf16.msra.mxu0 0
    %1891 = vmatprep.subr.bf16.mxu0 0
    %1892 = vmatpush1.bf16.msra.mxu0 0
    %1893 = vmatprep.mubr.bf16.mxu0 0
    %1894 = vmatmul.mubr.bf16.gmra.mrb[0].mxu0 %v1859
    %v1895 = vpop.f32.mrb[0].mxu0
    %v1896 = vadd.f32 0.0, %v1895
    %v1897 = vpop.f32.mrb[0].mxu0
    %v1898 = vpop.f32.mrb[0].mxu0
    %v1899 = vadd.f32 0.0, %v1898
    %v1900 = vpop.f32.mrb[0].mxu0
    %1901 = vdwg.mxu0
    %v1903 = vsel %vm549, %v1788, 0
    %1905 = vmatprep.subr.bf16.mxu0 0
    %1906 = vmatpush1.bf16.msra.mxu0 %v1718
    %1907 = vmatprep.subr.bf16.mxu0 0
    %1908 = vmatpush1.bf16.msra.mxu0 0
    %1909 = vmatprep.subr.bf16.mxu0 0
    %1910 = vmatpush1.bf16.msra.mxu0 0
    %1911 = vmatprep.subr.bf16.mxu0 0
    %1912 = vmatpush1.bf16.msra.mxu0 0
    %1913 = vmatprep.subr.bf16.mxu0 0
    %1914 = vmatpush1.bf16.msra.mxu0 0
    %1915 = vmatprep.subr.bf16.mxu0 0
    %1916 = vmatpush1.bf16.msra.mxu0 0
    %1917 = vmatprep.subr.bf16.mxu0 0
    %1918 = vmatpush1.bf16.msra.mxu0 0
    %1919 = vmatprep.subr.bf16.mxu0 0
    %1920 = vmatpush1.bf16.msra.mxu0 0
    %1921 = vmatprep.subr.bf16.mxu0 0
    %1922 = vmatpush1.bf16.msra.mxu0 0
    %1923 = vmatprep.subr.bf16.mxu0 0
    %1924 = vmatpush1.bf16.msra.mxu0 0
    %1925 = vmatprep.subr.bf16.mxu0 0
    %1926 = vmatpush1.bf16.msra.mxu0 0
    %1927 = vmatprep.subr.bf16.mxu0 0
    %1928 = vmatpush1.bf16.msra.mxu0 0
    %1929 = vmatprep.subr.bf16.mxu0 0
    %1930 = vmatpush1.bf16.msra.mxu0 0
    %1931 = vmatprep.subr.bf16.mxu0 0
    %1932 = vmatpush1.bf16.msra.mxu0 0
    %1933 = vmatprep.subr.bf16.mxu0 0
    %1934 = vmatpush1.bf16.msra.mxu0 0
    %1935 = vmatprep.subr.bf16.mxu0 0
    %1936 = vmatpush1.bf16.msra.mxu0 0
    %1937 = vmatprep.mubr.bf16.mxu0 0
    %1938 = vmatmul.mubr.bf16.gmra.mrb[0].mxu0 %v1903
    %v1939 = vpop.f32.mrb[0].mxu0
    %v1940 = vadd.f32 %v1896, %v1939
    %v1941 = vpop.f32.mrb[0].mxu0
    %v1942 = vpop.f32.mrb[0].mxu0
    %v1943 = vadd.f32 %v1899, %v1942
    %v1944 = vpop.f32.mrb[0].mxu0
    %1945 = vdwg.mxu0
    %v1946 = vsel %vm747, %v1712, 0
    %v1947 = vsel %vm747, %v1714, 0
    %v1949 = vsel %vm214, %v1946, 0
    %1951 = vmatprep.subr.bf16.mxu0 0
    %1952 = vmatpush1.bf16.xpose.msra.mxu0 %v1723
    %1953 = vmatprep.subr.bf16.mxu0 0
    %1954 = vmatpush1.bf16.xpose.msra.mxu0 0
    %1955 = vmatprep.subr.bf16.mxu0 0
    %1956 = vmatpush1.bf16.xpose.msra.mxu0 0
    %1957 = vmatprep.subr.bf16.mxu0 0
    %1958 = vmatpush1.bf16.xpose.msra.mxu0 0
    %1959 = vmatprep.subr.bf16.mxu0 0
    %1960 = vmatpush1.bf16.xpose.msra.mxu0 0
    %1961 = vmatprep.subr.bf16.mxu0 0
    %1962 = vmatpush1.bf16.xpose.msra.mxu0 0
    %1963 = vmatprep.subr.bf16.mxu0 0
    %1964 = vmatpush1.bf16.xpose.msra.mxu0 0
    %1965 = vmatprep.subr.bf16.mxu0 0
    %1966 = vmatpush1.bf16.xpose.msra.mxu0 0
    %1967 = vmatprep.subr.bf16.mxu0 0
    %1968 = vmatpush1.bf16.xpose.msra.mxu0 0
    %1969 = vmatprep.subr.bf16.mxu0 0
    %1970 = vmatpush1.bf16.xpose.msra.mxu0 0
    %1971 = vmatprep.subr.bf16.mxu0 0
    %1972 = vmatpush1.bf16.xpose.msra.mxu0 0
    %1973 = vmatprep.subr.bf16.mxu0 0
    %1974 = vmatpush1.bf16.xpose.msra.mxu0 0
    %1975 = vmatprep.subr.bf16.mxu0 0
    %1976 = vmatpush1.bf16.xpose.msra.mxu0 0
    %1977 = vmatprep.subr.bf16.mxu0 0
    %1978 = vmatpush1.bf16.xpose.msra.mxu0 0
    %1979 = vmatprep.subr.bf16.mxu0 0
    %1980 = vmatpush1.bf16.xpose.msra.mxu0 0
    %1981 = vmatprep.subr.bf16.mxu0 0
    %1982 = vmatpush1.bf16.xpose.msra.mxu0 0
    %1983 = vmatprep.mubr.bf16.mxu0 0
    %1984 = vmatmul.mubr.bf16.gmra.mrb[0].mxu0 %v1949
    %v1985 = vpop.f32.mrb[0].mxu0
    %v1986 = vadd.f32 %v1715, %v1985
    %v1987 = vpop.f32.mrb[0].mxu0
    %v1988 = vpop.f32.mrb[0].mxu0
    %v1989 = vadd.f32 %v1716, %v1988
    %v1990 = vpop.f32.mrb[0].mxu0
    %1991 = vdwg.mxu0
    %v1992 = vsel %vm549, %v1986, -inf
    %1993 = vmax.xlane.f32.xlu0 %v1992
    %v1994 = vpop.xlane.xlu0 %1993
    %v1995 = vsel %vm549, %v1989, -inf
    %1996 = vmax.xlane.f32.xlu0 %v1995
    %v1997 = vpop.xlane.xlu0 %1996
    %v1998 = vsub.f32 %v1986, %v1994
    %v1999 = vsub.f32 %v1989, %v1997
    %v2000 = vmul.f32 %v1998, 1.442695
    %v2001 = vpow.pop %v2000
    %v2002 = vmul.f32 %v1999, 1.442695
    %v2003 = vpow.pop %v2002
    %v2004 = vsel %vm549, %v2001, 0.0
    %2005 = vadd.xlane.f32.xlu0 %v2004
    %v2006 = vpop.xlane.xlu0 %2005
    %v2007 = vsel %vm549, %v2003, 0.0
    %2008 = vadd.xlane.f32.xlu0 %v2007
    %v2009 = vpop.xlane.xlu0 %2008
    %v2010 = vrcp.pop %v2006
    %v2011 = vrcp.pop %v2009
    %v2012 = vmul.f32 %v2001, %v2010
    %v2013 = vmul.f32 %v2003, %v2011
    %v2014 = vpack.c.bf16 %v2013, %v2012
    %v2016 = vsel %vm549, %v2014, 0
    %2018 = vmatprep.subr.bf16.mxu0 0
    %2019 = vmatpush1.bf16.msra.mxu0 %v1947
    %2020 = vmatprep.subr.bf16.mxu0 0
    %2021 = vmatpush1.bf16.msra.mxu0 0
    %2022 = vmatprep.subr.bf16.mxu0 0
    %2023 = vmatpush1.bf16.msra.mxu0 0
    %2024 = vmatprep.subr.bf16.mxu0 0
    %2025 = vmatpush1.bf16.msra.mxu0 0
    %2026 = vmatprep.subr.bf16.mxu0 0
    %2027 = vmatpush1.bf16.msra.mxu0 0
    %2028 = vmatprep.subr.bf16.mxu0 0
    %2029 = vmatpush1.bf16.msra.mxu0 0
    %2030 = vmatprep.subr.bf16.mxu0 0
    %2031 = vmatpush1.bf16.msra.mxu0 0
    %2032 = vmatprep.subr.bf16.mxu0 0
    %2033 = vmatpush1.bf16.msra.mxu0 0
    %2034 = vmatprep.subr.bf16.mxu0 0
    %2035 = vmatpush1.bf16.msra.mxu0 0
    %2036 = vmatprep.subr.bf16.mxu0 0
    %2037 = vmatpush1.bf16.msra.mxu0 0
    %2038 = vmatprep.subr.bf16.mxu0 0
    %2039 = vmatpush1.bf16.msra.mxu0 0
    %2040 = vmatprep.subr.bf16.mxu0 0
    %2041 = vmatpush1.bf16.msra.mxu0 0
    %2042 = vmatprep.subr.bf16.mxu0 0
    %2043 = vmatpush1.bf16.msra.mxu0 0
    %2044 = vmatprep.subr.bf16.mxu0 0
    %2045 = vmatpush1.bf16.msra.mxu0 0
    %2046 = vmatprep.subr.bf16.mxu0 0
    %2047 = vmatpush1.bf16.msra.mxu0 0
    %2048 = vmatprep.subr.bf16.mxu0 0
    %2049 = vmatpush1.bf16.msra.mxu0 0
    %2050 = vmatprep.mubr.bf16.mxu0 0
    %2051 = vmatmul.mubr.bf16.gmra.mrb[0].mxu0 %v2016
    %v2052 = vpop.f32.mrb[0].mxu0
    %v2053 = vadd.f32 0.0, %v2052
    %v2054 = vpop.f32.mrb[0].mxu0
    %v2055 = vpop.f32.mrb[0].mxu0
    %v2056 = vadd.f32 0.0, %v2055
    %v2057 = vpop.f32.mrb[0].mxu0
    %2058 = vdwg.mxu0
    %v2059 = vadd.f32 %v1940, %v2053
    %v2060 = vadd.f32 %v1943, %v2056
    %v2061 = vsel %vm871, %v1712, 0
    %v2062 = vsel %vm871, %v1714, 0
    %v2064 = vsel %vm214, %v2061, 0
    %2066 = vmatprep.subr.bf16.mxu0 0
    %2067 = vmatpush1.bf16.xpose.msra.mxu0 %v1723
    %2068 = vmatprep.subr.bf16.mxu0 0
    %2069 = vmatpush1.bf16.xpose.msra.mxu0 0
    %2070 = vmatprep.subr.bf16.mxu0 0
    %2071 = vmatpush1.bf16.xpose.msra.mxu0 0
    %2072 = vmatprep.subr.bf16.mxu0 0
    %2073 = vmatpush1.bf16.xpose.msra.mxu0 0
    %2074 = vmatprep.subr.bf16.mxu0 0
    %2075 = vmatpush1.bf16.xpose.msra.mxu0 0
    %2076 = vmatprep.subr.bf16.mxu0 0
    %2077 = vmatpush1.bf16.xpose.msra.mxu0 0
    %2078 = vmatprep.subr.bf16.mxu0 0
    %2079 = vmatpush1.bf16.xpose.msra.mxu0 0
    %2080 = vmatprep.subr.bf16.mxu0 0
    %2081 = vmatpush1.bf16.xpose.msra.mxu0 0
    %2082 = vmatprep.subr.bf16.mxu0 0
    %2083 = vmatpush1.bf16.xpose.msra.mxu0 0
    %2084 = vmatprep.subr.bf16.mxu0 0
    %2085 = vmatpush1.bf16.xpose.msra.mxu0 0
    %2086 = vmatprep.subr.bf16.mxu0 0
    %2087 = vmatpush1.bf16.xpose.msra.mxu0 0
    %2088 = vmatprep.subr.bf16.mxu0 0
    %2089 = vmatpush1.bf16.xpose.msra.mxu0 0
    %2090 = vmatprep.subr.bf16.mxu0 0
    %2091 = vmatpush1.bf16.xpose.msra.mxu0 0
    %2092 = vmatprep.subr.bf16.mxu0 0
    %2093 = vmatpush1.bf16.xpose.msra.mxu0 0
    %2094 = vmatprep.subr.bf16.mxu0 0
    %2095 = vmatpush1.bf16.xpose.msra.mxu0 0
    %2096 = vmatprep.subr.bf16.mxu0 0
    %2097 = vmatpush1.bf16.xpose.msra.mxu0 0
    %2098 = vmatprep.mubr.bf16.mxu0 0
    %2099 = vmatmul.mubr.bf16.gmra.mrb[0].mxu0 %v2064
    %v2100 = vpop.f32.mrb[0].mxu0
    %v2101 = vadd.f32 %v1715, %v2100
    %v2102 = vpop.f32.mrb[0].mxu0
    %v2103 = vpop.f32.mrb[0].mxu0
    %v2104 = vadd.f32 %v1716, %v2103
    %v2105 = vpop.f32.mrb[0].mxu0
    %2106 = vdwg.mxu0
    %v2107 = vsel %vm549, %v2101, -inf
    %2108 = vmax.xlane.f32.xlu0 %v2107
    %v2109 = vpop.xlane.xlu0 %2108
    %v2110 = vsel %vm549, %v2104, -inf
    %2111 = vmax.xlane.f32.xlu0 %v2110
    %v2112 = vpop.xlane.xlu0 %2111
    %v2113 = vsub.f32 %v2101, %v2109
    %v2114 = vsub.f32 %v2104, %v2112
    %v2115 = vmul.f32 %v2113, 1.442695
    %v2116 = vpow.pop %v2115
    %v2117 = vmul.f32 %v2114, 1.442695
    %v2118 = vpow.pop %v2117
    %v2119 = vsel %vm549, %v2116, 0.0
    %2120 = vadd.xlane.f32.xlu0 %v2119
    %v2121 = vpop.xlane.xlu0 %2120
    %v2122 = vsel %vm549, %v2118, 0.0
    %2123 = vadd.xlane.f32.xlu0 %v2122
    %v2124 = vpop.xlane.xlu0 %2123
    %v2125 = vrcp.pop %v2121
    %v2126 = vrcp.pop %v2124
    %v2127 = vmul.f32 %v2116, %v2125
    %v2128 = vmul.f32 %v2118, %v2126
    %v2129 = vpack.c.bf16 %v2128, %v2127
    %v2131 = vsel %vm549, %v2129, 0
    %2133 = vmatprep.subr.bf16.mxu0 0
    %2134 = vmatpush1.bf16.msra.mxu0 %v2062
    %2135 = vmatprep.subr.bf16.mxu0 0
    %2136 = vmatpush1.bf16.msra.mxu0 0
    %2137 = vmatprep.subr.bf16.mxu0 0
    %2138 = vmatpush1.bf16.msra.mxu0 0
    %2139 = vmatprep.subr.bf16.mxu0 0
    %2140 = vmatpush1.bf16.msra.mxu0 0
    %2141 = vmatprep.subr.bf16.mxu0 0
    %2142 = vmatpush1.bf16.msra.mxu0 0
    %2143 = vmatprep.subr.bf16.mxu0 0
    %2144 = vmatpush1.bf16.msra.mxu0 0
    %2145 = vmatprep.subr.bf16.mxu0 0
    %2146 = vmatpush1.bf16.msra.mxu0 0
    %2147 = vmatprep.subr.bf16.mxu0 0
    %2148 = vmatpush1.bf16.msra.mxu0 0
    %2149 = vmatprep.subr.bf16.mxu0 0
    %2150 = vmatpush1.bf16.msra.mxu0 0
    %2151 = vmatprep.subr.bf16.mxu0 0
    %2152 = vmatpush1.bf16.msra.mxu0 0
    %2153 = vmatprep.subr.bf16.mxu0 0
    %2154 = vmatpush1.bf16.msra.mxu0 0
    %2155 = vmatprep.subr.bf16.mxu0 0
    %2156 = vmatpush1.bf16.msra.mxu0 0
    %2157 = vmatprep.subr.bf16.mxu0 0
    %2158 = vmatpush1.bf16.msra.mxu0 0
    %2159 = vmatprep.subr.bf16.mxu0 0
    %2160 = vmatpush1.bf16.msra.mxu0 0
    %2161 = vmatprep.subr.bf16.mxu0 0
    %2162 = vmatpush1.bf16.msra.mxu0 0
    %2163 = vmatprep.subr.bf16.mxu0 0
    %2164 = vmatpush1.bf16.msra.mxu0 0
    %2165 = vmatprep.mubr.bf16.mxu0 0
    %2166 = vmatmul.mubr.bf16.gmra.mrb[0].mxu0 %v2131
    %v2167 = vpop.f32.mrb[0].mxu0
    %v2168 = vadd.f32 0.0, %v2167
    %v2169 = vpop.f32.mrb[0].mxu0
    %v2170 = vpop.f32.mrb[0].mxu0
    %v2171 = vadd.f32 0.0, %v2170
    %v2172 = vpop.f32.mrb[0].mxu0
    %2173 = vdwg.mxu0
    %v2174 = vadd.f32 %v2059, %v2168
    %v2175 = vadd.f32 %v2060, %v2171
    %s2176 = scalar_lea.vmem %s7, 112
    %v2177 = vld [vmem:[%s2176] sm:$0xf]
    %v2178 = vld [vmem:[%s2176 + $0x4] sm:$0xf]
    %v2179 = vld [vmem:[%s2176 + $0x8] sm:$0xf]
    %v2180 = vld [vmem:[%s2176 + $0xc] sm:$0xf]
    %v2181 = vld [vmem:[%s10 + $0x34] sm:$0x1]
    %v2182 = vpack.c.bf16 %v2175, %v2174
    %v2183 = vlaneseq
    %v2184 = vshrl.u32 %v2183, 7
    %v2185 = vsub.s32 0, %v2184
    %v2186 = vrot.slane %v2181, %v2185
    %v2191 = vunpack.c.l.b16 %v2177
    %v2192 = vunpack.c.l.b16 %v2178
    %v2193 = vunpack.c.l.b16 %v2179
    %v2194 = vunpack.c.l.b16 %v2180
    %v2195 = vpack.c.b16 %v2192, %v2191
    %v2196 = vpack.c.b16 %v2194, %v2193
    %v2200 = vsel %vm214, %v2182, 0
    %2202 = vmatprep.subr.bf16.mxu0 0
    %2203 = vmatpush1.bf16.msra.mxu0 %v2195
    %2204 = vmatprep.subr.bf16.mxu0 0
    %2205 = vmatpush1.bf16.msra.mxu0 %v2196
    %2206 = vmatprep.subr.bf16.mxu0 0
    %2207 = vmatpush1.bf16.msra.mxu0 0
    %2208 = vmatprep.subr.bf16.mxu0 0
    %2209 = vmatpush1.bf16.msra.mxu0 0
    %2210 = vmatprep.subr.bf16.mxu0 0
    %2211 = vmatpush1.bf16.msra.mxu0 0
    %2212 = vmatprep.subr.bf16.mxu0 0
    %2213 = vmatpush1.bf16.msra.mxu0 0
    %2214 = vmatprep.subr.bf16.mxu0 0
    %2215 = vmatpush1.bf16.msra.mxu0 0
    %2216 = vmatprep.subr.bf16.mxu0 0
    %2217 = vmatpush1.bf16.msra.mxu0 0
    %2218 = vmatprep.subr.bf16.mxu0 0
    %2219 = vmatpush1.bf16.msra.mxu0 0
    %2220 = vmatprep.subr.bf16.mxu0 0
    %2221 = vmatpush1.bf16.msra.mxu0 0
    %2222 = vmatprep.subr.bf16.mxu0 0
    %2223 = vmatpush1.bf16.msra.mxu0 0
    %2224 = vmatprep.subr.bf16.mxu0 0
    %2225 = vmatpush1.bf16.msra.mxu0 0
    %2226 = vmatprep.subr.bf16.mxu0 0
    %2227 = vmatpush1.bf16.msra.mxu0 0
    %2228 = vmatprep.subr.bf16.mxu0 0
    %2229 = vmatpush1.bf16.msra.mxu0 0
    %2230 = vmatprep.subr.bf16.mxu0 0
    %2231 = vmatpush1.bf16.msra.mxu0 0
    %2232 = vmatprep.subr.bf16.mxu0 0
    %2233 = vmatpush1.bf16.msra.mxu0 0
    %2234 = vmatprep.mubr.bf16.mxu0 0
    %2235 = vmatmul.mubr.bf16.gmra.mrb[0].mxu0 %v2200
    %v2236 = vpop.f32.mrb[0].mxu0
    %v2237 = vadd.f32 %v2186, %v2236
    %v2238 = vpop.f32.mrb[0].mxu0
    %v2239 = vpop.f32.mrb[0].mxu0
    %v2240 = vadd.f32 %v2186, %v2239
    %v2241 = vpop.f32.mrb[0].mxu0
    %2242 = vdwg.mxu0
    %v2243 = vadd.f32 %v1473, %v2237
    %v2244 = vadd.f32 %v1476, %v2240
    %v2245 = vld [vmem:[%s10 + $0x35] sm:$0x1]
    %v2246 = vld [vmem:[%s10 + $0x36] sm:$0x1]
    %v2247 = vsel %vm214, %v2243, 0.0
    %2248 = vadd.xlane.f32.xlu0 %v2247
    %v2249 = vpop.xlane.xlu0 %2248
    %v2250 = vsel %vm214, %v2244, 0.0
    %2251 = vadd.xlane.f32.xlu0 %v2250
    %v2252 = vpop.xlane.xlu0 %2251
    %v2253 = vmul.f32 %v2249, %v221
    %v2254 = vmul.f32 %v2252, %v221
    %v2255 = vsub.f32 %v2243, %v2253
    %v2256 = vsub.f32 %v2244, %v2254
    %v2257 = vmul.f32 %v2255, %v2255
    %v2258 = vmul.f32 %v2256, %v2256
    %v2259 = vsel %vm214, %v2257, 0.0
    %2260 = vadd.xlane.f32.xlu0 %v2259
    %v2261 = vpop.xlane.xlu0 %2260
    %v2262 = vsel %vm214, %v2258, 0.0
    %2263 = vadd.xlane.f32.xlu0 %v2262
    %v2264 = vpop.xlane.xlu0 %2263
    %v2265 = vmul.f32 %v2261, %v221
    %v2266 = vmul.f32 %v2264, %v221
    %v2267 = vadd.f32 %v2265, 1e-05
    %v2268 = vadd.f32 %v2266, 1e-05
    %v2269 = vrsqrt.pop %v2267
    %v2270 = vrsqrt.pop %v2268
    %v2271 = vmul.f32 %v2255, %v2269
    %v2272 = vmul.f32 %v2256, %v2270
    %v2273 = vlaneseq
    %v2274 = vshrl.u32 %v2273, 7
    %v2275 = vsub.s32 0, %v2274
    %v2276 = vrot.slane %v2245, %v2275
    %v2277 = vmul.f32 %v2271, %v2276
    %v2278 = vmul.f32 %v2272, %v2276
    %v2279 = vlaneseq
    %v2280 = vshrl.u32 %v2279, 7
    %v2281 = vsub.s32 0, %v2280
    %v2282 = vrot.slane %v2246, %v2281
    %v2283 = vadd.f32 %v2277, %v2282
    %v2284 = vadd.f32 %v2278, %v2282
    %s2285 = scalar_lea.vmem %s7, 128
    %v2286 = vld [vmem:[%s2285] sm:$0xf]
    %v2287 = vld [vmem:[%s2285 + $0x4] sm:$0xf]
    %v2288 = vld [vmem:[%s2285 + $0x8] sm:$0xf]
    %v2289 = vld [vmem:[%s2285 + $0xc] sm:$0xf]
    %v2290 = vld [vmem:[%s10 + $0x37] sm:$0x1]
    %v2291 = vpack.c.bf16 %v2284, %v2283
    %v2292 = vlaneseq
    %v2293 = vshrl.u32 %v2292, 7
    %v2294 = vsub.s32 0, %v2293
    %v2295 = vrot.slane %v2290, %v2294
    %v2300 = vunpack.c.l.b16 %v2286
    %v2301 = vunpack.c.l.b16 %v2287
    %v2302 = vunpack.c.l.b16 %v2288
    %v2303 = vunpack.c.l.b16 %v2289
    %v2304 = vpack.c.b16 %v2301, %v2300
    %v2305 = vpack.c.b16 %v2303, %v2302
    %v2309 = vsel %vm214, %v2291, 0
    %2311 = vmatprep.subr.bf16.mxu0 0
    %2312 = vmatpush1.bf16.msra.mxu0 %v2304
    %2313 = vmatprep.subr.bf16.mxu0 0
    %2314 = vmatpush1.bf16.msra.mxu0 %v2305
    %2315 = vmatprep.subr.bf16.mxu0 0
    %2316 = vmatpush1.bf16.msra.mxu0 0
    %2317 = vmatprep.subr.bf16.mxu0 0
    %2318 = vmatpush1.bf16.msra.mxu0 0
    %2319 = vmatprep.subr.bf16.mxu0 0
    %2320 = vmatpush1.bf16.msra.mxu0 0
    %2321 = vmatprep.subr.bf16.mxu0 0
    %2322 = vmatpush1.bf16.msra.mxu0 0
    %2323 = vmatprep.subr.bf16.mxu0 0
    %2324 = vmatpush1.bf16.msra.mxu0 0
    %2325 = vmatprep.subr.bf16.mxu0 0
    %2326 = vmatpush1.bf16.msra.mxu0 0
    %2327 = vmatprep.subr.bf16.mxu0 0
    %2328 = vmatpush1.bf16.msra.mxu0 0
    %2329 = vmatprep.subr.bf16.mxu0 0
    %2330 = vmatpush1.bf16.msra.mxu0 0
    %2331 = vmatprep.subr.bf16.mxu0 0
    %2332 = vmatpush1.bf16.msra.mxu0 0
    %2333 = vmatprep.subr.bf16.mxu0 0
    %2334 = vmatpush1.bf16.msra.mxu0 0
    %2335 = vmatprep.subr.bf16.mxu0 0
    %2336 = vmatpush1.bf16.msra.mxu0 0
    %2337 = vmatprep.subr.bf16.mxu0 0
    %2338 = vmatpush1.bf16.msra.mxu0 0
    %2339 = vmatprep.subr.bf16.mxu0 0
    %2340 = vmatpush1.bf16.msra.mxu0 0
    %2341 = vmatprep.subr.bf16.mxu0 0
    %2342 = vmatpush1.bf16.msra.mxu0 0
    %2343 = vmatprep.mubr.bf16.mxu0 0
    %2344 = vmatmul.mubr.bf16.gmra.mrb[0].mxu0 %v2309
    %v2345 = vpop.f32.mrb[0].mxu0
    %v2346 = vadd.f32 %v2295, %v2345
    %v2347 = vpop.f32.mrb[0].mxu0
    %v2348 = vpop.f32.mrb[0].mxu0
    %v2349 = vadd.f32 %v2295, %v2348
    %v2350 = vpop.f32.mrb[0].mxu0
    %2351 = vdwg.mxu0
    %s2352 = scalar_lea.vmem %s7, 144
    %v2353 = vld [vmem:[%s2352] sm:$0xf]
    %v2354 = vld [vmem:[%s2352 + $0x4] sm:$0xf]
    %v2355 = vld [vmem:[%s2352 + $0x8] sm:$0xf]
    %v2356 = vld [vmem:[%s2352 + $0xc] sm:$0xf]
    %v2357 = vld [vmem:[%s10 + $0x38] sm:$0x1]
    %v2358 = vpack.c.bf16 %v1353, %v1350
    %v2359 = vlaneseq
    %v2360 = vshrl.u32 %v2359, 7
    %v2361 = vsub.s32 0, %v2360
    %v2362 = vrot.slane %v2357, %v2361
    %v2367 = vunpack.c.l.b16 %v2353
    %v2368 = vunpack.c.l.b16 %v2354
    %v2369 = vunpack.c.l.b16 %v2355
    %v2370 = vunpack.c.l.b16 %v2356
    %v2371 = vpack.c.b16 %v2368, %v2367
    %v2372 = vpack.c.b16 %v2370, %v2369
    %v2376 = vsel %vm214, %v2358, 0
    %2378 = vmatprep.subr.bf16.mxu0 0
    %2379 = vmatpush1.bf16.msra.mxu0 %v2371
    %2380 = vmatprep.subr.bf16.mxu0 0
    %2381 = vmatpush1.bf16.msra.mxu0 %v2372
    %2382 = vmatprep.subr.bf16.mxu0 0
    %2383 = vmatpush1.bf16.msra.mxu0 0
    %2384 = vmatprep.subr.bf16.mxu0 0
    %2385 = vmatpush1.bf16.msra.mxu0 0
    %2386 = vmatprep.subr.bf16.mxu0 0
    %2387 = vmatpush1.bf16.msra.mxu0 0
    %2388 = vmatprep.subr.bf16.mxu0 0
    %2389 = vmatpush1.bf16.msra.mxu0 0
    %2390 = vmatprep.subr.bf16.mxu0 0
    %2391 = vmatpush1.bf16.msra.mxu0 0
    %2392 = vmatprep.subr.bf16.mxu0 0
    %2393 = vmatpush1.bf16.msra.mxu0 0
    %2394 = vmatprep.subr.bf16.mxu0 0
    %2395 = vmatpush1.bf16.msra.mxu0 0
    %2396 = vmatprep.subr.bf16.mxu0 0
    %2397 = vmatpush1.bf16.msra.mxu0 0
    %2398 = vmatprep.subr.bf16.mxu0 0
    %2399 = vmatpush1.bf16.msra.mxu0 0
    %2400 = vmatprep.subr.bf16.mxu0 0
    %2401 = vmatpush1.bf16.msra.mxu0 0
    %2402 = vmatprep.subr.bf16.mxu0 0
    %2403 = vmatpush1.bf16.msra.mxu0 0
    %2404 = vmatprep.subr.bf16.mxu0 0
    %2405 = vmatpush1.bf16.msra.mxu0 0
    %2406 = vmatprep.subr.bf16.mxu0 0
    %2407 = vmatpush1.bf16.msra.mxu0 0
    %2408 = vmatprep.subr.bf16.mxu0 0
    %2409 = vmatpush1.bf16.msra.mxu0 0
    %2410 = vmatprep.mubr.bf16.mxu0 0
    %2411 = vmatmul.mubr.bf16.gmra.mrb[0].mxu0 %v2376
    %v2412 = vpop.f32.mrb[0].mxu0
    %v2413 = vadd.f32 %v2362, %v2412
    %v2414 = vpop.f32.mrb[0].mxu0
    %v2415 = vpop.f32.mrb[0].mxu0
    %v2416 = vadd.f32 %v2362, %v2415
    %v2417 = vpop.f32.mrb[0].mxu0
    %2418 = vdwg.mxu0
    %s2419 = scalar_lea.vmem %s7, 160
    %v2420 = vld [vmem:[%s2419] sm:$0xf]
    %v2421 = vld [vmem:[%s2419 + $0x4] sm:$0xf]
    %v2422 = vld [vmem:[%s2419 + $0x8] sm:$0xf]
    %v2423 = vld [vmem:[%s2419 + $0xc] sm:$0xf]
    %v2424 = vld [vmem:[%s10 + $0x39] sm:$0x1]
    %v2425 = vlaneseq
    %v2426 = vshrl.u32 %v2425, 7
    %v2427 = vsub.s32 0, %v2426
    %v2428 = vrot.slane %v2424, %v2427
    %v2433 = vunpack.c.l.b16 %v2420
    %v2434 = vunpack.c.l.b16 %v2421
    %v2435 = vunpack.c.l.b16 %v2422
    %v2436 = vunpack.c.l.b16 %v2423
    %v2437 = vpack.c.b16 %v2434, %v2433
    %v2438 = vpack.c.b16 %v2436, %v2435
    %2441 = vmatprep.subr.bf16.mxu0 0
    %2442 = vmatpush1.bf16.msra.mxu0 %v2437
    %2443 = vmatprep.subr.bf16.mxu0 0
    %2444 = vmatpush1.bf16.msra.mxu0 %v2438
    %2445 = vmatprep.subr.bf16.mxu0 0
    %2446 = vmatpush1.bf16.msra.mxu0 0
    %2447 = vmatprep.subr.bf16.mxu0 0
    %2448 = vmatpush1.bf16.msra.mxu0 0
    %2449 = vmatprep.subr.bf16.mxu0 0
    %2450 = vmatpush1.bf16.msra.mxu0 0
    %2451 = vmatprep.subr.bf16.mxu0 0
    %2452 = vmatpush1.bf16.msra.mxu0 0
    %2453 = vmatprep.subr.bf16.mxu0 0
    %2454 = vmatpush1.bf16.msra.mxu0 0
    %2455 = vmatprep.subr.bf16.mxu0 0
    %2456 = vmatpush1.bf16.msra.mxu0 0
    %2457 = vmatprep.subr.bf16.mxu0 0
    %2458 = vmatpush1.bf16.msra.mxu0 0
    %2459 = vmatprep.subr.bf16.mxu0 0
    %2460 = vmatpush1.bf16.msra.mxu0 0
    %2461 = vmatprep.subr.bf16.mxu0 0
    %2462 = vmatpush1.bf16.msra.mxu0 0
    %2463 = vmatprep.subr.bf16.mxu0 0
    %2464 = vmatpush1.bf16.msra.mxu0 0
    %2465 = vmatprep.subr.bf16.mxu0 0
    %2466 = vmatpush1.bf16.msra.mxu0 0
    %2467 = vmatprep.subr.bf16.mxu0 0
    %2468 = vmatpush1.bf16.msra.mxu0 0
    %2469 = vmatprep.subr.bf16.mxu0 0
    %2470 = vmatpush1.bf16.msra.mxu0 0
    %2471 = vmatprep.subr.bf16.mxu0 0
    %2472 = vmatpush1.bf16.msra.mxu0 0
    %2473 = vmatprep.mubr.bf16.mxu0 0
    %2474 = vmatmul.mubr.bf16.gmra.mrb[0].mxu0 %v2376
    %v2475 = vpop.f32.mrb[0].mxu0
    %v2476 = vadd.f32 %v2428, %v2475
    %v2477 = vpop.f32.mrb[0].mxu0
    %v2478 = vpop.f32.mrb[0].mxu0
    %v2479 = vadd.f32 %v2428, %v2478
    %v2480 = vpop.f32.mrb[0].mxu0
    %2481 = vdwg.mxu0
    %v2482 = vpack.c.bf16 %v2349, %v2346
    %v2483 = vpack.c.bf16 %v2416, %v2413
    %v2484 = vpack.c.bf16 %v2479, %v2476
    %v2485 = vld [vmem:[%s5] sm:$0xff]
    %v2486 = vld [vmem:[%s5 + $0x8] sm:$0xff]
    %v2487 = vsel %vm499, %v2482, 0
    %v2488 = vsel %vm499, %v2484, 0
    %v2490 = vsel %vm214, %v2487, 0
    %v2493 = vsel %vm214, %v2483, 0
    %2495 = vmatprep.subr.bf16.mxu0 0
    %2496 = vmatpush1.bf16.xpose.msra.mxu0 %v2493
    %2497 = vmatprep.subr.bf16.mxu0 0
    %2498 = vmatpush1.bf16.xpose.msra.mxu0 0
    %2499 = vmatprep.subr.bf16.mxu0 0
    %2500 = vmatpush1.bf16.xpose.msra.mxu0 0
    %2501 = vmatprep.subr.bf16.mxu0 0
    %2502 = vmatpush1.bf16.xpose.msra.mxu0 0
    %2503 = vmatprep.subr.bf16.mxu0 0
    %2504 = vmatpush1.bf16.xpose.msra.mxu0 0
    %2505 = vmatprep.subr.bf16.mxu0 0
    %2506 = vmatpush1.bf16.xpose.msra.mxu0 0
    %2507 = vmatprep.subr.bf16.mxu0 0
    %2508 = vmatpush1.bf16.xpose.msra.mxu0 0
    %2509 = vmatprep.subr.bf16.mxu0 0
    %2510 = vmatpush1.bf16.xpose.msra.mxu0 0
    %2511 = vmatprep.subr.bf16.mxu0 0
    %2512 = vmatpush1.bf16.xpose.msra.mxu0 0
    %2513 = vmatprep.subr.bf16.mxu0 0
    %2514 = vmatpush1.bf16.xpose.msra.mxu0 0
    %2515 = vmatprep.subr.bf16.mxu0 0
    %2516 = vmatpush1.bf16.xpose.msra.mxu0 0
    %2517 = vmatprep.subr.bf16.mxu0 0
    %2518 = vmatpush1.bf16.xpose.msra.mxu0 0
    %2519 = vmatprep.subr.bf16.mxu0 0
    %2520 = vmatpush1.bf16.xpose.msra.mxu0 0
    %2521 = vmatprep.subr.bf16.mxu0 0
    %2522 = vmatpush1.bf16.xpose.msra.mxu0 0
    %2523 = vmatprep.subr.bf16.mxu0 0
    %2524 = vmatpush1.bf16.xpose.msra.mxu0 0
    %2525 = vmatprep.subr.bf16.mxu0 0
    %2526 = vmatpush1.bf16.xpose.msra.mxu0 0
    %2527 = vmatprep.mubr.bf16.mxu0 0
    %2528 = vmatmul.mubr.bf16.gmra.mrb[0].mxu0 %v2490
    %v2529 = vpop.f32.mrb[0].mxu0
    %v2530 = vadd.f32 %v2485, %v2529
    %v2531 = vpop.f32.mrb[0].mxu0
    %v2532 = vpop.f32.mrb[0].mxu0
    %v2533 = vadd.f32 %v2486, %v2532
    %v2534 = vpop.f32.mrb[0].mxu0
    %2535 = vdwg.mxu0
    %v2536 = vsel %vm549, %v2530, -inf
    %2537 = vmax.xlane.f32.xlu0 %v2536
    %v2538 = vpop.xlane.xlu0 %2537
    %v2539 = vsel %vm549, %v2533, -inf
    %2540 = vmax.xlane.f32.xlu0 %v2539
    %v2541 = vpop.xlane.xlu0 %2540
    %v2542 = vsub.f32 %v2530, %v2538
    %v2543 = vsub.f32 %v2533, %v2541
    %v2544 = vmul.f32 %v2542, 1.442695
    %v2545 = vpow.pop %v2544
    %v2546 = vmul.f32 %v2543, 1.442695
    %v2547 = vpow.pop %v2546
    %v2548 = vsel %vm549, %v2545, 0.0
    %2549 = vadd.xlane.f32.xlu0 %v2548
    %v2550 = vpop.xlane.xlu0 %2549
    %v2551 = vsel %vm549, %v2547, 0.0
    %2552 = vadd.xlane.f32.xlu0 %v2551
    %v2553 = vpop.xlane.xlu0 %2552
    %v2554 = vrcp.pop %v2550
    %v2555 = vrcp.pop %v2553
    %v2556 = vmul.f32 %v2545, %v2554
    %v2557 = vmul.f32 %v2547, %v2555
    %v2558 = vpack.c.bf16 %v2557, %v2556
    %v2559 = vsel %vm581, %v2482, 0
    %v2560 = vsel %vm581, %v2484, 0
    %v2562 = vsel %vm214, %v2559, 0
    %2564 = vmatprep.subr.bf16.mxu0 0
    %2565 = vmatpush1.bf16.xpose.msra.mxu0 %v2493
    %2566 = vmatprep.subr.bf16.mxu0 0
    %2567 = vmatpush1.bf16.xpose.msra.mxu0 0
    %2568 = vmatprep.subr.bf16.mxu0 0
    %2569 = vmatpush1.bf16.xpose.msra.mxu0 0
    %2570 = vmatprep.subr.bf16.mxu0 0
    %2571 = vmatpush1.bf16.xpose.msra.mxu0 0
    %2572 = vmatprep.subr.bf16.mxu0 0
    %2573 = vmatpush1.bf16.xpose.msra.mxu0 0
    %2574 = vmatprep.subr.bf16.mxu0 0
    %2575 = vmatpush1.bf16.xpose.msra.mxu0 0
    %2576 = vmatprep.subr.bf16.mxu0 0
    %2577 = vmatpush1.bf16.xpose.msra.mxu0 0
    %2578 = vmatprep.subr.bf16.mxu0 0
    %2579 = vmatpush1.bf16.xpose.msra.mxu0 0
    %2580 = vmatprep.subr.bf16.mxu0 0
    %2581 = vmatpush1.bf16.xpose.msra.mxu0 0
    %2582 = vmatprep.subr.bf16.mxu0 0
    %2583 = vmatpush1.bf16.xpose.msra.mxu0 0
    %2584 = vmatprep.subr.bf16.mxu0 0
    %2585 = vmatpush1.bf16.xpose.msra.mxu0 0
    %2586 = vmatprep.subr.bf16.mxu0 0
    %2587 = vmatpush1.bf16.xpose.msra.mxu0 0
    %2588 = vmatprep.subr.bf16.mxu0 0
    %2589 = vmatpush1.bf16.xpose.msra.mxu0 0
    %2590 = vmatprep.subr.bf16.mxu0 0
    %2591 = vmatpush1.bf16.xpose.msra.mxu0 0
    %2592 = vmatprep.subr.bf16.mxu0 0
    %2593 = vmatpush1.bf16.xpose.msra.mxu0 0
    %2594 = vmatprep.subr.bf16.mxu0 0
    %2595 = vmatpush1.bf16.xpose.msra.mxu0 0
    %2596 = vmatprep.mubr.bf16.mxu0 0
    %2597 = vmatmul.mubr.bf16.gmra.mrb[0].mxu0 %v2562
    %v2598 = vpop.f32.mrb[0].mxu0
    %v2599 = vadd.f32 %v2485, %v2598
    %v2600 = vpop.f32.mrb[0].mxu0
    %v2601 = vpop.f32.mrb[0].mxu0
    %v2602 = vadd.f32 %v2486, %v2601
    %v2603 = vpop.f32.mrb[0].mxu0
    %2604 = vdwg.mxu0
    %v2605 = vsel %vm549, %v2599, -inf
    %2606 = vmax.xlane.f32.xlu0 %v2605
    %v2607 = vpop.xlane.xlu0 %2606
    %v2608 = vsel %vm549, %v2602, -inf
    %2609 = vmax.xlane.f32.xlu0 %v2608
    %v2610 = vpop.xlane.xlu0 %2609
    %v2611 = vsub.f32 %v2599, %v2607
    %v2612 = vsub.f32 %v2602, %v2610
    %v2613 = vmul.f32 %v2611, 1.442695
    %v2614 = vpow.pop %v2613
    %v2615 = vmul.f32 %v2612, 1.442695
    %v2616 = vpow.pop %v2615
    %v2617 = vsel %vm549, %v2614, 0.0
    %2618 = vadd.xlane.f32.xlu0 %v2617
    %v2619 = vpop.xlane.xlu0 %2618
    %v2620 = vsel %vm549, %v2616, 0.0
    %2621 = vadd.xlane.f32.xlu0 %v2620
    %v2622 = vpop.xlane.xlu0 %2621
    %v2623 = vrcp.pop %v2619
    %v2624 = vrcp.pop %v2622
    %v2625 = vmul.f32 %v2614, %v2623
    %v2626 = vmul.f32 %v2616, %v2624
    %v2627 = vpack.c.bf16 %v2626, %v2625
    %v2629 = vsel %vm549, %v2627, 0
    %2631 = vmatprep.subr.bf16.mxu0 0
    %2632 = vmatpush1.bf16.msra.mxu0 %v2560
    %2633 = vmatprep.subr.bf16.mxu0 0
    %2634 = vmatpush1.bf16.msra.mxu0 0
    %2635 = vmatprep.subr.bf16.mxu0 0
    %2636 = vmatpush1.bf16.msra.mxu0 0
    %2637 = vmatprep.subr.bf16.mxu0 0
    %2638 = vmatpush1.bf16.msra.mxu0 0
    %2639 = vmatprep.subr.bf16.mxu0 0
    %2640 = vmatpush1.bf16.msra.mxu0 0
    %2641 = vmatprep.subr.bf16.mxu0 0
    %2642 = vmatpush1.bf16.msra.mxu0 0
    %2643 = vmatprep.subr.bf16.mxu0 0
    %2644 = vmatpush1.bf16.msra.mxu0 0
    %2645 = vmatprep.subr.bf16.mxu0 0
    %2646 = vmatpush1.bf16.msra.mxu0 0
    %2647 = vmatprep.subr.bf16.mxu0 0
    %2648 = vmatpush1.bf16.msra.mxu0 0
    %2649 = vmatprep.subr.bf16.mxu0 0
    %2650 = vmatpush1.bf16.msra.mxu0 0
    %2651 = vmatprep.subr.bf16.mxu0 0
    %2652 = vmatpush1.bf16.msra.mxu0 0
    %2653 = vmatprep.subr.bf16.mxu0 0
    %2654 = vmatpush1.bf16.msra.mxu0 0
    %2655 = vmatprep.subr.bf16.mxu0 0
    %2656 = vmatpush1.bf16.msra.mxu0 0
    %2657 = vmatprep.subr.bf16.mxu0 0
    %2658 = vmatpush1.bf16.msra.mxu0 0
    %2659 = vmatprep.subr.bf16.mxu0 0
    %2660 = vmatpush1.bf16.msra.mxu0 0
    %2661 = vmatprep.subr.bf16.mxu0 0
    %2662 = vmatpush1.bf16.msra.mxu0 0
    %2663 = vmatprep.mubr.bf16.mxu0 0
    %2664 = vmatmul.mubr.bf16.gmra.mrb[0].mxu0 %v2629
    %v2665 = vpop.f32.mrb[0].mxu0
    %v2666 = vadd.f32 0.0, %v2665
    %v2667 = vpop.f32.mrb[0].mxu0
    %v2668 = vpop.f32.mrb[0].mxu0
    %v2669 = vadd.f32 0.0, %v2668
    %v2670 = vpop.f32.mrb[0].mxu0
    %2671 = vdwg.mxu0
    %v2673 = vsel %vm549, %v2558, 0
    %2675 = vmatprep.subr.bf16.mxu0 0
    %2676 = vmatpush1.bf16.msra.mxu0 %v2488
    %2677 = vmatprep.subr.bf16.mxu0 0
    %2678 = vmatpush1.bf16.msra.mxu0 0
    %2679 = vmatprep.subr.bf16.mxu0 0
    %2680 = vmatpush1.bf16.msra.mxu0 0
    %2681 = vmatprep.subr.bf16.mxu0 0
    %2682 = vmatpush1.bf16.msra.mxu0 0
    %2683 = vmatprep.subr.bf16.mxu0 0
    %2684 = vmatpush1.bf16.msra.mxu0 0
    %2685 = vmatprep.subr.bf16.mxu0 0
    %2686 = vmatpush1.bf16.msra.mxu0 0
    %2687 = vmatprep.subr.bf16.mxu0 0
    %2688 = vmatpush1.bf16.msra.mxu0 0
    %2689 = vmatprep.subr.bf16.mxu0 0
    %2690 = vmatpush1.bf16.msra.mxu0 0
    %2691 = vmatprep.subr.bf16.mxu0 0
    %2692 = vmatpush1.bf16.msra.mxu0 0
    %2693 = vmatprep.subr.bf16.mxu0 0
    %2694 = vmatpush1.bf16.msra.mxu0 0
    %2695 = vmatprep.subr.bf16.mxu0 0
    %2696 = vmatpush1.bf16.msra.mxu0 0
    %2697 = vmatprep.subr.bf16.mxu0 0
    %2698 = vmatpush1.bf16.msra.mxu0 0
    %2699 = vmatprep.subr.bf16.mxu0 0
    %2700 = vmatpush1.bf16.msra.mxu0 0
    %2701 = vmatprep.subr.bf16.mxu0 0
    %2702 = vmatpush1.bf16.msra.mxu0 0
    %2703 = vmatprep.subr.bf16.mxu0 0
    %2704 = vmatpush1.bf16.msra.mxu0 0
    %2705 = vmatprep.subr.bf16.mxu0 0
    %2706 = vmatpush1.bf16.msra.mxu0 0
    %2707 = vmatprep.mubr.bf16.mxu0 0
    %2708 = vmatmul.mubr.bf16.gmra.mrb[0].mxu0 %v2673
    %v2709 = vpop.f32.mrb[0].mxu0
    %v2710 = vadd.f32 %v2666, %v2709
    %v2711 = vpop.f32.mrb[0].mxu0
    %v2712 = vpop.f32.mrb[0].mxu0
    %v2713 = vadd.f32 %v2669, %v2712
    %v2714 = vpop.f32.mrb[0].mxu0
    %2715 = vdwg.mxu0
    %v2716 = vsel %vm747, %v2482, 0
    %v2717 = vsel %vm747, %v2484, 0
    %v2719 = vsel %vm214, %v2716, 0
    %2721 = vmatprep.subr.bf16.mxu0 0
    %2722 = vmatpush1.bf16.xpose.msra.mxu0 %v2493
    %2723 = vmatprep.subr.bf16.mxu0 0
    %2724 = vmatpush1.bf16.xpose.msra.mxu0 0
    %2725 = vmatprep.subr.bf16.mxu0 0
    %2726 = vmatpush1.bf16.xpose.msra.mxu0 0
    %2727 = vmatprep.subr.bf16.mxu0 0
    %2728 = vmatpush1.bf16.xpose.msra.mxu0 0
    %2729 = vmatprep.subr.bf16.mxu0 0
    %2730 = vmatpush1.bf16.xpose.msra.mxu0 0
    %2731 = vmatprep.subr.bf16.mxu0 0
    %2732 = vmatpush1.bf16.xpose.msra.mxu0 0
    %2733 = vmatprep.subr.bf16.mxu0 0
    %2734 = vmatpush1.bf16.xpose.msra.mxu0 0
    %2735 = vmatprep.subr.bf16.mxu0 0
    %2736 = vmatpush1.bf16.xpose.msra.mxu0 0
    %2737 = vmatprep.subr.bf16.mxu0 0
    %2738 = vmatpush1.bf16.xpose.msra.mxu0 0
    %2739 = vmatprep.subr.bf16.mxu0 0
    %2740 = vmatpush1.bf16.xpose.msra.mxu0 0
    %2741 = vmatprep.subr.bf16.mxu0 0
    %2742 = vmatpush1.bf16.xpose.msra.mxu0 0
    %2743 = vmatprep.subr.bf16.mxu0 0
    %2744 = vmatpush1.bf16.xpose.msra.mxu0 0
    %2745 = vmatprep.subr.bf16.mxu0 0
    %2746 = vmatpush1.bf16.xpose.msra.mxu0 0
    %2747 = vmatprep.subr.bf16.mxu0 0
    %2748 = vmatpush1.bf16.xpose.msra.mxu0 0
    %2749 = vmatprep.subr.bf16.mxu0 0
    %2750 = vmatpush1.bf16.xpose.msra.mxu0 0
    %2751 = vmatprep.subr.bf16.mxu0 0
    %2752 = vmatpush1.bf16.xpose.msra.mxu0 0
    %2753 = vmatprep.mubr.bf16.mxu0 0
    %2754 = vmatmul.mubr.bf16.gmra.mrb[0].mxu0 %v2719
    %v2755 = vpop.f32.mrb[0].mxu0
    %v2756 = vadd.f32 %v2485, %v2755
    %v2757 = vpop.f32.mrb[0].mxu0
    %v2758 = vpop.f32.mrb[0].mxu0
    %v2759 = vadd.f32 %v2486, %v2758
    %v2760 = vpop.f32.mrb[0].mxu0
    %2761 = vdwg.mxu0
    %v2762 = vsel %vm549, %v2756, -inf
    %2763 = vmax.xlane.f32.xlu0 %v2762
    %v2764 = vpop.xlane.xlu0 %2763
    %v2765 = vsel %vm549, %v2759, -inf
    %2766 = vmax.xlane.f32.xlu0 %v2765
    %v2767 = vpop.xlane.xlu0 %2766
    %v2768 = vsub.f32 %v2756, %v2764
    %v2769 = vsub.f32 %v2759, %v2767
    %v2770 = vmul.f32 %v2768, 1.442695
    %v2771 = vpow.pop %v2770
    %v2772 = vmul.f32 %v2769, 1.442695
    %v2773 = vpow.pop %v2772
    %v2774 = vsel %vm549, %v2771, 0.0
    %2775 = vadd.xlane.f32.xlu0 %v2774
    %v2776 = vpop.xlane.xlu0 %2775
    %v2777 = vsel %vm549, %v2773, 0.0
    %2778 = vadd.xlane.f32.xlu0 %v2777
    %v2779 = vpop.xlane.xlu0 %2778
    %v2780 = vrcp.pop %v2776
    %v2781 = vrcp.pop %v2779
    %v2782 = vmul.f32 %v2771, %v2780
    %v2783 = vmul.f32 %v2773, %v2781
    %v2784 = vpack.c.bf16 %v2783, %v2782
    %v2786 = vsel %vm549, %v2784, 0
    %2788 = vmatprep.subr.bf16.mxu0 0
    %2789 = vmatpush1.bf16.msra.mxu0 %v2717
    %2790 = vmatprep.subr.bf16.mxu0 0
    %2791 = vmatpush1.bf16.msra.mxu0 0
    %2792 = vmatprep.subr.bf16.mxu0 0
    %2793 = vmatpush1.bf16.msra.mxu0 0
    %2794 = vmatprep.subr.bf16.mxu0 0
    %2795 = vmatpush1.bf16.msra.mxu0 0
    %2796 = vmatprep.subr.bf16.mxu0 0
    %2797 = vmatpush1.bf16.msra.mxu0 0
    %2798 = vmatprep.subr.bf16.mxu0 0
    %2799 = vmatpush1.bf16.msra.mxu0 0
    %2800 = vmatprep.subr.bf16.mxu0 0
    %2801 = vmatpush1.bf16.msra.mxu0 0
    %2802 = vmatprep.subr.bf16.mxu0 0
    %2803 = vmatpush1.bf16.msra.mxu0 0
    %2804 = vmatprep.subr.bf16.mxu0 0
    %2805 = vmatpush1.bf16.msra.mxu0 0
    %2806 = vmatprep.subr.bf16.mxu0 0
    %2807 = vmatpush1.bf16.msra.mxu0 0
    %2808 = vmatprep.subr.bf16.mxu0 0
    %2809 = vmatpush1.bf16.msra.mxu0 0
    %2810 = vmatprep.subr.bf16.mxu0 0
    %2811 = vmatpush1.bf16.msra.mxu0 0
    %2812 = vmatprep.subr.bf16.mxu0 0
    %2813 = vmatpush1.bf16.msra.mxu0 0
    %2814 = vmatprep.subr.bf16.mxu0 0
    %2815 = vmatpush1.bf16.msra.mxu0 0
    %2816 = vmatprep.subr.bf16.mxu0 0
    %2817 = vmatpush1.bf16.msra.mxu0 0
    %2818 = vmatprep.subr.bf16.mxu0 0
    %2819 = vmatpush1.bf16.msra.mxu0 0
    %2820 = vmatprep.mubr.bf16.mxu0 0
    %2821 = vmatmul.mubr.bf16.gmra.mrb[0].mxu0 %v2786
    %v2822 = vpop.f32.mrb[0].mxu0
    %v2823 = vadd.f32 0.0, %v2822
    %v2824 = vpop.f32.mrb[0].mxu0
    %v2825 = vpop.f32.mrb[0].mxu0
    %v2826 = vadd.f32 0.0, %v2825
    %v2827 = vpop.f32.mrb[0].mxu0
    %2828 = vdwg.mxu0
    %v2829 = vadd.f32 %v2710, %v2823
    %v2830 = vadd.f32 %v2713, %v2826
    %v2831 = vsel %vm871, %v2482, 0
    %v2832 = vsel %vm871, %v2484, 0
    %v2834 = vsel %vm214, %v2831, 0
    %2836 = vmatprep.subr.bf16.mxu0 0
    %2837 = vmatpush1.bf16.xpose.msra.mxu0 %v2493
    %2838 = vmatprep.subr.bf16.mxu0 0
    %2839 = vmatpush1.bf16.xpose.msra.mxu0 0
    %2840 = vmatprep.subr.bf16.mxu0 0
    %2841 = vmatpush1.bf16.xpose.msra.mxu0 0
    %2842 = vmatprep.subr.bf16.mxu0 0
    %2843 = vmatpush1.bf16.xpose.msra.mxu0 0
    %2844 = vmatprep.subr.bf16.mxu0 0
    %2845 = vmatpush1.bf16.xpose.msra.mxu0 0
    %2846 = vmatprep.subr.bf16.mxu0 0
    %2847 = vmatpush1.bf16.xpose.msra.mxu0 0
    %2848 = vmatprep.subr.bf16.mxu0 0
    %2849 = vmatpush1.bf16.xpose.msra.mxu0 0
    %2850 = vmatprep.subr.bf16.mxu0 0
    %2851 = vmatpush1.bf16.xpose.msra.mxu0 0
    %2852 = vmatprep.subr.bf16.mxu0 0
    %2853 = vmatpush1.bf16.xpose.msra.mxu0 0
    %2854 = vmatprep.subr.bf16.mxu0 0
    %2855 = vmatpush1.bf16.xpose.msra.mxu0 0
    %2856 = vmatprep.subr.bf16.mxu0 0
    %2857 = vmatpush1.bf16.xpose.msra.mxu0 0
    %2858 = vmatprep.subr.bf16.mxu0 0
    %2859 = vmatpush1.bf16.xpose.msra.mxu0 0
    %2860 = vmatprep.subr.bf16.mxu0 0
    %2861 = vmatpush1.bf16.xpose.msra.mxu0 0
    %2862 = vmatprep.subr.bf16.mxu0 0
    %2863 = vmatpush1.bf16.xpose.msra.mxu0 0
    %2864 = vmatprep.subr.bf16.mxu0 0
    %2865 = vmatpush1.bf16.xpose.msra.mxu0 0
    %2866 = vmatprep.subr.bf16.mxu0 0
    %2867 = vmatpush1.bf16.xpose.msra.mxu0 0
    %2868 = vmatprep.mubr.bf16.mxu0 0
    %2869 = vmatmul.mubr.bf16.gmra.mrb[0].mxu0 %v2834
    %v2870 = vpop.f32.mrb[0].mxu0
    %v2871 = vadd.f32 %v2485, %v2870
    %v2872 = vpop.f32.mrb[0].mxu0
    %v2873 = vpop.f32.mrb[0].mxu0
    %v2874 = vadd.f32 %v2486, %v2873
    %v2875 = vpop.f32.mrb[0].mxu0
    %2876 = vdwg.mxu0
    %v2877 = vsel %vm549, %v2871, -inf
    %2878 = vmax.xlane.f32.xlu0 %v2877
    %v2879 = vpop.xlane.xlu0 %2878
    %v2880 = vsel %vm549, %v2874, -inf
    %2881 = vmax.xlane.f32.xlu0 %v2880
    %v2882 = vpop.xlane.xlu0 %2881
    %v2883 = vsub.f32 %v2871, %v2879
    %v2884 = vsub.f32 %v2874, %v2882
    %v2885 = vmul.f32 %v2883, 1.442695
    %v2886 = vpow.pop %v2885
    %v2887 = vmul.f32 %v2884, 1.442695
    %v2888 = vpow.pop %v2887
    %v2889 = vsel %vm549, %v2886, 0.0
    %2890 = vadd.xlane.f32.xlu0 %v2889
    %v2891 = vpop.xlane.xlu0 %2890
    %v2892 = vsel %vm549, %v2888, 0.0
    %2893 = vadd.xlane.f32.xlu0 %v2892
    %v2894 = vpop.xlane.xlu0 %2893
    %v2895 = vrcp.pop %v2891
    %v2896 = vrcp.pop %v2894
    %v2897 = vmul.f32 %v2886, %v2895
    %v2898 = vmul.f32 %v2888, %v2896
    %v2899 = vpack.c.bf16 %v2898, %v2897
    %v2901 = vsel %vm549, %v2899, 0
    %2903 = vmatprep.subr.bf16.mxu0 0
    %2904 = vmatpush1.bf16.msra.mxu0 %v2832
    %2905 = vmatprep.subr.bf16.mxu0 0
    %2906 = vmatpush1.bf16.msra.mxu0 0
    %2907 = vmatprep.subr.bf16.mxu0 0
    %2908 = vmatpush1.bf16.msra.mxu0 0
    %2909 = vmatprep.subr.bf16.mxu0 0
    %2910 = vmatpush1.bf16.msra.mxu0 0
    %2911 = vmatprep.subr.bf16.mxu0 0
    %2912 = vmatpush1.bf16.msra.mxu0 0
    %2913 = vmatprep.subr.bf16.mxu0 0
    %2914 = vmatpush1.bf16.msra.mxu0 0
    %2915 = vmatprep.subr.bf16.mxu0 0
    %2916 = vmatpush1.bf16.msra.mxu0 0
    %2917 = vmatprep.subr.bf16.mxu0 0
    %2918 = vmatpush1.bf16.msra.mxu0 0
    %2919 = vmatprep.subr.bf16.mxu0 0
    %2920 = vmatpush1.bf16.msra.mxu0 0
    %2921 = vmatprep.subr.bf16.mxu0 0
    %2922 = vmatpush1.bf16.msra.mxu0 0
    %2923 = vmatprep.subr.bf16.mxu0 0
    %2924 = vmatpush1.bf16.msra.mxu0 0
    %2925 = vmatprep.subr.bf16.mxu0 0
    %2926 = vmatpush1.bf16.msra.mxu0 0
    %2927 = vmatprep.subr.bf16.mxu0 0
    %2928 = vmatpush1.bf16.msra.mxu0 0
    %2929 = vmatprep.subr.bf16.mxu0 0
    %2930 = vmatpush1.bf16.msra.mxu0 0
    %2931 = vmatprep.subr.bf16.mxu0 0
    %2932 = vmatpush1.bf16.msra.mxu0 0
    %2933 = vmatprep.subr.bf16.mxu0 0
    %2934 = vmatpush1.bf16.msra.mxu0 0
    %2935 = vmatprep.mubr.bf16.mxu0 0
    %2936 = vmatmul.mubr.bf16.gmra.mrb[0].mxu0 %v2901
    %v2937 = vpop.f32.mrb[0].mxu0
    %v2938 = vadd.f32 0.0, %v2937
    %v2939 = vpop.f32.mrb[0].mxu0
    %v2940 = vpop.f32.mrb[0].mxu0
    %v2941 = vadd.f32 0.0, %v2940
    %v2942 = vpop.f32.mrb[0].mxu0
    %2943 = vdwg.mxu0
    %v2944 = vadd.f32 %v2829, %v2938
    %v2945 = vadd.f32 %v2830, %v2941
    %s2946 = scalar_lea.vmem %s7, 176
    %v2947 = vld [vmem:[%s2946] sm:$0xf]
    %v2948 = vld [vmem:[%s2946 + $0x4] sm:$0xf]
    %v2949 = vld [vmem:[%s2946 + $0x8] sm:$0xf]
    %v2950 = vld [vmem:[%s2946 + $0xc] sm:$0xf]
    %v2951 = vld [vmem:[%s10 + $0x3a] sm:$0x1]
    %v2952 = vpack.c.bf16 %v2945, %v2944
    %v2953 = vlaneseq
    %v2954 = vshrl.u32 %v2953, 7
    %v2955 = vsub.s32 0, %v2954
    %v2956 = vrot.slane %v2951, %v2955
    %v2961 = vunpack.c.l.b16 %v2947
    %v2962 = vunpack.c.l.b16 %v2948
    %v2963 = vunpack.c.l.b16 %v2949
    %v2964 = vunpack.c.l.b16 %v2950
    %v2965 = vpack.c.b16 %v2962, %v2961
    %v2966 = vpack.c.b16 %v2964, %v2963
    %v2970 = vsel %vm214, %v2952, 0
    %2972 = vmatprep.subr.bf16.mxu0 0
    %2973 = vmatpush1.bf16.msra.mxu0 %v2965
    %2974 = vmatprep.subr.bf16.mxu0 0
    %2975 = vmatpush1.bf16.msra.mxu0 %v2966
    %2976 = vmatprep.subr.bf16.mxu0 0
    %2977 = vmatpush1.bf16.msra.mxu0 0
    %2978 = vmatprep.subr.bf16.mxu0 0
    %2979 = vmatpush1.bf16.msra.mxu0 0
    %2980 = vmatprep.subr.bf16.mxu0 0
    %2981 = vmatpush1.bf16.msra.mxu0 0
    %2982 = vmatprep.subr.bf16.mxu0 0
    %2983 = vmatpush1.bf16.msra.mxu0 0
    %2984 = vmatprep.subr.bf16.mxu0 0
    %2985 = vmatpush1.bf16.msra.mxu0 0
    %2986 = vmatprep.subr.bf16.mxu0 0
    %2987 = vmatpush1.bf16.msra.mxu0 0
    %2988 = vmatprep.subr.bf16.mxu0 0
    %2989 = vmatpush1.bf16.msra.mxu0 0
    %2990 = vmatprep.subr.bf16.mxu0 0
    %2991 = vmatpush1.bf16.msra.mxu0 0
    %2992 = vmatprep.subr.bf16.mxu0 0
    %2993 = vmatpush1.bf16.msra.mxu0 0
    %2994 = vmatprep.subr.bf16.mxu0 0
    %2995 = vmatpush1.bf16.msra.mxu0 0
    %2996 = vmatprep.subr.bf16.mxu0 0
    %2997 = vmatpush1.bf16.msra.mxu0 0
    %2998 = vmatprep.subr.bf16.mxu0 0
    %2999 = vmatpush1.bf16.msra.mxu0 0
    %3000 = vmatprep.subr.bf16.mxu0 0
    %3001 = vmatpush1.bf16.msra.mxu0 0
    %3002 = vmatprep.subr.bf16.mxu0 0
    %3003 = vmatpush1.bf16.msra.mxu0 0
    %3004 = vmatprep.mubr.bf16.mxu0 0
    %3005 = vmatmul.mubr.bf16.gmra.mrb[0].mxu0 %v2970
    %v3006 = vpop.f32.mrb[0].mxu0
    %v3007 = vadd.f32 %v2956, %v3006
    %v3008 = vpop.f32.mrb[0].mxu0
    %v3009 = vpop.f32.mrb[0].mxu0
    %v3010 = vadd.f32 %v2956, %v3009
    %v3011 = vpop.f32.mrb[0].mxu0
    %3012 = vdwg.mxu0
    %v3013 = vadd.f32 %v2243, %v3007
    %v3014 = vadd.f32 %v2244, %v3010
    %v3015 = vld [vmem:[%s10 + $0x3b] sm:$0x1]
    %v3016 = vld [vmem:[%s10 + $0x3c] sm:$0x1]
    %v3017 = vsel %vm214, %v3013, 0.0
    %3018 = vadd.xlane.f32.xlu0 %v3017
    %v3019 = vpop.xlane.xlu0 %3018
    %v3020 = vsel %vm214, %v3014, 0.0
    %3021 = vadd.xlane.f32.xlu0 %v3020
    %v3022 = vpop.xlane.xlu0 %3021
    %v3023 = vmul.f32 %v3019, %v221
    %v3024 = vmul.f32 %v3022, %v221
    %v3025 = vsub.f32 %v3013, %v3023
    %v3026 = vsub.f32 %v3014, %v3024
    %v3027 = vmul.f32 %v3025, %v3025
    %v3028 = vmul.f32 %v3026, %v3026
    %v3029 = vsel %vm214, %v3027, 0.0
    %3030 = vadd.xlane.f32.xlu0 %v3029
    %v3031 = vpop.xlane.xlu0 %3030
    %v3032 = vsel %vm214, %v3028, 0.0
    %3033 = vadd.xlane.f32.xlu0 %v3032
    %v3034 = vpop.xlane.xlu0 %3033
    %v3035 = vmul.f32 %v3031, %v221
    %v3036 = vmul.f32 %v3034, %v221
    %v3037 = vadd.f32 %v3035, 1e-05
    %v3038 = vadd.f32 %v3036, 1e-05
    %v3039 = vrsqrt.pop %v3037
    %v3040 = vrsqrt.pop %v3038
    %v3041 = vmul.f32 %v3025, %v3039
    %v3042 = vmul.f32 %v3026, %v3040
    %v3043 = vlaneseq
    %v3044 = vshrl.u32 %v3043, 7
    %v3045 = vsub.s32 0, %v3044
    %v3046 = vrot.slane %v3015, %v3045
    %v3047 = vmul.f32 %v3041, %v3046
    %v3048 = vmul.f32 %v3042, %v3046
    %v3049 = vlaneseq
    %v3050 = vshrl.u32 %v3049, 7
    %v3051 = vsub.s32 0, %v3050
    %v3052 = vrot.slane %v3016, %v3051
    %v3053 = vadd.f32 %v3047, %v3052
    %v3054 = vadd.f32 %v3048, %v3052
    %s3055 = scalar_lea.vmem %s8, 16
    %v3056 = vld [vmem:[%s3055] sm:$0xf]
    %v3057 = vld [vmem:[%s3055 + $0x4] sm:$0xf]
    %v3058 = vld [vmem:[%s3055 + $0x8] sm:$0xf]
    %v3059 = vld [vmem:[%s3055 + $0xc] sm:$0xf]
    %v3060 = vld [vmem:[%s10 + $0x3d] sm:$0x1]
    %v3061 = vpack.c.bf16 %v3054, %v3053
    %v3062 = vlaneseq
    %v3063 = vshrl.u32 %v3062, 7
    %v3064 = vsub.s32 0, %v3063
    %v3065 = vrot.slane %v3060, %v3064
    %v3070 = vunpack.c.l.b16 %v3056
    %v3071 = vunpack.c.l.b16 %v3057
    %v3072 = vunpack.c.l.b16 %v3058
    %v3073 = vunpack.c.l.b16 %v3059
    %v3074 = vpack.c.b16 %v3071, %v3070
    %v3075 = vpack.c.b16 %v3073, %v3072
    %v3079 = vsel %vm214, %v3061, 0
    %3081 = vmatprep.subr.bf16.mxu0 0
    %3082 = vmatpush1.bf16.msra.mxu0 %v3074
    %3083 = vmatprep.subr.bf16.mxu0 0
    %3084 = vmatpush1.bf16.msra.mxu0 %v3075
    %3085 = vmatprep.subr.bf16.mxu0 0
    %3086 = vmatpush1.bf16.msra.mxu0 0
    %3087 = vmatprep.subr.bf16.mxu0 0
    %3088 = vmatpush1.bf16.msra.mxu0 0
    %3089 = vmatprep.subr.bf16.mxu0 0
    %3090 = vmatpush1.bf16.msra.mxu0 0
    %3091 = vmatprep.subr.bf16.mxu0 0
    %3092 = vmatpush1.bf16.msra.mxu0 0
    %3093 = vmatprep.subr.bf16.mxu0 0
    %3094 = vmatpush1.bf16.msra.mxu0 0
    %3095 = vmatprep.subr.bf16.mxu0 0
    %3096 = vmatpush1.bf16.msra.mxu0 0
    %3097 = vmatprep.subr.bf16.mxu0 0
    %3098 = vmatpush1.bf16.msra.mxu0 0
    %3099 = vmatprep.subr.bf16.mxu0 0
    %3100 = vmatpush1.bf16.msra.mxu0 0
    %3101 = vmatprep.subr.bf16.mxu0 0
    %3102 = vmatpush1.bf16.msra.mxu0 0
    %3103 = vmatprep.subr.bf16.mxu0 0
    %3104 = vmatpush1.bf16.msra.mxu0 0
    %3105 = vmatprep.subr.bf16.mxu0 0
    %3106 = vmatpush1.bf16.msra.mxu0 0
    %3107 = vmatprep.subr.bf16.mxu0 0
    %3108 = vmatpush1.bf16.msra.mxu0 0
    %3109 = vmatprep.subr.bf16.mxu0 0
    %3110 = vmatpush1.bf16.msra.mxu0 0
    %3111 = vmatprep.subr.bf16.mxu0 0
    %3112 = vmatpush1.bf16.msra.mxu0 0
    %3113 = vmatprep.mubr.bf16.mxu0 0
    %3114 = vmatmul.mubr.bf16.gmra.mrb[0].mxu0 %v3079
    %v3115 = vpop.f32.mrb[0].mxu0
    %v3116 = vadd.f32 %v3065, %v3115
    %v3117 = vpop.f32.mrb[0].mxu0
    %v3118 = vpop.f32.mrb[0].mxu0
    %v3119 = vadd.f32 %v3065, %v3118
    %v3120 = vpop.f32.mrb[0].mxu0
    %3121 = vdwg.mxu0
    %v3122 = vmul.f32 %v3116, 0.5
    %v3123 = vmul.f32 %v3119, 0.5
    %v3124 = vmul.f32 %v3116, 0.044715
    %v3125 = vmul.f32 %v3119, 0.044715
    %v3126 = vmul.f32 %v3124, %v3116
    %v3127 = vmul.f32 %v3125, %v3119
    %v3128 = vmul.f32 %v3126, %v3116
    %v3129 = vmul.f32 %v3127, %v3119
    %v3130 = vadd.f32 %v3116, %v3128
    %v3131 = vadd.f32 %v3119, %v3129
    %v3132 = vmul.f32 %v3130, 0.7978846
    %v3133 = vmul.f32 %v3131, 0.7978846
    %v3134 = vtanh.pop %v3132
    %v3135 = vtanh.pop %v3133
    %v3136 = vadd.f32 %v3134, 1.0
    %v3137 = vadd.f32 %v3135, 1.0
    %v3138 = vmul.f32 %v3122, %v3136
    %v3139 = vmul.f32 %v3123, %v3137
    %s3140 = scalar_lea.vmem %s9, 64
    %v3141 = vld [vmem:[%s3140] sm:$0xf]
    %v3142 = vld [vmem:[%s3140 + $0x4] sm:$0xf]
    %v3143 = vld [vmem:[%s3140 + $0x8] sm:$0xf]
    %v3144 = vld [vmem:[%s3140 + $0xc] sm:$0xf]
    %v3145 = vld [vmem:[%s3140 + $0x10] sm:$0xf]
    %v3146 = vld [vmem:[%s3140 + $0x14] sm:$0xf]
    %v3147 = vld [vmem:[%s3140 + $0x18] sm:$0xf]
    %v3148 = vld [vmem:[%s3140 + $0x1c] sm:$0xf]
    %v3149 = vld [vmem:[%s3140 + $0x20] sm:$0xf]
    %v3150 = vld [vmem:[%s3140 + $0x24] sm:$0xf]
    %v3151 = vld [vmem:[%s3140 + $0x28] sm:$0xf]
    %v3152 = vld [vmem:[%s3140 + $0x2c] sm:$0xf]
    %v3153 = vld [vmem:[%s3140 + $0x30] sm:$0xf]
    %v3154 = vld [vmem:[%s3140 + $0x34] sm:$0xf]
    %v3155 = vld [vmem:[%s3140 + $0x38] sm:$0xf]
    %v3156 = vld [vmem:[%s3140 + $0x3c] sm:$0xf]
    %v3157 = vld [vmem:[%s10 + $0x3e] sm:$0x1]
    %v3158 = vpack.c.bf16 %v3139, %v3138
    %v3159 = vlaneseq
    %v3160 = vshrl.u32 %v3159, 7
    %v3161 = vsub.s32 0, %v3160
    %v3162 = vrot.slane %v3157, %v3161
    %v3179 = vunpack.c.l.b16 %v3141
    %v3180 = vunpack.c.l.b16 %v3142
    %v3181 = vunpack.c.l.b16 %v3143
    %v3182 = vunpack.c.l.b16 %v3144
    %v3183 = vunpack.c.l.b16 %v3145
    %v3184 = vunpack.c.l.b16 %v3146
    %v3185 = vunpack.c.l.b16 %v3147
    %v3186 = vunpack.c.l.b16 %v3148
    %v3187 = vunpack.c.l.b16 %v3149
    %v3188 = vunpack.c.l.b16 %v3150
    %v3189 = vunpack.c.l.b16 %v3151
    %v3190 = vunpack.c.l.b16 %v3152
    %v3191 = vunpack.c.l.b16 %v3153
    %v3192 = vunpack.c.l.b16 %v3154
    %v3193 = vunpack.c.l.b16 %v3155
    %v3194 = vunpack.c.l.b16 %v3156
    %v3195 = vpack.c.b16 %v3180, %v3179
    %v3196 = vpack.c.b16 %v3182, %v3181
    %v3197 = vpack.c.b16 %v3184, %v3183
    %v3198 = vpack.c.b16 %v3186, %v3185
    %v3199 = vpack.c.b16 %v3188, %v3187
    %v3200 = vpack.c.b16 %v3190, %v3189
    %v3201 = vpack.c.b16 %v3192, %v3191
    %v3202 = vpack.c.b16 %v3194, %v3193
    %3211 = vmatprep.subr.bf16.mxu0 0
    %3212 = vmatpush1.bf16.msra.mxu0 %v3195
    %3213 = vmatprep.subr.bf16.mxu0 0
    %3214 = vmatpush1.bf16.msra.mxu0 %v3196
    %3215 = vmatprep.subr.bf16.mxu0 0
    %3216 = vmatpush1.bf16.msra.mxu0 %v3197
    %3217 = vmatprep.subr.bf16.mxu0 0
    %3218 = vmatpush1.bf16.msra.mxu0 %v3198
    %3219 = vmatprep.subr.bf16.mxu0 0
    %3220 = vmatpush1.bf16.msra.mxu0 %v3199
    %3221 = vmatprep.subr.bf16.mxu0 0
    %3222 = vmatpush1.bf16.msra.mxu0 %v3200
    %3223 = vmatprep.subr.bf16.mxu0 0
    %3224 = vmatpush1.bf16.msra.mxu0 %v3201
    %3225 = vmatprep.subr.bf16.mxu0 0
    %3226 = vmatpush1.bf16.msra.mxu0 %v3202
    %3227 = vmatprep.subr.bf16.mxu0 0
    %3228 = vmatpush1.bf16.msra.mxu0 0
    %3229 = vmatprep.subr.bf16.mxu0 0
    %3230 = vmatpush1.bf16.msra.mxu0 0
    %3231 = vmatprep.subr.bf16.mxu0 0
    %3232 = vmatpush1.bf16.msra.mxu0 0
    %3233 = vmatprep.subr.bf16.mxu0 0
    %3234 = vmatpush1.bf16.msra.mxu0 0
    %3235 = vmatprep.subr.bf16.mxu0 0
    %3236 = vmatpush1.bf16.msra.mxu0 0
    %3237 = vmatprep.subr.bf16.mxu0 0
    %3238 = vmatpush1.bf16.msra.mxu0 0
    %3239 = vmatprep.subr.bf16.mxu0 0
    %3240 = vmatpush1.bf16.msra.mxu0 0
    %3241 = vmatprep.subr.bf16.mxu0 0
    %3242 = vmatpush1.bf16.msra.mxu0 0
    %3243 = vmatprep.mubr.bf16.mxu0 0
    %3244 = vmatmul.mubr.bf16.gmra.mrb[0].mxu0 %v3158
    %v3245 = vpop.f32.mrb[0].mxu0
    %v3246 = vadd.f32 %v3162, %v3245
    %v3247 = vpop.f32.mrb[0].mxu0
    %v3248 = vpop.f32.mrb[0].mxu0
    %v3249 = vadd.f32 %v3162, %v3248
    %v3250 = vpop.f32.mrb[0].mxu0
    %3251 = vdwg.mxu0
    %v3252 = vadd.f32 %v3013, %v3246
    %v3253 = vadd.f32 %v3014, %v3249
    %v3254 = vld [vmem:[%s10 + $0x3f] sm:$0x1]
    %v3255 = vld [vmem:[%s10 + $0x40] sm:$0x1]
    %v3256 = vsel %vm214, %v3252, 0.0
    %3257 = vadd.xlane.f32.xlu0 %v3256
    %v3258 = vpop.xlane.xlu0 %3257
    %v3259 = vsel %vm214, %v3253, 0.0
    %3260 = vadd.xlane.f32.xlu0 %v3259
    %v3261 = vpop.xlane.xlu0 %3260
    %v3262 = vmul.f32 %v3258, %v221
    %v3263 = vmul.f32 %v3261, %v221
    %v3264 = vsub.f32 %v3252, %v3262
    %v3265 = vsub.f32 %v3253, %v3263
    %v3266 = vmul.f32 %v3264, %v3264
    %v3267 = vmul.f32 %v3265, %v3265
    %v3268 = vsel %vm214, %v3266, 0.0
    %3269 = vadd.xlane.f32.xlu0 %v3268
    %v3270 = vpop.xlane.xlu0 %3269
    %v3271 = vsel %vm214, %v3267, 0.0
    %3272 = vadd.xlane.f32.xlu0 %v3271
    %v3273 = vpop.xlane.xlu0 %3272
    %v3274 = vmul.f32 %v3270, %v221
    %v3275 = vmul.f32 %v3273, %v221
    %v3276 = vadd.f32 %v3274, 1e-05
    %v3277 = vadd.f32 %v3275, 1e-05
    %v3278 = vrsqrt.pop %v3276
    %v3279 = vrsqrt.pop %v3277
    %v3280 = vmul.f32 %v3264, %v3278
    %v3281 = vmul.f32 %v3265, %v3279
    %v3282 = vlaneseq
    %v3283 = vshrl.u32 %v3282, 7
    %v3284 = vsub.s32 0, %v3283
    %v3285 = vrot.slane %v3254, %v3284
    %v3286 = vmul.f32 %v3280, %v3285
    %v3287 = vmul.f32 %v3281, %v3285
    %v3288 = vlaneseq
    %v3289 = vshrl.u32 %v3288, 7
    %v3290 = vsub.s32 0, %v3289
    %v3291 = vrot.slane %v3255, %v3290
    %v3292 = vadd.f32 %v3286, %v3291
    %v3293 = vadd.f32 %v3287, %v3291
    %s3294 = scalar_lea.vmem %s7, 192
    %v3295 = vld [vmem:[%s3294] sm:$0xf]
    %v3296 = vld [vmem:[%s3294 + $0x4] sm:$0xf]
    %v3297 = vld [vmem:[%s3294 + $0x8] sm:$0xf]
    %v3298 = vld [vmem:[%s3294 + $0xc] sm:$0xf]
    %v3299 = vld [vmem:[%s10 + $0x41] sm:$0x1]
    %v3300 = vpack.c.bf16 %v3293, %v3292
    %v3301 = vlaneseq
    %v3302 = vshrl.u32 %v3301, 7
    %v3303 = vsub.s32 0, %v3302
    %v3304 = vrot.slane %v3299, %v3303
    %v3309 = vunpack.c.l.b16 %v3295
    %v3310 = vunpack.c.l.b16 %v3296
    %v3311 = vunpack.c.l.b16 %v3297
    %v3312 = vunpack.c.l.b16 %v3298
    %v3313 = vpack.c.b16 %v3310, %v3309
    %v3314 = vpack.c.b16 %v3312, %v3311
    %v3318 = vsel %vm214, %v3300, 0
    %3320 = vmatprep.subr.bf16.mxu0 0
    %3321 = vmatpush1.bf16.msra.mxu0 %v3313
    %3322 = vmatprep.subr.bf16.mxu0 0
    %3323 = vmatpush1.bf16.msra.mxu0 %v3314
    %3324 = vmatprep.subr.bf16.mxu0 0
    %3325 = vmatpush1.bf16.msra.mxu0 0
    %3326 = vmatprep.subr.bf16.mxu0 0
    %3327 = vmatpush1.bf16.msra.mxu0 0
    %3328 = vmatprep.subr.bf16.mxu0 0
    %3329 = vmatpush1.bf16.msra.mxu0 0
    %3330 = vmatprep.subr.bf16.mxu0 0
    %3331 = vmatpush1.bf16.msra.mxu0 0
    %3332 = vmatprep.subr.bf16.mxu0 0
    %3333 = vmatpush1.bf16.msra.mxu0 0
    %3334 = vmatprep.subr.bf16.mxu0 0
    %3335 = vmatpush1.bf16.msra.mxu0 0
    %3336 = vmatprep.subr.bf16.mxu0 0
    %3337 = vmatpush1.bf16.msra.mxu0 0
    %3338 = vmatprep.subr.bf16.mxu0 0
    %3339 = vmatpush1.bf16.msra.mxu0 0
    %3340 = vmatprep.subr.bf16.mxu0 0
    %3341 = vmatpush1.bf16.msra.mxu0 0
    %3342 = vmatprep.subr.bf16.mxu0 0
    %3343 = vmatpush1.bf16.msra.mxu0 0
    %3344 = vmatprep.subr.bf16.mxu0 0
    %3345 = vmatpush1.bf16.msra.mxu0 0
    %3346 = vmatprep.subr.bf16.mxu0 0
    %3347 = vmatpush1.bf16.msra.mxu0 0
    %3348 = vmatprep.subr.bf16.mxu0 0
    %3349 = vmatpush1.bf16.msra.mxu0 0
    %3350 = vmatprep.subr.bf16.mxu0 0
    %3351 = vmatpush1.bf16.msra.mxu0 0
    %3352 = vmatprep.mubr.bf16.mxu0 0
    %3353 = vmatmul.mubr.bf16.gmra.mrb[0].mxu0 %v3318
    %v3354 = vpop.f32.mrb[0].mxu0
    %v3355 = vadd.f32 %v3304, %v3354
    %v3356 = vpop.f32.mrb[0].mxu0
    %v3357 = vpop.f32.mrb[0].mxu0
    %v3358 = vadd.f32 %v3304, %v3357
    %v3359 = vpop.f32.mrb[0].mxu0
    %3360 = vdwg.mxu0
    %s3361 = scalar_lea.vmem %s7, 208
    %v3362 = vld [vmem:[%s3361] sm:$0xf]
    %v3363 = vld [vmem:[%s3361 + $0x4] sm:$0xf]
    %v3364 = vld [vmem:[%s3361 + $0x8] sm:$0xf]
    %v3365 = vld [vmem:[%s3361 + $0xc] sm:$0xf]
    %v3366 = vld [vmem:[%s10 + $0x42] sm:$0x1]
    %v3367 = vlaneseq
    %v3368 = vshrl.u32 %v3367, 7
    %v3369 = vsub.s32 0, %v3368
    %v3370 = vrot.slane %v3366, %v3369
    %v3375 = vunpack.c.l.b16 %v3362
    %v3376 = vunpack.c.l.b16 %v3363
    %v3377 = vunpack.c.l.b16 %v3364
    %v3378 = vunpack.c.l.b16 %v3365
    %v3379 = vpack.c.b16 %v3376, %v3375
    %v3380 = vpack.c.b16 %v3378, %v3377
    %3383 = vmatprep.subr.bf16.mxu0 0
    %3384 = vmatpush1.bf16.msra.mxu0 %v3379
    %3385 = vmatprep.subr.bf16.mxu0 0
    %3386 = vmatpush1.bf16.msra.mxu0 %v3380
    %3387 = vmatprep.subr.bf16.mxu0 0
    %3388 = vmatpush1.bf16.msra.mxu0 0
    %3389 = vmatprep.subr.bf16.mxu0 0
    %3390 = vmatpush1.bf16.msra.mxu0 0
    %3391 = vmatprep.subr.bf16.mxu0 0
    %3392 = vmatpush1.bf16.msra.mxu0 0
    %3393 = vmatprep.subr.bf16.mxu0 0
    %3394 = vmatpush1.bf16.msra.mxu0 0
    %3395 = vmatprep.subr.bf16.mxu0 0
    %3396 = vmatpush1.bf16.msra.mxu0 0
    %3397 = vmatprep.subr.bf16.mxu0 0
    %3398 = vmatpush1.bf16.msra.mxu0 0
    %3399 = vmatprep.subr.bf16.mxu0 0
    %3400 = vmatpush1.bf16.msra.mxu0 0
    %3401 = vmatprep.subr.bf16.mxu0 0
    %3402 = vmatpush1.bf16.msra.mxu0 0
    %3403 = vmatprep.subr.bf16.mxu0 0
    %3404 = vmatpush1.bf16.msra.mxu0 0
    %3405 = vmatprep.subr.bf16.mxu0 0
    %3406 = vmatpush1.bf16.msra.mxu0 0
    %3407 = vmatprep.subr.bf16.mxu0 0
    %3408 = vmatpush1.bf16.msra.mxu0 0
    %3409 = vmatprep.subr.bf16.mxu0 0
    %3410 = vmatpush1.bf16.msra.mxu0 0
    %3411 = vmatprep.subr.bf16.mxu0 0
    %3412 = vmatpush1.bf16.msra.mxu0 0
    %3413 = vmatprep.subr.bf16.mxu0 0
    %3414 = vmatpush1.bf16.msra.mxu0 0
    %3415 = vmatprep.mubr.bf16.mxu0 0
    %3416 = vmatmul.mubr.bf16.gmra.mrb[0].mxu0 %v3318
    %v3417 = vpop.f32.mrb[0].mxu0
    %v3418 = vadd.f32 %v3370, %v3417
    %v3419 = vpop.f32.mrb[0].mxu0
    %v3420 = vpop.f32.mrb[0].mxu0
    %v3421 = vadd.f32 %v3370, %v3420
    %v3422 = vpop.f32.mrb[0].mxu0
    %3423 = vdwg.mxu0
    %s3424 = scalar_lea.vmem %s7, 224
    %v3425 = vld [vmem:[%s3424] sm:$0xf]
    %v3426 = vld [vmem:[%s3424 + $0x4] sm:$0xf]
    %v3427 = vld [vmem:[%s3424 + $0x8] sm:$0xf]
    %v3428 = vld [vmem:[%s3424 + $0xc] sm:$0xf]
    %v3429 = vld [vmem:[%s10 + $0x43] sm:$0x1]
    %v3430 = vlaneseq
    %v3431 = vshrl.u32 %v3430, 7
    %v3432 = vsub.s32 0, %v3431
    %v3433 = vrot.slane %v3429, %v3432
    %v3438 = vunpack.c.l.b16 %v3425
    %v3439 = vunpack.c.l.b16 %v3426
    %v3440 = vunpack.c.l.b16 %v3427
    %v3441 = vunpack.c.l.b16 %v3428
    %v3442 = vpack.c.b16 %v3439, %v3438
    %v3443 = vpack.c.b16 %v3441, %v3440
    %3446 = vmatprep.subr.bf16.mxu0 0
    %3447 = vmatpush1.bf16.msra.mxu0 %v3442
    %3448 = vmatprep.subr.bf16.mxu0 0
    %3449 = vmatpush1.bf16.msra.mxu0 %v3443
    %3450 = vmatprep.subr.bf16.mxu0 0
    %3451 = vmatpush1.bf16.msra.mxu0 0
    %3452 = vmatprep.subr.bf16.mxu0 0
    %3453 = vmatpush1.bf16.msra.mxu0 0
    %3454 = vmatprep.subr.bf16.mxu0 0
    %3455 = vmatpush1.bf16.msra.mxu0 0
    %3456 = vmatprep.subr.bf16.mxu0 0
    %3457 = vmatpush1.bf16.msra.mxu0 0
    %3458 = vmatprep.subr.bf16.mxu0 0
    %3459 = vmatpush1.bf16.msra.mxu0 0
    %3460 = vmatprep.subr.bf16.mxu0 0
    %3461 = vmatpush1.bf16.msra.mxu0 0
    %3462 = vmatprep.subr.bf16.mxu0 0
    %3463 = vmatpush1.bf16.msra.mxu0 0
    %3464 = vmatprep.subr.bf16.mxu0 0
    %3465 = vmatpush1.bf16.msra.mxu0 0
    %3466 = vmatprep.subr.bf16.mxu0 0
    %3467 = vmatpush1.bf16.msra.mxu0 0
    %3468 = vmatprep.subr.bf16.mxu0 0
    %3469 = vmatpush1.bf16.msra.mxu0 0
    %3470 = vmatprep.subr.bf16.mxu0 0
    %3471 = vmatpush1.bf16.msra.mxu0 0
    %3472 = vmatprep.subr.bf16.mxu0 0
    %3473 = vmatpush1.bf16.msra.mxu0 0
    %3474 = vmatprep.subr.bf16.mxu0 0
    %3475 = vmatpush1.bf16.msra.mxu0 0
    %3476 = vmatprep.subr.bf16.mxu0 0
    %3477 = vmatpush1.bf16.msra.mxu0 0
    %3478 = vmatprep.mubr.bf16.mxu0 0
    %3479 = vmatmul.mubr.bf16.gmra.mrb[0].mxu0 %v3318
    %v3480 = vpop.f32.mrb[0].mxu0
    %v3481 = vadd.f32 %v3433, %v3480
    %v3482 = vpop.f32.mrb[0].mxu0
    %v3483 = vpop.f32.mrb[0].mxu0
    %v3484 = vadd.f32 %v3433, %v3483
    %v3485 = vpop.f32.mrb[0].mxu0
    %3486 = vdwg.mxu0
    %v3487 = vpack.c.bf16 %v3358, %v3355
    %v3488 = vpack.c.bf16 %v3421, %v3418
    %v3489 = vpack.c.bf16 %v3484, %v3481
    %v3490 = vsel %vm499, %v3487, 0
    %v3491 = vsel %vm499, %v3489, 0
    %v3493 = vsel %vm214, %v3490, 0
    %v3496 = vsel %vm214, %v3488, 0
    %3498 = vmatprep.subr.bf16.mxu0 0
    %3499 = vmatpush1.bf16.xpose.msra.mxu0 %v3496
    %3500 = vmatprep.subr.bf16.mxu0 0
    %3501 = vmatpush1.bf16.xpose.msra.mxu0 0
    %3502 = vmatprep.subr.bf16.mxu0 0
    %3503 = vmatpush1.bf16.xpose.msra.mxu0 0
    %3504 = vmatprep.subr.bf16.mxu0 0
    %3505 = vmatpush1.bf16.xpose.msra.mxu0 0
    %3506 = vmatprep.subr.bf16.mxu0 0
    %3507 = vmatpush1.bf16.xpose.msra.mxu0 0
    %3508 = vmatprep.subr.bf16.mxu0 0
    %3509 = vmatpush1.bf16.xpose.msra.mxu0 0
    %3510 = vmatprep.subr.bf16.mxu0 0
    %3511 = vmatpush1.bf16.xpose.msra.mxu0 0
    %3512 = vmatprep.subr.bf16.mxu0 0
    %3513 = vmatpush1.bf16.xpose.msra.mxu0 0
    %3514 = vmatprep.subr.bf16.mxu0 0
    %3515 = vmatpush1.bf16.xpose.msra.mxu0 0
    %3516 = vmatprep.subr.bf16.mxu0 0
    %3517 = vmatpush1.bf16.xpose.msra.mxu0 0
    %3518 = vmatprep.subr.bf16.mxu0 0
    %3519 = vmatpush1.bf16.xpose.msra.mxu0 0
    %3520 = vmatprep.subr.bf16.mxu0 0
    %3521 = vmatpush1.bf16.xpose.msra.mxu0 0
    %3522 = vmatprep.subr.bf16.mxu0 0
    %3523 = vmatpush1.bf16.xpose.msra.mxu0 0
    %3524 = vmatprep.subr.bf16.mxu0 0
    %3525 = vmatpush1.bf16.xpose.msra.mxu0 0
    %3526 = vmatprep.subr.bf16.mxu0 0
    %3527 = vmatpush1.bf16.xpose.msra.mxu0 0
    %3528 = vmatprep.subr.bf16.mxu0 0
    %3529 = vmatpush1.bf16.xpose.msra.mxu0 0
    %3530 = vmatprep.mubr.bf16.mxu0 0
    %3531 = vmatmul.mubr.bf16.gmra.mrb[0].mxu0 %v3493
    %v3532 = vpop.f32.mrb[0].mxu0
    %v3533 = vadd.f32 %v1715, %v3532
    %v3534 = vpop.f32.mrb[0].mxu0
    %v3535 = vpop.f32.mrb[0].mxu0
    %v3536 = vadd.f32 %v1716, %v3535
    %v3537 = vpop.f32.mrb[0].mxu0
    %3538 = vdwg.mxu0
    %v3539 = vsel %vm549, %v3533, -inf
    %3540 = vmax.xlane.f32.xlu0 %v3539
    %v3541 = vpop.xlane.xlu0 %3540
    %v3542 = vsel %vm549, %v3536, -inf
    %3543 = vmax.xlane.f32.xlu0 %v3542
    %v3544 = vpop.xlane.xlu0 %3543
    %v3545 = vsub.f32 %v3533, %v3541
    %v3546 = vsub.f32 %v3536, %v3544
    %v3547 = vmul.f32 %v3545, 1.442695
    %v3548 = vpow.pop %v3547
    %v3549 = vmul.f32 %v3546, 1.442695
    %v3550 = vpow.pop %v3549
    %v3551 = vsel %vm549, %v3548, 0.0
    %3552 = vadd.xlane.f32.xlu0 %v3551
    %v3553 = vpop.xlane.xlu0 %3552
    %v3554 = vsel %vm549, %v3550, 0.0
    %3555 = vadd.xlane.f32.xlu0 %v3554
    %v3556 = vpop.xlane.xlu0 %3555
    %v3557 = vrcp.pop %v3553
    %v3558 = vrcp.pop %v3556
    %v3559 = vmul.f32 %v3548, %v3557
    %v3560 = vmul.f32 %v3550, %v3558
    %v3561 = vpack.c.bf16 %v3560, %v3559
    %v3562 = vsel %vm581, %v3487, 0
    %v3563 = vsel %vm581, %v3489, 0
    %v3565 = vsel %vm214, %v3562, 0
    %3567 = vmatprep.subr.bf16.mxu0 0
    %3568 = vmatpush1.bf16.xpose.msra.mxu0 %v3496
    %3569 = vmatprep.subr.bf16.mxu0 0
    %3570 = vmatpush1.bf16.xpose.msra.mxu0 0
    %3571 = vmatprep.subr.bf16.mxu0 0
    %3572 = vmatpush1.bf16.xpose.msra.mxu0 0
    %3573 = vmatprep.subr.bf16.mxu0 0
    %3574 = vmatpush1.bf16.xpose.msra.mxu0 0
    %3575 = vmatprep.subr.bf16.mxu0 0
    %3576 = vmatpush1.bf16.xpose.msra.mxu0 0
    %3577 = vmatprep.subr.bf16.mxu0 0
    %3578 = vmatpush1.bf16.xpose.msra.mxu0 0
    %3579 = vmatprep.subr.bf16.mxu0 0
    %3580 = vmatpush1.bf16.xpose.msra.mxu0 0
    %3581 = vmatprep.subr.bf16.mxu0 0
    %3582 = vmatpush1.bf16.xpose.msra.mxu0 0
    %3583 = vmatprep.subr.bf16.mxu0 0
    %3584 = vmatpush1.bf16.xpose.msra.mxu0 0
    %3585 = vmatprep.subr.bf16.mxu0 0
    %3586 = vmatpush1.bf16.xpose.msra.mxu0 0
    %3587 = vmatprep.subr.bf16.mxu0 0
    %3588 = vmatpush1.bf16.xpose.msra.mxu0 0
    %3589 = vmatprep.subr.bf16.mxu0 0
    %3590 = vmatpush1.bf16.xpose.msra.mxu0 0
    %3591 = vmatprep.subr.bf16.mxu0 0
    %3592 = vmatpush1.bf16.xpose.msra.mxu0 0
    %3593 = vmatprep.subr.bf16.mxu0 0
    %3594 = vmatpush1.bf16.xpose.msra.mxu0 0
    %3595 = vmatprep.subr.bf16.mxu0 0
    %3596 = vmatpush1.bf16.xpose.msra.mxu0 0
    %3597 = vmatprep.subr.bf16.mxu0 0
    %3598 = vmatpush1.bf16.xpose.msra.mxu0 0
    %3599 = vmatprep.mubr.bf16.mxu0 0
    %3600 = vmatmul.mubr.bf16.gmra.mrb[0].mxu0 %v3565
    %v3601 = vpop.f32.mrb[0].mxu0
    %v3602 = vadd.f32 %v1715, %v3601
    %v3603 = vpop.f32.mrb[0].mxu0
    %v3604 = vpop.f32.mrb[0].mxu0
    %v3605 = vadd.f32 %v1716, %v3604
    %v3606 = vpop.f32.mrb[0].mxu0
    %3607 = vdwg.mxu0
    %v3608 = vsel %vm549, %v3602, -inf
    %3609 = vmax.xlane.f32.xlu0 %v3608
    %v3610 = vpop.xlane.xlu0 %3609
    %v3611 = vsel %vm549, %v3605, -inf
    %3612 = vmax.xlane.f32.xlu0 %v3611
    %v3613 = vpop.xlane.xlu0 %3612
    %v3614 = vsub.f32 %v3602, %v3610
    %v3615 = vsub.f32 %v3605, %v3613
    %v3616 = vmul.f32 %v3614, 1.442695
    %v3617 = vpow.pop %v3616
    %v3618 = vmul.f32 %v3615, 1.442695
    %v3619 = vpow.pop %v3618
    %v3620 = vsel %vm549, %v3617, 0.0
    %3621 = vadd.xlane.f32.xlu0 %v3620
    %v3622 = vpop.xlane.xlu0 %3621
    %v3623 = vsel %vm549, %v3619, 0.0
    %3624 = vadd.xlane.f32.xlu0 %v3623
    %v3625 = vpop.xlane.xlu0 %3624
    %v3626 = vrcp.pop %v3622
    %v3627 = vrcp.pop %v3625
    %v3628 = vmul.f32 %v3617, %v3626
    %v3629 = vmul.f32 %v3619, %v3627
    %v3630 = vpack.c.bf16 %v3629, %v3628
    %v3632 = vsel %vm549, %v3630, 0
    %3634 = vmatprep.subr.bf16.mxu0 0
    %3635 = vmatpush1.bf16.msra.mxu0 %v3563
    %3636 = vmatprep.subr.bf16.mxu0 0
    %3637 = vmatpush1.bf16.msra.mxu0 0
    %3638 = vmatprep.subr.bf16.mxu0 0
    %3639 = vmatpush1.bf16.msra.mxu0 0
    %3640 = vmatprep.subr.bf16.mxu0 0
    %3641 = vmatpush1.bf16.msra.mxu0 0
    %3642 = vmatprep.subr.bf16.mxu0 0
    %3643 = vmatpush1.bf16.msra.mxu0 0
    %3644 = vmatprep.subr.bf16.mxu0 0
    %3645 = vmatpush1.bf16.msra.mxu0 0
    %3646 = vmatprep.subr.bf16.mxu0 0
    %3647 = vmatpush1.bf16.msra.mxu0 0
    %3648 = vmatprep.subr.bf16.mxu0 0
    %3649 = vmatpush1.bf16.msra.mxu0 0
    %3650 = vmatprep.subr.bf16.mxu0 0
    %3651 = vmatpush1.bf16.msra.mxu0 0
    %3652 = vmatprep.subr.bf16.mxu0 0
    %3653 = vmatpush1.bf16.msra.mxu0 0
    %3654 = vmatprep.subr.bf16.mxu0 0
    %3655 = vmatpush1.bf16.msra.mxu0 0
    %3656 = vmatprep.subr.bf16.mxu0 0
    %3657 = vmatpush1.bf16.msra.mxu0 0
    %3658 = vmatprep.subr.bf16.mxu0 0
    %3659 = vmatpush1.bf16.msra.mxu0 0
    %3660 = vmatprep.subr.bf16.mxu0 0
    %3661 = vmatpush1.bf16.msra.mxu0 0
    %3662 = vmatprep.subr.bf16.mxu0 0
    %3663 = vmatpush1.bf16.msra.mxu0 0
    %3664 = vmatprep.subr.bf16.mxu0 0
    %3665 = vmatpush1.bf16.msra.mxu0 0
    %3666 = vmatprep.mubr.bf16.mxu0 0
    %3667 = vmatmul.mubr.bf16.gmra.mrb[0].mxu0 %v3632
    %v3668 = vpop.f32.mrb[0].mxu0
    %v3669 = vadd.f32 0.0, %v3668
    %v3670 = vpop.f32.mrb[0].mxu0
    %v3671 = vpop.f32.mrb[0].mxu0
    %v3672 = vadd.f32 0.0, %v3671
    %v3673 = vpop.f32.mrb[0].mxu0
    %3674 = vdwg.mxu0
    %v3676 = vsel %vm549, %v3561, 0
    %3678 = vmatprep.subr.bf16.mxu0 0
    %3679 = vmatpush1.bf16.msra.mxu0 %v3491
    %3680 = vmatprep.subr.bf16.mxu0 0
    %3681 = vmatpush1.bf16.msra.mxu0 0
    %3682 = vmatprep.subr.bf16.mxu0 0
    %3683 = vmatpush1.bf16.msra.mxu0 0
    %3684 = vmatprep.subr.bf16.mxu0 0
    %3685 = vmatpush1.bf16.msra.mxu0 0
    %3686 = vmatprep.subr.bf16.mxu0 0
    %3687 = vmatpush1.bf16.msra.mxu0 0
    %3688 = vmatprep.subr.bf16.mxu0 0
    %3689 = vmatpush1.bf16.msra.mxu0 0
    %3690 = vmatprep.subr.bf16.mxu0 0
    %3691 = vmatpush1.bf16.msra.mxu0 0
    %3692 = vmatprep.subr.bf16.mxu0 0
    %3693 = vmatpush1.bf16.msra.mxu0 0
    %3694 = vmatprep.subr.bf16.mxu0 0
    %3695 = vmatpush1.bf16.msra.mxu0 0
    %3696 = vmatprep.subr.bf16.mxu0 0
    %3697 = vmatpush1.bf16.msra.mxu0 0
    %3698 = vmatprep.subr.bf16.mxu0 0
    %3699 = vmatpush1.bf16.msra.mxu0 0
    %3700 = vmatprep.subr.bf16.mxu0 0
    %3701 = vmatpush1.bf16.msra.mxu0 0
    %3702 = vmatprep.subr.bf16.mxu0 0
    %3703 = vmatpush1.bf16.msra.mxu0 0
    %3704 = vmatprep.subr.bf16.mxu0 0
    %3705 = vmatpush1.bf16.msra.mxu0 0
    %3706 = vmatprep.subr.bf16.mxu0 0
    %3707 = vmatpush1.bf16.msra.mxu0 0
    %3708 = vmatprep.subr.bf16.mxu0 0
    %3709 = vmatpush1.bf16.msra.mxu0 0
    %3710 = vmatprep.mubr.bf16.mxu0 0
    %3711 = vmatmul.mubr.bf16.gmra.mrb[0].mxu0 %v3676
    %v3712 = vpop.f32.mrb[0].mxu0
    %v3713 = vadd.f32 %v3669, %v3712
    %v3714 = vpop.f32.mrb[0].mxu0
    %v3715 = vpop.f32.mrb[0].mxu0
    %v3716 = vadd.f32 %v3672, %v3715
    %v3717 = vpop.f32.mrb[0].mxu0
    %3718 = vdwg.mxu0
    %v3719 = vsel %vm747, %v3487, 0
    %v3720 = vsel %vm747, %v3489, 0
    %v3722 = vsel %vm214, %v3719, 0
    %3724 = vmatprep.subr.bf16.mxu0 0
    %3725 = vmatpush1.bf16.xpose.msra.mxu0 %v3496
    %3726 = vmatprep.subr.bf16.mxu0 0
    %3727 = vmatpush1.bf16.xpose.msra.mxu0 0
    %3728 = vmatprep.subr.bf16.mxu0 0
    %3729 = vmatpush1.bf16.xpose.msra.mxu0 0
    %3730 = vmatprep.subr.bf16.mxu0 0
    %3731 = vmatpush1.bf16.xpose.msra.mxu0 0
    %3732 = vmatprep.subr.bf16.mxu0 0
    %3733 = vmatpush1.bf16.xpose.msra.mxu0 0
    %3734 = vmatprep.subr.bf16.mxu0 0
    %3735 = vmatpush1.bf16.xpose.msra.mxu0 0
    %3736 = vmatprep.subr.bf16.mxu0 0
    %3737 = vmatpush1.bf16.xpose.msra.mxu0 0
    %3738 = vmatprep.subr.bf16.mxu0 0
    %3739 = vmatpush1.bf16.xpose.msra.mxu0 0
    %3740 = vmatprep.subr.bf16.mxu0 0
    %3741 = vmatpush1.bf16.xpose.msra.mxu0 0
    %3742 = vmatprep.subr.bf16.mxu0 0
    %3743 = vmatpush1.bf16.xpose.msra.mxu0 0
    %3744 = vmatprep.subr.bf16.mxu0 0
    %3745 = vmatpush1.bf16.xpose.msra.mxu0 0
    %3746 = vmatprep.subr.bf16.mxu0 0
    %3747 = vmatpush1.bf16.xpose.msra.mxu0 0
    %3748 = vmatprep.subr.bf16.mxu0 0
    %3749 = vmatpush1.bf16.xpose.msra.mxu0 0
    %3750 = vmatprep.subr.bf16.mxu0 0
    %3751 = vmatpush1.bf16.xpose.msra.mxu0 0
    %3752 = vmatprep.subr.bf16.mxu0 0
    %3753 = vmatpush1.bf16.xpose.msra.mxu0 0
    %3754 = vmatprep.subr.bf16.mxu0 0
    %3755 = vmatpush1.bf16.xpose.msra.mxu0 0
    %3756 = vmatprep.mubr.bf16.mxu0 0
    %3757 = vmatmul.mubr.bf16.gmra.mrb[0].mxu0 %v3722
    %v3758 = vpop.f32.mrb[0].mxu0
    %v3759 = vadd.f32 %v1715, %v3758
    %v3760 = vpop.f32.mrb[0].mxu0
    %v3761 = vpop.f32.mrb[0].mxu0
    %v3762 = vadd.f32 %v1716, %v3761
    %v3763 = vpop.f32.mrb[0].mxu0
    %3764 = vdwg.mxu0
    %v3765 = vsel %vm549, %v3759, -inf
    %3766 = vmax.xlane.f32.xlu0 %v3765
    %v3767 = vpop.xlane.xlu0 %3766
    %v3768 = vsel %vm549, %v3762, -inf
    %3769 = vmax.xlane.f32.xlu0 %v3768
    %v3770 = vpop.xlane.xlu0 %3769
    %v3771 = vsub.f32 %v3759, %v3767
    %v3772 = vsub.f32 %v3762, %v3770
    %v3773 = vmul.f32 %v3771, 1.442695
    %v3774 = vpow.pop %v3773
    %v3775 = vmul.f32 %v3772, 1.442695
    %v3776 = vpow.pop %v3775
    %v3777 = vsel %vm549, %v3774, 0.0
    %3778 = vadd.xlane.f32.xlu0 %v3777
    %v3779 = vpop.xlane.xlu0 %3778
    %v3780 = vsel %vm549, %v3776, 0.0
    %3781 = vadd.xlane.f32.xlu0 %v3780
    %v3782 = vpop.xlane.xlu0 %3781
    %v3783 = vrcp.pop %v3779
    %v3784 = vrcp.pop %v3782
    %v3785 = vmul.f32 %v3774, %v3783
    %v3786 = vmul.f32 %v3776, %v3784
    %v3787 = vpack.c.bf16 %v3786, %v3785
    %v3789 = vsel %vm549, %v3787, 0
    %3791 = vmatprep.subr.bf16.mxu0 0
    %3792 = vmatpush1.bf16.msra.mxu0 %v3720
    %3793 = vmatprep.subr.bf16.mxu0 0
    %3794 = vmatpush1.bf16.msra.mxu0 0
    %3795 = vmatprep.subr.bf16.mxu0 0
    %3796 = vmatpush1.bf16.msra.mxu0 0
    %3797 = vmatprep.subr.bf16.mxu0 0
    %3798 = vmatpush1.bf16.msra.mxu0 0
    %3799 = vmatprep.subr.bf16.mxu0 0
    %3800 = vmatpush1.bf16.msra.mxu0 0
    %3801 = vmatprep.subr.bf16.mxu0 0
    %3802 = vmatpush1.bf16.msra.mxu0 0
    %3803 = vmatprep.subr.bf16.mxu0 0
    %3804 = vmatpush1.bf16.msra.mxu0 0
    %3805 = vmatprep.subr.bf16.mxu0 0
    %3806 = vmatpush1.bf16.msra.mxu0 0
    %3807 = vmatprep.subr.bf16.mxu0 0
    %3808 = vmatpush1.bf16.msra.mxu0 0
    %3809 = vmatprep.subr.bf16.mxu0 0
    %3810 = vmatpush1.bf16.msra.mxu0 0
    %3811 = vmatprep.subr.bf16.mxu0 0
    %3812 = vmatpush1.bf16.msra.mxu0 0
    %3813 = vmatprep.subr.bf16.mxu0 0
    %3814 = vmatpush1.bf16.msra.mxu0 0
    %3815 = vmatprep.subr.bf16.mxu0 0
    %3816 = vmatpush1.bf16.msra.mxu0 0
    %3817 = vmatprep.subr.bf16.mxu0 0
    %3818 = vmatpush1.bf16.msra.mxu0 0
    %3819 = vmatprep.subr.bf16.mxu0 0
    %3820 = vmatpush1.bf16.msra.mxu0 0
    %3821 = vmatprep.subr.bf16.mxu0 0
    %3822 = vmatpush1.bf16.msra.mxu0 0
    %3823 = vmatprep.mubr.bf16.mxu0 0
    %3824 = vmatmul.mubr.bf16.gmra.mrb[0].mxu0 %v3789
    %v3825 = vpop.f32.mrb[0].mxu0
    %v3826 = vadd.f32 0.0, %v3825
    %v3827 = vpop.f32.mrb[0].mxu0
    %v3828 = vpop.f32.mrb[0].mxu0
    %v3829 = vadd.f32 0.0, %v3828
    %v3830 = vpop.f32.mrb[0].mxu0
    %3831 = vdwg.mxu0
    %v3832 = vadd.f32 %v3713, %v3826
    %v3833 = vadd.f32 %v3716, %v3829
    %v3834 = vsel %vm871, %v3487, 0
    %v3835 = vsel %vm871, %v3489, 0
    %v3837 = vsel %vm214, %v3834, 0
    %3839 = vmatprep.subr.bf16.mxu0 0
    %3840 = vmatpush1.bf16.xpose.msra.mxu0 %v3496
    %3841 = vmatprep.subr.bf16.mxu0 0
    %3842 = vmatpush1.bf16.xpose.msra.mxu0 0
    %3843 = vmatprep.subr.bf16.mxu0 0
    %3844 = vmatpush1.bf16.xpose.msra.mxu0 0
    %3845 = vmatprep.subr.bf16.mxu0 0
    %3846 = vmatpush1.bf16.xpose.msra.mxu0 0
    %3847 = vmatprep.subr.bf16.mxu0 0
    %3848 = vmatpush1.bf16.xpose.msra.mxu0 0
    %3849 = vmatprep.subr.bf16.mxu0 0
    %3850 = vmatpush1.bf16.xpose.msra.mxu0 0
    %3851 = vmatprep.subr.bf16.mxu0 0
    %3852 = vmatpush1.bf16.xpose.msra.mxu0 0
    %3853 = vmatprep.subr.bf16.mxu0 0
    %3854 = vmatpush1.bf16.xpose.msra.mxu0 0
    %3855 = vmatprep.subr.bf16.mxu0 0
    %3856 = vmatpush1.bf16.xpose.msra.mxu0 0
    %3857 = vmatprep.subr.bf16.mxu0 0
    %3858 = vmatpush1.bf16.xpose.msra.mxu0 0
    %3859 = vmatprep.subr.bf16.mxu0 0
    %3860 = vmatpush1.bf16.xpose.msra.mxu0 0
    %3861 = vmatprep.subr.bf16.mxu0 0
    %3862 = vmatpush1.bf16.xpose.msra.mxu0 0
    %3863 = vmatprep.subr.bf16.mxu0 0
    %3864 = vmatpush1.bf16.xpose.msra.mxu0 0
    %3865 = vmatprep.subr.bf16.mxu0 0
    %3866 = vmatpush1.bf16.xpose.msra.mxu0 0
    %3867 = vmatprep.subr.bf16.mxu0 0
    %3868 = vmatpush1.bf16.xpose.msra.mxu0 0
    %3869 = vmatprep.subr.bf16.mxu0 0
    %3870 = vmatpush1.bf16.xpose.msra.mxu0 0
    %3871 = vmatprep.mubr.bf16.mxu0 0
    %3872 = vmatmul.mubr.bf16.gmra.mrb[0].mxu0 %v3837
    %v3873 = vpop.f32.mrb[0].mxu0
    %v3874 = vadd.f32 %v1715, %v3873
    %v3875 = vpop.f32.mrb[0].mxu0
    %v3876 = vpop.f32.mrb[0].mxu0
    %v3877 = vadd.f32 %v1716, %v3876
    %v3878 = vpop.f32.mrb[0].mxu0
    %3879 = vdwg.mxu0
    %v3880 = vsel %vm549, %v3874, -inf
    %3881 = vmax.xlane.f32.xlu0 %v3880
    %v3882 = vpop.xlane.xlu0 %3881
    %v3883 = vsel %vm549, %v3877, -inf
    %3884 = vmax.xlane.f32.xlu0 %v3883
    %v3885 = vpop.xlane.xlu0 %3884
    %v3886 = vsub.f32 %v3874, %v3882
    %v3887 = vsub.f32 %v3877, %v3885
    %v3888 = vmul.f32 %v3886, 1.442695
    %v3889 = vpow.pop %v3888
    %v3890 = vmul.f32 %v3887, 1.442695
    %v3891 = vpow.pop %v3890
    %v3892 = vsel %vm549, %v3889, 0.0
    %3893 = vadd.xlane.f32.xlu0 %v3892
    %v3894 = vpop.xlane.xlu0 %3893
    %v3895 = vsel %vm549, %v3891, 0.0
    %3896 = vadd.xlane.f32.xlu0 %v3895
    %v3897 = vpop.xlane.xlu0 %3896
    %v3898 = vrcp.pop %v3894
    %v3899 = vrcp.pop %v3897
    %v3900 = vmul.f32 %v3889, %v3898
    %v3901 = vmul.f32 %v3891, %v3899
    %v3902 = vpack.c.bf16 %v3901, %v3900
    %v3904 = vsel %vm549, %v3902, 0
    %3906 = vmatprep.subr.bf16.mxu0 0
    %3907 = vmatpush1.bf16.msra.mxu0 %v3835
    %3908 = vmatprep.subr.bf16.mxu0 0
    %3909 = vmatpush1.bf16.msra.mxu0 0
    %3910 = vmatprep.subr.bf16.mxu0 0
    %3911 = vmatpush1.bf16.msra.mxu0 0
    %3912 = vmatprep.subr.bf16.mxu0 0
    %3913 = vmatpush1.bf16.msra.mxu0 0
    %3914 = vmatprep.subr.bf16.mxu0 0
    %3915 = vmatpush1.bf16.msra.mxu0 0
    %3916 = vmatprep.subr.bf16.mxu0 0
    %3917 = vmatpush1.bf16.msra.mxu0 0
    %3918 = vmatprep.subr.bf16.mxu0 0
    %3919 = vmatpush1.bf16.msra.mxu0 0
    %3920 = vmatprep.subr.bf16.mxu0 0
    %3921 = vmatpush1.bf16.msra.mxu0 0
    %3922 = vmatprep.subr.bf16.mxu0 0
    %3923 = vmatpush1.bf16.msra.mxu0 0
    %3924 = vmatprep.subr.bf16.mxu0 0
    %3925 = vmatpush1.bf16.msra.mxu0 0
    %3926 = vmatprep.subr.bf16.mxu0 0
    %3927 = vmatpush1.bf16.msra.mxu0 0
    %3928 = vmatprep.subr.bf16.mxu0 0
    %3929 = vmatpush1.bf16.msra.mxu0 0
    %3930 = vmatprep.subr.bf16.mxu0 0
    %3931 = vmatpush1.bf16.msra.mxu0 0
    %3932 = vmatprep.subr.bf16.mxu0 0
    %3933 = vmatpush1.bf16.msra.mxu0 0
    %3934 = vmatprep.subr.bf16.mxu0 0
    %3935 = vmatpush1.bf16.msra.mxu0 0
    %3936 = vmatprep.subr.bf16.mxu0 0
    %3937 = vmatpush1.bf16.msra.mxu0 0
    %3938 = vmatprep.mubr.bf16.mxu0 0
    %3939 = vmatmul.mubr.bf16.gmra.mrb[0].mxu0 %v3904
    %v3940 = vpop.f32.mrb[0].mxu0
    %v3941 = vadd.f32 0.0, %v3940
    %v3942 = vpop.f32.mrb[0].mxu0
    %v3943 = vpop.f32.mrb[0].mxu0
    %v3944 = vadd.f32 0.0, %v3943
    %v3945 = vpop.f32.mrb[0].mxu0
    %3946 = vdwg.mxu0
    %v3947 = vadd.f32 %v3832, %v3941
    %v3948 = vadd.f32 %v3833, %v3944
    %s3949 = scalar_lea.vmem %s7, 240
    %v3950 = vld [vmem:[%s3949] sm:$0xf]
    %v3951 = vld [vmem:[%s3949 + $0x4] sm:$0xf]
    %v3952 = vld [vmem:[%s3949 + $0x8] sm:$0xf]
    %v3953 = vld [vmem:[%s3949 + $0xc] sm:$0xf]
    %v3954 = vld [vmem:[%s10 + $0x44] sm:$0x1]
    %v3955 = vpack.c.bf16 %v3948, %v3947
    %v3956 = vlaneseq
    %v3957 = vshrl.u32 %v3956, 7
    %v3958 = vsub.s32 0, %v3957
    %v3959 = vrot.slane %v3954, %v3958
    %v3964 = vunpack.c.l.b16 %v3950
    %v3965 = vunpack.c.l.b16 %v3951
    %v3966 = vunpack.c.l.b16 %v3952
    %v3967 = vunpack.c.l.b16 %v3953
    %v3968 = vpack.c.b16 %v3965, %v3964
    %v3969 = vpack.c.b16 %v3967, %v3966
    %v3973 = vsel %vm214, %v3955, 0
    %3975 = vmatprep.subr.bf16.mxu0 0
    %3976 = vmatpush1.bf16.msra.mxu0 %v3968
    %3977 = vmatprep.subr.bf16.mxu0 0
    %3978 = vmatpush1.bf16.msra.mxu0 %v3969
    %3979 = vmatprep.subr.bf16.mxu0 0
    %3980 = vmatpush1.bf16.msra.mxu0 0
    %3981 = vmatprep.subr.bf16.mxu0 0
    %3982 = vmatpush1.bf16.msra.mxu0 0
    %3983 = vmatprep.subr.bf16.mxu0 0
    %3984 = vmatpush1.bf16.msra.mxu0 0
    %3985 = vmatprep.subr.bf16.mxu0 0
    %3986 = vmatpush1.bf16.msra.mxu0 0
    %3987 = vmatprep.subr.bf16.mxu0 0
    %3988 = vmatpush1.bf16.msra.mxu0 0
    %3989 = vmatprep.subr.bf16.mxu0 0
    %3990 = vmatpush1.bf16.msra.mxu0 0
    %3991 = vmatprep.subr.bf16.mxu0 0
    %3992 = vmatpush1.bf16.msra.mxu0 0
    %3993 = vmatprep.subr.bf16.mxu0 0
    %3994 = vmatpush1.bf16.msra.mxu0 0
    %3995 = vmatprep.subr.bf16.mxu0 0
    %3996 = vmatpush1.bf16.msra.mxu0 0
    %3997 = vmatprep.subr.bf16.mxu0 0
    %3998 = vmatpush1.bf16.msra.mxu0 0
    %3999 = vmatprep.subr.bf16.mxu0 0
    %4000 = vmatpush1.bf16.msra.mxu0 0
    %4001 = vmatprep.subr.bf16.mxu0 0
    %4002 = vmatpush1.bf16.msra.mxu0 0
    %4003 = vmatprep.subr.bf16.mxu0 0
    %4004 = vmatpush1.bf16.msra.mxu0 0
    %4005 = vmatprep.subr.bf16.mxu0 0
    %4006 = vmatpush1.bf16.msra.mxu0 0
    %4007 = vmatprep.mubr.bf16.mxu0 0
    %4008 = vmatmul.mubr.bf16.gmra.mrb[0].mxu0 %v3973
    %v4009 = vpop.f32.mrb[0].mxu0
    %v4010 = vadd.f32 %v3959, %v4009
    %v4011 = vpop.f32.mrb[0].mxu0
    %v4012 = vpop.f32.mrb[0].mxu0
    %v4013 = vadd.f32 %v3959, %v4012
    %v4014 = vpop.f32.mrb[0].mxu0
    %4015 = vdwg.mxu0
    %v4016 = vadd.f32 %v3252, %v4010
    %v4017 = vadd.f32 %v3253, %v4013
    %v4018 = vld [vmem:[%s10 + $0x45] sm:$0x1]
    %v4019 = vld [vmem:[%s10 + $0x46] sm:$0x1]
    %v4020 = vsel %vm214, %v4016, 0.0
    %4021 = vadd.xlane.f32.xlu0 %v4020
    %v4022 = vpop.xlane.xlu0 %4021
    %v4023 = vsel %vm214, %v4017, 0.0
    %4024 = vadd.xlane.f32.xlu0 %v4023
    %v4025 = vpop.xlane.xlu0 %4024
    %v4026 = vmul.f32 %v4022, %v221
    %v4027 = vmul.f32 %v4025, %v221
    %v4028 = vsub.f32 %v4016, %v4026
    %v4029 = vsub.f32 %v4017, %v4027
    %v4030 = vmul.f32 %v4028, %v4028
    %v4031 = vmul.f32 %v4029, %v4029
    %v4032 = vsel %vm214, %v4030, 0.0
    %4033 = vadd.xlane.f32.xlu0 %v4032
    %v4034 = vpop.xlane.xlu0 %4033
    %v4035 = vsel %vm214, %v4031, 0.0
    %4036 = vadd.xlane.f32.xlu0 %v4035
    %v4037 = vpop.xlane.xlu0 %4036
    %v4038 = vmul.f32 %v4034, %v221
    %v4039 = vmul.f32 %v4037, %v221
    %v4040 = vadd.f32 %v4038, 1e-05
    %v4041 = vadd.f32 %v4039, 1e-05
    %v4042 = vrsqrt.pop %v4040
    %v4043 = vrsqrt.pop %v4041
    %v4044 = vmul.f32 %v4028, %v4042
    %v4045 = vmul.f32 %v4029, %v4043
    %v4046 = vlaneseq
    %v4047 = vshrl.u32 %v4046, 7
    %v4048 = vsub.s32 0, %v4047
    %v4049 = vrot.slane %v4018, %v4048
    %v4050 = vmul.f32 %v4044, %v4049
    %v4051 = vmul.f32 %v4045, %v4049
    %v4052 = vlaneseq
    %v4053 = vshrl.u32 %v4052, 7
    %v4054 = vsub.s32 0, %v4053
    %v4055 = vrot.slane %v4019, %v4054
    %v4056 = vadd.f32 %v4050, %v4055
    %v4057 = vadd.f32 %v4051, %v4055
    %s4058 = scalar_lea.vmem %s7, 256
    %v4059 = vld [vmem:[%s4058] sm:$0xf]
    %v4060 = vld [vmem:[%s4058 + $0x4] sm:$0xf]
    %v4061 = vld [vmem:[%s4058 + $0x8] sm:$0xf]
    %v4062 = vld [vmem:[%s4058 + $0xc] sm:$0xf]
    %v4063 = vld [vmem:[%s10 + $0x47] sm:$0x1]
    %v4064 = vpack.c.bf16 %v4057, %v4056
    %v4065 = vlaneseq
    %v4066 = vshrl.u32 %v4065, 7
    %v4067 = vsub.s32 0, %v4066
    %v4068 = vrot.slane %v4063, %v4067
    %v4073 = vunpack.c.l.b16 %v4059
    %v4074 = vunpack.c.l.b16 %v4060
    %v4075 = vunpack.c.l.b16 %v4061
    %v4076 = vunpack.c.l.b16 %v4062
    %v4077 = vpack.c.b16 %v4074, %v4073
    %v4078 = vpack.c.b16 %v4076, %v4075
    %v4082 = vsel %vm214, %v4064, 0
    %4084 = vmatprep.subr.bf16.mxu0 0
    %4085 = vmatpush1.bf16.msra.mxu0 %v4077
    %4086 = vmatprep.subr.bf16.mxu0 0
    %4087 = vmatpush1.bf16.msra.mxu0 %v4078
    %4088 = vmatprep.subr.bf16.mxu0 0
    %4089 = vmatpush1.bf16.msra.mxu0 0
    %4090 = vmatprep.subr.bf16.mxu0 0
    %4091 = vmatpush1.bf16.msra.mxu0 0
    %4092 = vmatprep.subr.bf16.mxu0 0
    %4093 = vmatpush1.bf16.msra.mxu0 0
    %4094 = vmatprep.subr.bf16.mxu0 0
    %4095 = vmatpush1.bf16.msra.mxu0 0
    %4096 = vmatprep.subr.bf16.mxu0 0
    %4097 = vmatpush1.bf16.msra.mxu0 0
    %4098 = vmatprep.subr.bf16.mxu0 0
    %4099 = vmatpush1.bf16.msra.mxu0 0
    %4100 = vmatprep.subr.bf16.mxu0 0
    %4101 = vmatpush1.bf16.msra.mxu0 0
    %4102 = vmatprep.subr.bf16.mxu0 0
    %4103 = vmatpush1.bf16.msra.mxu0 0
    %4104 = vmatprep.subr.bf16.mxu0 0
    %4105 = vmatpush1.bf16.msra.mxu0 0
    %4106 = vmatprep.subr.bf16.mxu0 0
    %4107 = vmatpush1.bf16.msra.mxu0 0
    %4108 = vmatprep.subr.bf16.mxu0 0
    %4109 = vmatpush1.bf16.msra.mxu0 0
    %4110 = vmatprep.subr.bf16.mxu0 0
    %4111 = vmatpush1.bf16.msra.mxu0 0
    %4112 = vmatprep.subr.bf16.mxu0 0
    %4113 = vmatpush1.bf16.msra.mxu0 0
    %4114 = vmatprep.subr.bf16.mxu0 0
    %4115 = vmatpush1.bf16.msra.mxu0 0
    %4116 = vmatprep.mubr.bf16.mxu0 0
    %4117 = vmatmul.mubr.bf16.gmra.mrb[0].mxu0 %v4082
    %v4118 = vpop.f32.mrb[0].mxu0
    %v4119 = vadd.f32 %v4068, %v4118
    %v4120 = vpop.f32.mrb[0].mxu0
    %v4121 = vpop.f32.mrb[0].mxu0
    %v4122 = vadd.f32 %v4068, %v4121
    %v4123 = vpop.f32.mrb[0].mxu0
    %4124 = vdwg.mxu0
    %s4125 = scalar_lea.vmem %s7, 272
    %v4126 = vld [vmem:[%s4125] sm:$0xf]
    %v4127 = vld [vmem:[%s4125 + $0x4] sm:$0xf]
    %v4128 = vld [vmem:[%s4125 + $0x8] sm:$0xf]
    %v4129 = vld [vmem:[%s4125 + $0xc] sm:$0xf]
    %v4130 = vld [vmem:[%s10 + $0x48] sm:$0x1]
    %v4131 = vlaneseq
    %v4132 = vshrl.u32 %v4131, 7
    %v4133 = vsub.s32 0, %v4132
    %v4134 = vrot.slane %v4130, %v4133
    %v4139 = vunpack.c.l.b16 %v4126
    %v4140 = vunpack.c.l.b16 %v4127
    %v4141 = vunpack.c.l.b16 %v4128
    %v4142 = vunpack.c.l.b16 %v4129
    %v4143 = vpack.c.b16 %v4140, %v4139
    %v4144 = vpack.c.b16 %v4142, %v4141
    %4147 = vmatprep.subr.bf16.mxu0 0
    %4148 = vmatpush1.bf16.msra.mxu0 %v4143
    %4149 = vmatprep.subr.bf16.mxu0 0
    %4150 = vmatpush1.bf16.msra.mxu0 %v4144
    %4151 = vmatprep.subr.bf16.mxu0 0
    %4152 = vmatpush1.bf16.msra.mxu0 0
    %4153 = vmatprep.subr.bf16.mxu0 0
    %4154 = vmatpush1.bf16.msra.mxu0 0
    %4155 = vmatprep.subr.bf16.mxu0 0
    %4156 = vmatpush1.bf16.msra.mxu0 0
    %4157 = vmatprep.subr.bf16.mxu0 0
    %4158 = vmatpush1.bf16.msra.mxu0 0
    %4159 = vmatprep.subr.bf16.mxu0 0
    %4160 = vmatpush1.bf16.msra.mxu0 0
    %4161 = vmatprep.subr.bf16.mxu0 0
    %4162 = vmatpush1.bf16.msra.mxu0 0
    %4163 = vmatprep.subr.bf16.mxu0 0
    %4164 = vmatpush1.bf16.msra.mxu0 0
    %4165 = vmatprep.subr.bf16.mxu0 0
    %4166 = vmatpush1.bf16.msra.mxu0 0
    %4167 = vmatprep.subr.bf16.mxu0 0
    %4168 = vmatpush1.bf16.msra.mxu0 0
    %4169 = vmatprep.subr.bf16.mxu0 0
    %4170 = vmatpush1.bf16.msra.mxu0 0
    %4171 = vmatprep.subr.bf16.mxu0 0
    %4172 = vmatpush1.bf16.msra.mxu0 0
    %4173 = vmatprep.subr.bf16.mxu0 0
    %4174 = vmatpush1.bf16.msra.mxu0 0
    %4175 = vmatprep.subr.bf16.mxu0 0
    %4176 = vmatpush1.bf16.msra.mxu0 0
    %4177 = vmatprep.subr.bf16.mxu0 0
    %4178 = vmatpush1.bf16.msra.mxu0 0
    %4179 = vmatprep.mubr.bf16.mxu0 0
    %4180 = vmatmul.mubr.bf16.gmra.mrb[0].mxu0 %v2376
    %v4181 = vpop.f32.mrb[0].mxu0
    %v4182 = vadd.f32 %v4134, %v4181
    %v4183 = vpop.f32.mrb[0].mxu0
    %v4184 = vpop.f32.mrb[0].mxu0
    %v4185 = vadd.f32 %v4134, %v4184
    %v4186 = vpop.f32.mrb[0].mxu0
    %4187 = vdwg.mxu0
    %s4188 = scalar_lea.vmem %s7, 288
    %v4189 = vld [vmem:[%s4188] sm:$0xf]
    %v4190 = vld [vmem:[%s4188 + $0x4] sm:$0xf]
    %v4191 = vld [vmem:[%s4188 + $0x8] sm:$0xf]
    %v4192 = vld [vmem:[%s4188 + $0xc] sm:$0xf]
    %v4193 = vld [vmem:[%s10 + $0x49] sm:$0x1]
    %v4194 = vlaneseq
    %v4195 = vshrl.u32 %v4194, 7
    %v4196 = vsub.s32 0, %v4195
    %v4197 = vrot.slane %v4193, %v4196
    %v4202 = vunpack.c.l.b16 %v4189
    %v4203 = vunpack.c.l.b16 %v4190
    %v4204 = vunpack.c.l.b16 %v4191
    %v4205 = vunpack.c.l.b16 %v4192
    %v4206 = vpack.c.b16 %v4203, %v4202
    %v4207 = vpack.c.b16 %v4205, %v4204
    %4210 = vmatprep.subr.bf16.mxu0 0
    %4211 = vmatpush1.bf16.msra.mxu0 %v4206
    %4212 = vmatprep.subr.bf16.mxu0 0
    %4213 = vmatpush1.bf16.msra.mxu0 %v4207
    %4214 = vmatprep.subr.bf16.mxu0 0
    %4215 = vmatpush1.bf16.msra.mxu0 0
    %4216 = vmatprep.subr.bf16.mxu0 0
    %4217 = vmatpush1.bf16.msra.mxu0 0
    %4218 = vmatprep.subr.bf16.mxu0 0
    %4219 = vmatpush1.bf16.msra.mxu0 0
    %4220 = vmatprep.subr.bf16.mxu0 0
    %4221 = vmatpush1.bf16.msra.mxu0 0
    %4222 = vmatprep.subr.bf16.mxu0 0
    %4223 = vmatpush1.bf16.msra.mxu0 0
    %4224 = vmatprep.subr.bf16.mxu0 0
    %4225 = vmatpush1.bf16.msra.mxu0 0
    %4226 = vmatprep.subr.bf16.mxu0 0
    %4227 = vmatpush1.bf16.msra.mxu0 0
    %4228 = vmatprep.subr.bf16.mxu0 0
    %4229 = vmatpush1.bf16.msra.mxu0 0
    %4230 = vmatprep.subr.bf16.mxu0 0
    %4231 = vmatpush1.bf16.msra.mxu0 0
    %4232 = vmatprep.subr.bf16.mxu0 0
    %4233 = vmatpush1.bf16.msra.mxu0 0
    %4234 = vmatprep.subr.bf16.mxu0 0
    %4235 = vmatpush1.bf16.msra.mxu0 0
    %4236 = vmatprep.subr.bf16.mxu0 0
    %4237 = vmatpush1.bf16.msra.mxu0 0
    %4238 = vmatprep.subr.bf16.mxu0 0
    %4239 = vmatpush1.bf16.msra.mxu0 0
    %4240 = vmatprep.subr.bf16.mxu0 0
    %4241 = vmatpush1.bf16.msra.mxu0 0
    %4242 = vmatprep.mubr.bf16.mxu0 0
    %4243 = vmatmul.mubr.bf16.gmra.mrb[0].mxu0 %v2376
    %v4244 = vpop.f32.mrb[0].mxu0
    %v4245 = vadd.f32 %v4197, %v4244
    %v4246 = vpop.f32.mrb[0].mxu0
    %v4247 = vpop.f32.mrb[0].mxu0
    %v4248 = vadd.f32 %v4197, %v4247
    %v4249 = vpop.f32.mrb[0].mxu0
    %4250 = vdwg.mxu0
    %v4251 = vpack.c.bf16 %v4122, %v4119
    %v4252 = vpack.c.bf16 %v4185, %v4182
    %v4253 = vpack.c.bf16 %v4248, %v4245
    %v4254 = vsel %vm499, %v4251, 0
    %v4255 = vsel %vm499, %v4253, 0
    %v4257 = vsel %vm214, %v4254, 0
    %v4260 = vsel %vm214, %v4252, 0
    %4262 = vmatprep.subr.bf16.mxu0 0
    %4263 = vmatpush1.bf16.xpose.msra.mxu0 %v4260
    %4264 = vmatprep.subr.bf16.mxu0 0
    %4265 = vmatpush1.bf16.xpose.msra.mxu0 0
    %4266 = vmatprep.subr.bf16.mxu0 0
    %4267 = vmatpush1.bf16.xpose.msra.mxu0 0
    %4268 = vmatprep.subr.bf16.mxu0 0
    %4269 = vmatpush1.bf16.xpose.msra.mxu0 0
    %4270 = vmatprep.subr.bf16.mxu0 0
    %4271 = vmatpush1.bf16.xpose.msra.mxu0 0
    %4272 = vmatprep.subr.bf16.mxu0 0
    %4273 = vmatpush1.bf16.xpose.msra.mxu0 0
    %4274 = vmatprep.subr.bf16.mxu0 0
    %4275 = vmatpush1.bf16.xpose.msra.mxu0 0
    %4276 = vmatprep.subr.bf16.mxu0 0
    %4277 = vmatpush1.bf16.xpose.msra.mxu0 0
    %4278 = vmatprep.subr.bf16.mxu0 0
    %4279 = vmatpush1.bf16.xpose.msra.mxu0 0
    %4280 = vmatprep.subr.bf16.mxu0 0
    %4281 = vmatpush1.bf16.xpose.msra.mxu0 0
    %4282 = vmatprep.subr.bf16.mxu0 0
    %4283 = vmatpush1.bf16.xpose.msra.mxu0 0
    %4284 = vmatprep.subr.bf16.mxu0 0
    %4285 = vmatpush1.bf16.xpose.msra.mxu0 0
    %4286 = vmatprep.subr.bf16.mxu0 0
    %4287 = vmatpush1.bf16.xpose.msra.mxu0 0
    %4288 = vmatprep.subr.bf16.mxu0 0
    %4289 = vmatpush1.bf16.xpose.msra.mxu0 0
    %4290 = vmatprep.subr.bf16.mxu0 0
    %4291 = vmatpush1.bf16.xpose.msra.mxu0 0
    %4292 = vmatprep.subr.bf16.mxu0 0
    %4293 = vmatpush1.bf16.xpose.msra.mxu0 0
    %4294 = vmatprep.mubr.bf16.mxu0 0
    %4295 = vmatmul.mubr.bf16.gmra.mrb[0].mxu0 %v4257
    %v4296 = vpop.f32.mrb[0].mxu0
    %v4297 = vadd.f32 %v2485, %v4296
    %v4298 = vpop.f32.mrb[0].mxu0
    %v4299 = vpop.f32.mrb[0].mxu0
    %v4300 = vadd.f32 %v2486, %v4299
    %v4301 = vpop.f32.mrb[0].mxu0
    %4302 = vdwg.mxu0
    %v4303 = vsel %vm549, %v4297, -inf
    %4304 = vmax.xlane.f32.xlu0 %v4303
    %v4305 = vpop.xlane.xlu0 %4304
    %v4306 = vsel %vm549, %v4300, -inf
    %4307 = vmax.xlane.f32.xlu0 %v4306
    %v4308 = vpop.xlane.xlu0 %4307
    %v4309 = vsub.f32 %v4297, %v4305
    %v4310 = vsub.f32 %v4300, %v4308
    %v4311 = vmul.f32 %v4309, 1.442695
    %v4312 = vpow.pop %v4311
    %v4313 = vmul.f32 %v4310, 1.442695
    %v4314 = vpow.pop %v4313
    %v4315 = vsel %vm549, %v4312, 0.0
    %4316 = vadd.xlane.f32.xlu0 %v4315
    %v4317 = vpop.xlane.xlu0 %4316
    %v4318 = vsel %vm549, %v4314, 0.0
    %4319 = vadd.xlane.f32.xlu0 %v4318
    %v4320 = vpop.xlane.xlu0 %4319
    %v4321 = vrcp.pop %v4317
    %v4322 = vrcp.pop %v4320
    %v4323 = vmul.f32 %v4312, %v4321
    %v4324 = vmul.f32 %v4314, %v4322
    %v4325 = vpack.c.bf16 %v4324, %v4323
    %v4326 = vsel %vm581, %v4251, 0
    %v4327 = vsel %vm581, %v4253, 0
    %v4329 = vsel %vm214, %v4326, 0
    %4331 = vmatprep.subr.bf16.mxu0 0
    %4332 = vmatpush1.bf16.xpose.msra.mxu0 %v4260
    %4333 = vmatprep.subr.bf16.mxu0 0
    %4334 = vmatpush1.bf16.xpose.msra.mxu0 0
    %4335 = vmatprep.subr.bf16.mxu0 0
    %4336 = vmatpush1.bf16.xpose.msra.mxu0 0
    %4337 = vmatprep.subr.bf16.mxu0 0
    %4338 = vmatpush1.bf16.xpose.msra.mxu0 0
    %4339 = vmatprep.subr.bf16.mxu0 0
    %4340 = vmatpush1.bf16.xpose.msra.mxu0 0
    %4341 = vmatprep.subr.bf16.mxu0 0
    %4342 = vmatpush1.bf16.xpose.msra.mxu0 0
    %4343 = vmatprep.subr.bf16.mxu0 0
    %4344 = vmatpush1.bf16.xpose.msra.mxu0 0
    %4345 = vmatprep.subr.bf16.mxu0 0
    %4346 = vmatpush1.bf16.xpose.msra.mxu0 0
    %4347 = vmatprep.subr.bf16.mxu0 0
    %4348 = vmatpush1.bf16.xpose.msra.mxu0 0
    %4349 = vmatprep.subr.bf16.mxu0 0
    %4350 = vmatpush1.bf16.xpose.msra.mxu0 0
    %4351 = vmatprep.subr.bf16.mxu0 0
    %4352 = vmatpush1.bf16.xpose.msra.mxu0 0
    %4353 = vmatprep.subr.bf16.mxu0 0
    %4354 = vmatpush1.bf16.xpose.msra.mxu0 0
    %4355 = vmatprep.subr.bf16.mxu0 0
    %4356 = vmatpush1.bf16.xpose.msra.mxu0 0
    %4357 = vmatprep.subr.bf16.mxu0 0
    %4358 = vmatpush1.bf16.xpose.msra.mxu0 0
    %4359 = vmatprep.subr.bf16.mxu0 0
    %4360 = vmatpush1.bf16.xpose.msra.mxu0 0
    %4361 = vmatprep.subr.bf16.mxu0 0
    %4362 = vmatpush1.bf16.xpose.msra.mxu0 0
    %4363 = vmatprep.mubr.bf16.mxu0 0
    %4364 = vmatmul.mubr.bf16.gmra.mrb[0].mxu0 %v4329
    %v4365 = vpop.f32.mrb[0].mxu0
    %v4366 = vadd.f32 %v2485, %v4365
    %v4367 = vpop.f32.mrb[0].mxu0
    %v4368 = vpop.f32.mrb[0].mxu0
    %v4369 = vadd.f32 %v2486, %v4368
    %v4370 = vpop.f32.mrb[0].mxu0
    %4371 = vdwg.mxu0
    %v4372 = vsel %vm549, %v4366, -inf
    %4373 = vmax.xlane.f32.xlu0 %v4372
    %v4374 = vpop.xlane.xlu0 %4373
    %v4375 = vsel %vm549, %v4369, -inf
    %4376 = vmax.xlane.f32.xlu0 %v4375
    %v4377 = vpop.xlane.xlu0 %4376
    %v4378 = vsub.f32 %v4366, %v4374
    %v4379 = vsub.f32 %v4369, %v4377
    %v4380 = vmul.f32 %v4378, 1.442695
    %v4381 = vpow.pop %v4380
    %v4382 = vmul.f32 %v4379, 1.442695
    %v4383 = vpow.pop %v4382
    %v4384 = vsel %vm549, %v4381, 0.0
    %4385 = vadd.xlane.f32.xlu0 %v4384
    %v4386 = vpop.xlane.xlu0 %4385
    %v4387 = vsel %vm549, %v4383, 0.0
    %4388 = vadd.xlane.f32.xlu0 %v4387
    %v4389 = vpop.xlane.xlu0 %4388
    %v4390 = vrcp.pop %v4386
    %v4391 = vrcp.pop %v4389
    %v4392 = vmul.f32 %v4381, %v4390
    %v4393 = vmul.f32 %v4383, %v4391
    %v4394 = vpack.c.bf16 %v4393, %v4392
    %v4396 = vsel %vm549, %v4394, 0
    %4398 = vmatprep.subr.bf16.mxu0 0
    %4399 = vmatpush1.bf16.msra.mxu0 %v4327
    %4400 = vmatprep.subr.bf16.mxu0 0
    %4401 = vmatpush1.bf16.msra.mxu0 0
    %4402 = vmatprep.subr.bf16.mxu0 0
    %4403 = vmatpush1.bf16.msra.mxu0 0
    %4404 = vmatprep.subr.bf16.mxu0 0
    %4405 = vmatpush1.bf16.msra.mxu0 0
    %4406 = vmatprep.subr.bf16.mxu0 0
    %4407 = vmatpush1.bf16.msra.mxu0 0
    %4408 = vmatprep.subr.bf16.mxu0 0
    %4409 = vmatpush1.bf16.msra.mxu0 0
    %4410 = vmatprep.subr.bf16.mxu0 0
    %4411 = vmatpush1.bf16.msra.mxu0 0
    %4412 = vmatprep.subr.bf16.mxu0 0
    %4413 = vmatpush1.bf16.msra.mxu0 0
    %4414 = vmatprep.subr.bf16.mxu0 0
    %4415 = vmatpush1.bf16.msra.mxu0 0
    %4416 = vmatprep.subr.bf16.mxu0 0
    %4417 = vmatpush1.bf16.msra.mxu0 0
    %4418 = vmatprep.subr.bf16.mxu0 0
    %4419 = vmatpush1.bf16.msra.mxu0 0
    %4420 = vmatprep.subr.bf16.mxu0 0
    %4421 = vmatpush1.bf16.msra.mxu0 0
    %4422 = vmatprep.subr.bf16.mxu0 0
    %4423 = vmatpush1.bf16.msra.mxu0 0
    %4424 = vmatprep.subr.bf16.mxu0 0
    %4425 = vmatpush1.bf16.msra.mxu0 0
    %4426 = vmatprep.subr.bf16.mxu0 0
    %4427 = vmatpush1.bf16.msra.mxu0 0
    %4428 = vmatprep.subr.bf16.mxu0 0
    %4429 = vmatpush1.bf16.msra.mxu0 0
    %4430 = vmatprep.mubr.bf16.mxu0 0
    %4431 = vmatmul.mubr.bf16.gmra.mrb[0].mxu0 %v4396
    %v4432 = vpop.f32.mrb[0].mxu0
    %v4433 = vadd.f32 0.0, %v4432
    %v4434 = vpop.f32.mrb[0].mxu0
    %v4435 = vpop.f32.mrb[0].mxu0
    %v4436 = vadd.f32 0.0, %v4435
    %v4437 = vpop.f32.mrb[0].mxu0
    %4438 = vdwg.mxu0
    %v4440 = vsel %vm549, %v4325, 0
    %4442 = vmatprep.subr.bf16.mxu0 0
    %4443 = vmatpush1.bf16.msra.mxu0 %v4255
    %4444 = vmatprep.subr.bf16.mxu0 0
    %4445 = vmatpush1.bf16.msra.mxu0 0
    %4446 = vmatprep.subr.bf16.mxu0 0
    %4447 = vmatpush1.bf16.msra.mxu0 0
    %4448 = vmatprep.subr.bf16.mxu0 0
    %4449 = vmatpush1.bf16.msra.mxu0 0
    %4450 = vmatprep.subr.bf16.mxu0 0
    %4451 = vmatpush1.bf16.msra.mxu0 0
    %4452 = vmatprep.subr.bf16.mxu0 0
    %4453 = vmatpush1.bf16.msra.mxu0 0
    %4454 = vmatprep.subr.bf16.mxu0 0
    %4455 = vmatpush1.bf16.msra.mxu0 0
    %4456 = vmatprep.subr.bf16.mxu0 0
    %4457 = vmatpush1.bf16.msra.mxu0 0
    %4458 = vmatprep.subr.bf16.mxu0 0
    %4459 = vmatpush1.bf16.msra.mxu0 0
    %4460 = vmatprep.subr.bf16.mxu0 0
    %4461 = vmatpush1.bf16.msra.mxu0 0
    %4462 = vmatprep.subr.bf16.mxu0 0
    %4463 = vmatpush1.bf16.msra.mxu0 0
    %4464 = vmatprep.subr.bf16.mxu0 0
    %4465 = vmatpush1.bf16.msra.mxu0 0
    %4466 = vmatprep.subr.bf16.mxu0 0
    %4467 = vmatpush1.bf16.msra.mxu0 0
    %4468 = vmatprep.subr.bf16.mxu0 0
    %4469 = vmatpush1.bf16.msra.mxu0 0
    %4470 = vmatprep.subr.bf16.mxu0 0
    %4471 = vmatpush1.bf16.msra.mxu0 0
    %4472 = vmatprep.subr.bf16.mxu0 0
    %4473 = vmatpush1.bf16.msra.mxu0 0
    %4474 = vmatprep.mubr.bf16.mxu0 0
    %4475 = vmatmul.mubr.bf16.gmra.mrb[0].mxu0 %v4440
    %v4476 = vpop.f32.mrb[0].mxu0
    %v4477 = vadd.f32 %v4433, %v4476
    %v4478 = vpop.f32.mrb[0].mxu0
    %v4479 = vpop.f32.mrb[0].mxu0
    %v4480 = vadd.f32 %v4436, %v4479
    %v4481 = vpop.f32.mrb[0].mxu0
    %4482 = vdwg.mxu0
    %v4483 = vsel %vm747, %v4251, 0
    %v4484 = vsel %vm747, %v4253, 0
    %v4486 = vsel %vm214, %v4483, 0
    %4488 = vmatprep.subr.bf16.mxu0 0
    %4489 = vmatpush1.bf16.xpose.msra.mxu0 %v4260
    %4490 = vmatprep.subr.bf16.mxu0 0
    %4491 = vmatpush1.bf16.xpose.msra.mxu0 0
    %4492 = vmatprep.subr.bf16.mxu0 0
    %4493 = vmatpush1.bf16.xpose.msra.mxu0 0
    %4494 = vmatprep.subr.bf16.mxu0 0
    %4495 = vmatpush1.bf16.xpose.msra.mxu0 0
    %4496 = vmatprep.subr.bf16.mxu0 0
    %4497 = vmatpush1.bf16.xpose.msra.mxu0 0
    %4498 = vmatprep.subr.bf16.mxu0 0
    %4499 = vmatpush1.bf16.xpose.msra.mxu0 0
    %4500 = vmatprep.subr.bf16.mxu0 0
    %4501 = vmatpush1.bf16.xpose.msra.mxu0 0
    %4502 = vmatprep.subr.bf16.mxu0 0
    %4503 = vmatpush1.bf16.xpose.msra.mxu0 0
    %4504 = vmatprep.subr.bf16.mxu0 0
    %4505 = vmatpush1.bf16.xpose.msra.mxu0 0
    %4506 = vmatprep.subr.bf16.mxu0 0
    %4507 = vmatpush1.bf16.xpose.msra.mxu0 0
    %4508 = vmatprep.subr.bf16.mxu0 0
    %4509 = vmatpush1.bf16.xpose.msra.mxu0 0
    %4510 = vmatprep.subr.bf16.mxu0 0
    %4511 = vmatpush1.bf16.xpose.msra.mxu0 0
    %4512 = vmatprep.subr.bf16.mxu0 0
    %4513 = vmatpush1.bf16.xpose.msra.mxu0 0
    %4514 = vmatprep.subr.bf16.mxu0 0
    %4515 = vmatpush1.bf16.xpose.msra.mxu0 0
    %4516 = vmatprep.subr.bf16.mxu0 0
    %4517 = vmatpush1.bf16.xpose.msra.mxu0 0
    %4518 = vmatprep.subr.bf16.mxu0 0
    %4519 = vmatpush1.bf16.xpose.msra.mxu0 0
    %4520 = vmatprep.mubr.bf16.mxu0 0
    %4521 = vmatmul.mubr.bf16.gmra.mrb[0].mxu0 %v4486
    %v4522 = vpop.f32.mrb[0].mxu0
    %v4523 = vadd.f32 %v2485, %v4522
    %v4524 = vpop.f32.mrb[0].mxu0
    %v4525 = vpop.f32.mrb[0].mxu0
    %v4526 = vadd.f32 %v2486, %v4525
    %v4527 = vpop.f32.mrb[0].mxu0
    %4528 = vdwg.mxu0
    %v4529 = vsel %vm549, %v4523, -inf
    %4530 = vmax.xlane.f32.xlu0 %v4529
    %v4531 = vpop.xlane.xlu0 %4530
    %v4532 = vsel %vm549, %v4526, -inf
    %4533 = vmax.xlane.f32.xlu0 %v4532
    %v4534 = vpop.xlane.xlu0 %4533
    %v4535 = vsub.f32 %v4523, %v4531
    %v4536 = vsub.f32 %v4526, %v4534
    %v4537 = vmul.f32 %v4535, 1.442695
    %v4538 = vpow.pop %v4537
    %v4539 = vmul.f32 %v4536, 1.442695
    %v4540 = vpow.pop %v4539
    %v4541 = vsel %vm549, %v4538, 0.0
    %4542 = vadd.xlane.f32.xlu0 %v4541
    %v4543 = vpop.xlane.xlu0 %4542
    %v4544 = vsel %vm549, %v4540, 0.0
    %4545 = vadd.xlane.f32.xlu0 %v4544
    %v4546 = vpop.xlane.xlu0 %4545
    %v4547 = vrcp.pop %v4543
    %v4548 = vrcp.pop %v4546
    %v4549 = vmul.f32 %v4538, %v4547
    %v4550 = vmul.f32 %v4540, %v4548
    %v4551 = vpack.c.bf16 %v4550, %v4549
    %v4553 = vsel %vm549, %v4551, 0
    %4555 = vmatprep.subr.bf16.mxu0 0
    %4556 = vmatpush1.bf16.msra.mxu0 %v4484
    %4557 = vmatprep.subr.bf16.mxu0 0
    %4558 = vmatpush1.bf16.msra.mxu0 0
    %4559 = vmatprep.subr.bf16.mxu0 0
    %4560 = vmatpush1.bf16.msra.mxu0 0
    %4561 = vmatprep.subr.bf16.mxu0 0
    %4562 = vmatpush1.bf16.msra.mxu0 0
    %4563 = vmatprep.subr.bf16.mxu0 0
    %4564 = vmatpush1.bf16.msra.mxu0 0
    %4565 = vmatprep.subr.bf16.mxu0 0
    %4566 = vmatpush1.bf16.msra.mxu0 0
    %4567 = vmatprep.subr.bf16.mxu0 0
    %4568 = vmatpush1.bf16.msra.mxu0 0
    %4569 = vmatprep.subr.bf16.mxu0 0
    %4570 = vmatpush1.bf16.msra.mxu0 0
    %4571 = vmatprep.subr.bf16.mxu0 0
    %4572 = vmatpush1.bf16.msra.mxu0 0
    %4573 = vmatprep.subr.bf16.mxu0 0
    %4574 = vmatpush1.bf16.msra.mxu0 0
    %4575 = vmatprep.subr.bf16.mxu0 0
    %4576 = vmatpush1.bf16.msra.mxu0 0
    %4577 = vmatprep.subr.bf16.mxu0 0
    %4578 = vmatpush1.bf16.msra.mxu0 0
    %4579 = vmatprep.subr.bf16.mxu0 0
    %4580 = vmatpush1.bf16.msra.mxu0 0
    %4581 = vmatprep.subr.bf16.mxu0 0
    %4582 = vmatpush1.bf16.msra.mxu0 0
    %4583 = vmatprep.subr.bf16.mxu0 0
    %4584 = vmatpush1.bf16.msra.mxu0 0
    %4585 = vmatprep.subr.bf16.mxu0 0
    %4586 = vmatpush1.bf16.msra.mxu0 0
    %4587 = vmatprep.mubr.bf16.mxu0 0
    %4588 = vmatmul.mubr.bf16.gmra.mrb[0].mxu0 %v4553
    %v4589 = vpop.f32.mrb[0].mxu0
    %v4590 = vadd.f32 0.0, %v4589
    %v4591 = vpop.f32.mrb[0].mxu0
    %v4592 = vpop.f32.mrb[0].mxu0
    %v4593 = vadd.f32 0.0, %v4592
    %v4594 = vpop.f32.mrb[0].mxu0
    %4595 = vdwg.mxu0
    %v4596 = vadd.f32 %v4477, %v4590
    %v4597 = vadd.f32 %v4480, %v4593
    %v4598 = vsel %vm871, %v4251, 0
    %v4599 = vsel %vm871, %v4253, 0
    %v4601 = vsel %vm214, %v4598, 0
    %4603 = vmatprep.subr.bf16.mxu0 0
    %4604 = vmatpush1.bf16.xpose.msra.mxu0 %v4260
    %4605 = vmatprep.subr.bf16.mxu0 0
    %4606 = vmatpush1.bf16.xpose.msra.mxu0 0
    %4607 = vmatprep.subr.bf16.mxu0 0
    %4608 = vmatpush1.bf16.xpose.msra.mxu0 0
    %4609 = vmatprep.subr.bf16.mxu0 0
    %4610 = vmatpush1.bf16.xpose.msra.mxu0 0
    %4611 = vmatprep.subr.bf16.mxu0 0
    %4612 = vmatpush1.bf16.xpose.msra.mxu0 0
    %4613 = vmatprep.subr.bf16.mxu0 0
    %4614 = vmatpush1.bf16.xpose.msra.mxu0 0
    %4615 = vmatprep.subr.bf16.mxu0 0
    %4616 = vmatpush1.bf16.xpose.msra.mxu0 0
    %4617 = vmatprep.subr.bf16.mxu0 0
    %4618 = vmatpush1.bf16.xpose.msra.mxu0 0
    %4619 = vmatprep.subr.bf16.mxu0 0
    %4620 = vmatpush1.bf16.xpose.msra.mxu0 0
    %4621 = vmatprep.subr.bf16.mxu0 0
    %4622 = vmatpush1.bf16.xpose.msra.mxu0 0
    %4623 = vmatprep.subr.bf16.mxu0 0
    %4624 = vmatpush1.bf16.xpose.msra.mxu0 0
    %4625 = vmatprep.subr.bf16.mxu0 0
    %4626 = vmatpush1.bf16.xpose.msra.mxu0 0
    %4627 = vmatprep.subr.bf16.mxu0 0
    %4628 = vmatpush1.bf16.xpose.msra.mxu0 0
    %4629 = vmatprep.subr.bf16.mxu0 0
    %4630 = vmatpush1.bf16.xpose.msra.mxu0 0
    %4631 = vmatprep.subr.bf16.mxu0 0
    %4632 = vmatpush1.bf16.xpose.msra.mxu0 0
    %4633 = vmatprep.subr.bf16.mxu0 0
    %4634 = vmatpush1.bf16.xpose.msra.mxu0 0
    %4635 = vmatprep.mubr.bf16.mxu0 0
    %4636 = vmatmul.mubr.bf16.gmra.mrb[0].mxu0 %v4601
    %v4637 = vpop.f32.mrb[0].mxu0
    %v4638 = vadd.f32 %v2485, %v4637
    %v4639 = vpop.f32.mrb[0].mxu0
    %v4640 = vpop.f32.mrb[0].mxu0
    %v4641 = vadd.f32 %v2486, %v4640
    %v4642 = vpop.f32.mrb[0].mxu0
    %4643 = vdwg.mxu0
    %v4644 = vsel %vm549, %v4638, -inf
    %4645 = vmax.xlane.f32.xlu0 %v4644
    %v4646 = vpop.xlane.xlu0 %4645
    %v4647 = vsel %vm549, %v4641, -inf
    %4648 = vmax.xlane.f32.xlu0 %v4647
    %v4649 = vpop.xlane.xlu0 %4648
    %v4650 = vsub.f32 %v4638, %v4646
    %v4651 = vsub.f32 %v4641, %v4649
    %v4652 = vmul.f32 %v4650, 1.442695
    %v4653 = vpow.pop %v4652
    %v4654 = vmul.f32 %v4651, 1.442695
    %v4655 = vpow.pop %v4654
    %v4656 = vsel %vm549, %v4653, 0.0
    %4657 = vadd.xlane.f32.xlu0 %v4656
    %v4658 = vpop.xlane.xlu0 %4657
    %v4659 = vsel %vm549, %v4655, 0.0
    %4660 = vadd.xlane.f32.xlu0 %v4659
    %v4661 = vpop.xlane.xlu0 %4660
    %v4662 = vrcp.pop %v4658
    %v4663 = vrcp.pop %v4661
    %v4664 = vmul.f32 %v4653, %v4662
    %v4665 = vmul.f32 %v4655, %v4663
    %v4666 = vpack.c.bf16 %v4665, %v4664
    %v4668 = vsel %vm549, %v4666, 0
    %4670 = vmatprep.subr.bf16.mxu0 0
    %4671 = vmatpush1.bf16.msra.mxu0 %v4599
    %4672 = vmatprep.subr.bf16.mxu0 0
    %4673 = vmatpush1.bf16.msra.mxu0 0
    %4674 = vmatprep.subr.bf16.mxu0 0
    %4675 = vmatpush1.bf16.msra.mxu0 0
    %4676 = vmatprep.subr.bf16.mxu0 0
    %4677 = vmatpush1.bf16.msra.mxu0 0
    %4678 = vmatprep.subr.bf16.mxu0 0
    %4679 = vmatpush1.bf16.msra.mxu0 0
    %4680 = vmatprep.subr.bf16.mxu0 0
    %4681 = vmatpush1.bf16.msra.mxu0 0
    %4682 = vmatprep.subr.bf16.mxu0 0
    %4683 = vmatpush1.bf16.msra.mxu0 0
    %4684 = vmatprep.subr.bf16.mxu0 0
    %4685 = vmatpush1.bf16.msra.mxu0 0
    %4686 = vmatprep.subr.bf16.mxu0 0
    %4687 = vmatpush1.bf16.msra.mxu0 0
    %4688 = vmatprep.subr.bf16.mxu0 0
    %4689 = vmatpush1.bf16.msra.mxu0 0
    %4690 = vmatprep.subr.bf16.mxu0 0
    %4691 = vmatpush1.bf16.msra.mxu0 0
    %4692 = vmatprep.subr.bf16.mxu0 0
    %4693 = vmatpush1.bf16.msra.mxu0 0
    %4694 = vmatprep.subr.bf16.mxu0 0
    %4695 = vmatpush1.bf16.msra.mxu0 0
    %4696 = vmatprep.subr.bf16.mxu0 0
    %4697 = vmatpush1.bf16.msra.mxu0 0
    %4698 = vmatprep.subr.bf16.mxu0 0
    %4699 = vmatpush1.bf16.msra.mxu0 0
    %4700 = vmatprep.subr.bf16.mxu0 0
    %4701 = vmatpush1.bf16.msra.mxu0 0
    %4702 = vmatprep.mubr.bf16.mxu0 0
    %4703 = vmatmul.mubr.bf16.gmra.mrb[0].mxu0 %v4668
    %v4704 = vpop.f32.mrb[0].mxu0
    %v4705 = vadd.f32 0.0, %v4704
    %v4706 = vpop.f32.mrb[0].mxu0
    %v4707 = vpop.f32.mrb[0].mxu0
    %v4708 = vadd.f32 0.0, %v4707
    %v4709 = vpop.f32.mrb[0].mxu0
    %4710 = vdwg.mxu0
    %v4711 = vadd.f32 %v4596, %v4705
    %v4712 = vadd.f32 %v4597, %v4708
    %s4713 = scalar_lea.vmem %s7, 304
    %v4714 = vld [vmem:[%s4713] sm:$0xf]
    %v4715 = vld [vmem:[%s4713 + $0x4] sm:$0xf]
    %v4716 = vld [vmem:[%s4713 + $0x8] sm:$0xf]
    %v4717 = vld [vmem:[%s4713 + $0xc] sm:$0xf]
    %v4718 = vld [vmem:[%s10 + $0x4a] sm:$0x1]
    %v4719 = vpack.c.bf16 %v4712, %v4711
    %v4720 = vlaneseq
    %v4721 = vshrl.u32 %v4720, 7
    %v4722 = vsub.s32 0, %v4721
    %v4723 = vrot.slane %v4718, %v4722
    %v4728 = vunpack.c.l.b16 %v4714
    %v4729 = vunpack.c.l.b16 %v4715
    %v4730 = vunpack.c.l.b16 %v4716
    %v4731 = vunpack.c.l.b16 %v4717
    %v4732 = vpack.c.b16 %v4729, %v4728
    %v4733 = vpack.c.b16 %v4731, %v4730
    %v4737 = vsel %vm214, %v4719, 0
    %4739 = vmatprep.subr.bf16.mxu0 0
    %4740 = vmatpush1.bf16.msra.mxu0 %v4732
    %4741 = vmatprep.subr.bf16.mxu0 0
    %4742 = vmatpush1.bf16.msra.mxu0 %v4733
    %4743 = vmatprep.subr.bf16.mxu0 0
    %4744 = vmatpush1.bf16.msra.mxu0 0
    %4745 = vmatprep.subr.bf16.mxu0 0
    %4746 = vmatpush1.bf16.msra.mxu0 0
    %4747 = vmatprep.subr.bf16.mxu0 0
    %4748 = vmatpush1.bf16.msra.mxu0 0
    %4749 = vmatprep.subr.bf16.mxu0 0
    %4750 = vmatpush1.bf16.msra.mxu0 0
    %4751 = vmatprep.subr.bf16.mxu0 0
    %4752 = vmatpush1.bf16.msra.mxu0 0
    %4753 = vmatprep.subr.bf16.mxu0 0
    %4754 = vmatpush1.bf16.msra.mxu0 0
    %4755 = vmatprep.subr.bf16.mxu0 0
    %4756 = vmatpush1.bf16.msra.mxu0 0
    %4757 = vmatprep.subr.bf16.mxu0 0
    %4758 = vmatpush1.bf16.msra.mxu0 0
    %4759 = vmatprep.subr.bf16.mxu0 0
    %4760 = vmatpush1.bf16.msra.mxu0 0
    %4761 = vmatprep.subr.bf16.mxu0 0
    %4762 = vmatpush1.bf16.msra.mxu0 0
    %4763 = vmatprep.subr.bf16.mxu0 0
    %4764 = vmatpush1.bf16.msra.mxu0 0
    %4765 = vmatprep.subr.bf16.mxu0 0
    %4766 = vmatpush1.bf16.msra.mxu0 0
    %4767 = vmatprep.subr.bf16.mxu0 0
    %4768 = vmatpush1.bf16.msra.mxu0 0
    %4769 = vmatprep.subr.bf16.mxu0 0
    %4770 = vmatpush1.bf16.msra.mxu0 0
    %4771 = vmatprep.mubr.bf16.mxu0 0
    %4772 = vmatmul.mubr.bf16.gmra.mrb[0].mxu0 %v4737
    %v4773 = vpop.f32.mrb[0].mxu0
    %v4774 = vadd.f32 %v4723, %v4773
    %v4775 = vpop.f32.mrb[0].mxu0
    %v4776 = vpop.f32.mrb[0].mxu0
    %v4777 = vadd.f32 %v4723, %v4776
    %v4778 = vpop.f32.mrb[0].mxu0
    %4779 = vdwg.mxu0
    %v4780 = vadd.f32 %v4016, %v4774
    %v4781 = vadd.f32 %v4017, %v4777
    %v4782 = vld [vmem:[%s10 + $0x4b] sm:$0x1]
    %v4783 = vld [vmem:[%s10 + $0x4c] sm:$0x1]
    %v4784 = vsel %vm214, %v4780, 0.0
    %4785 = vadd.xlane.f32.xlu0 %v4784
    %v4786 = vpop.xlane.xlu0 %4785
    %v4787 = vsel %vm214, %v4781, 0.0
    %4788 = vadd.xlane.f32.xlu0 %v4787
    %v4789 = vpop.xlane.xlu0 %4788
    %v4790 = vmul.f32 %v4786, %v221
    %v4791 = vmul.f32 %v4789, %v221
    %v4792 = vsub.f32 %v4780, %v4790
    %v4793 = vsub.f32 %v4781, %v4791
    %v4794 = vmul.f32 %v4792, %v4792
    %v4795 = vmul.f32 %v4793, %v4793
    %v4796 = vsel %vm214, %v4794, 0.0
    %4797 = vadd.xlane.f32.xlu0 %v4796
    %v4798 = vpop.xlane.xlu0 %4797
    %v4799 = vsel %vm214, %v4795, 0.0
    %4800 = vadd.xlane.f32.xlu0 %v4799
    %v4801 = vpop.xlane.xlu0 %4800
    %v4802 = vmul.f32 %v4798, %v221
    %v4803 = vmul.f32 %v4801, %v221
    %v4804 = vadd.f32 %v4802, 1e-05
    %v4805 = vadd.f32 %v4803, 1e-05
    %v4806 = vrsqrt.pop %v4804
    %v4807 = vrsqrt.pop %v4805
    %v4808 = vmul.f32 %v4792, %v4806
    %v4809 = vmul.f32 %v4793, %v4807
    %v4810 = vlaneseq
    %v4811 = vshrl.u32 %v4810, 7
    %v4812 = vsub.s32 0, %v4811
    %v4813 = vrot.slane %v4782, %v4812
    %v4814 = vmul.f32 %v4808, %v4813
    %v4815 = vmul.f32 %v4809, %v4813
    %v4816 = vlaneseq
    %v4817 = vshrl.u32 %v4816, 7
    %v4818 = vsub.s32 0, %v4817
    %v4819 = vrot.slane %v4783, %v4818
    %v4820 = vadd.f32 %v4814, %v4819
    %v4821 = vadd.f32 %v4815, %v4819
    %s4822 = scalar_lea.vmem %s8, 32
    %v4823 = vld [vmem:[%s4822] sm:$0xf]
    %v4824 = vld [vmem:[%s4822 + $0x4] sm:$0xf]
    %v4825 = vld [vmem:[%s4822 + $0x8] sm:$0xf]
    %v4826 = vld [vmem:[%s4822 + $0xc] sm:$0xf]
    %v4827 = vld [vmem:[%s10 + $0x4d] sm:$0x1]
    %v4828 = vpack.c.bf16 %v4821, %v4820
    %v4829 = vlaneseq
    %v4830 = vshrl.u32 %v4829, 7
    %v4831 = vsub.s32 0, %v4830
    %v4832 = vrot.slane %v4827, %v4831
    %v4837 = vunpack.c.l.b16 %v4823
    %v4838 = vunpack.c.l.b16 %v4824
    %v4839 = vunpack.c.l.b16 %v4825
    %v4840 = vunpack.c.l.b16 %v4826
    %v4841 = vpack.c.b16 %v4838, %v4837
    %v4842 = vpack.c.b16 %v4840, %v4839
    %v4846 = vsel %vm214, %v4828, 0
    %4848 = vmatprep.subr.bf16.mxu0 0
    %4849 = vmatpush1.bf16.msra.mxu0 %v4841
    %4850 = vmatprep.subr.bf16.mxu0 0
    %4851 = vmatpush1.bf16.msra.mxu0 %v4842
    %4852 = vmatprep.subr.bf16.mxu0 0
    %4853 = vmatpush1.bf16.msra.mxu0 0
    %4854 = vmatprep.subr.bf16.mxu0 0
    %4855 = vmatpush1.bf16.msra.mxu0 0
    %4856 = vmatprep.subr.bf16.mxu0 0
    %4857 = vmatpush1.bf16.msra.mxu0 0
    %4858 = vmatprep.subr.bf16.mxu0 0
    %4859 = vmatpush1.bf16.msra.mxu0 0
    %4860 = vmatprep.subr.bf16.mxu0 0
    %4861 = vmatpush1.bf16.msra.mxu0 0
    %4862 = vmatprep.subr.bf16.mxu0 0
    %4863 = vmatpush1.bf16.msra.mxu0 0
    %4864 = vmatprep.subr.bf16.mxu0 0
    %4865 = vmatpush1.bf16.msra.mxu0 0
    %4866 = vmatprep.subr.bf16.mxu0 0
    %4867 = vmatpush1.bf16.msra.mxu0 0
    %4868 = vmatprep.subr.bf16.mxu0 0
    %4869 = vmatpush1.bf16.msra.mxu0 0
    %4870 = vmatprep.subr.bf16.mxu0 0
    %4871 = vmatpush1.bf16.msra.mxu0 0
    %4872 = vmatprep.subr.bf16.mxu0 0
    %4873 = vmatpush1.bf16.msra.mxu0 0
    %4874 = vmatprep.subr.bf16.mxu0 0
    %4875 = vmatpush1.bf16.msra.mxu0 0
    %4876 = vmatprep.subr.bf16.mxu0 0
    %4877 = vmatpush1.bf16.msra.mxu0 0
    %4878 = vmatprep.subr.bf16.mxu0 0
    %4879 = vmatpush1.bf16.msra.mxu0 0
    %4880 = vmatprep.mubr.bf16.mxu0 0
    %4881 = vmatmul.mubr.bf16.gmra.mrb[0].mxu0 %v4846
    %v4882 = vpop.f32.mrb[0].mxu0
    %v4883 = vadd.f32 %v4832, %v4882
    %v4884 = vpop.f32.mrb[0].mxu0
    %v4885 = vpop.f32.mrb[0].mxu0
    %v4886 = vadd.f32 %v4832, %v4885
    %v4887 = vpop.f32.mrb[0].mxu0
    %4888 = vdwg.mxu0
    %v4889 = vmul.f32 %v4883, 0.5
    %v4890 = vmul.f32 %v4886, 0.5
    %v4891 = vmul.f32 %v4883, 0.044715
    %v4892 = vmul.f32 %v4886, 0.044715
    %v4893 = vmul.f32 %v4891, %v4883
    %v4894 = vmul.f32 %v4892, %v4886
    %v4895 = vmul.f32 %v4893, %v4883
    %v4896 = vmul.f32 %v4894, %v4886
    %v4897 = vadd.f32 %v4883, %v4895
    %v4898 = vadd.f32 %v4886, %v4896
    %v4899 = vmul.f32 %v4897, 0.7978846
    %v4900 = vmul.f32 %v4898, 0.7978846
    %v4901 = vtanh.pop %v4899
    %v4902 = vtanh.pop %v4900
    %v4903 = vadd.f32 %v4901, 1.0
    %v4904 = vadd.f32 %v4902, 1.0
    %v4905 = vmul.f32 %v4889, %v4903
    %v4906 = vmul.f32 %v4890, %v4904
    %s4907 = scalar_lea.vmem %s9, 128
    %v4908 = vld [vmem:[%s4907] sm:$0xf]
    %v4909 = vld [vmem:[%s4907 + $0x4] sm:$0xf]
    %v4910 = vld [vmem:[%s4907 + $0x8] sm:$0xf]
    %v4911 = vld [vmem:[%s4907 + $0xc] sm:$0xf]
    %v4912 = vld [vmem:[%s4907 + $0x10] sm:$0xf]
    %v4913 = vld [vmem:[%s4907 + $0x14] sm:$0xf]
    %v4914 = vld [vmem:[%s4907 + $0x18] sm:$0xf]
    %v4915 = vld [vmem:[%s4907 + $0x1c] sm:$0xf]
    %v4916 = vld [vmem:[%s4907 + $0x20] sm:$0xf]
    %v4917 = vld [vmem:[%s4907 + $0x24] sm:$0xf]
    %v4918 = vld [vmem:[%s4907 + $0x28] sm:$0xf]
    %v4919 = vld [vmem:[%s4907 + $0x2c] sm:$0xf]
    %v4920 = vld [vmem:[%s4907 + $0x30] sm:$0xf]
    %v4921 = vld [vmem:[%s4907 + $0x34] sm:$0xf]
    %v4922 = vld [vmem:[%s4907 + $0x38] sm:$0xf]
    %v4923 = vld [vmem:[%s4907 + $0x3c] sm:$0xf]
    %v4924 = vld [vmem:[%s10 + $0x4e] sm:$0x1]
    %v4925 = vpack.c.bf16 %v4906, %v4905
    %v4926 = vlaneseq
    %v4927 = vshrl.u32 %v4926, 7
    %v4928 = vsub.s32 0, %v4927
    %v4929 = vrot.slane %v4924, %v4928
    %v4946 = vunpack.c.l.b16 %v4908
    %v4947 = vunpack.c.l.b16 %v4909
    %v4948 = vunpack.c.l.b16 %v4910
    %v4949 = vunpack.c.l.b16 %v4911
    %v4950 = vunpack.c.l.b16 %v4912
    %v4951 = vunpack.c.l.b16 %v4913
    %v4952 = vunpack.c.l.b16 %v4914
    %v4953 = vunpack.c.l.b16 %v4915
    %v4954 = vunpack.c.l.b16 %v4916
    %v4955 = vunpack.c.l.b16 %v4917
    %v4956 = vunpack.c.l.b16 %v4918
    %v4957 = vunpack.c.l.b16 %v4919
    %v4958 = vunpack.c.l.b16 %v4920
    %v4959 = vunpack.c.l.b16 %v4921
    %v4960 = vunpack.c.l.b16 %v4922
    %v4961 = vunpack.c.l.b16 %v4923
    %v4962 = vpack.c.b16 %v4947, %v4946
    %v4963 = vpack.c.b16 %v4949, %v4948
    %v4964 = vpack.c.b16 %v4951, %v4950
    %v4965 = vpack.c.b16 %v4953, %v4952
    %v4966 = vpack.c.b16 %v4955, %v4954
    %v4967 = vpack.c.b16 %v4957, %v4956
    %v4968 = vpack.c.b16 %v4959, %v4958
    %v4969 = vpack.c.b16 %v4961, %v4960
    %4978 = vmatprep.subr.bf16.mxu0 0
    %4979 = vmatpush1.bf16.msra.mxu0 %v4962
    %4980 = vmatprep.subr.bf16.mxu0 0
    %4981 = vmatpush1.bf16.msra.mxu0 %v4963
    %4982 = vmatprep.subr.bf16.mxu0 0
    %4983 = vmatpush1.bf16.msra.mxu0 %v4964
    %4984 = vmatprep.subr.bf16.mxu0 0
    %4985 = vmatpush1.bf16.msra.mxu0 %v4965
    %4986 = vmatprep.subr.bf16.mxu0 0
    %4987 = vmatpush1.bf16.msra.mxu0 %v4966
    %4988 = vmatprep.subr.bf16.mxu0 0
    %4989 = vmatpush1.bf16.msra.mxu0 %v4967
    %4990 = vmatprep.subr.bf16.mxu0 0
    %4991 = vmatpush1.bf16.msra.mxu0 %v4968
    %4992 = vmatprep.subr.bf16.mxu0 0
    %4993 = vmatpush1.bf16.msra.mxu0 %v4969
    %4994 = vmatprep.subr.bf16.mxu0 0
    %4995 = vmatpush1.bf16.msra.mxu0 0
    %4996 = vmatprep.subr.bf16.mxu0 0
    %4997 = vmatpush1.bf16.msra.mxu0 0
    %4998 = vmatprep.subr.bf16.mxu0 0
    %4999 = vmatpush1.bf16.msra.mxu0 0
    %5000 = vmatprep.subr.bf16.mxu0 0
    %5001 = vmatpush1.bf16.msra.mxu0 0
    %5002 = vmatprep.subr.bf16.mxu0 0
    %5003 = vmatpush1.bf16.msra.mxu0 0
    %5004 = vmatprep.subr.bf16.mxu0 0
    %5005 = vmatpush1.bf16.msra.mxu0 0
    %5006 = vmatprep.subr.bf16.mxu0 0
    %5007 = vmatpush1.bf16.msra.mxu0 0
    %5008 = vmatprep.subr.bf16.mxu0 0
    %5009 = vmatpush1.bf16.msra.mxu0 0
    %5010 = vmatprep.mubr.bf16.mxu0 0
    %5011 = vmatmul.mubr.bf16.gmra.mrb[0].mxu0 %v4925
    %v5012 = vpop.f32.mrb[0].mxu0
    %v5013 = vadd.f32 %v4929, %v5012
    %v5014 = vpop.f32.mrb[0].mxu0
    %v5015 = vpop.f32.mrb[0].mxu0
    %v5016 = vadd.f32 %v4929, %v5015
    %v5017 = vpop.f32.mrb[0].mxu0
    %5018 = vdwg.mxu0
    %v5019 = vadd.f32 %v4780, %v5013
    %v5020 = vadd.f32 %v4781, %v5016
    %v5021 = vld [vmem:[%s10 + $0x23] sm:$0x1]
    %v5022 = vld [vmem:[%s10 + $0x24] sm:$0x1]
    %v5023 = vsel %vm214, %v5019, 0.0
    %5024 = vadd.xlane.f32.xlu0 %v5023
    %v5025 = vpop.xlane.xlu0 %5024
    %v5026 = vsel %vm214, %v5020, 0.0
    %5027 = vadd.xlane.f32.xlu0 %v5026
    %v5028 = vpop.xlane.xlu0 %5027
    %v5029 = vmul.f32 %v5025, %v221
    %v5030 = vmul.f32 %v5028, %v221
    %v5031 = vsub.f32 %v5019, %v5029
    %v5032 = vsub.f32 %v5020, %v5030
    %v5033 = vmul.f32 %v5031, %v5031
    %v5034 = vmul.f32 %v5032, %v5032
    %v5035 = vsel %vm214, %v5033, 0.0
    %5036 = vadd.xlane.f32.xlu0 %v5035
    %v5037 = vpop.xlane.xlu0 %5036
    %v5038 = vsel %vm214, %v5034, 0.0
    %5039 = vadd.xlane.f32.xlu0 %v5038
    %v5040 = vpop.xlane.xlu0 %5039
    %v5041 = vmul.f32 %v5037, %v221
    %v5042 = vmul.f32 %v5040, %v221
    %v5043 = vadd.f32 %v5041, 1e-05
    %v5044 = vadd.f32 %v5042, 1e-05
    %v5045 = vrsqrt.pop %v5043
    %v5046 = vrsqrt.pop %v5044
    %v5047 = vmul.f32 %v5031, %v5045
    %v5048 = vmul.f32 %v5032, %v5046
    %v5049 = vlaneseq
    %v5050 = vshrl.u32 %v5049, 7
    %v5051 = vsub.s32 0, %v5050
    %v5052 = vrot.slane %v5021, %v5051
    %v5053 = vmul.f32 %v5047, %v5052
    %v5054 = vmul.f32 %v5048, %v5052
    %v5055 = vlaneseq
    %v5056 = vshrl.u32 %v5055, 7
    %v5057 = vsub.s32 0, %v5056
    %v5058 = vrot.slane %v5022, %v5057
    %v5059 = vadd.f32 %v5053, %v5058
    %v5060 = vadd.f32 %v5054, %v5058
    %v5061 = vpack.c.bf16 %v5060, %v5059
    %s5062 = scalar_lea.vmem %s8, 48
    %v5063 = vld [vmem:[%s5062] sm:$0xf]
    %v5064 = vld [vmem:[%s5062 + $0x4] sm:$0xf]
    %v5065 = vld [vmem:[%s5062 + $0x8] sm:$0xf]
    %v5066 = vld [vmem:[%s5062 + $0xc] sm:$0xf]
    %v5071 = vunpack.c.l.b16 %v5063
    %v5072 = vunpack.c.l.b16 %v5064
    %v5073 = vunpack.c.l.b16 %v5065
    %v5074 = vunpack.c.l.b16 %v5066
    %v5075 = vpack.c.b16 %v5072, %v5071
    %v5076 = vpack.c.b16 %v5074, %v5073
    %v5080 = vsel %vm214, %v5061, 0
    %5082 = vmatprep.subr.bf16.mxu0 0
    %5083 = vmatpush1.bf16.msra.mxu0 %v5075
    %5084 = vmatprep.subr.bf16.mxu0 0
    %5085 = vmatpush1.bf16.msra.mxu0 %v5076
    %5086 = vmatprep.subr.bf16.mxu0 0
    %5087 = vmatpush1.bf16.msra.mxu0 0
    %5088 = vmatprep.subr.bf16.mxu0 0
    %5089 = vmatpush1.bf16.msra.mxu0 0
    %5090 = vmatprep.subr.bf16.mxu0 0
    %5091 = vmatpush1.bf16.msra.mxu0 0
    %5092 = vmatprep.subr.bf16.mxu0 0
    %5093 = vmatpush1.bf16.msra.mxu0 0
    %5094 = vmatprep.subr.bf16.mxu0 0
    %5095 = vmatpush1.bf16.msra.mxu0 0
    %5096 = vmatprep.subr.bf16.mxu0 0
    %5097 = vmatpush1.bf16.msra.mxu0 0
    %5098 = vmatprep.subr.bf16.mxu0 0
    %5099 = vmatpush1.bf16.msra.mxu0 0
    %5100 = vmatprep.subr.bf16.mxu0 0
    %5101 = vmatpush1.bf16.msra.mxu0 0
    %5102 = vmatprep.subr.bf16.mxu0 0
    %5103 = vmatpush1.bf16.msra.mxu0 0
    %5104 = vmatprep.subr.bf16.mxu0 0
    %5105 = vmatpush1.bf16.msra.mxu0 0
    %5106 = vmatprep.subr.bf16.mxu0 0
    %5107 = vmatpush1.bf16.msra.mxu0 0
    %5108 = vmatprep.subr.bf16.mxu0 0
    %5109 = vmatpush1.bf16.msra.mxu0 0
    %5110 = vmatprep.subr.bf16.mxu0 0
    %5111 = vmatpush1.bf16.msra.mxu0 0
    %5112 = vmatprep.subr.bf16.mxu0 0
    %5113 = vmatpush1.bf16.msra.mxu0 0
    %5114 = vmatprep.mubr.bf16.mxu0 0
    %5115 = vmatmul.mubr.bf16.gmra.mrb[0].mxu0 %v5080
    %v5116 = vpop.f32.mrb[0].mxu0
    %v5117 = vadd.f32 0.0, %v5116
    %v5118 = vpop.f32.mrb[0].mxu0
    %v5119 = vpop.f32.mrb[0].mxu0
    %v5120 = vadd.f32 0.0, %v5119
    %v5121 = vpop.f32.mrb[0].mxu0
    %5122 = vdwg.mxu0
    %5123 = vst [vmem:[%s11] sm:$0xff] %v5117
    %5124 = vst [vmem:[%s11 + $0x8] sm:$0xff] %v5120
    %vm5125 = vcmp.lt.s32.totalorder %v45, 64
    %v5126 = vsel %vm5125, 0.0, -1e+09
    %v5127 = vadd.f32 %v5117, %v5126
    %v5128 = vadd.f32 %v5120, %v5126
    %5129 = vmax.xlane.f32.xlu0 %v5127
    %v5130 = vpop.xlane.xlu0 %5129
    %5131 = vmax.xlane.f32.xlu0 %v5128
    %v5132 = vpop.xlane.xlu0 %5131
    %v5133 = vsub.f32 %v5127, %v5130
    %v5134 = vsub.f32 %v5128, %v5132
    %v5135 = vmul.f32 %v5133, 1.442695
    %v5136 = vpow.pop %v5135
    %v5137 = vmul.f32 %v5134, 1.442695
    %v5138 = vpow.pop %v5137
    %5139 = vadd.xlane.f32.xlu0 %v5136
    %v5140 = vpop.xlane.xlu0 %5139
    %5141 = vadd.xlane.f32.xlu0 %v5138
    %v5142 = vpop.xlane.xlu0 %5141
    %v5143 = vlog2.pop %v5140
    %v5144 = vmul.f32 %v5143, 0.6931472
    %v5145 = vlog2.pop %v5142
    %v5146 = vmul.f32 %v5145, 0.6931472
    %v5147 = vsub.f32 %v5133, %v5144
    %v5148 = vsub.f32 %v5134, %v5146
    %v5149 = vld [vmem:[%s1] sm:$0xff]
    %v5150 = vld [vmem:[%s1 + $0x8] sm:$0xff]
    %5151 = vset.pattern.permute.xlu0 1
    %5152 = vperm.xlu0 %5151, %v5149
    %v5153 = vpop.permute.xlu0 %5152
    %5154 = vset.pattern.permute.xlu0 1
    %5155 = vperm.xlu0 %5154, %v5150
    %v5156 = vpop.permute.xlu0 %5155
    %vm5157 = vcmp.eq.s32.totalorder %v45, %v5153
    %vm5158 = vcmp.eq.s32.totalorder %v45, %v5156
    %v5159 = vsel %vm5157, 1, 0
    %v5160 = vsel %vm5158, 1, 0
    %v5161 = vcvt.s32.f32 %v5159
    %v5162 = vcvt.s32.f32 %v5160
    %v5163 = vmul.f32 %v5147, %v5161
    %v5164 = vmul.f32 %v5148, %v5162
    %5165 = vadd.xlane.f32.xlu0 %v5163
    %v5166 = vpop.xlane.xlu0 %5165
    %5167 = vadd.xlane.f32.xlu0 %v5164
    %v5168 = vpop.xlane.xlu0 %5167
    %v5169 = vsub.f32 0.0, %v5166
    %v5170 = vsub.f32 0.0, %v5168
    %v5171 = vld [vmem:[%s2] sm:$0xff]
    %v5172 = vld [vmem:[%s2 + $0x8] sm:$0xff]
    %v5173 = vmul.f32 %v5169, %v5171
    %v5174 = vmul.f32 %v5170, %v5172
    %vm5175 = vcmask 7168
    %v5176 = vsel %vm5175, %v5173, 0.0
    %v5177 = vsel %vm5175, %v5174, 0.0
    %v5178 = vadd.f32 %v5176, %v5177
    %v5179 = vrot.slane %v5178, 4
    %v5180 = vadd.f32 %v5178, %v5179
    %v5181 = vrot.slane %v5180, 2
    %v5182 = vadd.f32 %v5180, %v5181
    %v5183 = vrot.slane %v5182, 1
    %v5184 = vadd.f32 %v5182, %v5183
    %v5185 = vmul.f32 %v5184, 0.071428575
    %vm5186 = vcmask 0
    %5187 = vst.msk [vmem:[#allocation2] sm:$0x1] %vm5186, %v5185
    // Predicated region
    $region46: #{knowledge_vision_gpt2_forward.1} parent=1 // pred_check
      _
    $region47: #{knowledge_vision_gpt2_forward.1} parent=1 // pred_check_branch
      %5189 = sbr.rel (0) target = $region49
    $region48: #{knowledge_vision_gpt2_forward.1} parent=1 // pred_region
      _
    $region49: #{knowledge_vision_gpt2_forward.1} parent=1 // pred_fallthru
      _
    // Predicated region
    $region50: #{knowledge_vision_gpt2_forward.1} parent=1 // pred_check
      _
    $region51: #{knowledge_vision_gpt2_forward.1} parent=1 // pred_check_branch
      %5191 = sbr.rel (0) target = $region53
    $region52: #{knowledge_vision_gpt2_forward.1} parent=1 // pred_region
      %s5193 = ssub.s32 16, 16
      %5194 = vsyncadd [#allocation3], %s5193
      %s5196 = sshll.u32 [#allocation2], 4
      %s5197 = int_to_ptr.vmem [resolvable:$true] %s5196
      %5199 = dma.vmem_to_hbm [thread:$0]  %s5197, 16, %s12, [#allocation3]
    $region53: #{knowledge_vision_gpt2_forward.1} parent=1 // pred_fallthru
      _
    // Predicated region
    $region54: #{knowledge_vision_gpt2_forward.1} parent=1 // pred_check
      _
    $region55: #{knowledge_vision_gpt2_forward.1} parent=1 // pred_check_branch
      %5201 = sbr.rel (0) target = $region57
    $region56: #{knowledge_vision_gpt2_forward.1} parent=1 // pred_region
      _
    $region57: #{knowledge_vision_gpt2_forward.1} parent=1 // pred_fallthru
      _
    // Predicated region
    $region58: #{knowledge_vision_gpt2_forward.1} parent=1 // pred_check
      _
    $region59: #{knowledge_vision_gpt2_forward.1} parent=1 // pred_check_branch
      %5203 = sbr.rel (0) target = $region61
    $region60: #{knowledge_vision_gpt2_forward.1} parent=1 // pred_region
      %5204 = dma.done [#allocation3], 16
    $region61: #{knowledge_vision_gpt2_forward.1} parent=1 // pred_fallthru
      _
    %5205 = vsyncpa [#allocation3], 1

</llo_original>
